<compile_context>
chip_gen: v5e
topology: v5e:2x2
jax: 0.10.0
libtpu: 0.0.40
codegen_flags: <defaults>
</compile_context>

<pallas_src>
import jax
import jax.numpy as jnp
from jax.experimental import pallas as pl
from jax.experimental.pallas import tpu as pltpu

HIDDEN_DIMS = (256, 512, 1024, 512, 256, 128)   # as in the nn.Sequential
N_LAYERS = len(HIDDEN_DIMS) + 1                 # 7 Linear layers total
LANE = 128
SUB = 16                                        # sublane alignment (bf16 tile = (16,128))


def _round_up(x, m):
    return (x + m - 1) // m * m


def _leaky_relu(x, negative_slope=0.01):
    # slope < 1  =>  LeakyReLU(x) == max(x, slope*x); cheaper than compare+select.
    return jnp.maximum(x, negative_slope * x)


def _stable_sigmoid_ref(x):
    # Reference (exact divide) stable sigmoid; never exponentiates a large positive.
    z = jnp.exp(-jnp.abs(x))
    return jnp.where(x >= 0, 1.0 / (1.0 + z), z / (1.0 + z))


def mlp_kernel(x_ref, *refs):
    """refs = (w0..w6, b0..b6, out_ref). Whole MLP computed on one batch tile."""
    w_refs = refs[:N_LAYERS]
    b_refs = refs[N_LAYERS:2 * N_LAYERS]
    out_ref = refs[2 * N_LAYERS]

    h = x_ref[...]                                       # bf16 (tile_b, 128), zero-padded cols
    for li in range(N_LAYERS):
        # bf16 operands on the MXU, f32 accumulation.
        acc = jnp.dot(h, w_refs[li][...], preferred_element_type=jnp.float32)
        acc = acc + b_refs[li][...]                      # f32 bias, broadcasts over rows
        if li < N_LAYERS - 1:
            # Epilogue math in f32 (v5e-safe); only the stored activation is bf16.
            h = _leaky_relu(acc).astype(jnp.bfloat16)
        else:
            # Numerically-stable sigmoid; one EUP reciprocal instead of two divides.
            z = jnp.exp(-jnp.abs(acc))
            r = pl.reciprocal(1.0 + z, approx=True)
            out_ref[...] = jnp.where(acc >= 0, r, z * r).astype(out_ref.dtype)


def _choose_tile_b(B, tile_b):
    if tile_b is None:
        tile_b = 1024 if B >= 2048 else 512
    tile_b = max(SUB, _round_up(tile_b, SUB))
    tile_b = min(tile_b, _round_up(B, SUB))
    # Keep >= 2 grid steps when possible so v7x's two TensorCores both get work.
    if _round_up(B, tile_b) // tile_b < 2 and tile_b >= 2 * SUB:
        tile_b = _round_up(tile_b // 2, SUB)
    return tile_b


def pcg3d_float_forward(x, weights, biases, *, tile_b=None):
    """x: (B, input_size) f32. weights[i]: (in_i, out_i) f32. biases[i]: (1, out_i) f32."""
    B, in_dim = x.shape
    out_dim = weights[-1].shape[1]

    # --- lane-pad first-layer input and last-layer output to 128 lanes --------
    in_pad = _round_up(max(in_dim, LANE), LANE)
    out_pad = _round_up(max(out_dim, LANE), LANE)

    w_k, b_k = [], []
    for li, (w, b) in enumerate(zip(weights, biases)):
        b = jnp.reshape(b, (1, -1)).astype(jnp.float32)
        if li == 0:
            w = jnp.pad(w, ((0, in_pad - w.shape[0]), (0, 0)))
        if li == N_LAYERS - 1:
            w = jnp.pad(w, ((0, 0), (0, out_pad - w.shape[1])))
            b = jnp.pad(b, ((0, 0), (0, out_pad - b.shape[1])))
        w_k.append(w.astype(jnp.bfloat16))       # bf16 weights, f32 MXU accumulation
        b_k.append(b)

    # --- batch tiling ----------------------------------------------------------
    tile_b = _choose_tile_b(B, tile_b)
    B_pad = _round_up(B, tile_b)

    # bf16 input DMA (padded block is mostly zeros; halves input traffic).
    x_p = jnp.zeros((B_pad, in_pad), jnp.bfloat16).at[:B, :in_dim].set(
        x.astype(jnp.bfloat16))

    grid = (B_pad // tile_b,)

    def _resident_spec(shape, use_buffered):
        # Grid-invariant block: index_map constant, so 1 buffer is enough.
        if use_buffered:
            return pl.BlockSpec(shape, lambda i: (0, 0), pipeline_mode=pl.Buffered(1))
        return pl.BlockSpec(shape, lambda i: (0, 0))

    def _build(use_buffered):
        in_specs = [pl.BlockSpec((tile_b, in_pad), lambda i: (i, 0))]
        for w in w_k:
            in_specs.append(_resident_spec(w.shape, use_buffered))
        for b in b_k:
            in_specs.append(_resident_spec(b.shape, use_buffered))
        out_specs = pl.BlockSpec((tile_b, out_pad), lambda i: (i, 0))

        dims = [in_pad] + [w.shape[1] for w in w_k]
        flops = 2 * B_pad * sum(dims[i] * dims[i + 1] for i in range(N_LAYERS))
        transcendentals = B_pad * out_pad            # exp (+ reciprocal) in final sigmoid
        bytes_accessed = (sum(int(w.size) * 2 for w in w_k)
                          + sum(int(b.size) * 4 for b in b_k)
                          + B_pad * in_pad * 2 + B_pad * out_pad * 4)

        return pl.pallas_call(
            mlp_kernel,
            out_shape=jax.ShapeDtypeStruct((B_pad, out_pad), jnp.float32),
            grid=grid,
            in_specs=in_specs,
            out_specs=out_specs,
            compiler_params=pltpu.CompilerParams(
                dimension_semantics=("parallel",),
                vmem_limit_bytes=48 * 1024 * 1024,   # fits v7x's 64 MiB/TC budget
            ),
            cost_estimate=pl.CostEstimate(
                flops=flops,
                transcendentals=transcendentals,
                bytes_accessed=bytes_accessed,
            ),
        )

    use_buffered = hasattr(pl, "Buffered")
    try:
        out = _build(use_buffered)(x_p, *w_k, *b_k)
    except Exception:
        # Fallback: default double-buffered specs (still well under the VMEM cap).
        out = _build(False)(x_p, *w_k, *b_k)

    return out[:B, :out_dim]


def init_params(key, input_size, output_size):
    """Deterministic synthetic init (torch.nn.Linear-style fan_in scaling)."""
    dims = (input_size,) + HIDDEN_DIMS + (output_size,)
    weights, biases = [], []
    for li in range(N_LAYERS):
        fan_in, fan_out = dims[li], dims[li + 1]
        key, kw, kb = jax.random.split(key, 3)
        bound = 1.0 / jnp.sqrt(jnp.float32(fan_in))
        w = jax.random.uniform(kw, (fan_in, fan_out), jnp.float32, -bound, bound)
        b = jax.random.uniform(kb, (1, fan_out), jnp.float32, -bound, bound)
        weights.append(w)
        biases.append(b)
    return weights, biases


def reference_forward_bf16(x, weights, biases):
    """Pure-JAX reference matching the kernel's bf16-operand / f32-accumulate math."""
    h = x.astype(jnp.bfloat16)
    for li in range(N_LAYERS):
        acc = jnp.dot(h, weights[li].astype(jnp.bfloat16),
                      preferred_element_type=jnp.float32)
        acc = acc + jnp.reshape(biases[li], (1, -1))
        if li < N_LAYERS - 1:
            h = _leaky_relu(acc).astype(jnp.bfloat16)
        else:
            return _stable_sigmoid_ref(acc)


def reference_forward_f32(x, weights, biases):
    h = x
    for li in range(N_LAYERS):
        h = h @ weights[li] + jnp.reshape(biases[li], (1, -1))
        h = _leaky_relu(h) if li < N_LAYERS - 1 else _stable_sigmoid_ref(h)
    return h


if __name__ == "__main__":
    input_size, output_size = 3, 1   # PCG3dFloat: 3-D point in -> scalar float out

    key = jax.random.PRNGKey(0)
    key, kx1, kx2 = jax.random.split(key, 3)
    weights, biases = init_params(key, input_size, output_size)

    # Case 1: small batch (single grid step).
    B1 = 16
    x1 = jax.random.normal(kx1, (B1, input_size), jnp.float32)
    out1 = jax.block_until_ready(pcg3d_float_forward(x1, weights, biases))
    assert out1.shape == (B1, output_size)

    # Case 2: non-aligned batch exercising padding + multi-step grid (both TCs on v7x).
    B2 = 40
    x2 = jax.random.normal(kx2, (B2, input_size), jnp.float32)
    out2 = jax.block_until_ready(pcg3d_float_forward(x2, weights, biases))
    assert out2.shape == (B2, output_size)

    for x, out in ((x1, out1), (x2, out2)):
        ref_bf16 = reference_forward_bf16(x, weights, biases)
        ref_f32 = reference_forward_f32(x, weights, biases)
        assert jnp.allclose(out, ref_bf16, atol=5e-3, rtol=5e-3), \
            "mismatch vs bf16-matched JAX reference"
        assert jnp.allclose(out, ref_f32, atol=5e-2, rtol=5e-2), \
            "mismatch vs f32 JAX reference (gross error)"

    print("KERNEL_OK")
</pallas_src>

<mosaic_0001>
module attributes {stable_mosaic.version = 11 : i64} {
  func.func @mlp_kernel(%arg0: i32, %arg1: memref<16x128xbf16, #tpu.memory_space<vmem>>, %arg2: memref<128x256xbf16, #tpu.memory_space<vmem>>, %arg3: memref<256x512xbf16, #tpu.memory_space<vmem>>, %arg4: memref<512x1024xbf16, #tpu.memory_space<vmem>>, %arg5: memref<1024x512xbf16, #tpu.memory_space<vmem>>, %arg6: memref<512x256xbf16, #tpu.memory_space<vmem>>, %arg7: memref<256x128xbf16, #tpu.memory_space<vmem>>, %arg8: memref<128x128xbf16, #tpu.memory_space<vmem>>, %arg9: memref<1x256xf32, #tpu.memory_space<vmem>>, %arg10: memref<1x512xf32, #tpu.memory_space<vmem>>, %arg11: memref<1x1024xf32, #tpu.memory_space<vmem>>, %arg12: memref<1x512xf32, #tpu.memory_space<vmem>>, %arg13: memref<1x256xf32, #tpu.memory_space<vmem>>, %arg14: memref<1x128xf32, #tpu.memory_space<vmem>>, %arg15: memref<1x128xf32, #tpu.memory_space<vmem>>, %arg16: memref<16x128xf32, #tpu.memory_space<vmem>>) attributes {dimension_semantics = [#tpu.dimension_semantics<parallel>], iteration_bounds = array<i64: 1>, scalar_prefetch = 0 : i64, scratch_operands = 0 : i64, tpu.core_type = #tpu.core_type<tc>, window_params = [{transform_indices = @transform_0, window_bounds = array<i64: 16, 128>}, {pipeline_mode = #tpu.pipeline_mode<synchronous>, transform_indices = @transform_1, window_bounds = array<i64: 128, 256>}, {pipeline_mode = #tpu.pipeline_mode<synchronous>, transform_indices = @transform_2, window_bounds = array<i64: 256, 512>}, {pipeline_mode = #tpu.pipeline_mode<synchronous>, transform_indices = @transform_3, window_bounds = array<i64: 512, 1024>}, {pipeline_mode = #tpu.pipeline_mode<synchronous>, transform_indices = @transform_4, window_bounds = array<i64: 1024, 512>}, {pipeline_mode = #tpu.pipeline_mode<synchronous>, transform_indices = @transform_5, window_bounds = array<i64: 512, 256>}, {pipeline_mode = #tpu.pipeline_mode<synchronous>, transform_indices = @transform_6, window_bounds = array<i64: 256, 128>}, {pipeline_mode = #tpu.pipeline_mode<synchronous>, transform_indices = @transform_7, window_bounds = array<i64: 128, 128>}, {pipeline_mode = #tpu.pipeline_mode<synchronous>, transform_indices = @transform_8, window_bounds = array<i64: 1, 256>}, {pipeline_mode = #tpu.pipeline_mode<synchronous>, transform_indices = @transform_9, window_bounds = array<i64: 1, 512>}, {pipeline_mode = #tpu.pipeline_mode<synchronous>, transform_indices = @transform_10, window_bounds = array<i64: 1, 1024>}, {pipeline_mode = #tpu.pipeline_mode<synchronous>, transform_indices = @transform_11, window_bounds = array<i64: 1, 512>}, {pipeline_mode = #tpu.pipeline_mode<synchronous>, transform_indices = @transform_12, window_bounds = array<i64: 1, 256>}, {pipeline_mode = #tpu.pipeline_mode<synchronous>, transform_indices = @transform_13, window_bounds = array<i64: 1, 128>}, {pipeline_mode = #tpu.pipeline_mode<synchronous>, transform_indices = @transform_14, window_bounds = array<i64: 1, 128>}, {transform_indices = @transform_15, window_bounds = array<i64: 16, 128>}]} {
    %c0 = arith.constant 0 : index
    %c0_0 = arith.constant 0 : index
    %0 = vector.load %arg1[%c0, %c0_0] : memref<16x128xbf16, #tpu.memory_space<vmem>>, vector<16x128xbf16>
    %c0_1 = arith.constant 0 : index
    %c0_2 = arith.constant 0 : index
    %1 = vector.load %arg2[%c0_1, %c0_2] : memref<128x256xbf16, #tpu.memory_space<vmem>>, vector<128x256xbf16>
    %cst = arith.constant dense<0.000000e+00> : vector<16x256xf32>
    %2 = tpu.matmul %0, %1, %cst {dimension_numbers = #tpu.dot_dimension_numbers<[1], [0], [0], [1], [0, 0, 1, 1], [], []>} : vector<16x128xbf16>, vector<128x256xbf16>, vector<16x256xf32> -> vector<16x256xf32>
    %c0_3 = arith.constant 0 : index
    %c0_4 = arith.constant 0 : index
    %3 = vector.load %arg9[%c0_3, %c0_4] : memref<1x256xf32, #tpu.memory_space<vmem>>, vector<1x256xf32>
    %4 = vector.broadcast %3 : vector<1x256xf32> to vector<16x256xf32>
    %5 = arith.addf %2, %4 : vector<16x256xf32>
    %cst_5 = arith.constant 0.00999999977 : f32
    %6 = vector.broadcast %cst_5 : f32 to vector<16x256xf32>
    %7 = arith.mulf %6, %5 : vector<16x256xf32>
    %8 = arith.maximumf %5, %7 : vector<16x256xf32>
    %9 = arith.truncf %8 : vector<16x256xf32> to vector<16x256xbf16>
    %c0_6 = arith.constant 0 : index
    %c0_7 = arith.constant 0 : index
    %10 = vector.load %arg3[%c0_6, %c0_7] : memref<256x512xbf16, #tpu.memory_space<vmem>>, vector<256x512xbf16>
    %cst_8 = arith.constant dense<0.000000e+00> : vector<16x512xf32>
    %11 = tpu.matmul %9, %10, %cst_8 {dimension_numbers = #tpu.dot_dimension_numbers<[1], [0], [0], [1], [0, 0, 1, 1], [], []>} : vector<16x256xbf16>, vector<256x512xbf16>, vector<16x512xf32> -> vector<16x512xf32>
    %c0_9 = arith.constant 0 : index
    %c0_10 = arith.constant 0 : index
    %12 = vector.load %arg10[%c0_9, %c0_10] : memref<1x512xf32, #tpu.memory_space<vmem>>, vector<1x512xf32>
    %13 = vector.broadcast %12 : vector<1x512xf32> to vector<16x512xf32>
    %14 = arith.addf %11, %13 : vector<16x512xf32>
    %cst_11 = arith.constant 0.00999999977 : f32
    %15 = vector.broadcast %cst_11 : f32 to vector<16x512xf32>
    %16 = arith.mulf %15, %14 : vector<16x512xf32>
    %17 = arith.maximumf %14, %16 : vector<16x512xf32>
    %18 = arith.truncf %17 : vector<16x512xf32> to vector<16x512xbf16>
    %c0_12 = arith.constant 0 : index
    %c0_13 = arith.constant 0 : index
    %19 = vector.load %arg4[%c0_12, %c0_13] : memref<512x1024xbf16, #tpu.memory_space<vmem>>, vector<512x1024xbf16>
    %cst_14 = arith.constant dense<0.000000e+00> : vector<16x1024xf32>
    %20 = tpu.matmul %18, %19, %cst_14 {dimension_numbers = #tpu.dot_dimension_numbers<[1], [0], [0], [1], [0, 0, 1, 1], [], []>} : vector<16x512xbf16>, vector<512x1024xbf16>, vector<16x1024xf32> -> vector<16x1024xf32>
    %c0_15 = arith.constant 0 : index
    %c0_16 = arith.constant 0 : index
    %21 = vector.load %arg11[%c0_15, %c0_16] : memref<1x1024xf32, #tpu.memory_space<vmem>>, vector<1x1024xf32>
    %22 = vector.broadcast %21 : vector<1x1024xf32> to vector<16x1024xf32>
    %23 = arith.addf %20, %22 : vector<16x1024xf32>
    %cst_17 = arith.constant 0.00999999977 : f32
    %24 = vector.broadcast %cst_17 : f32 to vector<16x1024xf32>
    %25 = arith.mulf %24, %23 : vector<16x1024xf32>
    %26 = arith.maximumf %23, %25 : vector<16x1024xf32>
    %27 = arith.truncf %26 : vector<16x1024xf32> to vector<16x1024xbf16>
    %c0_18 = arith.constant 0 : index
    %c0_19 = arith.constant 0 : index
    %28 = vector.load %arg5[%c0_18, %c0_19] : memref<1024x512xbf16, #tpu.memory_space<vmem>>, vector<1024x512xbf16>
    %cst_20 = arith.constant dense<0.000000e+00> : vector<16x512xf32>
    %29 = tpu.matmul %27, %28, %cst_20 {dimension_numbers = #tpu.dot_dimension_numbers<[1], [0], [0], [1], [0, 0, 1, 1], [], []>} : vector<16x1024xbf16>, vector<1024x512xbf16>, vector<16x512xf32> -> vector<16x512xf32>
    %c0_21 = arith.constant 0 : index
    %c0_22 = arith.constant 0 : index
    %30 = vector.load %arg12[%c0_21, %c0_22] : memref<1x512xf32, #tpu.memory_space<vmem>>, vector<1x512xf32>
    %31 = vector.broadcast %30 : vector<1x512xf32> to vector<16x512xf32>
    %32 = arith.addf %29, %31 : vector<16x512xf32>
    %cst_23 = arith.constant 0.00999999977 : f32
    %33 = vector.broadcast %cst_23 : f32 to vector<16x512xf32>
    %34 = arith.mulf %33, %32 : vector<16x512xf32>
    %35 = arith.maximumf %32, %34 : vector<16x512xf32>
    %36 = arith.truncf %35 : vector<16x512xf32> to vector<16x512xbf16>
    %c0_24 = arith.constant 0 : index
    %c0_25 = arith.constant 0 : index
    %37 = vector.load %arg6[%c0_24, %c0_25] : memref<512x256xbf16, #tpu.memory_space<vmem>>, vector<512x256xbf16>
    %cst_26 = arith.constant dense<0.000000e+00> : vector<16x256xf32>
    %38 = tpu.matmul %36, %37, %cst_26 {dimension_numbers = #tpu.dot_dimension_numbers<[1], [0], [0], [1], [0, 0, 1, 1], [], []>} : vector<16x512xbf16>, vector<512x256xbf16>, vector<16x256xf32> -> vector<16x256xf32>
    %c0_27 = arith.constant 0 : index
    %c0_28 = arith.constant 0 : index
    %39 = vector.load %arg13[%c0_27, %c0_28] : memref<1x256xf32, #tpu.memory_space<vmem>>, vector<1x256xf32>
    %40 = vector.broadcast %39 : vector<1x256xf32> to vector<16x256xf32>
    %41 = arith.addf %38, %40 : vector<16x256xf32>
    %cst_29 = arith.constant 0.00999999977 : f32
    %42 = vector.broadcast %cst_29 : f32 to vector<16x256xf32>
    %43 = arith.mulf %42, %41 : vector<16x256xf32>
    %44 = arith.maximumf %41, %43 : vector<16x256xf32>
    %45 = arith.truncf %44 : vector<16x256xf32> to vector<16x256xbf16>
    %c0_30 = arith.constant 0 : index
    %c0_31 = arith.constant 0 : index
    %46 = vector.load %arg7[%c0_30, %c0_31] : memref<256x128xbf16, #tpu.memory_space<vmem>>, vector<256x128xbf16>
    %cst_32 = arith.constant dense<0.000000e+00> : vector<16x128xf32>
    %47 = tpu.matmul %45, %46, %cst_32 {dimension_numbers = #tpu.dot_dimension_numbers<[1], [0], [0], [1], [0, 0, 1, 1], [], []>} : vector<16x256xbf16>, vector<256x128xbf16>, vector<16x128xf32> -> vector<16x128xf32>
    %c0_33 = arith.constant 0 : index
    %c0_34 = arith.constant 0 : index
    %48 = vector.load %arg14[%c0_33, %c0_34] : memref<1x128xf32, #tpu.memory_space<vmem>>, vector<1x128xf32>
    %49 = vector.broadcast %48 : vector<1x128xf32> to vector<16x128xf32>
    %50 = arith.addf %47, %49 : vector<16x128xf32>
    %cst_35 = arith.constant 0.00999999977 : f32
    %51 = vector.broadcast %cst_35 : f32 to vector<16x128xf32>
    %52 = arith.mulf %51, %50 : vector<16x128xf32>
    %53 = arith.maximumf %50, %52 : vector<16x128xf32>
    %54 = arith.truncf %53 : vector<16x128xf32> to vector<16x128xbf16>
    %c0_36 = arith.constant 0 : index
    %c0_37 = arith.constant 0 : index
    %55 = vector.load %arg8[%c0_36, %c0_37] : memref<128x128xbf16, #tpu.memory_space<vmem>>, vector<128x128xbf16>
    %cst_38 = arith.constant dense<0.000000e+00> : vector<16x128xf32>
    %56 = tpu.matmul %54, %55, %cst_38 {dimension_numbers = #tpu.dot_dimension_numbers<[1], [0], [0], [1], [0, 0, 1, 1], [], []>} : vector<16x128xbf16>, vector<128x128xbf16>, vector<16x128xf32> -> vector<16x128xf32>
    %c0_39 = arith.constant 0 : index
    %c0_40 = arith.constant 0 : index
    %57 = vector.load %arg15[%c0_39, %c0_40] : memref<1x128xf32, #tpu.memory_space<vmem>>, vector<1x128xf32>
    %58 = vector.broadcast %57 : vector<1x128xf32> to vector<16x128xf32>
    %59 = arith.addf %56, %58 : vector<16x128xf32>
    %60 = math.absf %59 : vector<16x128xf32>
    %cst_41 = arith.constant 0.000000e+00 : f32
    %61 = vector.broadcast %cst_41 : f32 to vector<16x128xf32>
    %62 = arith.subf %61, %60 : vector<16x128xf32>
    %63 = math.exp %62 : vector<16x128xf32>
    %cst_42 = arith.constant 1.000000e+00 : f32
    %64 = vector.broadcast %cst_42 : f32 to vector<16x128xf32>
    %65 = arith.addf %64, %63 : vector<16x128xf32>
    %66 = tpu.reciprocal %65 {approx = true} : vector<16x128xf32> -> vector<16x128xf32>
    %cst_43 = arith.constant 0.000000e+00 : f32
    %67 = vector.broadcast %cst_43 : f32 to vector<16x128xf32>
    %68 = arith.cmpf oge, %59, %67 : vector<16x128xf32>
    %69 = arith.mulf %63, %66 : vector<16x128xf32>
    %70 = arith.select %68, %66, %69 : vector<16x128xi1>, vector<16x128xf32>
    %c0_44 = arith.constant 0 : index
    %c0_45 = arith.constant 0 : index
    %71 = vector.load %arg16[%c0_44, %c0_45] : memref<16x128xf32, #tpu.memory_space<vmem>>, vector<16x128xf32>
    tpu.vector_store %arg16[%c0_44, %c0_45], %70 {strides = array<i32>} : memref<16x128xf32, #tpu.memory_space<vmem>>, vector<16x128xf32>,
    return
  }
  func.func @transform_0(%arg0: i32) -> (i32, i32) {
    %c0_i32 = arith.constant 0 : i32
    %c0_i32_0 = arith.constant 0 : i32
    return %arg0, %c0_i32 : i32, i32
  }
  func.func @transform_1(%arg0: i32) -> (i32, i32) {
    %c0_i32 = arith.constant 0 : i32
    %c0_i32_0 = arith.constant 0 : i32
    %c0_i32_1 = arith.constant 0 : i32
    return %c0_i32, %c0_i32_0 : i32, i32
  }
  func.func @transform_2(%arg0: i32) -> (i32, i32) {
    %c0_i32 = arith.constant 0 : i32
    %c0_i32_0 = arith.constant 0 : i32
    %c0_i32_1 = arith.constant 0 : i32
    return %c0_i32, %c0_i32_0 : i32, i32
  }
  func.func @transform_3(%arg0: i32) -> (i32, i32) {
    %c0_i32 = arith.constant 0 : i32
    %c0_i32_0 = arith.constant 0 : i32
    %c0_i32_1 = arith.constant 0 : i32
    return %c0_i32, %c0_i32_0 : i32, i32
  }
  func.func @transform_4(%arg0: i32) -> (i32, i32) {
    %c0_i32 = arith.constant 0 : i32
    %c0_i32_0 = arith.constant 0 : i32
    %c0_i32_1 = arith.constant 0 : i32
    return %c0_i32, %c0_i32_0 : i32, i32
  }
  func.func @transform_5(%arg0: i32) -> (i32, i32) {
    %c0_i32 = arith.constant 0 : i32
    %c0_i32_0 = arith.constant 0 : i32
    %c0_i32_1 = arith.constant 0 : i32
    return %c0_i32, %c0_i32_0 : i32, i32
  }
  func.func @transform_6(%arg0: i32) -> (i32, i32) {
    %c0_i32 = arith.constant 0 : i32
    %c0_i32_0 = arith.constant 0 : i32
    %c0_i32_1 = arith.constant 0 : i32
    return %c0_i32, %c0_i32_0 : i32, i32
  }
  func.func @transform_7(%arg0: i32) -> (i32, i32) {
    %c0_i32 = arith.constant 0 : i32
    %c0_i32_0 = arith.constant 0 : i32
    %c0_i32_1 = arith.constant 0 : i32
    return %c0_i32, %c0_i32_0 : i32, i32
  }
  func.func @transform_8(%arg0: i32) -> (i32, i32) {
    %c0_i32 = arith.constant 0 : i32
    %c0_i32_0 = arith.constant 0 : i32
    %c0_i32_1 = arith.constant 0 : i32
    return %c0_i32, %c0_i32_0 : i32, i32
  }
  func.func @transform_9(%arg0: i32) -> (i32, i32) {
    %c0_i32 = arith.constant 0 : i32
    %c0_i32_0 = arith.constant 0 : i32
    %c0_i32_1 = arith.constant 0 : i32
    return %c0_i32, %c0_i32_0 : i32, i32
  }
  func.func @transform_10(%arg0: i32) -> (i32, i32) {
    %c0_i32 = arith.constant 0 : i32
    %c0_i32_0 = arith.constant 0 : i32
    %c0_i32_1 = arith.constant 0 : i32
    return %c0_i32, %c0_i32_0 : i32, i32
  }
  func.func @transform_11(%arg0: i32) -> (i32, i32) {
    %c0_i32 = arith.constant 0 : i32
    %c0_i32_0 = arith.constant 0 : i32
    %c0_i32_1 = arith.constant 0 : i32
    return %c0_i32, %c0_i32_0 : i32, i32
  }
  func.func @transform_12(%arg0: i32) -> (i32, i32) {
    %c0_i32 = arith.constant 0 : i32
    %c0_i32_0 = arith.constant 0 : i32
    %c0_i32_1 = arith.constant 0 : i32
    return %c0_i32, %c0_i32_0 : i32, i32
  }
  func.func @transform_13(%arg0: i32) -> (i32, i32) {
    %c0_i32 = arith.constant 0 : i32
    %c0_i32_0 = arith.constant 0 : i32
    %c0_i32_1 = arith.constant 0 : i32
    return %c0_i32, %c0_i32_0 : i32, i32
  }
  func.func @transform_14(%arg0: i32) -> (i32, i32) {
    %c0_i32 = arith.constant 0 : i32
    %c0_i32_0 = arith.constant 0 : i32
    %c0_i32_1 = arith.constant 0 : i32
    return %c0_i32, %c0_i32_0 : i32, i32
  }
  func.func @transform_15(%arg0: i32) -> (i32, i32) {
    %c0_i32 = arith.constant 0 : i32
    %c0_i32_0 = arith.constant 0 : i32
    return %arg0, %c0_i32 : i32, i32
  }
}

module attributes {stable_mosaic.version = 11 : i64} {
  func.func @mlp_kernel(%arg0: i32, %arg1: memref<16x128xbf16, #tpu.memory_space<vmem>>, %arg2: memref<128x256xbf16, #tpu.memory_space<vmem>>, %arg3: memref<256x512xbf16, #tpu.memory_space<vmem>>, %arg4: memref<512x1024xbf16, #tpu.memory_space<vmem>>, %arg5: memref<1024x512xbf16, #tpu.memory_space<vmem>>, %arg6: memref<512x256xbf16, #tpu.memory_space<vmem>>, %arg7: memref<256x128xbf16, #tpu.memory_space<vmem>>, %arg8: memref<128x128xbf16, #tpu.memory_space<vmem>>, %arg9: memref<1x256xf32, #tpu.memory_space<vmem>>, %arg10: memref<1x512xf32, #tpu.memory_space<vmem>>, %arg11: memref<1x1024xf32, #tpu.memory_space<vmem>>, %arg12: memref<1x512xf32, #tpu.memory_space<vmem>>, %arg13: memref<1x256xf32, #tpu.memory_space<vmem>>, %arg14: memref<1x128xf32, #tpu.memory_space<vmem>>, %arg15: memref<1x128xf32, #tpu.memory_space<vmem>>, %arg16: memref<16x128xf32, #tpu.memory_space<vmem>>) attributes {dimension_semantics = [#tpu.dimension_semantics<parallel>], iteration_bounds = array<i64: 1>, scalar_prefetch = 0 : i64, scratch_operands = 0 : i64, tpu.core_type = #tpu.core_type<tc>, window_params = [{transform_indices = @transform_0, window_bounds = array<i64: 16, 128>}, {pipeline_mode = #tpu.pipeline_mode<synchronous>, transform_indices = @transform_1, window_bounds = array<i64: 128, 256>}, {pipeline_mode = #tpu.pipeline_mode<synchronous>, transform_indices = @transform_2, window_bounds = array<i64: 256, 512>}, {pipeline_mode = #tpu.pipeline_mode<synchronous>, transform_indices = @transform_3, window_bounds = array<i64: 512, 1024>}, {pipeline_mode = #tpu.pipeline_mode<synchronous>, transform_indices = @transform_4, window_bounds = array<i64: 1024, 512>}, {pipeline_mode = #tpu.pipeline_mode<synchronous>, transform_indices = @transform_5, window_bounds = array<i64: 512, 256>}, {pipeline_mode = #tpu.pipeline_mode<synchronous>, transform_indices = @transform_6, window_bounds = array<i64: 256, 128>}, {pipeline_mode = #tpu.pipeline_mode<synchronous>, transform_indices = @transform_7, window_bounds = array<i64: 128, 128>}, {pipeline_mode = #tpu.pipeline_mode<synchronous>, transform_indices = @transform_8, window_bounds = array<i64: 1, 256>}, {pipeline_mode = #tpu.pipeline_mode<synchronous>, transform_indices = @transform_9, window_bounds = array<i64: 1, 512>}, {pipeline_mode = #tpu.pipeline_mode<synchronous>, transform_indices = @transform_10, window_bounds = array<i64: 1, 1024>}, {pipeline_mode = #tpu.pipeline_mode<synchronous>, transform_indices = @transform_11, window_bounds = array<i64: 1, 512>}, {pipeline_mode = #tpu.pipeline_mode<synchronous>, transform_indices = @transform_12, window_bounds = array<i64: 1, 256>}, {pipeline_mode = #tpu.pipeline_mode<synchronous>, transform_indices = @transform_13, window_bounds = array<i64: 1, 128>}, {pipeline_mode = #tpu.pipeline_mode<synchronous>, transform_indices = @transform_14, window_bounds = array<i64: 1, 128>}, {transform_indices = @transform_15, window_bounds = array<i64: 16, 128>}]} {
    %c0 = arith.constant 0 : index
    %c0_0 = arith.constant 0 : index
    %0 = vector.load %arg1[%c0, %c0_0] : memref<16x128xbf16, #tpu.memory_space<vmem>>, vector<16x128xbf16>
    %c0_1 = arith.constant 0 : index
    %c0_2 = arith.constant 0 : index
    %1 = vector.load %arg2[%c0_1, %c0_2] : memref<128x256xbf16, #tpu.memory_space<vmem>>, vector<128x256xbf16>
    %cst = arith.constant dense<0.000000e+00> : vector<16x256xf32>
    %2 = tpu.matmul %0, %1, %cst {dimension_numbers = #tpu.dot_dimension_numbers<[1], [0], [0], [1], [0, 0, 1, 1], [], []>} : vector<16x128xbf16>, vector<128x256xbf16>, vector<16x256xf32> -> vector<16x256xf32>
    %c0_3 = arith.constant 0 : index
    %c0_4 = arith.constant 0 : index
    %3 = vector.load %arg9[%c0_3, %c0_4] : memref<1x256xf32, #tpu.memory_space<vmem>>, vector<1x256xf32>
    %4 = vector.broadcast %3 : vector<1x256xf32> to vector<16x256xf32>
    %5 = arith.addf %2, %4 : vector<16x256xf32>
    %cst_5 = arith.constant 0.00999999977 : f32
    %6 = vector.broadcast %cst_5 : f32 to vector<16x256xf32>
    %7 = arith.mulf %6, %5 : vector<16x256xf32>
    %8 = arith.maximumf %5, %7 : vector<16x256xf32>
    %9 = arith.truncf %8 : vector<16x256xf32> to vector<16x256xbf16>
    %c0_6 = arith.constant 0 : index
    %c0_7 = arith.constant 0 : index
    %10 = vector.load %arg3[%c0_6, %c0_7] : memref<256x512xbf16, #tpu.memory_space<vmem>>, vector<256x512xbf16>
    %cst_8 = arith.constant dense<0.000000e+00> : vector<16x512xf32>
    %11 = tpu.matmul %9, %10, %cst_8 {dimension_numbers = #tpu.dot_dimension_numbers<[1], [0], [0], [1], [0, 0, 1, 1], [], []>} : vector<16x256xbf16>, vector<256x512xbf16>, vector<16x512xf32> -> vector<16x512xf32>
    %c0_9 = arith.constant 0 : index
    %c0_10 = arith.constant 0 : index
    %12 = vector.load %arg10[%c0_9, %c0_10] : memref<1x512xf32, #tpu.memory_space<vmem>>, vector<1x512xf32>
    %13 = vector.broadcast %12 : vector<1x512xf32> to vector<16x512xf32>
    %14 = arith.addf %11, %13 : vector<16x512xf32>
    %cst_11 = arith.constant 0.00999999977 : f32
    %15 = vector.broadcast %cst_11 : f32 to vector<16x512xf32>
    %16 = arith.mulf %15, %14 : vector<16x512xf32>
    %17 = arith.maximumf %14, %16 : vector<16x512xf32>
    %18 = arith.truncf %17 : vector<16x512xf32> to vector<16x512xbf16>
    %c0_12 = arith.constant 0 : index
    %c0_13 = arith.constant 0 : index
    %19 = vector.load %arg4[%c0_12, %c0_13] : memref<512x1024xbf16, #tpu.memory_space<vmem>>, vector<512x1024xbf16>
    %cst_14 = arith.constant dense<0.000000e+00> : vector<16x1024xf32>
    %20 = tpu.matmul %18, %19, %cst_14 {dimension_numbers = #tpu.dot_dimension_numbers<[1], [0], [0], [1], [0, 0, 1, 1], [], []>} : vector<16x512xbf16>, vector<512x1024xbf16>, vector<16x1024xf32> -> vector<16x1024xf32>
    %c0_15 = arith.constant 0 : index
    %c0_16 = arith.constant 0 : index
    %21 = vector.load %arg11[%c0_15, %c0_16] : memref<1x1024xf32, #tpu.memory_space<vmem>>, vector<1x1024xf32>
    %22 = vector.broadcast %21 : vector<1x1024xf32> to vector<16x1024xf32>
    %23 = arith.addf %20, %22 : vector<16x1024xf32>
    %cst_17 = arith.constant 0.00999999977 : f32
    %24 = vector.broadcast %cst_17 : f32 to vector<16x1024xf32>
    %25 = arith.mulf %24, %23 : vector<16x1024xf32>
    %26 = arith.maximumf %23, %25 : vector<16x1024xf32>
    %27 = arith.truncf %26 : vector<16x1024xf32> to vector<16x1024xbf16>
    %c0_18 = arith.constant 0 : index
    %c0_19 = arith.constant 0 : index
    %28 = vector.load %arg5[%c0_18, %c0_19] : memref<1024x512xbf16, #tpu.memory_space<vmem>>, vector<1024x512xbf16>
    %cst_20 = arith.constant dense<0.000000e+00> : vector<16x512xf32>
    %29 = tpu.matmul %27, %28, %cst_20 {dimension_numbers = #tpu.dot_dimension_numbers<[1], [0], [0], [1], [0, 0, 1, 1], [], []>} : vector<16x1024xbf16>, vector<1024x512xbf16>, vector<16x512xf32> -> vector<16x512xf32>
    %c0_21 = arith.constant 0 : index
    %c0_22 = arith.constant 0 : index
    %30 = vector.load %arg12[%c0_21, %c0_22] : memref<1x512xf32, #tpu.memory_space<vmem>>, vector<1x512xf32>
    %31 = vector.broadcast %30 : vector<1x512xf32> to vector<16x512xf32>
    %32 = arith.addf %29, %31 : vector<16x512xf32>
    %cst_23 = arith.constant 0.00999999977 : f32
    %33 = vector.broadcast %cst_23 : f32 to vector<16x512xf32>
    %34 = arith.mulf %33, %32 : vector<16x512xf32>
    %35 = arith.maximumf %32, %34 : vector<16x512xf32>
    %36 = arith.truncf %35 : vector<16x512xf32> to vector<16x512xbf16>
    %c0_24 = arith.constant 0 : index
    %c0_25 = arith.constant 0 : index
    %37 = vector.load %arg6[%c0_24, %c0_25] : memref<512x256xbf16, #tpu.memory_space<vmem>>, vector<512x256xbf16>
    %cst_26 = arith.constant dense<0.000000e+00> : vector<16x256xf32>
    %38 = tpu.matmul %36, %37, %cst_26 {dimension_numbers = #tpu.dot_dimension_numbers<[1], [0], [0], [1], [0, 0, 1, 1], [], []>} : vector<16x512xbf16>, vector<512x256xbf16>, vector<16x256xf32> -> vector<16x256xf32>
    %c0_27 = arith.constant 0 : index
    %c0_28 = arith.constant 0 : index
    %39 = vector.load %arg13[%c0_27, %c0_28] : memref<1x256xf32, #tpu.memory_space<vmem>>, vector<1x256xf32>
    %40 = vector.broadcast %39 : vector<1x256xf32> to vector<16x256xf32>
    %41 = arith.addf %38, %40 : vector<16x256xf32>
    %cst_29 = arith.constant 0.00999999977 : f32
    %42 = vector.broadcast %cst_29 : f32 to vector<16x256xf32>
    %43 = arith.mulf %42, %41 : vector<16x256xf32>
    %44 = arith.maximumf %41, %43 : vector<16x256xf32>
    %45 = arith.truncf %44 : vector<16x256xf32> to vector<16x256xbf16>
    %c0_30 = arith.constant 0 : index
    %c0_31 = arith.constant 0 : index
    %46 = vector.load %arg7[%c0_30, %c0_31] : memref<256x128xbf16, #tpu.memory_space<vmem>>, vector<256x128xbf16>
    %cst_32 = arith.constant dense<0.000000e+00> : vector<16x128xf32>
    %47 = tpu.matmul %45, %46, %cst_32 {dimension_numbers = #tpu.dot_dimension_numbers<[1], [0], [0], [1], [0, 0, 1, 1], [], []>} : vector<16x256xbf16>, vector<256x128xbf16>, vector<16x128xf32> -> vector<16x128xf32>
    %c0_33 = arith.constant 0 : index
    %c0_34 = arith.constant 0 : index
    %48 = vector.load %arg14[%c0_33, %c0_34] : memref<1x128xf32, #tpu.memory_space<vmem>>, vector<1x128xf32>
    %49 = vector.broadcast %48 : vector<1x128xf32> to vector<16x128xf32>
    %50 = arith.addf %47, %49 : vector<16x128xf32>
    %cst_35 = arith.constant 0.00999999977 : f32
    %51 = vector.broadcast %cst_35 : f32 to vector<16x128xf32>
    %52 = arith.mulf %51, %50 : vector<16x128xf32>
    %53 = arith.maximumf %50, %52 : vector<16x128xf32>
    %54 = arith.truncf %53 : vector<16x128xf32> to vector<16x128xbf16>
    %c0_36 = arith.constant 0 : index
    %c0_37 = arith.constant 0 : index
    %55 = vector.load %arg8[%c0_36, %c0_37] : memref<128x128xbf16, #tpu.memory_space<vmem>>, vector<128x128xbf16>
    %cst_38 = arith.constant dense<0.000000e+00> : vector<16x128xf32>
    %56 = tpu.matmul %54, %55, %cst_38 {dimension_numbers = #tpu.dot_dimension_numbers<[1], [0], [0], [1], [0, 0, 1, 1], [], []>} : vector<16x128xbf16>, vector<128x128xbf16>, vector<16x128xf32> -> vector<16x128xf32>
    %c0_39 = arith.constant 0 : index
    %c0_40 = arith.constant 0 : index
    %57 = vector.load %arg15[%c0_39, %c0_40] : memref<1x128xf32, #tpu.memory_space<vmem>>, vector<1x128xf32>
    %58 = vector.broadcast %57 : vector<1x128xf32> to vector<16x128xf32>
    %59 = arith.addf %56, %58 : vector<16x128xf32>
    %60 = math.absf %59 : vector<16x128xf32>
    %cst_41 = arith.constant 0.000000e+00 : f32
    %61 = vector.broadcast %cst_41 : f32 to vector<16x128xf32>
    %62 = arith.subf %61, %60 : vector<16x128xf32>
    %63 = math.exp %62 : vector<16x128xf32>
    %cst_42 = arith.constant 1.000000e+00 : f32
    %64 = vector.broadcast %cst_42 : f32 to vector<16x128xf32>
    %65 = arith.addf %64, %63 : vector<16x128xf32>
    %66 = tpu.reciprocal %65 {approx = true} : vector<16x128xf32> -> vector<16x128xf32>
    %cst_43 = arith.constant 0.000000e+00 : f32
    %67 = vector.broadcast %cst_43 : f32 to vector<16x128xf32>
    %68 = arith.cmpf oge, %59, %67 : vector<16x128xf32>
    %69 = arith.mulf %63, %66 : vector<16x128xf32>
    %70 = arith.select %68, %66, %69 : vector<16x128xi1>, vector<16x128xf32>
    %c0_44 = arith.constant 0 : index
    %c0_45 = arith.constant 0 : index
    %71 = vector.load %arg16[%c0_44, %c0_45] : memref<16x128xf32, #tpu.memory_space<vmem>>, vector<16x128xf32>
    tpu.vector_store %arg16[%c0_44, %c0_45], %70 {strides = array<i32>} : memref<16x128xf32, #tpu.memory_space<vmem>>, vector<16x128xf32>,
    return
  }
  func.func @transform_0(%arg0: i32) -> (i32, i32) {
    %c0_i32 = arith.constant 0 : i32
    %c0_i32_0 = arith.constant 0 : i32
    return %arg0, %c0_i32 : i32, i32
  }
  func.func @transform_1(%arg0: i32) -> (i32, i32) {
    %c0_i32 = arith.constant 0 : i32
    %c0_i32_0 = arith.constant 0 : i32
    %c0_i32_1 = arith.constant 0 : i32
    return %c0_i32, %c0_i32_0 : i32, i32
  }
  func.func @transform_2(%arg0: i32) -> (i32, i32) {
    %c0_i32 = arith.constant 0 : i32
    %c0_i32_0 = arith.constant 0 : i32
    %c0_i32_1 = arith.constant 0 : i32
    return %c0_i32, %c0_i32_0 : i32, i32
  }
  func.func @transform_3(%arg0: i32) -> (i32, i32) {
    %c0_i32 = arith.constant 0 : i32
    %c0_i32_0 = arith.constant 0 : i32
    %c0_i32_1 = arith.constant 0 : i32
    return %c0_i32, %c0_i32_0 : i32, i32
  }
  func.func @transform_4(%arg0: i32) -> (i32, i32) {
    %c0_i32 = arith.constant 0 : i32
    %c0_i32_0 = arith.constant 0 : i32
    %c0_i32_1 = arith.constant 0 : i32
    return %c0_i32, %c0_i32_0 : i32, i32
  }
  func.func @transform_5(%arg0: i32) -> (i32, i32) {
    %c0_i32 = arith.constant 0 : i32
    %c0_i32_0 = arith.constant 0 : i32
    %c0_i32_1 = arith.constant 0 : i32
    return %c0_i32, %c0_i32_0 : i32, i32
  }
  func.func @transform_6(%arg0: i32) -> (i32, i32) {
    %c0_i32 = arith.constant 0 : i32
    %c0_i32_0 = arith.constant 0 : i32
    %c0_i32_1 = arith.constant 0 : i32
    return %c0_i32, %c0_i32_0 : i32, i32
  }
  func.func @transform_7(%arg0: i32) -> (i32, i32) {
    %c0_i32 = arith.constant 0 : i32
    %c0_i32_0 = arith.constant 0 : i32
    %c0_i32_1 = arith.constant 0 : i32
    return %c0_i32, %c0_i32_0 : i32, i32
  }
  func.func @transform_8(%arg0: i32) -> (i32, i32) {
    %c0_i32 = arith.constant 0 : i32
    %c0_i32_0 = arith.constant 0 : i32
    %c0_i32_1 = arith.constant 0 : i32
    return %c0_i32, %c0_i32_0 : i32, i32
  }
  func.func @transform_9(%arg0: i32) -> (i32, i32) {
    %c0_i32 = arith.constant 0 : i32
    %c0_i32_0 = arith.constant 0 : i32
    %c0_i32_1 = arith.constant 0 : i32
    return %c0_i32, %c0_i32_0 : i32, i32
  }
  func.func @transform_10(%arg0: i32) -> (i32, i32) {
    %c0_i32 = arith.constant 0 : i32
    %c0_i32_0 = arith.constant 0 : i32
    %c0_i32_1 = arith.constant 0 : i32
    return %c0_i32, %c0_i32_0 : i32, i32
  }
  func.func @transform_11(%arg0: i32) -> (i32, i32) {
    %c0_i32 = arith.constant 0 : i32
    %c0_i32_0 = arith.constant 0 : i32
    %c0_i32_1 = arith.constant 0 : i32
    return %c0_i32, %c0_i32_0 : i32, i32
  }
  func.func @transform_12(%arg0: i32) -> (i32, i32) {
    %c0_i32 = arith.constant 0 : i32
    %c0_i32_0 = arith.constant 0 : i32
    %c0_i32_1 = arith.constant 0 : i32
    return %c0_i32, %c0_i32_0 : i32, i32
  }
  func.func @transform_13(%arg0: i32) -> (i32, i32) {
    %c0_i32 = arith.constant 0 : i32
    %c0_i32_0 = arith.constant 0 : i32
    %c0_i32_1 = arith.constant 0 : i32
    return %c0_i32, %c0_i32_0 : i32, i32
  }
  func.func @transform_14(%arg0: i32) -> (i32, i32) {
    %c0_i32 = arith.constant 0 : i32
    %c0_i32_0 = arith.constant 0 : i32
    %c0_i32_1 = arith.constant 0 : i32
    return %c0_i32, %c0_i32_0 : i32, i32
  }
  func.func @transform_15(%arg0: i32) -> (i32, i32) {
    %c0_i32 = arith.constant 0 : i32
    %c0_i32_0 = arith.constant 0 : i32
    return %arg0, %c0_i32 : i32, i32
  }
}

</mosaic_0001>

<llo_original>
// kernel: tpu_custom_call.1
$region0: #{tpu_custom_call.1}
  #allocation0 [shape = 'u32[]', space=smem, size = 0x4, offset = 0x4, fixed_abs, tag = 'smem constant byte address 0x4 - core index']
  #allocation1 [shape = 'u32[72,128]{1,0:T(1,128)}', space=vmem, size = 0x9000, scoped, tag = 'internal scratch']
  %s0 = inlined_call_operand.hbm [shape: bf16[16,128], index: 0, kind: input, shape index: {}]
  %s1 = inlined_call_operand.hbm [shape: bf16[128,256], index: 1, kind: input, shape index: {}]
  %s2 = inlined_call_operand.hbm [shape: bf16[256,512], index: 2, kind: input, shape index: {}]
  %s3 = inlined_call_operand.hbm [shape: bf16[512,1024], index: 3, kind: input, shape index: {}]
  %s4 = inlined_call_operand.hbm [shape: bf16[1024,512], index: 4, kind: input, shape index: {}]
  %s5 = inlined_call_operand.hbm [shape: bf16[512,256], index: 5, kind: input, shape index: {}]
  %s6 = inlined_call_operand.hbm [shape: bf16[256,128], index: 6, kind: input, shape index: {}]
  %s7 = inlined_call_operand.hbm [shape: bf16[128,128], index: 7, kind: input, shape index: {}]
  %s8 = inlined_call_operand.hbm [shape: f32[1,256], index: 8, kind: input, shape index: {}]
  %s9 = inlined_call_operand.hbm [shape: f32[1,512], index: 9, kind: input, shape index: {}]
  %s10 = inlined_call_operand.vmem [shape: f32[1,1024], index: 10, kind: input, shape index: {}]
  %s11 = inlined_call_operand.hbm [shape: f32[1,512], index: 11, kind: input, shape index: {}]
  %s12 = inlined_call_operand.vmem [shape: f32[1,256], index: 12, kind: input, shape index: {}]
  %s13 = inlined_call_operand.vmem [shape: f32[1,128], index: 13, kind: input, shape index: {}]
  %s14 = inlined_call_operand.vmem [shape: f32[1,128], index: 14, kind: input, shape index: {}]
  %s15 = inlined_call_operand.hbm [shape: f32[16,128], index: 15, kind: output, shape index: {}]
  %s16 = sld [smem:[#allocation0]]
  $region114: #{tpu_custom_call.1} parent=0
    _
  %s18 = ssub.s32 1, %s16
  %s19 = scalar_select 0, %s18, %s16
  $region1: #{tpu_custom_call.1} parent=0
    #allocation2 [shape = 'u8[4096]{0}', space=vmem, size = 0x1000, scoped, tag = 'input window, operand 0, single buffered']
    #allocation3 [shape = 's32[1]{0}', space=sflag, size = 0x4, scoped, tag = 'scoped memory for tpu_custom_call.1']
    #allocation4 [shape = 's32[1]{0}', space=sflag, size = 0x4, scoped, tag = 'scoped memory for tpu_custom_call.1']
    #allocation5 [shape = 'u8[65536]{0}', space=vmem, size = 0x10000, scoped, tag = 'input window, operand 1, single buffered']
    #allocation6 [shape = 's32[1]{0}', space=sflag, size = 0x4, scoped, tag = 'scoped memory for tpu_custom_call.1']
    #allocation7 [shape = 'u8[262144]{0}', space=vmem, size = 0x40000, scoped, tag = 'input window, operand 2, single buffered']
    #allocation8 [shape = 'u8[1048576]{0}', space=vmem, size = 0x100000, scoped, tag = 'input window, operand 3, single buffered']
    #allocation9 [shape = 's32[1]{0}', space=sflag, size = 0x4, scoped, tag = 'scoped memory for tpu_custom_call.1']
    #allocation10 [shape = 'u8[1048576]{0}', space=vmem, size = 0x100000, scoped, tag = 'input window, operand 4, single buffered']
    #allocation11 [shape = 'u8[262144]{0}', space=vmem, size = 0x40000, scoped, tag = 'input window, operand 5, single buffered']
    #allocation12 [shape = 's32[1]{0}', space=sflag, size = 0x4, scoped, tag = 'scoped memory for tpu_custom_call.1']
    #allocation13 [shape = 'u8[65536]{0}', space=vmem, size = 0x10000, scoped, tag = 'input window, operand 6, single buffered']
    #allocation14 [shape = 'u8[32768]{0}', space=vmem, size = 0x8000, scoped, tag = 'input window, operand 7, single buffered']
    #allocation15 [shape = 's32[1]{0}', space=sflag, size = 0x4, scoped, tag = 'scoped memory for tpu_custom_call.1']
    #allocation16 [shape = 'u8[1024]{0}', space=vmem, size = 0x400, scoped, tag = 'input window, operand 8, single buffered']
    #allocation17 [shape = 'u8[2048]{0}', space=vmem, size = 0x800, scoped, tag = 'input window, operand 9, single buffered']
    #allocation18 [shape = 's32[1]{0}', space=sflag, size = 0x4, scoped, tag = 'scoped memory for tpu_custom_call.1']
    #allocation19 [shape = 'u8[2048]{0}', space=vmem, size = 0x800, scoped, tag = 'input window, operand 11, single buffered']
    #allocation20 [shape = 'u8[8192]{0}', space=vmem, size = 0x2000, scoped, tag = 'output window, operand 0, single buffered']
    %20 = vsyncpa [#allocation3], 0
    %21 = vsyncpa [#allocation6], 0
    %22 = vsyncpa [#allocation9], 0
    %23 = vsyncpa [#allocation12], 0
    %24 = vsyncpa [#allocation15], 0
    %25 = vsyncpa [#allocation18], 0
    %26 = vsyncpa [#allocation4], 0
    // Predicated region
    $region2: #{tpu_custom_call.1} parent=1 // pred_check
      _
    $region3: #{tpu_custom_call.1} parent=1 // pred_check_branch
      %28 = sbr.rel (0) target = $region5
    $region4: #{tpu_custom_call.1} parent=1 // pred_region
      %30 = vsyncadd [#allocation3], 0
      %s31 = sshll.u32 %s0, 4
      %s32 = int_to_ptr.hbm [resolvable:$true] %s31
      %s33 = sshll.u32 [#allocation2], 4
      %s34 = int_to_ptr.vmem [resolvable:$true] %s33
      %39 = dma.hbm_to_vmem [thread:$0]  %s32, 128, %s34, [#allocation3], 64, 64, 4
    $region5: #{tpu_custom_call.1} parent=1 // pred_fallthru
      _
    // Predicated region
    $region6: #{tpu_custom_call.1} parent=1 // pred_check
      _
    $region7: #{tpu_custom_call.1} parent=1 // pred_check_branch
      %41 = sbr.rel (0) target = $region9
    $region8: #{tpu_custom_call.1} parent=1 // pred_region
      %43 = vsyncadd [#allocation6], 0
      %s44 = sshll.u32 %s1, 4
      %s45 = int_to_ptr.hbm [resolvable:$true] %s44
      %s46 = sshll.u32 [#allocation5], 4
      %s47 = int_to_ptr.vmem [resolvable:$true] %s46
      %52 = dma.hbm_to_vmem [thread:$0]  %s45, 2048, %s47, [#allocation6], 128, 128, 8
    $region9: #{tpu_custom_call.1} parent=1 // pred_fallthru
      _
    // Predicated region
    $region10: #{tpu_custom_call.1} parent=1 // pred_check
      _
    $region11: #{tpu_custom_call.1} parent=1 // pred_check_branch
      %54 = sbr.rel (0) target = $region13
    $region12: #{tpu_custom_call.1} parent=1 // pred_region
      %56 = vsyncadd [#allocation6], 0
      %s57 = sshll.u32 %s2, 4
      %s58 = int_to_ptr.hbm [resolvable:$true] %s57
      %s59 = sshll.u32 [#allocation7], 4
      %s60 = int_to_ptr.vmem [resolvable:$true] %s59
      %65 = dma.hbm_to_vmem [thread:$0]  %s58, 8192, %s60, [#allocation6], 256, 256, 16
    $region13: #{tpu_custom_call.1} parent=1 // pred_fallthru
      _
    // Predicated region
    $region14: #{tpu_custom_call.1} parent=1 // pred_check
      _
    $region15: #{tpu_custom_call.1} parent=1 // pred_check_branch
      %67 = sbr.rel (0) target = $region17
    $region16: #{tpu_custom_call.1} parent=1 // pred_region
      %69 = vsyncadd [#allocation9], 0
      %s70 = sshll.u32 %s3, 4
      %s71 = int_to_ptr.hbm [resolvable:$true] %s70
      %s72 = sshll.u32 [#allocation8], 4
      %s73 = int_to_ptr.vmem [resolvable:$true] %s72
      %78 = dma.hbm_to_vmem [thread:$0]  %s71, 32768, %s73, [#allocation9], 512, 512, 32
    $region17: #{tpu_custom_call.1} parent=1 // pred_fallthru
      _
    // Predicated region
    $region18: #{tpu_custom_call.1} parent=1 // pred_check
      _
    $region19: #{tpu_custom_call.1} parent=1 // pred_check_branch
      %80 = sbr.rel (0) target = $region21
    $region20: #{tpu_custom_call.1} parent=1 // pred_region
      %82 = vsyncadd [#allocation9], 0
      %s83 = sshll.u32 %s4, 4
      %s84 = int_to_ptr.hbm [resolvable:$true] %s83
      %s85 = sshll.u32 [#allocation10], 4
      %s86 = int_to_ptr.vmem [resolvable:$true] %s85
      %91 = dma.hbm_to_vmem [thread:$0]  %s84, 32768, %s86, [#allocation9], 256, 256, 16
    $region21: #{tpu_custom_call.1} parent=1 // pred_fallthru
      _
    // Predicated region
    $region22: #{tpu_custom_call.1} parent=1 // pred_check
      _
    $region23: #{tpu_custom_call.1} parent=1 // pred_check_branch
      %93 = sbr.rel (0) target = $region25
    $region24: #{tpu_custom_call.1} parent=1 // pred_region
      %95 = vsyncadd [#allocation12], 0
      %s96 = sshll.u32 %s5, 4
      %s97 = int_to_ptr.hbm [resolvable:$true] %s96
      %s98 = sshll.u32 [#allocation11], 4
      %s99 = int_to_ptr.vmem [resolvable:$true] %s98
      %104 = dma.hbm_to_vmem [thread:$0]  %s97, 8192, %s99, [#allocation12], 128, 128, 8
    $region25: #{tpu_custom_call.1} parent=1 // pred_fallthru
      _
    // Predicated region
    $region26: #{tpu_custom_call.1} parent=1 // pred_check
      _
    $region27: #{tpu_custom_call.1} parent=1 // pred_check_branch
      %106 = sbr.rel (0) target = $region29
    $region28: #{tpu_custom_call.1} parent=1 // pred_region
      %108 = vsyncadd [#allocation12], 0
      %s109 = sshll.u32 %s6, 4
      %s110 = int_to_ptr.hbm [resolvable:$true] %s109
      %s111 = sshll.u32 [#allocation13], 4
      %s112 = int_to_ptr.vmem [resolvable:$true] %s111
      %117 = dma.hbm_to_vmem [thread:$0]  %s110, 2048, %s112, [#allocation12], 64, 64, 4
    $region29: #{tpu_custom_call.1} parent=1 // pred_fallthru
      _
    // Predicated region
    $region30: #{tpu_custom_call.1} parent=1 // pred_check
      _
    $region31: #{tpu_custom_call.1} parent=1 // pred_check_branch
      %119 = sbr.rel (0) target = $region33
    $region32: #{tpu_custom_call.1} parent=1 // pred_region
      %121 = vsyncadd [#allocation15], 0
      %s122 = sshll.u32 %s7, 4
      %s123 = int_to_ptr.hbm [resolvable:$true] %s122
      %s124 = sshll.u32 [#allocation14], 4
      %s125 = int_to_ptr.vmem [resolvable:$true] %s124
      %130 = dma.hbm_to_vmem [thread:$0]  %s123, 1024, %s125, [#allocation15], 64, 64, 4
    $region33: #{tpu_custom_call.1} parent=1 // pred_fallthru
      _
    // Predicated region
    $region34: #{tpu_custom_call.1} parent=1 // pred_check
      _
    $region35: #{tpu_custom_call.1} parent=1 // pred_check_branch
      %132 = sbr.rel (0) target = $region37
    $region36: #{tpu_custom_call.1} parent=1 // pred_region
      %134 = vsyncadd [#allocation15], 0
      %s136 = sshll.u32 %s8, 4
      %s137 = int_to_ptr.hbm [resolvable:$true] %s136
      %s138 = sshll.u32 [#allocation16], 4
      %s139 = int_to_ptr.vmem [resolvable:$true] %s138
      %141 = dma.hbm_to_vmem [thread:$0]  %s137, 32, %s139, [#allocation15]
    $region37: #{tpu_custom_call.1} parent=1 // pred_fallthru
      _
    // Predicated region
    $region38: #{tpu_custom_call.1} parent=1 // pred_check
      _
    $region39: #{tpu_custom_call.1} parent=1 // pred_check_branch
      %143 = sbr.rel (0) target = $region41
    $region40: #{tpu_custom_call.1} parent=1 // pred_region
      %145 = vsyncadd [#allocation18], 0
      %s147 = sshll.u32 %s9, 4
      %s148 = int_to_ptr.hbm [resolvable:$true] %s147
      %s149 = sshll.u32 [#allocation17], 4
      %s150 = int_to_ptr.vmem [resolvable:$true] %s149
      %152 = dma.hbm_to_vmem [thread:$0]  %s148, 64, %s150, [#allocation18]
    $region41: #{tpu_custom_call.1} parent=1 // pred_fallthru
      _
    // Predicated region
    $region42: #{tpu_custom_call.1} parent=1 // pred_check
      _
    $region43: #{tpu_custom_call.1} parent=1 // pred_check_branch
      %154 = sbr.rel (0) target = $region45
    $region44: #{tpu_custom_call.1} parent=1 // pred_region
      _
    $region45: #{tpu_custom_call.1} parent=1 // pred_fallthru
      _
    // Predicated region
    $region46: #{tpu_custom_call.1} parent=1 // pred_check
      _
    $region47: #{tpu_custom_call.1} parent=1 // pred_check_branch
      %156 = sbr.rel (0) target = $region49
    $region48: #{tpu_custom_call.1} parent=1 // pred_region
      %158 = vsyncadd [#allocation18], 0
      %s160 = sshll.u32 %s11, 4
      %s161 = int_to_ptr.hbm [resolvable:$true] %s160
      %s162 = sshll.u32 [#allocation19], 4
      %s163 = int_to_ptr.vmem [resolvable:$true] %s162
      %165 = dma.hbm_to_vmem [thread:$0]  %s161, 64, %s163, [#allocation18]
    $region49: #{tpu_custom_call.1} parent=1 // pred_fallthru
      _
    // Predicated region
    $region50: #{tpu_custom_call.1} parent=1 // pred_check
      _
    $region51: #{tpu_custom_call.1} parent=1 // pred_check_branch
      %167 = sbr.rel (0) target = $region53
    $region52: #{tpu_custom_call.1} parent=1 // pred_region
      _
    $region53: #{tpu_custom_call.1} parent=1 // pred_fallthru
      _
    // Predicated region
    $region54: #{tpu_custom_call.1} parent=1 // pred_check
      _
    $region55: #{tpu_custom_call.1} parent=1 // pred_check_branch
      %169 = sbr.rel (0) target = $region57
    $region56: #{tpu_custom_call.1} parent=1 // pred_region
      _
    $region57: #{tpu_custom_call.1} parent=1 // pred_fallthru
      _
    // Predicated region
    $region58: #{tpu_custom_call.1} parent=1 // pred_check
      _
    $region59: #{tpu_custom_call.1} parent=1 // pred_check_branch
      %171 = sbr.rel (0) target = $region61
    $region60: #{tpu_custom_call.1} parent=1 // pred_region
      _
    $region61: #{tpu_custom_call.1} parent=1 // pred_fallthru
      _
    // Predicated region
    $region62: #{tpu_custom_call.1} parent=1 // pred_check
      _
    $region63: #{tpu_custom_call.1} parent=1 // pred_check_branch
      %173 = sbr.rel (0) target = $region65
    $region64: #{tpu_custom_call.1} parent=1 // pred_region
      %175 = dma.done [#allocation3], 128
    $region65: #{tpu_custom_call.1} parent=1 // pred_fallthru
      _
    // Predicated region
    $region66: #{tpu_custom_call.1} parent=1 // pred_check
      _
    $region67: #{tpu_custom_call.1} parent=1 // pred_check_branch
      %177 = sbr.rel (0) target = $region69
    $region68: #{tpu_custom_call.1} parent=1 // pred_region
      %179 = dma.done [#allocation6], 2048
    $region69: #{tpu_custom_call.1} parent=1 // pred_fallthru
      _
    // Predicated region
    $region70: #{tpu_custom_call.1} parent=1 // pred_check
      _
    $region71: #{tpu_custom_call.1} parent=1 // pred_check_branch
      %181 = sbr.rel (0) target = $region73
    $region72: #{tpu_custom_call.1} parent=1 // pred_region
      %183 = dma.done [#allocation6], 8192
    $region73: #{tpu_custom_call.1} parent=1 // pred_fallthru
      _
    // Predicated region
    $region74: #{tpu_custom_call.1} parent=1 // pred_check
      _
    $region75: #{tpu_custom_call.1} parent=1 // pred_check_branch
      %185 = sbr.rel (0) target = $region77
    $region76: #{tpu_custom_call.1} parent=1 // pred_region
      %187 = dma.done [#allocation9], 32768
    $region77: #{tpu_custom_call.1} parent=1 // pred_fallthru
      _
    // Predicated region
    $region78: #{tpu_custom_call.1} parent=1 // pred_check
      _
    $region79: #{tpu_custom_call.1} parent=1 // pred_check_branch
      %189 = sbr.rel (0) target = $region81
    $region80: #{tpu_custom_call.1} parent=1 // pred_region
      %191 = dma.done [#allocation9], 32768
    $region81: #{tpu_custom_call.1} parent=1 // pred_fallthru
      _
    // Predicated region
    $region82: #{tpu_custom_call.1} parent=1 // pred_check
      _
    $region83: #{tpu_custom_call.1} parent=1 // pred_check_branch
      %193 = sbr.rel (0) target = $region85
    $region84: #{tpu_custom_call.1} parent=1 // pred_region
      %195 = dma.done [#allocation12], 8192
    $region85: #{tpu_custom_call.1} parent=1 // pred_fallthru
      _
    // Predicated region
    $region86: #{tpu_custom_call.1} parent=1 // pred_check
      _
    $region87: #{tpu_custom_call.1} parent=1 // pred_check_branch
      %197 = sbr.rel (0) target = $region89
    $region88: #{tpu_custom_call.1} parent=1 // pred_region
      %199 = dma.done [#allocation12], 2048
    $region89: #{tpu_custom_call.1} parent=1 // pred_fallthru
      _
    // Predicated region
    $region90: #{tpu_custom_call.1} parent=1 // pred_check
      _
    $region91: #{tpu_custom_call.1} parent=1 // pred_check_branch
      %201 = sbr.rel (0) target = $region93
    $region92: #{tpu_custom_call.1} parent=1 // pred_region
      %203 = dma.done [#allocation15], 1024
    $region93: #{tpu_custom_call.1} parent=1 // pred_fallthru
      _
    // Predicated region
    $region94: #{tpu_custom_call.1} parent=1 // pred_check
      _
    $region95: #{tpu_custom_call.1} parent=1 // pred_check_branch
      %205 = sbr.rel (0) target = $region97
    $region96: #{tpu_custom_call.1} parent=1 // pred_region
      %207 = dma.done [#allocation15], 32
    $region97: #{tpu_custom_call.1} parent=1 // pred_fallthru
      _
    // Predicated region
    $region98: #{tpu_custom_call.1} parent=1 // pred_check
      _
    $region99: #{tpu_custom_call.1} parent=1 // pred_check_branch
      %209 = sbr.rel (0) target = $region101
    $region100: #{tpu_custom_call.1} parent=1 // pred_region
      %211 = dma.done [#allocation18], 64
    $region101: #{tpu_custom_call.1} parent=1 // pred_fallthru
      _
    // Predicated region
    $region102: #{tpu_custom_call.1} parent=1 // pred_check
      _
    $region103: #{tpu_custom_call.1} parent=1 // pred_check_branch
      %213 = sbr.rel (0) target = $region105
    $region104: #{tpu_custom_call.1} parent=1 // pred_region
      %215 = dma.done [#allocation18], 64
    $region105: #{tpu_custom_call.1} parent=1 // pred_fallthru
      _
    %v216 = vld [vmem:[#allocation2] sm:$0xf]
    %v217 = vld [vmem:[#allocation2 + $0x4] sm:$0xf]
    %v218 = vld [vmem:[#allocation5] sm:$0xff]
    %v219 = vld [vmem:[#allocation5 + $0x8] sm:$0xff]
    %v220 = vld [vmem:[#allocation5 + $0x10] sm:$0xff]
    %v221 = vld [vmem:[#allocation5 + $0x18] sm:$0xff]
    %v222 = vld [vmem:[#allocation5 + $0x20] sm:$0xff]
    %v223 = vld [vmem:[#allocation5 + $0x28] sm:$0xff]
    %v224 = vld [vmem:[#allocation5 + $0x30] sm:$0xff]
    %v225 = vld [vmem:[#allocation5 + $0x38] sm:$0xff]
    %v226 = vld [vmem:[#allocation5 + $0x40] sm:$0xff]
    %v227 = vld [vmem:[#allocation5 + $0x48] sm:$0xff]
    %v228 = vld [vmem:[#allocation5 + $0x50] sm:$0xff]
    %v229 = vld [vmem:[#allocation5 + $0x58] sm:$0xff]
    %v230 = vld [vmem:[#allocation5 + $0x60] sm:$0xff]
    %v231 = vld [vmem:[#allocation5 + $0x68] sm:$0xff]
    %v232 = vld [vmem:[#allocation5 + $0x70] sm:$0xff]
    %v233 = vld [vmem:[#allocation5 + $0x78] sm:$0xff]
    %v234 = vld [vmem:[#allocation16] sm:$0x3]
    %v236 = vperm.slane %v234, 0
    %v237 = vperm.slane %v234, 1
    %v242 = vunpack.c.l.b16 %v216
    %v243 = vunpack.c.l.b16 %v217
    %v244 = vpack.c.b16 %v243, %v242
    %v262 = vunpack.c.l.b16 %v218
    %v263 = vunpack.c.h.b16 %v218
    %v264 = vunpack.c.l.b16 %v219
    %v265 = vunpack.c.h.b16 %v219
    %v266 = vunpack.c.l.b16 %v220
    %v267 = vunpack.c.h.b16 %v220
    %v268 = vunpack.c.l.b16 %v221
    %v269 = vunpack.c.h.b16 %v221
    %v270 = vunpack.c.l.b16 %v222
    %v271 = vunpack.c.h.b16 %v222
    %v272 = vunpack.c.l.b16 %v223
    %v273 = vunpack.c.h.b16 %v223
    %v274 = vunpack.c.l.b16 %v224
    %v275 = vunpack.c.h.b16 %v224
    %v276 = vunpack.c.l.b16 %v225
    %v277 = vunpack.c.h.b16 %v225
    %v278 = vunpack.c.l.b16 %v226
    %v279 = vunpack.c.h.b16 %v226
    %v280 = vunpack.c.l.b16 %v227
    %v281 = vunpack.c.h.b16 %v227
    %v282 = vunpack.c.l.b16 %v228
    %v283 = vunpack.c.h.b16 %v228
    %v284 = vunpack.c.l.b16 %v229
    %v285 = vunpack.c.h.b16 %v229
    %v286 = vunpack.c.l.b16 %v230
    %v287 = vunpack.c.h.b16 %v230
    %v288 = vunpack.c.l.b16 %v231
    %v289 = vunpack.c.h.b16 %v231
    %v290 = vunpack.c.l.b16 %v232
    %v291 = vunpack.c.h.b16 %v232
    %v292 = vunpack.c.l.b16 %v233
    %v293 = vunpack.c.h.b16 %v233
    %v294 = vpack.c.b16 %v264, %v262
    %v295 = vpack.c.b16 %v265, %v263
    %v296 = vpack.c.b16 %v268, %v266
    %v297 = vpack.c.b16 %v269, %v267
    %v298 = vpack.c.b16 %v272, %v270
    %v299 = vpack.c.b16 %v273, %v271
    %v300 = vpack.c.b16 %v276, %v274
    %v301 = vpack.c.b16 %v277, %v275
    %v302 = vpack.c.b16 %v280, %v278
    %v303 = vpack.c.b16 %v281, %v279
    %v304 = vpack.c.b16 %v284, %v282
    %v305 = vpack.c.b16 %v285, %v283
    %v306 = vpack.c.b16 %v288, %v286
    %v307 = vpack.c.b16 %v289, %v287
    %v308 = vpack.c.b16 %v292, %v290
    %v309 = vpack.c.b16 %v293, %v291
    %326 = vmatpush.bf16.msra.mxu0 %v308
    %327 = vmatpush.bf16.msra.mxu0 %v306
    %328 = vmatpush.bf16.msra.mxu0 %v304
    %329 = vmatpush.bf16.msra.mxu0 %v302
    %330 = vmatpush.bf16.msra.mxu0 %v300
    %331 = vmatpush.bf16.msra.mxu0 %v298
    %332 = vmatpush.bf16.msra.mxu0 %v296
    %333 = vmatpush.bf16.msra.mxu0 %v294
    %334 = vmatmul.bf16.gmra.mxu0 %v244
    %v335 = vpop.f32.mrf.mxu0
    %v336 = vadd.f32 %v236, %v335
    %v337 = vpop.f32.mrf.mxu0
    %v338 = vadd.f32 %v236, %v337
    %339 = vdwg.mxu0
    %340 = vmatpush.bf16.msra.mxu0 %v309
    %341 = vmatpush.bf16.msra.mxu0 %v307
    %342 = vmatpush.bf16.msra.mxu0 %v305
    %343 = vmatpush.bf16.msra.mxu0 %v303
    %344 = vmatpush.bf16.msra.mxu0 %v301
    %345 = vmatpush.bf16.msra.mxu0 %v299
    %346 = vmatpush.bf16.msra.mxu0 %v297
    %347 = vmatpush.bf16.msra.mxu0 %v295
    %348 = vmatmul.bf16.gmra.mxu0 %v244
    %v349 = vpop.f32.mrf.mxu0
    %v350 = vadd.f32 %v237, %v349
    %v351 = vpop.f32.mrf.mxu0
    %v352 = vadd.f32 %v237, %v351
    %353 = vdwg.mxu0
    %v354 = vmul.f32 %v336, 0.01
    %v355 = vmul.f32 %v350, 0.01
    %v356 = vmul.f32 %v338, 0.01
    %v357 = vmul.f32 %v352, 0.01
    %v358 = vmax.f32 %v336, %v354
    %v359 = vmax.f32 %v350, %v355
    %v360 = vmax.f32 %v338, %v356
    %v361 = vmax.f32 %v352, %v357
    %v362 = vpack.c.bf16 %v360, %v358
    %v363 = vpack.c.bf16 %v361, %v359
    %v364 = vld [vmem:[#allocation7] sm:$0xff]
    %v365 = vld [vmem:[#allocation7 + $0x8] sm:$0xff]
    %v366 = vld [vmem:[#allocation7 + $0x10] sm:$0xff]
    %v367 = vld [vmem:[#allocation7 + $0x18] sm:$0xff]
    %v368 = vld [vmem:[#allocation7 + $0x20] sm:$0xff]
    %v369 = vld [vmem:[#allocation7 + $0x28] sm:$0xff]
    %v370 = vld [vmem:[#allocation7 + $0x30] sm:$0xff]
    %v371 = vld [vmem:[#allocation7 + $0x38] sm:$0xff]
    %v372 = vld [vmem:[#allocation7 + $0x40] sm:$0xff]
    %v373 = vld [vmem:[#allocation7 + $0x48] sm:$0xff]
    %v374 = vld [vmem:[#allocation7 + $0x50] sm:$0xff]
    %v375 = vld [vmem:[#allocation7 + $0x58] sm:$0xff]
    %v376 = vld [vmem:[#allocation7 + $0x60] sm:$0xff]
    %v377 = vld [vmem:[#allocation7 + $0x68] sm:$0xff]
    %v378 = vld [vmem:[#allocation7 + $0x70] sm:$0xff]
    %v379 = vld [vmem:[#allocation7 + $0x78] sm:$0xff]
    %v380 = vld [vmem:[#allocation7 + $0x80] sm:$0xff]
    %v381 = vld [vmem:[#allocation7 + $0x88] sm:$0xff]
    %v382 = vld [vmem:[#allocation7 + $0x90] sm:$0xff]
    %v383 = vld [vmem:[#allocation7 + $0x98] sm:$0xff]
    %v384 = vld [vmem:[#allocation7 + $0xa0] sm:$0xff]
    %v385 = vld [vmem:[#allocation7 + $0xa8] sm:$0xff]
    %v386 = vld [vmem:[#allocation7 + $0xb0] sm:$0xff]
    %v387 = vld [vmem:[#allocation7 + $0xb8] sm:$0xff]
    %v388 = vld [vmem:[#allocation7 + $0xc0] sm:$0xff]
    %v389 = vld [vmem:[#allocation7 + $0xc8] sm:$0xff]
    %v390 = vld [vmem:[#allocation7 + $0xd0] sm:$0xff]
    %v391 = vld [vmem:[#allocation7 + $0xd8] sm:$0xff]
    %v392 = vld [vmem:[#allocation7 + $0xe0] sm:$0xff]
    %v393 = vld [vmem:[#allocation7 + $0xe8] sm:$0xff]
    %v394 = vld [vmem:[#allocation7 + $0xf0] sm:$0xff]
    %v395 = vld [vmem:[#allocation7 + $0xf8] sm:$0xff]
    %v396 = vld [vmem:[#allocation7 + $0x100] sm:$0xff]
    %v397 = vld [vmem:[#allocation7 + $0x108] sm:$0xff]
    %v398 = vld [vmem:[#allocation7 + $0x110] sm:$0xff]
    %v399 = vld [vmem:[#allocation7 + $0x118] sm:$0xff]
    %v400 = vld [vmem:[#allocation7 + $0x120] sm:$0xff]
    %v401 = vld [vmem:[#allocation7 + $0x128] sm:$0xff]
    %v402 = vld [vmem:[#allocation7 + $0x130] sm:$0xff]
    %v403 = vld [vmem:[#allocation7 + $0x138] sm:$0xff]
    %v404 = vld [vmem:[#allocation7 + $0x140] sm:$0xff]
    %v405 = vld [vmem:[#allocation7 + $0x148] sm:$0xff]
    %v406 = vld [vmem:[#allocation7 + $0x150] sm:$0xff]
    %v407 = vld [vmem:[#allocation7 + $0x158] sm:$0xff]
    %v408 = vld [vmem:[#allocation7 + $0x160] sm:$0xff]
    %v409 = vld [vmem:[#allocation7 + $0x168] sm:$0xff]
    %v410 = vld [vmem:[#allocation7 + $0x170] sm:$0xff]
    %v411 = vld [vmem:[#allocation7 + $0x178] sm:$0xff]
    %v412 = vld [vmem:[#allocation7 + $0x180] sm:$0xff]
    %v413 = vld [vmem:[#allocation7 + $0x188] sm:$0xff]
    %v414 = vld [vmem:[#allocation7 + $0x190] sm:$0xff]
    %v415 = vld [vmem:[#allocation7 + $0x198] sm:$0xff]
    %v416 = vld [vmem:[#allocation7 + $0x1a0] sm:$0xff]
    %v417 = vld [vmem:[#allocation7 + $0x1a8] sm:$0xff]
    %v418 = vld [vmem:[#allocation7 + $0x1b0] sm:$0xff]
    %v419 = vld [vmem:[#allocation7 + $0x1b8] sm:$0xff]
    %v420 = vld [vmem:[#allocation7 + $0x1c0] sm:$0xff]
    %v421 = vld [vmem:[#allocation7 + $0x1c8] sm:$0xff]
    %v422 = vld [vmem:[#allocation7 + $0x1d0] sm:$0xff]
    %v423 = vld [vmem:[#allocation7 + $0x1d8] sm:$0xff]
    %v424 = vld [vmem:[#allocation7 + $0x1e0] sm:$0xff]
    %v425 = vld [vmem:[#allocation7 + $0x1e8] sm:$0xff]
    %v426 = vld [vmem:[#allocation7 + $0x1f0] sm:$0xff]
    %v427 = vld [vmem:[#allocation7 + $0x1f8] sm:$0xff]
    %v428 = vld [vmem:[#allocation17] sm:$0xf]
    %v430 = vperm.slane %v428, 0
    %v431 = vperm.slane %v428, 1
    %v432 = vperm.slane %v428, 2
    %v433 = vperm.slane %v428, 3
    %v502 = vunpack.c.l.b16 %v364
    %v503 = vunpack.c.h.b16 %v364
    %v504 = vunpack.c.l.b16 %v365
    %v505 = vunpack.c.h.b16 %v365
    %v506 = vunpack.c.l.b16 %v366
    %v507 = vunpack.c.h.b16 %v366
    %v508 = vunpack.c.l.b16 %v367
    %v509 = vunpack.c.h.b16 %v367
    %v510 = vunpack.c.l.b16 %v368
    %v511 = vunpack.c.h.b16 %v368
    %v512 = vunpack.c.l.b16 %v369
    %v513 = vunpack.c.h.b16 %v369
    %v514 = vunpack.c.l.b16 %v370
    %v515 = vunpack.c.h.b16 %v370
    %v516 = vunpack.c.l.b16 %v371
    %v517 = vunpack.c.h.b16 %v371
    %v518 = vunpack.c.l.b16 %v372
    %v519 = vunpack.c.h.b16 %v372
    %v520 = vunpack.c.l.b16 %v373
    %v521 = vunpack.c.h.b16 %v373
    %v522 = vunpack.c.l.b16 %v374
    %v523 = vunpack.c.h.b16 %v374
    %v524 = vunpack.c.l.b16 %v375
    %v525 = vunpack.c.h.b16 %v375
    %v526 = vunpack.c.l.b16 %v376
    %v527 = vunpack.c.h.b16 %v376
    %v528 = vunpack.c.l.b16 %v377
    %v529 = vunpack.c.h.b16 %v377
    %v530 = vunpack.c.l.b16 %v378
    %v531 = vunpack.c.h.b16 %v378
    %v532 = vunpack.c.l.b16 %v379
    %v533 = vunpack.c.h.b16 %v379
    %v534 = vunpack.c.l.b16 %v380
    %v535 = vunpack.c.h.b16 %v380
    %v536 = vunpack.c.l.b16 %v381
    %v537 = vunpack.c.h.b16 %v381
    %v538 = vunpack.c.l.b16 %v382
    %v539 = vunpack.c.h.b16 %v382
    %v540 = vunpack.c.l.b16 %v383
    %v541 = vunpack.c.h.b16 %v383
    %v542 = vunpack.c.l.b16 %v384
    %v543 = vunpack.c.h.b16 %v384
    %v544 = vunpack.c.l.b16 %v385
    %v545 = vunpack.c.h.b16 %v385
    %v546 = vunpack.c.l.b16 %v386
    %v547 = vunpack.c.h.b16 %v386
    %v548 = vunpack.c.l.b16 %v387
    %v549 = vunpack.c.h.b16 %v387
    %v550 = vunpack.c.l.b16 %v388
    %v551 = vunpack.c.h.b16 %v388
    %v552 = vunpack.c.l.b16 %v389
    %v553 = vunpack.c.h.b16 %v389
    %v554 = vunpack.c.l.b16 %v390
    %v555 = vunpack.c.h.b16 %v390
    %v556 = vunpack.c.l.b16 %v391
    %v557 = vunpack.c.h.b16 %v391
    %v558 = vunpack.c.l.b16 %v392
    %v559 = vunpack.c.h.b16 %v392
    %v560 = vunpack.c.l.b16 %v393
    %v561 = vunpack.c.h.b16 %v393
    %v562 = vunpack.c.l.b16 %v394
    %v563 = vunpack.c.h.b16 %v394
    %v564 = vunpack.c.l.b16 %v395
    %v565 = vunpack.c.h.b16 %v395
    %v566 = vunpack.c.l.b16 %v396
    %v567 = vunpack.c.h.b16 %v396
    %v568 = vunpack.c.l.b16 %v397
    %v569 = vunpack.c.h.b16 %v397
    %v570 = vunpack.c.l.b16 %v398
    %v571 = vunpack.c.h.b16 %v398
    %v572 = vunpack.c.l.b16 %v399
    %v573 = vunpack.c.h.b16 %v399
    %v574 = vunpack.c.l.b16 %v400
    %v575 = vunpack.c.h.b16 %v400
    %v576 = vunpack.c.l.b16 %v401
    %v577 = vunpack.c.h.b16 %v401
    %v578 = vunpack.c.l.b16 %v402
    %v579 = vunpack.c.h.b16 %v402
    %v580 = vunpack.c.l.b16 %v403
    %v581 = vunpack.c.h.b16 %v403
    %v582 = vunpack.c.l.b16 %v404
    %v583 = vunpack.c.h.b16 %v404
    %v584 = vunpack.c.l.b16 %v405
    %v585 = vunpack.c.h.b16 %v405
    %v586 = vunpack.c.l.b16 %v406
    %v587 = vunpack.c.h.b16 %v406
    %v588 = vunpack.c.l.b16 %v407
    %v589 = vunpack.c.h.b16 %v407
    %v590 = vunpack.c.l.b16 %v408
    %v591 = vunpack.c.h.b16 %v408
    %v592 = vunpack.c.l.b16 %v409
    %v593 = vunpack.c.h.b16 %v409
    %v594 = vunpack.c.l.b16 %v410
    %v595 = vunpack.c.h.b16 %v410
    %v596 = vunpack.c.l.b16 %v411
    %v597 = vunpack.c.h.b16 %v411
    %v598 = vunpack.c.l.b16 %v412
    %v599 = vunpack.c.h.b16 %v412
    %v600 = vunpack.c.l.b16 %v413
    %v601 = vunpack.c.h.b16 %v413
    %v602 = vunpack.c.l.b16 %v414
    %v603 = vunpack.c.h.b16 %v414
    %v604 = vunpack.c.l.b16 %v415
    %v605 = vunpack.c.h.b16 %v415
    %v606 = vunpack.c.l.b16 %v416
    %v607 = vunpack.c.h.b16 %v416
    %v608 = vunpack.c.l.b16 %v417
    %v609 = vunpack.c.h.b16 %v417
    %v610 = vunpack.c.l.b16 %v418
    %v611 = vunpack.c.h.b16 %v418
    %v612 = vunpack.c.l.b16 %v419
    %v613 = vunpack.c.h.b16 %v419
    %v614 = vunpack.c.l.b16 %v420
    %v615 = vunpack.c.h.b16 %v420
    %v616 = vunpack.c.l.b16 %v421
    %v617 = vunpack.c.h.b16 %v421
    %v618 = vunpack.c.l.b16 %v422
    %v619 = vunpack.c.h.b16 %v422
    %v620 = vunpack.c.l.b16 %v423
    %v621 = vunpack.c.h.b16 %v423
    %v622 = vunpack.c.l.b16 %v424
    %v623 = vunpack.c.h.b16 %v424
    %v624 = vunpack.c.l.b16 %v425
    %v625 = vunpack.c.h.b16 %v425
    %v626 = vunpack.c.l.b16 %v426
    %v627 = vunpack.c.h.b16 %v426
    %v628 = vunpack.c.l.b16 %v427
    %v629 = vunpack.c.h.b16 %v427
    %v630 = vpack.c.b16 %v506, %v502
    %v631 = vpack.c.b16 %v507, %v503
    %v632 = vpack.c.b16 %v508, %v504
    %v633 = vpack.c.b16 %v509, %v505
    %v634 = vpack.c.b16 %v514, %v510
    %v635 = vpack.c.b16 %v515, %v511
    %v636 = vpack.c.b16 %v516, %v512
    %v637 = vpack.c.b16 %v517, %v513
    %v638 = vpack.c.b16 %v522, %v518
    %v639 = vpack.c.b16 %v523, %v519
    %v640 = vpack.c.b16 %v524, %v520
    %v641 = vpack.c.b16 %v525, %v521
    %v642 = vpack.c.b16 %v530, %v526
    %v643 = vpack.c.b16 %v531, %v527
    %v644 = vpack.c.b16 %v532, %v528
    %v645 = vpack.c.b16 %v533, %v529
    %v646 = vpack.c.b16 %v538, %v534
    %v647 = vpack.c.b16 %v539, %v535
    %v648 = vpack.c.b16 %v540, %v536
    %v649 = vpack.c.b16 %v541, %v537
    %v650 = vpack.c.b16 %v546, %v542
    %v651 = vpack.c.b16 %v547, %v543
    %v652 = vpack.c.b16 %v548, %v544
    %v653 = vpack.c.b16 %v549, %v545
    %v654 = vpack.c.b16 %v554, %v550
    %v655 = vpack.c.b16 %v555, %v551
    %v656 = vpack.c.b16 %v556, %v552
    %v657 = vpack.c.b16 %v557, %v553
    %v658 = vpack.c.b16 %v562, %v558
    %v659 = vpack.c.b16 %v563, %v559
    %v660 = vpack.c.b16 %v564, %v560
    %v661 = vpack.c.b16 %v565, %v561
    %v662 = vpack.c.b16 %v570, %v566
    %v663 = vpack.c.b16 %v571, %v567
    %v664 = vpack.c.b16 %v572, %v568
    %v665 = vpack.c.b16 %v573, %v569
    %v666 = vpack.c.b16 %v578, %v574
    %v667 = vpack.c.b16 %v579, %v575
    %v668 = vpack.c.b16 %v580, %v576
    %v669 = vpack.c.b16 %v581, %v577
    %v670 = vpack.c.b16 %v586, %v582
    %v671 = vpack.c.b16 %v587, %v583
    %v672 = vpack.c.b16 %v588, %v584
    %v673 = vpack.c.b16 %v589, %v585
    %v674 = vpack.c.b16 %v594, %v590
    %v675 = vpack.c.b16 %v595, %v591
    %v676 = vpack.c.b16 %v596, %v592
    %v677 = vpack.c.b16 %v597, %v593
    %v678 = vpack.c.b16 %v602, %v598
    %v679 = vpack.c.b16 %v603, %v599
    %v680 = vpack.c.b16 %v604, %v600
    %v681 = vpack.c.b16 %v605, %v601
    %v682 = vpack.c.b16 %v610, %v606
    %v683 = vpack.c.b16 %v611, %v607
    %v684 = vpack.c.b16 %v612, %v608
    %v685 = vpack.c.b16 %v613, %v609
    %v686 = vpack.c.b16 %v618, %v614
    %v687 = vpack.c.b16 %v619, %v615
    %v688 = vpack.c.b16 %v620, %v616
    %v689 = vpack.c.b16 %v621, %v617
    %v690 = vpack.c.b16 %v626, %v622
    %v691 = vpack.c.b16 %v627, %v623
    %v692 = vpack.c.b16 %v628, %v624
    %v693 = vpack.c.b16 %v629, %v625
    %758 = vmatpush.bf16.msra.mxu0 %v658
    %759 = vmatpush.bf16.msra.mxu0 %v654
    %760 = vmatpush.bf16.msra.mxu0 %v650
    %761 = vmatpush.bf16.msra.mxu0 %v646
    %762 = vmatpush.bf16.msra.mxu0 %v642
    %763 = vmatpush.bf16.msra.mxu0 %v638
    %764 = vmatpush.bf16.msra.mxu0 %v634
    %765 = vmatpush.bf16.msra.mxu0 %v630
    %766 = vmatmul.bf16.gmra.mxu0 %v362
    %v767 = vpop.f32.mrf.mxu0
    %v768 = vadd.f32 %v430, %v767
    %v769 = vpop.f32.mrf.mxu0
    %v770 = vadd.f32 %v430, %v769
    %771 = vdwg.mxu0
    %772 = vmatpush.bf16.msra.mxu0 %v690
    %773 = vmatpush.bf16.msra.mxu0 %v686
    %774 = vmatpush.bf16.msra.mxu0 %v682
    %775 = vmatpush.bf16.msra.mxu0 %v678
    %776 = vmatpush.bf16.msra.mxu0 %v674
    %777 = vmatpush.bf16.msra.mxu0 %v670
    %778 = vmatpush.bf16.msra.mxu0 %v666
    %779 = vmatpush.bf16.msra.mxu0 %v662
    %780 = vmatmul.bf16.gmra.mxu0 %v363
    %v781 = vpop.f32.mrf.mxu0
    %v782 = vadd.f32 %v768, %v781
    %v783 = vpop.f32.mrf.mxu0
    %v784 = vadd.f32 %v770, %v783
    %785 = vdwg.mxu0
    %786 = vmatpush.bf16.msra.mxu0 %v659
    %787 = vmatpush.bf16.msra.mxu0 %v655
    %788 = vmatpush.bf16.msra.mxu0 %v651
    %789 = vmatpush.bf16.msra.mxu0 %v647
    %790 = vmatpush.bf16.msra.mxu0 %v643
    %791 = vmatpush.bf16.msra.mxu0 %v639
    %792 = vmatpush.bf16.msra.mxu0 %v635
    %793 = vmatpush.bf16.msra.mxu0 %v631
    %794 = vmatmul.bf16.gmra.mxu0 %v362
    %v795 = vpop.f32.mrf.mxu0
    %v796 = vadd.f32 %v431, %v795
    %v797 = vpop.f32.mrf.mxu0
    %v798 = vadd.f32 %v431, %v797
    %799 = vdwg.mxu0
    %800 = vmatpush.bf16.msra.mxu0 %v691
    %801 = vmatpush.bf16.msra.mxu0 %v687
    %802 = vmatpush.bf16.msra.mxu0 %v683
    %803 = vmatpush.bf16.msra.mxu0 %v679
    %804 = vmatpush.bf16.msra.mxu0 %v675
    %805 = vmatpush.bf16.msra.mxu0 %v671
    %806 = vmatpush.bf16.msra.mxu0 %v667
    %807 = vmatpush.bf16.msra.mxu0 %v663
    %808 = vmatmul.bf16.gmra.mxu0 %v363
    %v809 = vpop.f32.mrf.mxu0
    %v810 = vadd.f32 %v796, %v809
    %v811 = vpop.f32.mrf.mxu0
    %v812 = vadd.f32 %v798, %v811
    %813 = vdwg.mxu0
    %814 = vmatpush.bf16.msra.mxu0 %v660
    %815 = vmatpush.bf16.msra.mxu0 %v656
    %816 = vmatpush.bf16.msra.mxu0 %v652
    %817 = vmatpush.bf16.msra.mxu0 %v648
    %818 = vmatpush.bf16.msra.mxu0 %v644
    %819 = vmatpush.bf16.msra.mxu0 %v640
    %820 = vmatpush.bf16.msra.mxu0 %v636
    %821 = vmatpush.bf16.msra.mxu0 %v632
    %822 = vmatmul.bf16.gmra.mxu0 %v362
    %v823 = vpop.f32.mrf.mxu0
    %v824 = vadd.f32 %v432, %v823
    %v825 = vpop.f32.mrf.mxu0
    %v826 = vadd.f32 %v432, %v825
    %827 = vdwg.mxu0
    %828 = vmatpush.bf16.msra.mxu0 %v692
    %829 = vmatpush.bf16.msra.mxu0 %v688
    %830 = vmatpush.bf16.msra.mxu0 %v684
    %831 = vmatpush.bf16.msra.mxu0 %v680
    %832 = vmatpush.bf16.msra.mxu0 %v676
    %833 = vmatpush.bf16.msra.mxu0 %v672
    %834 = vmatpush.bf16.msra.mxu0 %v668
    %835 = vmatpush.bf16.msra.mxu0 %v664
    %836 = vmatmul.bf16.gmra.mxu0 %v363
    %v837 = vpop.f32.mrf.mxu0
    %v838 = vadd.f32 %v824, %v837
    %v839 = vpop.f32.mrf.mxu0
    %v840 = vadd.f32 %v826, %v839
    %841 = vdwg.mxu0
    %842 = vmatpush.bf16.msra.mxu0 %v661
    %843 = vmatpush.bf16.msra.mxu0 %v657
    %844 = vmatpush.bf16.msra.mxu0 %v653
    %845 = vmatpush.bf16.msra.mxu0 %v649
    %846 = vmatpush.bf16.msra.mxu0 %v645
    %847 = vmatpush.bf16.msra.mxu0 %v641
    %848 = vmatpush.bf16.msra.mxu0 %v637
    %849 = vmatpush.bf16.msra.mxu0 %v633
    %850 = vmatmul.bf16.gmra.mxu0 %v362
    %v851 = vpop.f32.mrf.mxu0
    %v852 = vadd.f32 %v433, %v851
    %v853 = vpop.f32.mrf.mxu0
    %v854 = vadd.f32 %v433, %v853
    %855 = vdwg.mxu0
    %856 = vmatpush.bf16.msra.mxu0 %v693
    %857 = vmatpush.bf16.msra.mxu0 %v689
    %858 = vmatpush.bf16.msra.mxu0 %v685
    %859 = vmatpush.bf16.msra.mxu0 %v681
    %860 = vmatpush.bf16.msra.mxu0 %v677
    %861 = vmatpush.bf16.msra.mxu0 %v673
    %862 = vmatpush.bf16.msra.mxu0 %v669
    %863 = vmatpush.bf16.msra.mxu0 %v665
    %864 = vmatmul.bf16.gmra.mxu0 %v363
    %v865 = vpop.f32.mrf.mxu0
    %v866 = vadd.f32 %v852, %v865
    %v867 = vpop.f32.mrf.mxu0
    %v868 = vadd.f32 %v854, %v867
    %869 = vdwg.mxu0
    %v870 = vmul.f32 %v782, 0.01
    %v871 = vmul.f32 %v810, 0.01
    %v872 = vmul.f32 %v838, 0.01
    %v873 = vmul.f32 %v866, 0.01
    %v874 = vmul.f32 %v784, 0.01
    %v875 = vmul.f32 %v812, 0.01
    %v876 = vmul.f32 %v840, 0.01
    %v877 = vmul.f32 %v868, 0.01
    %v878 = vmax.f32 %v782, %v870
    %v879 = vmax.f32 %v810, %v871
    %v880 = vmax.f32 %v838, %v872
    %v881 = vmax.f32 %v866, %v873
    %v882 = vmax.f32 %v784, %v874
    %v883 = vmax.f32 %v812, %v875
    %v884 = vmax.f32 %v840, %v876
    %v885 = vmax.f32 %v868, %v877
    %v886 = vpack.c.bf16 %v882, %v878
    %v887 = vpack.c.bf16 %v883, %v879
    %v888 = vpack.c.bf16 %v884, %v880
    %v889 = vpack.c.bf16 %v885, %v881
    %v890 = vld [vmem:[#allocation8] sm:$0xff]
    %v891 = vld [vmem:[#allocation8 + $0x8] sm:$0xff]
    %v892 = vld [vmem:[#allocation8 + $0x10] sm:$0xff]
    %v893 = vld [vmem:[#allocation8 + $0x18] sm:$0xff]
    %v894 = vld [vmem:[#allocation8 + $0x20] sm:$0xff]
    %v895 = vld [vmem:[#allocation8 + $0x28] sm:$0xff]
    %v896 = vld [vmem:[#allocation8 + $0x30] sm:$0xff]
    %v897 = vld [vmem:[#allocation8 + $0x38] sm:$0xff]
    %v898 = vld [vmem:[#allocation8 + $0x40] sm:$0xff]
    %v899 = vld [vmem:[#allocation8 + $0x48] sm:$0xff]
    %v900 = vld [vmem:[#allocation8 + $0x50] sm:$0xff]
    %v901 = vld [vmem:[#allocation8 + $0x58] sm:$0xff]
    %v902 = vld [vmem:[#allocation8 + $0x60] sm:$0xff]
    %v903 = vld [vmem:[#allocation8 + $0x68] sm:$0xff]
    %v904 = vld [vmem:[#allocation8 + $0x70] sm:$0xff]
    %v905 = vld [vmem:[#allocation8 + $0x78] sm:$0xff]
    %v906 = vld [vmem:[#allocation8 + $0x80] sm:$0xff]
    %v907 = vld [vmem:[#allocation8 + $0x88] sm:$0xff]
    %v908 = vld [vmem:[#allocation8 + $0x90] sm:$0xff]
    %v909 = vld [vmem:[#allocation8 + $0x98] sm:$0xff]
    %v910 = vld [vmem:[#allocation8 + $0xa0] sm:$0xff]
    %v911 = vld [vmem:[#allocation8 + $0xa8] sm:$0xff]
    %v912 = vld [vmem:[#allocation8 + $0xb0] sm:$0xff]
    %v913 = vld [vmem:[#allocation8 + $0xb8] sm:$0xff]
    %v914 = vld [vmem:[#allocation8 + $0xc0] sm:$0xff]
    %v915 = vld [vmem:[#allocation8 + $0xc8] sm:$0xff]
    %v916 = vld [vmem:[#allocation8 + $0xd0] sm:$0xff]
    %v917 = vld [vmem:[#allocation8 + $0xd8] sm:$0xff]
    %v918 = vld [vmem:[#allocation8 + $0xe0] sm:$0xff]
    %v919 = vld [vmem:[#allocation8 + $0xe8] sm:$0xff]
    %v920 = vld [vmem:[#allocation8 + $0xf0] sm:$0xff]
    %v921 = vld [vmem:[#allocation8 + $0xf8] sm:$0xff]
    %v922 = vld [vmem:[#allocation8 + $0x100] sm:$0xff]
    %v923 = vld [vmem:[#allocation8 + $0x108] sm:$0xff]
    %v924 = vld [vmem:[#allocation8 + $0x110] sm:$0xff]
    %v925 = vld [vmem:[#allocation8 + $0x118] sm:$0xff]
    %v926 = vld [vmem:[#allocation8 + $0x120] sm:$0xff]
    %v927 = vld [vmem:[#allocation8 + $0x128] sm:$0xff]
    %v928 = vld [vmem:[#allocation8 + $0x130] sm:$0xff]
    %v929 = vld [vmem:[#allocation8 + $0x138] sm:$0xff]
    %v930 = vld [vmem:[#allocation8 + $0x140] sm:$0xff]
    %v931 = vld [vmem:[#allocation8 + $0x148] sm:$0xff]
    %v932 = vld [vmem:[#allocation8 + $0x150] sm:$0xff]
    %v933 = vld [vmem:[#allocation8 + $0x158] sm:$0xff]
    %v934 = vld [vmem:[#allocation8 + $0x160] sm:$0xff]
    %v935 = vld [vmem:[#allocation8 + $0x168] sm:$0xff]
    %v936 = vld [vmem:[#allocation8 + $0x170] sm:$0xff]
    %v937 = vld [vmem:[#allocation8 + $0x178] sm:$0xff]
    %v938 = vld [vmem:[#allocation8 + $0x180] sm:$0xff]
    %v939 = vld [vmem:[#allocation8 + $0x188] sm:$0xff]
    %v940 = vld [vmem:[#allocation8 + $0x190] sm:$0xff]
    %v941 = vld [vmem:[#allocation8 + $0x198] sm:$0xff]
    %v942 = vld [vmem:[#allocation8 + $0x1a0] sm:$0xff]
    %v943 = vld [vmem:[#allocation8 + $0x1a8] sm:$0xff]
    %v944 = vld [vmem:[#allocation8 + $0x1b0] sm:$0xff]
    %v945 = vld [vmem:[#allocation8 + $0x1b8] sm:$0xff]
    %v946 = vld [vmem:[#allocation8 + $0x1c0] sm:$0xff]
    %v947 = vld [vmem:[#allocation8 + $0x1c8] sm:$0xff]
    %v948 = vld [vmem:[#allocation8 + $0x1d0] sm:$0xff]
    %v949 = vld [vmem:[#allocation8 + $0x1d8] sm:$0xff]
    %v950 = vld [vmem:[#allocation8 + $0x1e0] sm:$0xff]
    %v951 = vld [vmem:[#allocation8 + $0x1e8] sm:$0xff]
    %v952 = vld [vmem:[#allocation8 + $0x1f0] sm:$0xff]
    %v953 = vld [vmem:[#allocation8 + $0x1f8] sm:$0xff]
    %v954 = vld [vmem:[#allocation8 + $0x200] sm:$0xff]
    %v955 = vld [vmem:[#allocation8 + $0x208] sm:$0xff]
    %v956 = vld [vmem:[#allocation8 + $0x210] sm:$0xff]
    %v957 = vld [vmem:[#allocation8 + $0x218] sm:$0xff]
    %v958 = vld [vmem:[#allocation8 + $0x220] sm:$0xff]
    %v959 = vld [vmem:[#allocation8 + $0x228] sm:$0xff]
    %v960 = vld [vmem:[#allocation8 + $0x230] sm:$0xff]
    %v961 = vld [vmem:[#allocation8 + $0x238] sm:$0xff]
    %v962 = vld [vmem:[#allocation8 + $0x240] sm:$0xff]
    %v963 = vld [vmem:[#allocation8 + $0x248] sm:$0xff]
    %v964 = vld [vmem:[#allocation8 + $0x250] sm:$0xff]
    %v965 = vld [vmem:[#allocation8 + $0x258] sm:$0xff]
    %v966 = vld [vmem:[#allocation8 + $0x260] sm:$0xff]
    %v967 = vld [vmem:[#allocation8 + $0x268] sm:$0xff]
    %v968 = vld [vmem:[#allocation8 + $0x270] sm:$0xff]
    %v969 = vld [vmem:[#allocation8 + $0x278] sm:$0xff]
    %v970 = vld [vmem:[#allocation8 + $0x280] sm:$0xff]
    %v971 = vld [vmem:[#allocation8 + $0x288] sm:$0xff]
    %v972 = vld [vmem:[#allocation8 + $0x290] sm:$0xff]
    %v973 = vld [vmem:[#allocation8 + $0x298] sm:$0xff]
    %v974 = vld [vmem:[#allocation8 + $0x2a0] sm:$0xff]
    %v975 = vld [vmem:[#allocation8 + $0x2a8] sm:$0xff]
    %v976 = vld [vmem:[#allocation8 + $0x2b0] sm:$0xff]
    %v977 = vld [vmem:[#allocation8 + $0x2b8] sm:$0xff]
    %v978 = vld [vmem:[#allocation8 + $0x2c0] sm:$0xff]
    %v979 = vld [vmem:[#allocation8 + $0x2c8] sm:$0xff]
    %v980 = vld [vmem:[#allocation8 + $0x2d0] sm:$0xff]
    %v981 = vld [vmem:[#allocation8 + $0x2d8] sm:$0xff]
    %v982 = vld [vmem:[#allocation8 + $0x2e0] sm:$0xff]
    %v983 = vld [vmem:[#allocation8 + $0x2e8] sm:$0xff]
    %v984 = vld [vmem:[#allocation8 + $0x2f0] sm:$0xff]
    %v985 = vld [vmem:[#allocation8 + $0x2f8] sm:$0xff]
    %v986 = vld [vmem:[#allocation8 + $0x300] sm:$0xff]
    %v987 = vld [vmem:[#allocation8 + $0x308] sm:$0xff]
    %v988 = vld [vmem:[#allocation8 + $0x310] sm:$0xff]
    %v989 = vld [vmem:[#allocation8 + $0x318] sm:$0xff]
    %v990 = vld [vmem:[#allocation8 + $0x320] sm:$0xff]
    %v991 = vld [vmem:[#allocation8 + $0x328] sm:$0xff]
    %v992 = vld [vmem:[#allocation8 + $0x330] sm:$0xff]
    %v993 = vld [vmem:[#allocation8 + $0x338] sm:$0xff]
    %v994 = vld [vmem:[#allocation8 + $0x340] sm:$0xff]
    %v995 = vld [vmem:[#allocation8 + $0x348] sm:$0xff]
    %v996 = vld [vmem:[#allocation8 + $0x350] sm:$0xff]
    %v997 = vld [vmem:[#allocation8 + $0x358] sm:$0xff]
    %v998 = vld [vmem:[#allocation8 + $0x360] sm:$0xff]
    %v999 = vld [vmem:[#allocation8 + $0x368] sm:$0xff]
    %v1000 = vld [vmem:[#allocation8 + $0x370] sm:$0xff]
    %v1001 = vld [vmem:[#allocation8 + $0x378] sm:$0xff]
    %v1002 = vld [vmem:[#allocation8 + $0x380] sm:$0xff]
    %v1003 = vld [vmem:[#allocation8 + $0x388] sm:$0xff]
    %v1004 = vld [vmem:[#allocation8 + $0x390] sm:$0xff]
    %v1005 = vld [vmem:[#allocation8 + $0x398] sm:$0xff]
    %v1006 = vld [vmem:[#allocation8 + $0x3a0] sm:$0xff]
    %v1007 = vld [vmem:[#allocation8 + $0x3a8] sm:$0xff]
    %v1008 = vld [vmem:[#allocation8 + $0x3b0] sm:$0xff]
    %v1009 = vld [vmem:[#allocation8 + $0x3b8] sm:$0xff]
    %v1010 = vld [vmem:[#allocation8 + $0x3c0] sm:$0xff]
    %v1011 = vld [vmem:[#allocation8 + $0x3c8] sm:$0xff]
    %v1012 = vld [vmem:[#allocation8 + $0x3d0] sm:$0xff]
    %v1013 = vld [vmem:[#allocation8 + $0x3d8] sm:$0xff]
    %v1014 = vld [vmem:[#allocation8 + $0x3e0] sm:$0xff]
    %v1015 = vld [vmem:[#allocation8 + $0x3e8] sm:$0xff]
    %v1016 = vld [vmem:[#allocation8 + $0x3f0] sm:$0xff]
    %v1017 = vld [vmem:[#allocation8 + $0x3f8] sm:$0xff]
    %v1018 = vld [vmem:[#allocation8 + $0x400] sm:$0xff]
    %v1019 = vld [vmem:[#allocation8 + $0x408] sm:$0xff]
    %v1020 = vld [vmem:[#allocation8 + $0x410] sm:$0xff]
    %v1021 = vld [vmem:[#allocation8 + $0x418] sm:$0xff]
    %v1022 = vld [vmem:[#allocation8 + $0x420] sm:$0xff]
    %v1023 = vld [vmem:[#allocation8 + $0x428] sm:$0xff]
    %v1024 = vld [vmem:[#allocation8 + $0x430] sm:$0xff]
    %v1025 = vld [vmem:[#allocation8 + $0x438] sm:$0xff]
    %v1026 = vld [vmem:[#allocation8 + $0x440] sm:$0xff]
    %v1027 = vld [vmem:[#allocation8 + $0x448] sm:$0xff]
    %v1028 = vld [vmem:[#allocation8 + $0x450] sm:$0xff]
    %v1029 = vld [vmem:[#allocation8 + $0x458] sm:$0xff]
    %v1030 = vld [vmem:[#allocation8 + $0x460] sm:$0xff]
    %v1031 = vld [vmem:[#allocation8 + $0x468] sm:$0xff]
    %v1032 = vld [vmem:[#allocation8 + $0x470] sm:$0xff]
    %v1033 = vld [vmem:[#allocation8 + $0x478] sm:$0xff]
    %v1034 = vld [vmem:[#allocation8 + $0x480] sm:$0xff]
    %v1035 = vld [vmem:[#allocation8 + $0x488] sm:$0xff]
    %v1036 = vld [vmem:[#allocation8 + $0x490] sm:$0xff]
    %v1037 = vld [vmem:[#allocation8 + $0x498] sm:$0xff]
    %v1038 = vld [vmem:[#allocation8 + $0x4a0] sm:$0xff]
    %v1039 = vld [vmem:[#allocation8 + $0x4a8] sm:$0xff]
    %v1040 = vld [vmem:[#allocation8 + $0x4b0] sm:$0xff]
    %v1041 = vld [vmem:[#allocation8 + $0x4b8] sm:$0xff]
    %v1042 = vld [vmem:[#allocation8 + $0x4c0] sm:$0xff]
    %v1043 = vld [vmem:[#allocation8 + $0x4c8] sm:$0xff]
    %v1044 = vld [vmem:[#allocation8 + $0x4d0] sm:$0xff]
    %v1045 = vld [vmem:[#allocation8 + $0x4d8] sm:$0xff]
    %v1046 = vld [vmem:[#allocation8 + $0x4e0] sm:$0xff]
    %v1047 = vld [vmem:[#allocation8 + $0x4e8] sm:$0xff]
    %v1048 = vld [vmem:[#allocation8 + $0x4f0] sm:$0xff]
    %v1049 = vld [vmem:[#allocation8 + $0x4f8] sm:$0xff]
    %v1050 = vld [vmem:[#allocation8 + $0x500] sm:$0xff]
    %v1051 = vld [vmem:[#allocation8 + $0x508] sm:$0xff]
    %v1052 = vld [vmem:[#allocation8 + $0x510] sm:$0xff]
    %v1053 = vld [vmem:[#allocation8 + $0x518] sm:$0xff]
    %v1054 = vld [vmem:[#allocation8 + $0x520] sm:$0xff]
    %v1055 = vld [vmem:[#allocation8 + $0x528] sm:$0xff]
    %v1056 = vld [vmem:[#allocation8 + $0x530] sm:$0xff]
    %v1057 = vld [vmem:[#allocation8 + $0x538] sm:$0xff]
    %v1058 = vld [vmem:[#allocation8 + $0x540] sm:$0xff]
    %v1059 = vld [vmem:[#allocation8 + $0x548] sm:$0xff]
    %v1060 = vld [vmem:[#allocation8 + $0x550] sm:$0xff]
    %v1061 = vld [vmem:[#allocation8 + $0x558] sm:$0xff]
    %v1062 = vld [vmem:[#allocation8 + $0x560] sm:$0xff]
    %v1063 = vld [vmem:[#allocation8 + $0x568] sm:$0xff]
    %v1064 = vld [vmem:[#allocation8 + $0x570] sm:$0xff]
    %v1065 = vld [vmem:[#allocation8 + $0x578] sm:$0xff]
    %v1066 = vld [vmem:[#allocation8 + $0x580] sm:$0xff]
    %v1067 = vld [vmem:[#allocation8 + $0x588] sm:$0xff]
    %v1068 = vld [vmem:[#allocation8 + $0x590] sm:$0xff]
    %v1069 = vld [vmem:[#allocation8 + $0x598] sm:$0xff]
    %v1070 = vld [vmem:[#allocation8 + $0x5a0] sm:$0xff]
    %v1071 = vld [vmem:[#allocation8 + $0x5a8] sm:$0xff]
    %v1072 = vld [vmem:[#allocation8 + $0x5b0] sm:$0xff]
    %v1073 = vld [vmem:[#allocation8 + $0x5b8] sm:$0xff]
    %v1074 = vld [vmem:[#allocation8 + $0x5c0] sm:$0xff]
    %v1075 = vld [vmem:[#allocation8 + $0x5c8] sm:$0xff]
    %v1076 = vld [vmem:[#allocation8 + $0x5d0] sm:$0xff]
    %v1077 = vld [vmem:[#allocation8 + $0x5d8] sm:$0xff]
    %v1078 = vld [vmem:[#allocation8 + $0x5e0] sm:$0xff]
    %v1079 = vld [vmem:[#allocation8 + $0x5e8] sm:$0xff]
    %v1080 = vld [vmem:[#allocation8 + $0x5f0] sm:$0xff]
    %v1081 = vld [vmem:[#allocation8 + $0x5f8] sm:$0xff]
    %v1082 = vld [vmem:[#allocation8 + $0x600] sm:$0xff]
    %v1083 = vld [vmem:[#allocation8 + $0x608] sm:$0xff]
    %v1084 = vld [vmem:[#allocation8 + $0x610] sm:$0xff]
    %v1085 = vld [vmem:[#allocation8 + $0x618] sm:$0xff]
    %v1086 = vld [vmem:[#allocation8 + $0x620] sm:$0xff]
    %v1087 = vld [vmem:[#allocation8 + $0x628] sm:$0xff]
    %v1088 = vld [vmem:[#allocation8 + $0x630] sm:$0xff]
    %v1089 = vld [vmem:[#allocation8 + $0x638] sm:$0xff]
    %v1090 = vld [vmem:[#allocation8 + $0x640] sm:$0xff]
    %v1091 = vld [vmem:[#allocation8 + $0x648] sm:$0xff]
    %v1092 = vld [vmem:[#allocation8 + $0x650] sm:$0xff]
    %v1093 = vld [vmem:[#allocation8 + $0x658] sm:$0xff]
    %v1094 = vld [vmem:[#allocation8 + $0x660] sm:$0xff]
    %v1095 = vld [vmem:[#allocation8 + $0x668] sm:$0xff]
    %v1096 = vld [vmem:[#allocation8 + $0x670] sm:$0xff]
    %v1097 = vld [vmem:[#allocation8 + $0x678] sm:$0xff]
    %v1098 = vld [vmem:[#allocation8 + $0x680] sm:$0xff]
    %v1099 = vld [vmem:[#allocation8 + $0x688] sm:$0xff]
    %v1100 = vld [vmem:[#allocation8 + $0x690] sm:$0xff]
    %v1101 = vld [vmem:[#allocation8 + $0x698] sm:$0xff]
    %v1102 = vld [vmem:[#allocation8 + $0x6a0] sm:$0xff]
    %v1103 = vld [vmem:[#allocation8 + $0x6a8] sm:$0xff]
    %v1104 = vld [vmem:[#allocation8 + $0x6b0] sm:$0xff]
    %v1105 = vld [vmem:[#allocation8 + $0x6b8] sm:$0xff]
    %v1106 = vld [vmem:[#allocation8 + $0x6c0] sm:$0xff]
    %v1107 = vld [vmem:[#allocation8 + $0x6c8] sm:$0xff]
    %v1108 = vld [vmem:[#allocation8 + $0x6d0] sm:$0xff]
    %v1109 = vld [vmem:[#allocation8 + $0x6d8] sm:$0xff]
    %v1110 = vld [vmem:[#allocation8 + $0x6e0] sm:$0xff]
    %v1111 = vld [vmem:[#allocation8 + $0x6e8] sm:$0xff]
    %v1112 = vld [vmem:[#allocation8 + $0x6f0] sm:$0xff]
    %v1113 = vld [vmem:[#allocation8 + $0x6f8] sm:$0xff]
    %v1114 = vld [vmem:[#allocation8 + $0x700] sm:$0xff]
    %v1115 = vld [vmem:[#allocation8 + $0x708] sm:$0xff]
    %v1116 = vld [vmem:[#allocation8 + $0x710] sm:$0xff]
    %v1117 = vld [vmem:[#allocation8 + $0x718] sm:$0xff]
    %v1118 = vld [vmem:[#allocation8 + $0x720] sm:$0xff]
    %v1119 = vld [vmem:[#allocation8 + $0x728] sm:$0xff]
    %v1120 = vld [vmem:[#allocation8 + $0x730] sm:$0xff]
    %v1121 = vld [vmem:[#allocation8 + $0x738] sm:$0xff]
    %v1122 = vld [vmem:[#allocation8 + $0x740] sm:$0xff]
    %v1123 = vld [vmem:[#allocation8 + $0x748] sm:$0xff]
    %v1124 = vld [vmem:[#allocation8 + $0x750] sm:$0xff]
    %v1125 = vld [vmem:[#allocation8 + $0x758] sm:$0xff]
    %v1126 = vld [vmem:[#allocation8 + $0x760] sm:$0xff]
    %v1127 = vld [vmem:[#allocation8 + $0x768] sm:$0xff]
    %v1128 = vld [vmem:[#allocation8 + $0x770] sm:$0xff]
    %v1129 = vld [vmem:[#allocation8 + $0x778] sm:$0xff]
    %v1130 = vld [vmem:[#allocation8 + $0x780] sm:$0xff]
    %v1131 = vld [vmem:[#allocation8 + $0x788] sm:$0xff]
    %v1132 = vld [vmem:[#allocation8 + $0x790] sm:$0xff]
    %v1133 = vld [vmem:[#allocation8 + $0x798] sm:$0xff]
    %v1134 = vld [vmem:[#allocation8 + $0x7a0] sm:$0xff]
    %v1135 = vld [vmem:[#allocation8 + $0x7a8] sm:$0xff]
    %v1136 = vld [vmem:[#allocation8 + $0x7b0] sm:$0xff]
    %v1137 = vld [vmem:[#allocation8 + $0x7b8] sm:$0xff]
    %v1138 = vld [vmem:[#allocation8 + $0x7c0] sm:$0xff]
    %v1139 = vld [vmem:[#allocation8 + $0x7c8] sm:$0xff]
    %v1140 = vld [vmem:[#allocation8 + $0x7d0] sm:$0xff]
    %v1141 = vld [vmem:[#allocation8 + $0x7d8] sm:$0xff]
    %v1142 = vld [vmem:[#allocation8 + $0x7e0] sm:$0xff]
    %v1143 = vld [vmem:[#allocation8 + $0x7e8] sm:$0xff]
    %v1144 = vld [vmem:[#allocation8 + $0x7f0] sm:$0xff]
    %v1145 = vld [vmem:[#allocation8 + $0x7f8] sm:$0xff]
    %v1146 = vld [vmem:[%s10] sm:$0xff]
    %v1148 = vperm.slane %v1146, 0
    %v1149 = vperm.slane %v1146, 1
    %v1150 = vperm.slane %v1146, 2
    %v1151 = vperm.slane %v1146, 3
    %v1152 = vperm.slane %v1146, 4
    %v1153 = vperm.slane %v1146, 5
    %v1154 = vperm.slane %v1146, 6
    %v1155 = vperm.slane %v1146, 7
    %v1420 = vunpack.c.l.b16 %v890
    %v1421 = vunpack.c.h.b16 %v890
    %v1422 = vunpack.c.l.b16 %v891
    %v1423 = vunpack.c.h.b16 %v891
    %v1424 = vunpack.c.l.b16 %v892
    %v1425 = vunpack.c.h.b16 %v892
    %v1426 = vunpack.c.l.b16 %v893
    %v1427 = vunpack.c.h.b16 %v893
    %v1428 = vunpack.c.l.b16 %v894
    %v1429 = vunpack.c.h.b16 %v894
    %v1430 = vunpack.c.l.b16 %v895
    %v1431 = vunpack.c.h.b16 %v895
    %v1432 = vunpack.c.l.b16 %v896
    %v1433 = vunpack.c.h.b16 %v896
    %v1434 = vunpack.c.l.b16 %v897
    %v1435 = vunpack.c.h.b16 %v897
    %v1436 = vunpack.c.l.b16 %v898
    %v1437 = vunpack.c.h.b16 %v898
    %v1438 = vunpack.c.l.b16 %v899
    %v1439 = vunpack.c.h.b16 %v899
    %v1440 = vunpack.c.l.b16 %v900
    %v1441 = vunpack.c.h.b16 %v900
    %v1442 = vunpack.c.l.b16 %v901
    %v1443 = vunpack.c.h.b16 %v901
    %v1444 = vunpack.c.l.b16 %v902
    %v1445 = vunpack.c.h.b16 %v902
    %v1446 = vunpack.c.l.b16 %v903
    %v1447 = vunpack.c.h.b16 %v903
    %v1448 = vunpack.c.l.b16 %v904
    %v1449 = vunpack.c.h.b16 %v904
    %v1450 = vunpack.c.l.b16 %v905
    %v1451 = vunpack.c.h.b16 %v905
    %v1452 = vunpack.c.l.b16 %v906
    %v1453 = vunpack.c.h.b16 %v906
    %v1454 = vunpack.c.l.b16 %v907
    %v1455 = vunpack.c.h.b16 %v907
    %v1456 = vunpack.c.l.b16 %v908
    %v1457 = vunpack.c.h.b16 %v908
    %v1458 = vunpack.c.l.b16 %v909
    %v1459 = vunpack.c.h.b16 %v909
    %v1460 = vunpack.c.l.b16 %v910
    %v1461 = vunpack.c.h.b16 %v910
    %v1462 = vunpack.c.l.b16 %v911
    %v1463 = vunpack.c.h.b16 %v911
    %v1464 = vunpack.c.l.b16 %v912
    %v1465 = vunpack.c.h.b16 %v912
    %v1466 = vunpack.c.l.b16 %v913
    %v1467 = vunpack.c.h.b16 %v913
    %v1468 = vunpack.c.l.b16 %v914
    %v1469 = vunpack.c.h.b16 %v914
    %v1470 = vunpack.c.l.b16 %v915
    %v1471 = vunpack.c.h.b16 %v915
    %v1472 = vunpack.c.l.b16 %v916
    %v1473 = vunpack.c.h.b16 %v916
    %v1474 = vunpack.c.l.b16 %v917
    %v1475 = vunpack.c.h.b16 %v917
    %v1476 = vunpack.c.l.b16 %v918
    %v1477 = vunpack.c.h.b16 %v918
    %v1478 = vunpack.c.l.b16 %v919
    %v1479 = vunpack.c.h.b16 %v919
    %v1480 = vunpack.c.l.b16 %v920
    %v1481 = vunpack.c.h.b16 %v920
    %v1482 = vunpack.c.l.b16 %v921
    %v1483 = vunpack.c.h.b16 %v921
    %v1484 = vunpack.c.l.b16 %v922
    %v1485 = vunpack.c.h.b16 %v922
    %v1486 = vunpack.c.l.b16 %v923
    %v1487 = vunpack.c.h.b16 %v923
    %v1488 = vunpack.c.l.b16 %v924
    %v1489 = vunpack.c.h.b16 %v924
    %v1490 = vunpack.c.l.b16 %v925
    %v1491 = vunpack.c.h.b16 %v925
    %v1492 = vunpack.c.l.b16 %v926
    %v1493 = vunpack.c.h.b16 %v926
    %v1494 = vunpack.c.l.b16 %v927
    %v1495 = vunpack.c.h.b16 %v927
    %v1496 = vunpack.c.l.b16 %v928
    %v1497 = vunpack.c.h.b16 %v928
    %v1498 = vunpack.c.l.b16 %v929
    %v1499 = vunpack.c.h.b16 %v929
    %v1500 = vunpack.c.l.b16 %v930
    %v1501 = vunpack.c.h.b16 %v930
    %v1502 = vunpack.c.l.b16 %v931
    %v1503 = vunpack.c.h.b16 %v931
    %v1504 = vunpack.c.l.b16 %v932
    %v1505 = vunpack.c.h.b16 %v932
    %v1506 = vunpack.c.l.b16 %v933
    %v1507 = vunpack.c.h.b16 %v933
    %v1508 = vunpack.c.l.b16 %v934
    %v1509 = vunpack.c.h.b16 %v934
    %v1510 = vunpack.c.l.b16 %v935
    %v1511 = vunpack.c.h.b16 %v935
    %v1512 = vunpack.c.l.b16 %v936
    %v1513 = vunpack.c.h.b16 %v936
    %v1514 = vunpack.c.l.b16 %v937
    %v1515 = vunpack.c.h.b16 %v937
    %v1516 = vunpack.c.l.b16 %v938
    %v1517 = vunpack.c.h.b16 %v938
    %v1518 = vunpack.c.l.b16 %v939
    %v1519 = vunpack.c.h.b16 %v939
    %v1520 = vunpack.c.l.b16 %v940
    %v1521 = vunpack.c.h.b16 %v940
    %v1522 = vunpack.c.l.b16 %v941
    %v1523 = vunpack.c.h.b16 %v941
    %v1524 = vunpack.c.l.b16 %v942
    %v1525 = vunpack.c.h.b16 %v942
    %v1526 = vunpack.c.l.b16 %v943
    %v1527 = vunpack.c.h.b16 %v943
    %v1528 = vunpack.c.l.b16 %v944
    %v1529 = vunpack.c.h.b16 %v944
    %v1530 = vunpack.c.l.b16 %v945
    %v1531 = vunpack.c.h.b16 %v945
    %v1532 = vunpack.c.l.b16 %v946
    %v1533 = vunpack.c.h.b16 %v946
    %v1534 = vunpack.c.l.b16 %v947
    %v1535 = vunpack.c.h.b16 %v947
    %v1536 = vunpack.c.l.b16 %v948
    %v1537 = vunpack.c.h.b16 %v948
    %v1538 = vunpack.c.l.b16 %v949
    %v1539 = vunpack.c.h.b16 %v949
    %v1540 = vunpack.c.l.b16 %v950
    %v1541 = vunpack.c.h.b16 %v950
    %v1542 = vunpack.c.l.b16 %v951
    %v1543 = vunpack.c.h.b16 %v951
    %v1544 = vunpack.c.l.b16 %v952
    %v1545 = vunpack.c.h.b16 %v952
    %v1546 = vunpack.c.l.b16 %v953
    %v1547 = vunpack.c.h.b16 %v953
    %v1548 = vunpack.c.l.b16 %v954
    %v1549 = vunpack.c.h.b16 %v954
    %v1550 = vunpack.c.l.b16 %v955
    %v1551 = vunpack.c.h.b16 %v955
    %v1552 = vunpack.c.l.b16 %v956
    %v1553 = vunpack.c.h.b16 %v956
    %v1554 = vunpack.c.l.b16 %v957
    %v1555 = vunpack.c.h.b16 %v957
    %v1556 = vunpack.c.l.b16 %v958
    %v1557 = vunpack.c.h.b16 %v958
    %v1558 = vunpack.c.l.b16 %v959
    %v1559 = vunpack.c.h.b16 %v959
    %v1560 = vunpack.c.l.b16 %v960
    %v1561 = vunpack.c.h.b16 %v960
    %v1562 = vunpack.c.l.b16 %v961
    %v1563 = vunpack.c.h.b16 %v961
    %v1564 = vunpack.c.l.b16 %v962
    %v1565 = vunpack.c.h.b16 %v962
    %v1566 = vunpack.c.l.b16 %v963
    %v1567 = vunpack.c.h.b16 %v963
    %v1568 = vunpack.c.l.b16 %v964
    %v1569 = vunpack.c.h.b16 %v964
    %v1570 = vunpack.c.l.b16 %v965
    %v1571 = vunpack.c.h.b16 %v965
    %v1572 = vunpack.c.l.b16 %v966
    %v1573 = vunpack.c.h.b16 %v966
    %v1574 = vunpack.c.l.b16 %v967
    %v1575 = vunpack.c.h.b16 %v967
    %v1576 = vunpack.c.l.b16 %v968
    %v1577 = vunpack.c.h.b16 %v968
    %v1578 = vunpack.c.l.b16 %v969
    %v1579 = vunpack.c.h.b16 %v969
    %v1580 = vunpack.c.l.b16 %v970
    %v1581 = vunpack.c.h.b16 %v970
    %v1582 = vunpack.c.l.b16 %v971
    %v1583 = vunpack.c.h.b16 %v971
    %v1584 = vunpack.c.l.b16 %v972
    %v1585 = vunpack.c.h.b16 %v972
    %v1586 = vunpack.c.l.b16 %v973
    %v1587 = vunpack.c.h.b16 %v973
    %v1588 = vunpack.c.l.b16 %v974
    %v1589 = vunpack.c.h.b16 %v974
    %v1590 = vunpack.c.l.b16 %v975
    %v1591 = vunpack.c.h.b16 %v975
    %v1592 = vunpack.c.l.b16 %v976
    %v1593 = vunpack.c.h.b16 %v976
    %v1594 = vunpack.c.l.b16 %v977
    %v1595 = vunpack.c.h.b16 %v977
    %v1596 = vunpack.c.l.b16 %v978
    %v1597 = vunpack.c.h.b16 %v978
    %v1598 = vunpack.c.l.b16 %v979
    %v1599 = vunpack.c.h.b16 %v979
    %v1600 = vunpack.c.l.b16 %v980
    %v1601 = vunpack.c.h.b16 %v980
    %v1602 = vunpack.c.l.b16 %v981
    %v1603 = vunpack.c.h.b16 %v981
    %v1604 = vunpack.c.l.b16 %v982
    %v1605 = vunpack.c.h.b16 %v982
    %v1606 = vunpack.c.l.b16 %v983
    %v1607 = vunpack.c.h.b16 %v983
    %v1608 = vunpack.c.l.b16 %v984
    %v1609 = vunpack.c.h.b16 %v984
    %v1610 = vunpack.c.l.b16 %v985
    %v1611 = vunpack.c.h.b16 %v985
    %v1612 = vunpack.c.l.b16 %v986
    %v1613 = vunpack.c.h.b16 %v986
    %v1614 = vunpack.c.l.b16 %v987
    %v1615 = vunpack.c.h.b16 %v987
    %v1616 = vunpack.c.l.b16 %v988
    %v1617 = vunpack.c.h.b16 %v988
    %v1618 = vunpack.c.l.b16 %v989
    %v1619 = vunpack.c.h.b16 %v989
    %v1620 = vunpack.c.l.b16 %v990
    %v1621 = vunpack.c.h.b16 %v990
    %v1622 = vunpack.c.l.b16 %v991
    %v1623 = vunpack.c.h.b16 %v991
    %v1624 = vunpack.c.l.b16 %v992
    %v1625 = vunpack.c.h.b16 %v992
    %v1626 = vunpack.c.l.b16 %v993
    %v1627 = vunpack.c.h.b16 %v993
    %v1628 = vunpack.c.l.b16 %v994
    %v1629 = vunpack.c.h.b16 %v994
    %v1630 = vunpack.c.l.b16 %v995
    %v1631 = vunpack.c.h.b16 %v995
    %v1632 = vunpack.c.l.b16 %v996
    %v1633 = vunpack.c.h.b16 %v996
    %v1634 = vunpack.c.l.b16 %v997
    %v1635 = vunpack.c.h.b16 %v997
    %v1636 = vunpack.c.l.b16 %v998
    %v1637 = vunpack.c.h.b16 %v998
    %v1638 = vunpack.c.l.b16 %v999
    %v1639 = vunpack.c.h.b16 %v999
    %v1640 = vunpack.c.l.b16 %v1000
    %v1641 = vunpack.c.h.b16 %v1000
    %v1642 = vunpack.c.l.b16 %v1001
    %v1643 = vunpack.c.h.b16 %v1001
    %v1644 = vunpack.c.l.b16 %v1002
    %v1645 = vunpack.c.h.b16 %v1002
    %v1646 = vunpack.c.l.b16 %v1003
    %v1647 = vunpack.c.h.b16 %v1003
    %v1648 = vunpack.c.l.b16 %v1004
    %v1649 = vunpack.c.h.b16 %v1004
    %v1650 = vunpack.c.l.b16 %v1005
    %v1651 = vunpack.c.h.b16 %v1005
    %v1652 = vunpack.c.l.b16 %v1006
    %v1653 = vunpack.c.h.b16 %v1006
    %v1654 = vunpack.c.l.b16 %v1007
    %v1655 = vunpack.c.h.b16 %v1007
    %v1656 = vunpack.c.l.b16 %v1008
    %v1657 = vunpack.c.h.b16 %v1008
    %v1658 = vunpack.c.l.b16 %v1009
    %v1659 = vunpack.c.h.b16 %v1009
    %v1660 = vunpack.c.l.b16 %v1010
    %v1661 = vunpack.c.h.b16 %v1010
    %v1662 = vunpack.c.l.b16 %v1011
    %v1663 = vunpack.c.h.b16 %v1011
    %v1664 = vunpack.c.l.b16 %v1012
    %v1665 = vunpack.c.h.b16 %v1012
    %v1666 = vunpack.c.l.b16 %v1013
    %v1667 = vunpack.c.h.b16 %v1013
    %v1668 = vunpack.c.l.b16 %v1014
    %v1669 = vunpack.c.h.b16 %v1014
    %v1670 = vunpack.c.l.b16 %v1015
    %v1671 = vunpack.c.h.b16 %v1015
    %v1672 = vunpack.c.l.b16 %v1016
    %v1673 = vunpack.c.h.b16 %v1016
    %v1674 = vunpack.c.l.b16 %v1017
    %v1675 = vunpack.c.h.b16 %v1017
    %v1676 = vunpack.c.l.b16 %v1018
    %v1677 = vunpack.c.h.b16 %v1018
    %v1678 = vunpack.c.l.b16 %v1019
    %v1679 = vunpack.c.h.b16 %v1019
    %v1680 = vunpack.c.l.b16 %v1020
    %v1681 = vunpack.c.h.b16 %v1020
    %v1682 = vunpack.c.l.b16 %v1021
    %v1683 = vunpack.c.h.b16 %v1021
    %v1684 = vunpack.c.l.b16 %v1022
    %v1685 = vunpack.c.h.b16 %v1022
    %v1686 = vunpack.c.l.b16 %v1023
    %v1687 = vunpack.c.h.b16 %v1023
    %v1688 = vunpack.c.l.b16 %v1024
    %v1689 = vunpack.c.h.b16 %v1024
    %v1690 = vunpack.c.l.b16 %v1025
    %v1691 = vunpack.c.h.b16 %v1025
    %v1692 = vunpack.c.l.b16 %v1026
    %v1693 = vunpack.c.h.b16 %v1026
    %v1694 = vunpack.c.l.b16 %v1027
    %v1695 = vunpack.c.h.b16 %v1027
    %v1696 = vunpack.c.l.b16 %v1028
    %v1697 = vunpack.c.h.b16 %v1028
    %v1698 = vunpack.c.l.b16 %v1029
    %v1699 = vunpack.c.h.b16 %v1029
    %v1700 = vunpack.c.l.b16 %v1030
    %v1701 = vunpack.c.h.b16 %v1030
    %v1702 = vunpack.c.l.b16 %v1031
    %v1703 = vunpack.c.h.b16 %v1031
    %v1704 = vunpack.c.l.b16 %v1032
    %v1705 = vunpack.c.h.b16 %v1032
    %v1706 = vunpack.c.l.b16 %v1033
    %v1707 = vunpack.c.h.b16 %v1033
    %v1708 = vunpack.c.l.b16 %v1034
    %v1709 = vunpack.c.h.b16 %v1034
    %v1710 = vunpack.c.l.b16 %v1035
    %v1711 = vunpack.c.h.b16 %v1035
    %v1712 = vunpack.c.l.b16 %v1036
    %v1713 = vunpack.c.h.b16 %v1036
    %v1714 = vunpack.c.l.b16 %v1037
    %v1715 = vunpack.c.h.b16 %v1037
    %v1716 = vunpack.c.l.b16 %v1038
    %v1717 = vunpack.c.h.b16 %v1038
    %v1718 = vunpack.c.l.b16 %v1039
    %v1719 = vunpack.c.h.b16 %v1039
    %v1720 = vunpack.c.l.b16 %v1040
    %v1721 = vunpack.c.h.b16 %v1040
    %v1722 = vunpack.c.l.b16 %v1041
    %v1723 = vunpack.c.h.b16 %v1041
    %v1724 = vunpack.c.l.b16 %v1042
    %v1725 = vunpack.c.h.b16 %v1042
    %v1726 = vunpack.c.l.b16 %v1043
    %v1727 = vunpack.c.h.b16 %v1043
    %v1728 = vunpack.c.l.b16 %v1044
    %v1729 = vunpack.c.h.b16 %v1044
    %v1730 = vunpack.c.l.b16 %v1045
    %v1731 = vunpack.c.h.b16 %v1045
    %v1732 = vunpack.c.l.b16 %v1046
    %v1733 = vunpack.c.h.b16 %v1046
    %v1734 = vunpack.c.l.b16 %v1047
    %v1735 = vunpack.c.h.b16 %v1047
    %v1736 = vunpack.c.l.b16 %v1048
    %v1737 = vunpack.c.h.b16 %v1048
    %v1738 = vunpack.c.l.b16 %v1049
    %v1739 = vunpack.c.h.b16 %v1049
    %v1740 = vunpack.c.l.b16 %v1050
    %v1741 = vunpack.c.h.b16 %v1050
    %v1742 = vunpack.c.l.b16 %v1051
    %v1743 = vunpack.c.h.b16 %v1051
    %v1744 = vunpack.c.l.b16 %v1052
    %v1745 = vunpack.c.h.b16 %v1052
    %v1746 = vunpack.c.l.b16 %v1053
    %v1747 = vunpack.c.h.b16 %v1053
    %v1748 = vunpack.c.l.b16 %v1054
    %v1749 = vunpack.c.h.b16 %v1054
    %v1750 = vunpack.c.l.b16 %v1055
    %v1751 = vunpack.c.h.b16 %v1055
    %v1752 = vunpack.c.l.b16 %v1056
    %v1753 = vunpack.c.h.b16 %v1056
    %v1754 = vunpack.c.l.b16 %v1057
    %v1755 = vunpack.c.h.b16 %v1057
    %v1756 = vunpack.c.l.b16 %v1058
    %v1757 = vunpack.c.h.b16 %v1058
    %v1758 = vunpack.c.l.b16 %v1059
    %v1759 = vunpack.c.h.b16 %v1059
    %v1760 = vunpack.c.l.b16 %v1060
    %v1761 = vunpack.c.h.b16 %v1060
    %v1762 = vunpack.c.l.b16 %v1061
    %v1763 = vunpack.c.h.b16 %v1061
    %v1764 = vunpack.c.l.b16 %v1062
    %v1765 = vunpack.c.h.b16 %v1062
    %v1766 = vunpack.c.l.b16 %v1063
    %v1767 = vunpack.c.h.b16 %v1063
    %v1768 = vunpack.c.l.b16 %v1064
    %v1769 = vunpack.c.h.b16 %v1064
    %v1770 = vunpack.c.l.b16 %v1065
    %v1771 = vunpack.c.h.b16 %v1065
    %v1772 = vunpack.c.l.b16 %v1066
    %v1773 = vunpack.c.h.b16 %v1066
    %v1774 = vunpack.c.l.b16 %v1067
    %v1775 = vunpack.c.h.b16 %v1067
    %v1776 = vunpack.c.l.b16 %v1068
    %v1777 = vunpack.c.h.b16 %v1068
    %v1778 = vunpack.c.l.b16 %v1069
    %v1779 = vunpack.c.h.b16 %v1069
    %v1780 = vunpack.c.l.b16 %v1070
    %v1781 = vunpack.c.h.b16 %v1070
    %v1782 = vunpack.c.l.b16 %v1071
    %v1783 = vunpack.c.h.b16 %v1071
    %v1784 = vunpack.c.l.b16 %v1072
    %v1785 = vunpack.c.h.b16 %v1072
    %v1786 = vunpack.c.l.b16 %v1073
    %v1787 = vunpack.c.h.b16 %v1073
    %v1788 = vunpack.c.l.b16 %v1074
    %v1789 = vunpack.c.h.b16 %v1074
    %v1790 = vunpack.c.l.b16 %v1075
    %v1791 = vunpack.c.h.b16 %v1075
    %v1792 = vunpack.c.l.b16 %v1076
    %v1793 = vunpack.c.h.b16 %v1076
    %v1794 = vunpack.c.l.b16 %v1077
    %v1795 = vunpack.c.h.b16 %v1077
    %v1796 = vunpack.c.l.b16 %v1078
    %v1797 = vunpack.c.h.b16 %v1078
    %v1798 = vunpack.c.l.b16 %v1079
    %v1799 = vunpack.c.h.b16 %v1079
    %v1800 = vunpack.c.l.b16 %v1080
    %v1801 = vunpack.c.h.b16 %v1080
    %v1802 = vunpack.c.l.b16 %v1081
    %v1803 = vunpack.c.h.b16 %v1081
    %v1804 = vunpack.c.l.b16 %v1082
    %v1805 = vunpack.c.h.b16 %v1082
    %v1806 = vunpack.c.l.b16 %v1083
    %v1807 = vunpack.c.h.b16 %v1083
    %v1808 = vunpack.c.l.b16 %v1084
    %v1809 = vunpack.c.h.b16 %v1084
    %v1810 = vunpack.c.l.b16 %v1085
    %v1811 = vunpack.c.h.b16 %v1085
    %v1812 = vunpack.c.l.b16 %v1086
    %v1813 = vunpack.c.h.b16 %v1086
    %v1814 = vunpack.c.l.b16 %v1087
    %v1815 = vunpack.c.h.b16 %v1087
    %v1816 = vunpack.c.l.b16 %v1088
    %v1817 = vunpack.c.h.b16 %v1088
    %v1818 = vunpack.c.l.b16 %v1089
    %v1819 = vunpack.c.h.b16 %v1089
    %v1820 = vunpack.c.l.b16 %v1090
    %v1821 = vunpack.c.h.b16 %v1090
    %v1822 = vunpack.c.l.b16 %v1091
    %v1823 = vunpack.c.h.b16 %v1091
    %v1824 = vunpack.c.l.b16 %v1092
    %v1825 = vunpack.c.h.b16 %v1092
    %v1826 = vunpack.c.l.b16 %v1093
    %v1827 = vunpack.c.h.b16 %v1093
    %v1828 = vunpack.c.l.b16 %v1094
    %v1829 = vunpack.c.h.b16 %v1094
    %v1830 = vunpack.c.l.b16 %v1095
    %v1831 = vunpack.c.h.b16 %v1095
    %v1832 = vunpack.c.l.b16 %v1096
    %v1833 = vunpack.c.h.b16 %v1096
    %v1834 = vunpack.c.l.b16 %v1097
    %v1835 = vunpack.c.h.b16 %v1097
    %v1836 = vunpack.c.l.b16 %v1098
    %v1837 = vunpack.c.h.b16 %v1098
    %v1838 = vunpack.c.l.b16 %v1099
    %v1839 = vunpack.c.h.b16 %v1099
    %v1840 = vunpack.c.l.b16 %v1100
    %v1841 = vunpack.c.h.b16 %v1100
    %v1842 = vunpack.c.l.b16 %v1101
    %v1843 = vunpack.c.h.b16 %v1101
    %v1844 = vunpack.c.l.b16 %v1102
    %v1845 = vunpack.c.h.b16 %v1102
    %v1846 = vunpack.c.l.b16 %v1103
    %v1847 = vunpack.c.h.b16 %v1103
    %v1848 = vunpack.c.l.b16 %v1104
    %v1849 = vunpack.c.h.b16 %v1104
    %v1850 = vunpack.c.l.b16 %v1105
    %v1851 = vunpack.c.h.b16 %v1105
    %v1852 = vunpack.c.l.b16 %v1106
    %v1853 = vunpack.c.h.b16 %v1106
    %v1854 = vunpack.c.l.b16 %v1107
    %v1855 = vunpack.c.h.b16 %v1107
    %v1856 = vunpack.c.l.b16 %v1108
    %v1857 = vunpack.c.h.b16 %v1108
    %v1858 = vunpack.c.l.b16 %v1109
    %v1859 = vunpack.c.h.b16 %v1109
    %v1860 = vunpack.c.l.b16 %v1110
    %v1861 = vunpack.c.h.b16 %v1110
    %v1862 = vunpack.c.l.b16 %v1111
    %v1863 = vunpack.c.h.b16 %v1111
    %v1864 = vunpack.c.l.b16 %v1112
    %v1865 = vunpack.c.h.b16 %v1112
    %v1866 = vunpack.c.l.b16 %v1113
    %v1867 = vunpack.c.h.b16 %v1113
    %v1868 = vunpack.c.l.b16 %v1114
    %v1869 = vunpack.c.h.b16 %v1114
    %v1870 = vunpack.c.l.b16 %v1115
    %v1871 = vunpack.c.h.b16 %v1115
    %v1872 = vunpack.c.l.b16 %v1116
    %v1873 = vunpack.c.h.b16 %v1116
    %v1874 = vunpack.c.l.b16 %v1117
    %v1875 = vunpack.c.h.b16 %v1117
    %v1876 = vunpack.c.l.b16 %v1118
    %v1877 = vunpack.c.h.b16 %v1118
    %v1878 = vunpack.c.l.b16 %v1119
    %v1879 = vunpack.c.h.b16 %v1119
    %v1880 = vunpack.c.l.b16 %v1120
    %v1881 = vunpack.c.h.b16 %v1120
    %v1882 = vunpack.c.l.b16 %v1121
    %v1883 = vunpack.c.h.b16 %v1121
    %v1884 = vunpack.c.l.b16 %v1122
    %v1885 = vunpack.c.h.b16 %v1122
    %v1886 = vunpack.c.l.b16 %v1123
    %v1887 = vunpack.c.h.b16 %v1123
    %v1888 = vunpack.c.l.b16 %v1124
    %v1889 = vunpack.c.h.b16 %v1124
    %v1890 = vunpack.c.l.b16 %v1125
    %v1891 = vunpack.c.h.b16 %v1125
    %v1892 = vunpack.c.l.b16 %v1126
    %v1893 = vunpack.c.h.b16 %v1126
    %v1894 = vunpack.c.l.b16 %v1127
    %v1895 = vunpack.c.h.b16 %v1127
    %v1896 = vunpack.c.l.b16 %v1128
    %v1897 = vunpack.c.h.b16 %v1128
    %v1898 = vunpack.c.l.b16 %v1129
    %v1899 = vunpack.c.h.b16 %v1129
    %v1900 = vunpack.c.l.b16 %v1130
    %v1901 = vunpack.c.h.b16 %v1130
    %v1902 = vunpack.c.l.b16 %v1131
    %v1903 = vunpack.c.h.b16 %v1131
    %v1904 = vunpack.c.l.b16 %v1132
    %v1905 = vunpack.c.h.b16 %v1132
    %v1906 = vunpack.c.l.b16 %v1133
    %v1907 = vunpack.c.h.b16 %v1133
    %v1908 = vunpack.c.l.b16 %v1134
    %v1909 = vunpack.c.h.b16 %v1134
    %v1910 = vunpack.c.l.b16 %v1135
    %v1911 = vunpack.c.h.b16 %v1135
    %v1912 = vunpack.c.l.b16 %v1136
    %v1913 = vunpack.c.h.b16 %v1136
    %v1914 = vunpack.c.l.b16 %v1137
    %v1915 = vunpack.c.h.b16 %v1137
    %v1916 = vunpack.c.l.b16 %v1138
    %v1917 = vunpack.c.h.b16 %v1138
    %v1918 = vunpack.c.l.b16 %v1139
    %v1919 = vunpack.c.h.b16 %v1139
    %v1920 = vunpack.c.l.b16 %v1140
    %v1921 = vunpack.c.h.b16 %v1140
    %v1922 = vunpack.c.l.b16 %v1141
    %v1923 = vunpack.c.h.b16 %v1141
    %v1924 = vunpack.c.l.b16 %v1142
    %v1925 = vunpack.c.h.b16 %v1142
    %v1926 = vunpack.c.l.b16 %v1143
    %v1927 = vunpack.c.h.b16 %v1143
    %v1928 = vunpack.c.l.b16 %v1144
    %v1929 = vunpack.c.h.b16 %v1144
    %v1930 = vunpack.c.l.b16 %v1145
    %v1931 = vunpack.c.h.b16 %v1145
    %v1932 = vpack.c.b16 %v1428, %v1420
    %v1933 = vpack.c.b16 %v1429, %v1421
    %v1934 = vpack.c.b16 %v1430, %v1422
    %v1935 = vpack.c.b16 %v1431, %v1423
    %v1936 = vpack.c.b16 %v1432, %v1424
    %v1937 = vpack.c.b16 %v1433, %v1425
    %v1938 = vpack.c.b16 %v1434, %v1426
    %v1939 = vpack.c.b16 %v1435, %v1427
    %v1940 = vpack.c.b16 %v1444, %v1436
    %v1941 = vpack.c.b16 %v1445, %v1437
    %v1942 = vpack.c.b16 %v1446, %v1438
    %v1943 = vpack.c.b16 %v1447, %v1439
    %v1944 = vpack.c.b16 %v1448, %v1440
    %v1945 = vpack.c.b16 %v1449, %v1441
    %v1946 = vpack.c.b16 %v1450, %v1442
    %v1947 = vpack.c.b16 %v1451, %v1443
    %v1948 = vpack.c.b16 %v1460, %v1452
    %v1949 = vpack.c.b16 %v1461, %v1453
    %v1950 = vpack.c.b16 %v1462, %v1454
    %v1951 = vpack.c.b16 %v1463, %v1455
    %v1952 = vpack.c.b16 %v1464, %v1456
    %v1953 = vpack.c.b16 %v1465, %v1457
    %v1954 = vpack.c.b16 %v1466, %v1458
    %v1955 = vpack.c.b16 %v1467, %v1459
    %v1956 = vpack.c.b16 %v1476, %v1468
    %v1957 = vpack.c.b16 %v1477, %v1469
    %v1958 = vpack.c.b16 %v1478, %v1470
    %v1959 = vpack.c.b16 %v1479, %v1471
    %v1960 = vpack.c.b16 %v1480, %v1472
    %v1961 = vpack.c.b16 %v1481, %v1473
    %v1962 = vpack.c.b16 %v1482, %v1474
    %v1963 = vpack.c.b16 %v1483, %v1475
    %v1964 = vpack.c.b16 %v1492, %v1484
    %v1965 = vpack.c.b16 %v1493, %v1485
    %v1966 = vpack.c.b16 %v1494, %v1486
    %v1967 = vpack.c.b16 %v1495, %v1487
    %v1968 = vpack.c.b16 %v1496, %v1488
    %v1969 = vpack.c.b16 %v1497, %v1489
    %v1970 = vpack.c.b16 %v1498, %v1490
    %v1971 = vpack.c.b16 %v1499, %v1491
    %v1972 = vpack.c.b16 %v1508, %v1500
    %v1973 = vpack.c.b16 %v1509, %v1501
    %v1974 = vpack.c.b16 %v1510, %v1502
    %v1975 = vpack.c.b16 %v1511, %v1503
    %v1976 = vpack.c.b16 %v1512, %v1504
    %v1977 = vpack.c.b16 %v1513, %v1505
    %v1978 = vpack.c.b16 %v1514, %v1506
    %v1979 = vpack.c.b16 %v1515, %v1507
    %v1980 = vpack.c.b16 %v1524, %v1516
    %v1981 = vpack.c.b16 %v1525, %v1517
    %v1982 = vpack.c.b16 %v1526, %v1518
    %v1983 = vpack.c.b16 %v1527, %v1519
    %v1984 = vpack.c.b16 %v1528, %v1520
    %v1985 = vpack.c.b16 %v1529, %v1521
    %v1986 = vpack.c.b16 %v1530, %v1522
    %v1987 = vpack.c.b16 %v1531, %v1523
    %v1988 = vpack.c.b16 %v1540, %v1532
    %v1989 = vpack.c.b16 %v1541, %v1533
    %v1990 = vpack.c.b16 %v1542, %v1534
    %v1991 = vpack.c.b16 %v1543, %v1535
    %v1992 = vpack.c.b16 %v1544, %v1536
    %v1993 = vpack.c.b16 %v1545, %v1537
    %v1994 = vpack.c.b16 %v1546, %v1538
    %v1995 = vpack.c.b16 %v1547, %v1539
    %v1996 = vpack.c.b16 %v1556, %v1548
    %v1997 = vpack.c.b16 %v1557, %v1549
    %v1998 = vpack.c.b16 %v1558, %v1550
    %v1999 = vpack.c.b16 %v1559, %v1551
    %v2000 = vpack.c.b16 %v1560, %v1552
    %v2001 = vpack.c.b16 %v1561, %v1553
    %v2002 = vpack.c.b16 %v1562, %v1554
    %v2003 = vpack.c.b16 %v1563, %v1555
    %v2004 = vpack.c.b16 %v1572, %v1564
    %v2005 = vpack.c.b16 %v1573, %v1565
    %v2006 = vpack.c.b16 %v1574, %v1566
    %v2007 = vpack.c.b16 %v1575, %v1567
    %v2008 = vpack.c.b16 %v1576, %v1568
    %v2009 = vpack.c.b16 %v1577, %v1569
    %v2010 = vpack.c.b16 %v1578, %v1570
    %v2011 = vpack.c.b16 %v1579, %v1571
    %v2012 = vpack.c.b16 %v1588, %v1580
    %v2013 = vpack.c.b16 %v1589, %v1581
    %v2014 = vpack.c.b16 %v1590, %v1582
    %v2015 = vpack.c.b16 %v1591, %v1583
    %v2016 = vpack.c.b16 %v1592, %v1584
    %v2017 = vpack.c.b16 %v1593, %v1585
    %v2018 = vpack.c.b16 %v1594, %v1586
    %v2019 = vpack.c.b16 %v1595, %v1587
    %v2020 = vpack.c.b16 %v1604, %v1596
    %v2021 = vpack.c.b16 %v1605, %v1597
    %v2022 = vpack.c.b16 %v1606, %v1598
    %v2023 = vpack.c.b16 %v1607, %v1599
    %v2024 = vpack.c.b16 %v1608, %v1600
    %v2025 = vpack.c.b16 %v1609, %v1601
    %v2026 = vpack.c.b16 %v1610, %v1602
    %v2027 = vpack.c.b16 %v1611, %v1603
    %v2028 = vpack.c.b16 %v1620, %v1612
    %v2029 = vpack.c.b16 %v1621, %v1613
    %v2030 = vpack.c.b16 %v1622, %v1614
    %v2031 = vpack.c.b16 %v1623, %v1615
    %v2032 = vpack.c.b16 %v1624, %v1616
    %v2033 = vpack.c.b16 %v1625, %v1617
    %v2034 = vpack.c.b16 %v1626, %v1618
    %v2035 = vpack.c.b16 %v1627, %v1619
    %v2036 = vpack.c.b16 %v1636, %v1628
    %v2037 = vpack.c.b16 %v1637, %v1629
    %v2038 = vpack.c.b16 %v1638, %v1630
    %v2039 = vpack.c.b16 %v1639, %v1631
    %v2040 = vpack.c.b16 %v1640, %v1632
    %v2041 = vpack.c.b16 %v1641, %v1633
    %v2042 = vpack.c.b16 %v1642, %v1634
    %v2043 = vpack.c.b16 %v1643, %v1635
    %v2044 = vpack.c.b16 %v1652, %v1644
    %v2045 = vpack.c.b16 %v1653, %v1645
    %v2046 = vpack.c.b16 %v1654, %v1646
    %v2047 = vpack.c.b16 %v1655, %v1647
    %v2048 = vpack.c.b16 %v1656, %v1648
    %v2049 = vpack.c.b16 %v1657, %v1649
    %v2050 = vpack.c.b16 %v1658, %v1650
    %v2051 = vpack.c.b16 %v1659, %v1651
    %v2052 = vpack.c.b16 %v1668, %v1660
    %v2053 = vpack.c.b16 %v1669, %v1661
    %v2054 = vpack.c.b16 %v1670, %v1662
    %v2055 = vpack.c.b16 %v1671, %v1663
    %v2056 = vpack.c.b16 %v1672, %v1664
    %v2057 = vpack.c.b16 %v1673, %v1665
    %v2058 = vpack.c.b16 %v1674, %v1666
    %v2059 = vpack.c.b16 %v1675, %v1667
    %v2060 = vpack.c.b16 %v1684, %v1676
    %v2061 = vpack.c.b16 %v1685, %v1677
    %v2062 = vpack.c.b16 %v1686, %v1678
    %v2063 = vpack.c.b16 %v1687, %v1679
    %v2064 = vpack.c.b16 %v1688, %v1680
    %v2065 = vpack.c.b16 %v1689, %v1681
    %v2066 = vpack.c.b16 %v1690, %v1682
    %v2067 = vpack.c.b16 %v1691, %v1683
    %v2068 = vpack.c.b16 %v1700, %v1692
    %v2069 = vpack.c.b16 %v1701, %v1693
    %v2070 = vpack.c.b16 %v1702, %v1694
    %v2071 = vpack.c.b16 %v1703, %v1695
    %v2072 = vpack.c.b16 %v1704, %v1696
    %v2073 = vpack.c.b16 %v1705, %v1697
    %v2074 = vpack.c.b16 %v1706, %v1698
    %v2075 = vpack.c.b16 %v1707, %v1699
    %v2076 = vpack.c.b16 %v1716, %v1708
    %v2077 = vpack.c.b16 %v1717, %v1709
    %v2078 = vpack.c.b16 %v1718, %v1710
    %v2079 = vpack.c.b16 %v1719, %v1711
    %v2080 = vpack.c.b16 %v1720, %v1712
    %v2081 = vpack.c.b16 %v1721, %v1713
    %v2082 = vpack.c.b16 %v1722, %v1714
    %v2083 = vpack.c.b16 %v1723, %v1715
    %v2084 = vpack.c.b16 %v1732, %v1724
    %v2085 = vpack.c.b16 %v1733, %v1725
    %v2086 = vpack.c.b16 %v1734, %v1726
    %v2087 = vpack.c.b16 %v1735, %v1727
    %v2088 = vpack.c.b16 %v1736, %v1728
    %v2089 = vpack.c.b16 %v1737, %v1729
    %v2090 = vpack.c.b16 %v1738, %v1730
    %v2091 = vpack.c.b16 %v1739, %v1731
    %v2092 = vpack.c.b16 %v1748, %v1740
    %v2093 = vpack.c.b16 %v1749, %v1741
    %v2094 = vpack.c.b16 %v1750, %v1742
    %v2095 = vpack.c.b16 %v1751, %v1743
    %v2096 = vpack.c.b16 %v1752, %v1744
    %v2097 = vpack.c.b16 %v1753, %v1745
    %v2098 = vpack.c.b16 %v1754, %v1746
    %v2099 = vpack.c.b16 %v1755, %v1747
    %v2100 = vpack.c.b16 %v1764, %v1756
    %v2101 = vpack.c.b16 %v1765, %v1757
    %v2102 = vpack.c.b16 %v1766, %v1758
    %v2103 = vpack.c.b16 %v1767, %v1759
    %v2104 = vpack.c.b16 %v1768, %v1760
    %v2105 = vpack.c.b16 %v1769, %v1761
    %v2106 = vpack.c.b16 %v1770, %v1762
    %v2107 = vpack.c.b16 %v1771, %v1763
    %v2108 = vpack.c.b16 %v1780, %v1772
    %v2109 = vpack.c.b16 %v1781, %v1773
    %v2110 = vpack.c.b16 %v1782, %v1774
    %v2111 = vpack.c.b16 %v1783, %v1775
    %v2112 = vpack.c.b16 %v1784, %v1776
    %v2113 = vpack.c.b16 %v1785, %v1777
    %v2114 = vpack.c.b16 %v1786, %v1778
    %v2115 = vpack.c.b16 %v1787, %v1779
    %v2116 = vpack.c.b16 %v1796, %v1788
    %v2117 = vpack.c.b16 %v1797, %v1789
    %v2118 = vpack.c.b16 %v1798, %v1790
    %v2119 = vpack.c.b16 %v1799, %v1791
    %v2120 = vpack.c.b16 %v1800, %v1792
    %v2121 = vpack.c.b16 %v1801, %v1793
    %v2122 = vpack.c.b16 %v1802, %v1794
    %v2123 = vpack.c.b16 %v1803, %v1795
    %v2124 = vpack.c.b16 %v1812, %v1804
    %v2125 = vpack.c.b16 %v1813, %v1805
    %v2126 = vpack.c.b16 %v1814, %v1806
    %v2127 = vpack.c.b16 %v1815, %v1807
    %v2128 = vpack.c.b16 %v1816, %v1808
    %v2129 = vpack.c.b16 %v1817, %v1809
    %v2130 = vpack.c.b16 %v1818, %v1810
    %v2131 = vpack.c.b16 %v1819, %v1811
    %v2132 = vpack.c.b16 %v1828, %v1820
    %v2133 = vpack.c.b16 %v1829, %v1821
    %v2134 = vpack.c.b16 %v1830, %v1822
    %v2135 = vpack.c.b16 %v1831, %v1823
    %v2136 = vpack.c.b16 %v1832, %v1824
    %v2137 = vpack.c.b16 %v1833, %v1825
    %v2138 = vpack.c.b16 %v1834, %v1826
    %v2139 = vpack.c.b16 %v1835, %v1827
    %v2140 = vpack.c.b16 %v1844, %v1836
    %v2141 = vpack.c.b16 %v1845, %v1837
    %v2142 = vpack.c.b16 %v1846, %v1838
    %v2143 = vpack.c.b16 %v1847, %v1839
    %v2144 = vpack.c.b16 %v1848, %v1840
    %v2145 = vpack.c.b16 %v1849, %v1841
    %v2146 = vpack.c.b16 %v1850, %v1842
    %v2147 = vpack.c.b16 %v1851, %v1843
    %v2148 = vpack.c.b16 %v1860, %v1852
    %v2149 = vpack.c.b16 %v1861, %v1853
    %v2150 = vpack.c.b16 %v1862, %v1854
    %v2151 = vpack.c.b16 %v1863, %v1855
    %v2152 = vpack.c.b16 %v1864, %v1856
    %v2153 = vpack.c.b16 %v1865, %v1857
    %v2154 = vpack.c.b16 %v1866, %v1858
    %v2155 = vpack.c.b16 %v1867, %v1859
    %v2156 = vpack.c.b16 %v1876, %v1868
    %v2157 = vpack.c.b16 %v1877, %v1869
    %v2158 = vpack.c.b16 %v1878, %v1870
    %v2159 = vpack.c.b16 %v1879, %v1871
    %v2160 = vpack.c.b16 %v1880, %v1872
    %v2161 = vpack.c.b16 %v1881, %v1873
    %v2162 = vpack.c.b16 %v1882, %v1874
    %v2163 = vpack.c.b16 %v1883, %v1875
    %v2164 = vpack.c.b16 %v1892, %v1884
    %v2165 = vpack.c.b16 %v1893, %v1885
    %v2166 = vpack.c.b16 %v1894, %v1886
    %v2167 = vpack.c.b16 %v1895, %v1887
    %v2168 = vpack.c.b16 %v1896, %v1888
    %v2169 = vpack.c.b16 %v1897, %v1889
    %v2170 = vpack.c.b16 %v1898, %v1890
    %v2171 = vpack.c.b16 %v1899, %v1891
    %v2172 = vpack.c.b16 %v1908, %v1900
    %v2173 = vpack.c.b16 %v1909, %v1901
    %v2174 = vpack.c.b16 %v1910, %v1902
    %v2175 = vpack.c.b16 %v1911, %v1903
    %v2176 = vpack.c.b16 %v1912, %v1904
    %v2177 = vpack.c.b16 %v1913, %v1905
    %v2178 = vpack.c.b16 %v1914, %v1906
    %v2179 = vpack.c.b16 %v1915, %v1907
    %v2180 = vpack.c.b16 %v1924, %v1916
    %v2181 = vpack.c.b16 %v1925, %v1917
    %v2182 = vpack.c.b16 %v1926, %v1918
    %v2183 = vpack.c.b16 %v1927, %v1919
    %v2184 = vpack.c.b16 %v1928, %v1920
    %v2185 = vpack.c.b16 %v1929, %v1921
    %v2186 = vpack.c.b16 %v1930, %v1922
    %v2187 = vpack.c.b16 %v1931, %v1923
    %2444 = vmatpush.bf16.msra.mxu0 %v1988
    %2445 = vmatpush.bf16.msra.mxu0 %v1980
    %2446 = vmatpush.bf16.msra.mxu0 %v1972
    %2447 = vmatpush.bf16.msra.mxu0 %v1964
    %2448 = vmatpush.bf16.msra.mxu0 %v1956
    %2449 = vmatpush.bf16.msra.mxu0 %v1948
    %2450 = vmatpush.bf16.msra.mxu0 %v1940
    %2451 = vmatpush.bf16.msra.mxu0 %v1932
    %2452 = vmatmul.bf16.gmra.mxu0 %v886
    %v2453 = vpop.f32.mrf.mxu0
    %v2454 = vadd.f32 %v1148, %v2453
    %v2455 = vpop.f32.mrf.mxu0
    %v2456 = vadd.f32 %v1148, %v2455
    %2457 = vdwg.mxu0
    %2458 = vmatpush.bf16.msra.mxu0 %v2052
    %2459 = vmatpush.bf16.msra.mxu0 %v2044
    %2460 = vmatpush.bf16.msra.mxu0 %v2036
    %2461 = vmatpush.bf16.msra.mxu0 %v2028
    %2462 = vmatpush.bf16.msra.mxu0 %v2020
    %2463 = vmatpush.bf16.msra.mxu0 %v2012
    %2464 = vmatpush.bf16.msra.mxu0 %v2004
    %2465 = vmatpush.bf16.msra.mxu0 %v1996
    %2466 = vmatmul.bf16.gmra.mxu0 %v887
    %v2467 = vpop.f32.mrf.mxu0
    %v2468 = vadd.f32 %v2454, %v2467
    %v2469 = vpop.f32.mrf.mxu0
    %v2470 = vadd.f32 %v2456, %v2469
    %2471 = vdwg.mxu0
    %2472 = vmatpush.bf16.msra.mxu0 %v2116
    %2473 = vmatpush.bf16.msra.mxu0 %v2108
    %2474 = vmatpush.bf16.msra.mxu0 %v2100
    %2475 = vmatpush.bf16.msra.mxu0 %v2092
    %2476 = vmatpush.bf16.msra.mxu0 %v2084
    %2477 = vmatpush.bf16.msra.mxu0 %v2076
    %2478 = vmatpush.bf16.msra.mxu0 %v2068
    %2479 = vmatpush.bf16.msra.mxu0 %v2060
    %2480 = vmatmul.bf16.gmra.mxu0 %v888
    %v2481 = vpop.f32.mrf.mxu0
    %v2482 = vadd.f32 %v2468, %v2481
    %v2483 = vpop.f32.mrf.mxu0
    %v2484 = vadd.f32 %v2470, %v2483
    %2485 = vdwg.mxu0
    %2486 = vmatpush.bf16.msra.mxu0 %v2180
    %2487 = vmatpush.bf16.msra.mxu0 %v2172
    %2488 = vmatpush.bf16.msra.mxu0 %v2164
    %2489 = vmatpush.bf16.msra.mxu0 %v2156
    %2490 = vmatpush.bf16.msra.mxu0 %v2148
    %2491 = vmatpush.bf16.msra.mxu0 %v2140
    %2492 = vmatpush.bf16.msra.mxu0 %v2132
    %2493 = vmatpush.bf16.msra.mxu0 %v2124
    %2494 = vmatmul.bf16.gmra.mxu0 %v889
    %v2495 = vpop.f32.mrf.mxu0
    %v2496 = vadd.f32 %v2482, %v2495
    %v2497 = vpop.f32.mrf.mxu0
    %v2498 = vadd.f32 %v2484, %v2497
    %2499 = vdwg.mxu0
    %2500 = vmatpush.bf16.msra.mxu0 %v1989
    %2501 = vmatpush.bf16.msra.mxu0 %v1981
    %2502 = vmatpush.bf16.msra.mxu0 %v1973
    %2503 = vmatpush.bf16.msra.mxu0 %v1965
    %2504 = vmatpush.bf16.msra.mxu0 %v1957
    %2505 = vmatpush.bf16.msra.mxu0 %v1949
    %2506 = vmatpush.bf16.msra.mxu0 %v1941
    %2507 = vmatpush.bf16.msra.mxu0 %v1933
    %2508 = vmatmul.bf16.gmra.mxu0 %v886
    %v2509 = vpop.f32.mrf.mxu0
    %v2510 = vadd.f32 %v1149, %v2509
    %v2511 = vpop.f32.mrf.mxu0
    %v2512 = vadd.f32 %v1149, %v2511
    %2513 = vdwg.mxu0
    %2514 = vmatpush.bf16.msra.mxu0 %v2053
    %2515 = vmatpush.bf16.msra.mxu0 %v2045
    %2516 = vmatpush.bf16.msra.mxu0 %v2037
    %2517 = vmatpush.bf16.msra.mxu0 %v2029
    %2518 = vmatpush.bf16.msra.mxu0 %v2021
    %2519 = vmatpush.bf16.msra.mxu0 %v2013
    %2520 = vmatpush.bf16.msra.mxu0 %v2005
    %2521 = vmatpush.bf16.msra.mxu0 %v1997
    %2522 = vmatmul.bf16.gmra.mxu0 %v887
    %v2523 = vpop.f32.mrf.mxu0
    %v2524 = vadd.f32 %v2510, %v2523
    %v2525 = vpop.f32.mrf.mxu0
    %v2526 = vadd.f32 %v2512, %v2525
    %2527 = vdwg.mxu0
    %2528 = vmatpush.bf16.msra.mxu0 %v2117
    %2529 = vmatpush.bf16.msra.mxu0 %v2109
    %2530 = vmatpush.bf16.msra.mxu0 %v2101
    %2531 = vmatpush.bf16.msra.mxu0 %v2093
    %2532 = vmatpush.bf16.msra.mxu0 %v2085
    %2533 = vmatpush.bf16.msra.mxu0 %v2077
    %2534 = vmatpush.bf16.msra.mxu0 %v2069
    %2535 = vmatpush.bf16.msra.mxu0 %v2061
    %2536 = vmatmul.bf16.gmra.mxu0 %v888
    %v2537 = vpop.f32.mrf.mxu0
    %v2538 = vadd.f32 %v2524, %v2537
    %v2539 = vpop.f32.mrf.mxu0
    %v2540 = vadd.f32 %v2526, %v2539
    %2541 = vdwg.mxu0
    %2542 = vmatpush.bf16.msra.mxu0 %v2181
    %2543 = vmatpush.bf16.msra.mxu0 %v2173
    %2544 = vmatpush.bf16.msra.mxu0 %v2165
    %2545 = vmatpush.bf16.msra.mxu0 %v2157
    %2546 = vmatpush.bf16.msra.mxu0 %v2149
    %2547 = vmatpush.bf16.msra.mxu0 %v2141
    %2548 = vmatpush.bf16.msra.mxu0 %v2133
    %2549 = vmatpush.bf16.msra.mxu0 %v2125
    %2550 = vmatmul.bf16.gmra.mxu0 %v889
    %v2551 = vpop.f32.mrf.mxu0
    %v2552 = vadd.f32 %v2538, %v2551
    %v2553 = vpop.f32.mrf.mxu0
    %v2554 = vadd.f32 %v2540, %v2553
    %2555 = vdwg.mxu0
    %2556 = vmatpush.bf16.msra.mxu0 %v1990
    %2557 = vmatpush.bf16.msra.mxu0 %v1982
    %2558 = vmatpush.bf16.msra.mxu0 %v1974
    %2559 = vmatpush.bf16.msra.mxu0 %v1966
    %2560 = vmatpush.bf16.msra.mxu0 %v1958
    %2561 = vmatpush.bf16.msra.mxu0 %v1950
    %2562 = vmatpush.bf16.msra.mxu0 %v1942
    %2563 = vmatpush.bf16.msra.mxu0 %v1934
    %2564 = vmatmul.bf16.gmra.mxu0 %v886
    %v2565 = vpop.f32.mrf.mxu0
    %v2566 = vadd.f32 %v1150, %v2565
    %v2567 = vpop.f32.mrf.mxu0
    %v2568 = vadd.f32 %v1150, %v2567
    %2569 = vdwg.mxu0
    %2570 = vmatpush.bf16.msra.mxu0 %v2054
    %2571 = vmatpush.bf16.msra.mxu0 %v2046
    %2572 = vmatpush.bf16.msra.mxu0 %v2038
    %2573 = vmatpush.bf16.msra.mxu0 %v2030
    %2574 = vmatpush.bf16.msra.mxu0 %v2022
    %2575 = vmatpush.bf16.msra.mxu0 %v2014
    %2576 = vmatpush.bf16.msra.mxu0 %v2006
    %2577 = vmatpush.bf16.msra.mxu0 %v1998
    %2578 = vmatmul.bf16.gmra.mxu0 %v887
    %v2579 = vpop.f32.mrf.mxu0
    %v2580 = vadd.f32 %v2566, %v2579
    %v2581 = vpop.f32.mrf.mxu0
    %v2582 = vadd.f32 %v2568, %v2581
    %2583 = vdwg.mxu0
    %2584 = vmatpush.bf16.msra.mxu0 %v2118
    %2585 = vmatpush.bf16.msra.mxu0 %v2110
    %2586 = vmatpush.bf16.msra.mxu0 %v2102
    %2587 = vmatpush.bf16.msra.mxu0 %v2094
    %2588 = vmatpush.bf16.msra.mxu0 %v2086
    %2589 = vmatpush.bf16.msra.mxu0 %v2078
    %2590 = vmatpush.bf16.msra.mxu0 %v2070
    %2591 = vmatpush.bf16.msra.mxu0 %v2062
    %2592 = vmatmul.bf16.gmra.mxu0 %v888
    %v2593 = vpop.f32.mrf.mxu0
    %v2594 = vadd.f32 %v2580, %v2593
    %v2595 = vpop.f32.mrf.mxu0
    %v2596 = vadd.f32 %v2582, %v2595
    %2597 = vdwg.mxu0
    %2598 = vmatpush.bf16.msra.mxu0 %v2182
    %2599 = vmatpush.bf16.msra.mxu0 %v2174
    %2600 = vmatpush.bf16.msra.mxu0 %v2166
    %2601 = vmatpush.bf16.msra.mxu0 %v2158
    %2602 = vmatpush.bf16.msra.mxu0 %v2150
    %2603 = vmatpush.bf16.msra.mxu0 %v2142
    %2604 = vmatpush.bf16.msra.mxu0 %v2134
    %2605 = vmatpush.bf16.msra.mxu0 %v2126
    %2606 = vmatmul.bf16.gmra.mxu0 %v889
    %v2607 = vpop.f32.mrf.mxu0
    %v2608 = vadd.f32 %v2594, %v2607
    %v2609 = vpop.f32.mrf.mxu0
    %v2610 = vadd.f32 %v2596, %v2609
    %2611 = vdwg.mxu0
    %2612 = vmatpush.bf16.msra.mxu0 %v1991
    %2613 = vmatpush.bf16.msra.mxu0 %v1983
    %2614 = vmatpush.bf16.msra.mxu0 %v1975
    %2615 = vmatpush.bf16.msra.mxu0 %v1967
    %2616 = vmatpush.bf16.msra.mxu0 %v1959
    %2617 = vmatpush.bf16.msra.mxu0 %v1951
    %2618 = vmatpush.bf16.msra.mxu0 %v1943
    %2619 = vmatpush.bf16.msra.mxu0 %v1935
    %2620 = vmatmul.bf16.gmra.mxu0 %v886
    %v2621 = vpop.f32.mrf.mxu0
    %v2622 = vadd.f32 %v1151, %v2621
    %v2623 = vpop.f32.mrf.mxu0
    %v2624 = vadd.f32 %v1151, %v2623
    %2625 = vdwg.mxu0
    %2626 = vmatpush.bf16.msra.mxu0 %v2055
    %2627 = vmatpush.bf16.msra.mxu0 %v2047
    %2628 = vmatpush.bf16.msra.mxu0 %v2039
    %2629 = vmatpush.bf16.msra.mxu0 %v2031
    %2630 = vmatpush.bf16.msra.mxu0 %v2023
    %2631 = vmatpush.bf16.msra.mxu0 %v2015
    %2632 = vmatpush.bf16.msra.mxu0 %v2007
    %2633 = vmatpush.bf16.msra.mxu0 %v1999
    %2634 = vmatmul.bf16.gmra.mxu0 %v887
    %v2635 = vpop.f32.mrf.mxu0
    %v2636 = vadd.f32 %v2622, %v2635
    %v2637 = vpop.f32.mrf.mxu0
    %v2638 = vadd.f32 %v2624, %v2637
    %2639 = vdwg.mxu0
    %2640 = vmatpush.bf16.msra.mxu0 %v2119
    %2641 = vmatpush.bf16.msra.mxu0 %v2111
    %2642 = vmatpush.bf16.msra.mxu0 %v2103
    %2643 = vmatpush.bf16.msra.mxu0 %v2095
    %2644 = vmatpush.bf16.msra.mxu0 %v2087
    %2645 = vmatpush.bf16.msra.mxu0 %v2079
    %2646 = vmatpush.bf16.msra.mxu0 %v2071
    %2647 = vmatpush.bf16.msra.mxu0 %v2063
    %2648 = vmatmul.bf16.gmra.mxu0 %v888
    %v2649 = vpop.f32.mrf.mxu0
    %v2650 = vadd.f32 %v2636, %v2649
    %v2651 = vpop.f32.mrf.mxu0
    %v2652 = vadd.f32 %v2638, %v2651
    %2653 = vdwg.mxu0
    %2654 = vmatpush.bf16.msra.mxu0 %v2183
    %2655 = vmatpush.bf16.msra.mxu0 %v2175
    %2656 = vmatpush.bf16.msra.mxu0 %v2167
    %2657 = vmatpush.bf16.msra.mxu0 %v2159
    %2658 = vmatpush.bf16.msra.mxu0 %v2151
    %2659 = vmatpush.bf16.msra.mxu0 %v2143
    %2660 = vmatpush.bf16.msra.mxu0 %v2135
    %2661 = vmatpush.bf16.msra.mxu0 %v2127
    %2662 = vmatmul.bf16.gmra.mxu0 %v889
    %v2663 = vpop.f32.mrf.mxu0
    %v2664 = vadd.f32 %v2650, %v2663
    %v2665 = vpop.f32.mrf.mxu0
    %v2666 = vadd.f32 %v2652, %v2665
    %2667 = vdwg.mxu0
    %2668 = vmatpush.bf16.msra.mxu0 %v1992
    %2669 = vmatpush.bf16.msra.mxu0 %v1984
    %2670 = vmatpush.bf16.msra.mxu0 %v1976
    %2671 = vmatpush.bf16.msra.mxu0 %v1968
    %2672 = vmatpush.bf16.msra.mxu0 %v1960
    %2673 = vmatpush.bf16.msra.mxu0 %v1952
    %2674 = vmatpush.bf16.msra.mxu0 %v1944
    %2675 = vmatpush.bf16.msra.mxu0 %v1936
    %2676 = vmatmul.bf16.gmra.mxu0 %v886
    %v2677 = vpop.f32.mrf.mxu0
    %v2678 = vadd.f32 %v1152, %v2677
    %v2679 = vpop.f32.mrf.mxu0
    %v2680 = vadd.f32 %v1152, %v2679
    %2681 = vdwg.mxu0
    %2682 = vmatpush.bf16.msra.mxu0 %v2056
    %2683 = vmatpush.bf16.msra.mxu0 %v2048
    %2684 = vmatpush.bf16.msra.mxu0 %v2040
    %2685 = vmatpush.bf16.msra.mxu0 %v2032
    %2686 = vmatpush.bf16.msra.mxu0 %v2024
    %2687 = vmatpush.bf16.msra.mxu0 %v2016
    %2688 = vmatpush.bf16.msra.mxu0 %v2008
    %2689 = vmatpush.bf16.msra.mxu0 %v2000
    %2690 = vmatmul.bf16.gmra.mxu0 %v887
    %v2691 = vpop.f32.mrf.mxu0
    %v2692 = vadd.f32 %v2678, %v2691
    %v2693 = vpop.f32.mrf.mxu0
    %v2694 = vadd.f32 %v2680, %v2693
    %2695 = vdwg.mxu0
    %2696 = vmatpush.bf16.msra.mxu0 %v2120
    %2697 = vmatpush.bf16.msra.mxu0 %v2112
    %2698 = vmatpush.bf16.msra.mxu0 %v2104
    %2699 = vmatpush.bf16.msra.mxu0 %v2096
    %2700 = vmatpush.bf16.msra.mxu0 %v2088
    %2701 = vmatpush.bf16.msra.mxu0 %v2080
    %2702 = vmatpush.bf16.msra.mxu0 %v2072
    %2703 = vmatpush.bf16.msra.mxu0 %v2064
    %2704 = vmatmul.bf16.gmra.mxu0 %v888
    %v2705 = vpop.f32.mrf.mxu0
    %v2706 = vadd.f32 %v2692, %v2705
    %v2707 = vpop.f32.mrf.mxu0
    %v2708 = vadd.f32 %v2694, %v2707
    %2709 = vdwg.mxu0
    %2710 = vmatpush.bf16.msra.mxu0 %v2184
    %2711 = vmatpush.bf16.msra.mxu0 %v2176
    %2712 = vmatpush.bf16.msra.mxu0 %v2168
    %2713 = vmatpush.bf16.msra.mxu0 %v2160
    %2714 = vmatpush.bf16.msra.mxu0 %v2152
    %2715 = vmatpush.bf16.msra.mxu0 %v2144
    %2716 = vmatpush.bf16.msra.mxu0 %v2136
    %2717 = vmatpush.bf16.msra.mxu0 %v2128
    %2718 = vmatmul.bf16.gmra.mxu0 %v889
    %v2719 = vpop.f32.mrf.mxu0
    %v2720 = vadd.f32 %v2706, %v2719
    %v2721 = vpop.f32.mrf.mxu0
    %v2722 = vadd.f32 %v2708, %v2721
    %2723 = vdwg.mxu0
    %2724 = vmatpush.bf16.msra.mxu0 %v1993
    %2725 = vmatpush.bf16.msra.mxu0 %v1985
    %2726 = vmatpush.bf16.msra.mxu0 %v1977
    %2727 = vmatpush.bf16.msra.mxu0 %v1969
    %2728 = vmatpush.bf16.msra.mxu0 %v1961
    %2729 = vmatpush.bf16.msra.mxu0 %v1953
    %2730 = vmatpush.bf16.msra.mxu0 %v1945
    %2731 = vmatpush.bf16.msra.mxu0 %v1937
    %2732 = vmatmul.bf16.gmra.mxu0 %v886
    %v2733 = vpop.f32.mrf.mxu0
    %v2734 = vadd.f32 %v1153, %v2733
    %v2735 = vpop.f32.mrf.mxu0
    %v2736 = vadd.f32 %v1153, %v2735
    %2737 = vdwg.mxu0
    %2738 = vmatpush.bf16.msra.mxu0 %v2057
    %2739 = vmatpush.bf16.msra.mxu0 %v2049
    %2740 = vmatpush.bf16.msra.mxu0 %v2041
    %2741 = vmatpush.bf16.msra.mxu0 %v2033
    %2742 = vmatpush.bf16.msra.mxu0 %v2025
    %2743 = vmatpush.bf16.msra.mxu0 %v2017
    %2744 = vmatpush.bf16.msra.mxu0 %v2009
    %2745 = vmatpush.bf16.msra.mxu0 %v2001
    %2746 = vmatmul.bf16.gmra.mxu0 %v887
    %v2747 = vpop.f32.mrf.mxu0
    %v2748 = vadd.f32 %v2734, %v2747
    %v2749 = vpop.f32.mrf.mxu0
    %v2750 = vadd.f32 %v2736, %v2749
    %2751 = vdwg.mxu0
    %2752 = vmatpush.bf16.msra.mxu0 %v2121
    %2753 = vmatpush.bf16.msra.mxu0 %v2113
    %2754 = vmatpush.bf16.msra.mxu0 %v2105
    %2755 = vmatpush.bf16.msra.mxu0 %v2097
    %2756 = vmatpush.bf16.msra.mxu0 %v2089
    %2757 = vmatpush.bf16.msra.mxu0 %v2081
    %2758 = vmatpush.bf16.msra.mxu0 %v2073
    %2759 = vmatpush.bf16.msra.mxu0 %v2065
    %2760 = vmatmul.bf16.gmra.mxu0 %v888
    %v2761 = vpop.f32.mrf.mxu0
    %v2762 = vadd.f32 %v2748, %v2761
    %v2763 = vpop.f32.mrf.mxu0
    %v2764 = vadd.f32 %v2750, %v2763
    %2765 = vdwg.mxu0
    %2766 = vmatpush.bf16.msra.mxu0 %v2185
    %2767 = vmatpush.bf16.msra.mxu0 %v2177
    %2768 = vmatpush.bf16.msra.mxu0 %v2169
    %2769 = vmatpush.bf16.msra.mxu0 %v2161
    %2770 = vmatpush.bf16.msra.mxu0 %v2153
    %2771 = vmatpush.bf16.msra.mxu0 %v2145
    %2772 = vmatpush.bf16.msra.mxu0 %v2137
    %2773 = vmatpush.bf16.msra.mxu0 %v2129
    %2774 = vmatmul.bf16.gmra.mxu0 %v889
    %v2775 = vpop.f32.mrf.mxu0
    %v2776 = vadd.f32 %v2762, %v2775
    %v2777 = vpop.f32.mrf.mxu0
    %v2778 = vadd.f32 %v2764, %v2777
    %2779 = vdwg.mxu0
    %2780 = vmatpush.bf16.msra.mxu0 %v1994
    %2781 = vmatpush.bf16.msra.mxu0 %v1986
    %2782 = vmatpush.bf16.msra.mxu0 %v1978
    %2783 = vmatpush.bf16.msra.mxu0 %v1970
    %2784 = vmatpush.bf16.msra.mxu0 %v1962
    %2785 = vmatpush.bf16.msra.mxu0 %v1954
    %2786 = vmatpush.bf16.msra.mxu0 %v1946
    %2787 = vmatpush.bf16.msra.mxu0 %v1938
    %2788 = vmatmul.bf16.gmra.mxu0 %v886
    %v2789 = vpop.f32.mrf.mxu0
    %v2790 = vadd.f32 %v1154, %v2789
    %v2791 = vpop.f32.mrf.mxu0
    %v2792 = vadd.f32 %v1154, %v2791
    %2793 = vdwg.mxu0
    %2794 = vmatpush.bf16.msra.mxu0 %v2058
    %2795 = vmatpush.bf16.msra.mxu0 %v2050
    %2796 = vmatpush.bf16.msra.mxu0 %v2042
    %2797 = vmatpush.bf16.msra.mxu0 %v2034
    %2798 = vmatpush.bf16.msra.mxu0 %v2026
    %2799 = vmatpush.bf16.msra.mxu0 %v2018
    %2800 = vmatpush.bf16.msra.mxu0 %v2010
    %2801 = vmatpush.bf16.msra.mxu0 %v2002
    %2802 = vmatmul.bf16.gmra.mxu0 %v887
    %v2803 = vpop.f32.mrf.mxu0
    %v2804 = vadd.f32 %v2790, %v2803
    %v2805 = vpop.f32.mrf.mxu0
    %v2806 = vadd.f32 %v2792, %v2805
    %2807 = vdwg.mxu0
    %2808 = vmatpush.bf16.msra.mxu0 %v2122
    %2809 = vmatpush.bf16.msra.mxu0 %v2114
    %2810 = vmatpush.bf16.msra.mxu0 %v2106
    %2811 = vmatpush.bf16.msra.mxu0 %v2098
    %2812 = vmatpush.bf16.msra.mxu0 %v2090
    %2813 = vmatpush.bf16.msra.mxu0 %v2082
    %2814 = vmatpush.bf16.msra.mxu0 %v2074
    %2815 = vmatpush.bf16.msra.mxu0 %v2066
    %2816 = vmatmul.bf16.gmra.mxu0 %v888
    %v2817 = vpop.f32.mrf.mxu0
    %v2818 = vadd.f32 %v2804, %v2817
    %v2819 = vpop.f32.mrf.mxu0
    %v2820 = vadd.f32 %v2806, %v2819
    %2821 = vdwg.mxu0
    %2822 = vmatpush.bf16.msra.mxu0 %v2186
    %2823 = vmatpush.bf16.msra.mxu0 %v2178
    %2824 = vmatpush.bf16.msra.mxu0 %v2170
    %2825 = vmatpush.bf16.msra.mxu0 %v2162
    %2826 = vmatpush.bf16.msra.mxu0 %v2154
    %2827 = vmatpush.bf16.msra.mxu0 %v2146
    %2828 = vmatpush.bf16.msra.mxu0 %v2138
    %2829 = vmatpush.bf16.msra.mxu0 %v2130
    %2830 = vmatmul.bf16.gmra.mxu0 %v889
    %v2831 = vpop.f32.mrf.mxu0
    %v2832 = vadd.f32 %v2818, %v2831
    %v2833 = vpop.f32.mrf.mxu0
    %v2834 = vadd.f32 %v2820, %v2833
    %2835 = vdwg.mxu0
    %2836 = vmatpush.bf16.msra.mxu0 %v1995
    %2837 = vmatpush.bf16.msra.mxu0 %v1987
    %2838 = vmatpush.bf16.msra.mxu0 %v1979
    %2839 = vmatpush.bf16.msra.mxu0 %v1971
    %2840 = vmatpush.bf16.msra.mxu0 %v1963
    %2841 = vmatpush.bf16.msra.mxu0 %v1955
    %2842 = vmatpush.bf16.msra.mxu0 %v1947
    %2843 = vmatpush.bf16.msra.mxu0 %v1939
    %2844 = vmatmul.bf16.gmra.mxu0 %v886
    %v2845 = vpop.f32.mrf.mxu0
    %v2846 = vadd.f32 %v1155, %v2845
    %v2847 = vpop.f32.mrf.mxu0
    %v2848 = vadd.f32 %v1155, %v2847
    %2849 = vdwg.mxu0
    %2850 = vmatpush.bf16.msra.mxu0 %v2059
    %2851 = vmatpush.bf16.msra.mxu0 %v2051
    %2852 = vmatpush.bf16.msra.mxu0 %v2043
    %2853 = vmatpush.bf16.msra.mxu0 %v2035
    %2854 = vmatpush.bf16.msra.mxu0 %v2027
    %2855 = vmatpush.bf16.msra.mxu0 %v2019
    %2856 = vmatpush.bf16.msra.mxu0 %v2011
    %2857 = vmatpush.bf16.msra.mxu0 %v2003
    %2858 = vmatmul.bf16.gmra.mxu0 %v887
    %v2859 = vpop.f32.mrf.mxu0
    %v2860 = vadd.f32 %v2846, %v2859
    %v2861 = vpop.f32.mrf.mxu0
    %v2862 = vadd.f32 %v2848, %v2861
    %2863 = vdwg.mxu0
    %2864 = vmatpush.bf16.msra.mxu0 %v2123
    %2865 = vmatpush.bf16.msra.mxu0 %v2115
    %2866 = vmatpush.bf16.msra.mxu0 %v2107
    %2867 = vmatpush.bf16.msra.mxu0 %v2099
    %2868 = vmatpush.bf16.msra.mxu0 %v2091
    %2869 = vmatpush.bf16.msra.mxu0 %v2083
    %2870 = vmatpush.bf16.msra.mxu0 %v2075
    %2871 = vmatpush.bf16.msra.mxu0 %v2067
    %2872 = vmatmul.bf16.gmra.mxu0 %v888
    %v2873 = vpop.f32.mrf.mxu0
    %v2874 = vadd.f32 %v2860, %v2873
    %v2875 = vpop.f32.mrf.mxu0
    %v2876 = vadd.f32 %v2862, %v2875
    %2877 = vdwg.mxu0
    %2878 = vmatpush.bf16.msra.mxu0 %v2187
    %2879 = vmatpush.bf16.msra.mxu0 %v2179
    %2880 = vmatpush.bf16.msra.mxu0 %v2171
    %2881 = vmatpush.bf16.msra.mxu0 %v2163
    %2882 = vmatpush.bf16.msra.mxu0 %v2155
    %2883 = vmatpush.bf16.msra.mxu0 %v2147
    %2884 = vmatpush.bf16.msra.mxu0 %v2139
    %2885 = vmatpush.bf16.msra.mxu0 %v2131
    %2886 = vmatmul.bf16.gmra.mxu0 %v889
    %v2887 = vpop.f32.mrf.mxu0
    %v2888 = vadd.f32 %v2874, %v2887
    %v2889 = vpop.f32.mrf.mxu0
    %v2890 = vadd.f32 %v2876, %v2889
    %2891 = vdwg.mxu0
    %v2892 = vmul.f32 %v2496, 0.01
    %v2893 = vmul.f32 %v2552, 0.01
    %v2894 = vmul.f32 %v2608, 0.01
    %v2895 = vmul.f32 %v2664, 0.01
    %v2896 = vmul.f32 %v2720, 0.01
    %v2897 = vmul.f32 %v2776, 0.01
    %v2898 = vmul.f32 %v2832, 0.01
    %v2899 = vmul.f32 %v2888, 0.01
    %v2900 = vmul.f32 %v2498, 0.01
    %v2901 = vmul.f32 %v2554, 0.01
    %v2902 = vmul.f32 %v2610, 0.01
    %v2903 = vmul.f32 %v2666, 0.01
    %v2904 = vmul.f32 %v2722, 0.01
    %v2905 = vmul.f32 %v2778, 0.01
    %v2906 = vmul.f32 %v2834, 0.01
    %v2907 = vmul.f32 %v2890, 0.01
    %v2908 = vmax.f32 %v2496, %v2892
    %v2909 = vmax.f32 %v2552, %v2893
    %v2910 = vmax.f32 %v2608, %v2894
    %v2911 = vmax.f32 %v2664, %v2895
    %v2912 = vmax.f32 %v2720, %v2896
    %v2913 = vmax.f32 %v2776, %v2897
    %v2914 = vmax.f32 %v2832, %v2898
    %v2915 = vmax.f32 %v2888, %v2899
    %v2916 = vmax.f32 %v2498, %v2900
    %v2917 = vmax.f32 %v2554, %v2901
    %v2918 = vmax.f32 %v2610, %v2902
    %v2919 = vmax.f32 %v2666, %v2903
    %v2920 = vmax.f32 %v2722, %v2904
    %v2921 = vmax.f32 %v2778, %v2905
    %v2922 = vmax.f32 %v2834, %v2906
    %v2923 = vmax.f32 %v2890, %v2907
    %v2924 = vpack.c.bf16 %v2916, %v2908
    %v2925 = vpack.c.bf16 %v2917, %v2909
    %v2926 = vpack.c.bf16 %v2918, %v2910
    %v2927 = vpack.c.bf16 %v2919, %v2911
    %v2928 = vpack.c.bf16 %v2920, %v2912
    %v2929 = vpack.c.bf16 %v2921, %v2913
    %v2930 = vpack.c.bf16 %v2922, %v2914
    %v2931 = vpack.c.bf16 %v2923, %v2915
    %v2932 = vld [vmem:[#allocation10] sm:$0xff]
    %v2933 = vld [vmem:[#allocation10 + $0x8] sm:$0xff]
    %v2934 = vld [vmem:[#allocation10 + $0x10] sm:$0xff]
    %v2935 = vld [vmem:[#allocation10 + $0x18] sm:$0xff]
    %v2936 = vld [vmem:[#allocation10 + $0x20] sm:$0xff]
    %v2937 = vld [vmem:[#allocation10 + $0x28] sm:$0xff]
    %v2938 = vld [vmem:[#allocation10 + $0x30] sm:$0xff]
    %v2939 = vld [vmem:[#allocation10 + $0x38] sm:$0xff]
    %v2940 = vld [vmem:[#allocation10 + $0x40] sm:$0xff]
    %v2941 = vld [vmem:[#allocation10 + $0x48] sm:$0xff]
    %v2942 = vld [vmem:[#allocation10 + $0x50] sm:$0xff]
    %v2943 = vld [vmem:[#allocation10 + $0x58] sm:$0xff]
    %v2944 = vld [vmem:[#allocation10 + $0x60] sm:$0xff]
    %v2945 = vld [vmem:[#allocation10 + $0x68] sm:$0xff]
    %v2946 = vld [vmem:[#allocation10 + $0x70] sm:$0xff]
    %v2947 = vld [vmem:[#allocation10 + $0x78] sm:$0xff]
    %v2948 = vld [vmem:[#allocation10 + $0x80] sm:$0xff]
    %v2949 = vld [vmem:[#allocation10 + $0x88] sm:$0xff]
    %v2950 = vld [vmem:[#allocation10 + $0x90] sm:$0xff]
    %v2951 = vld [vmem:[#allocation10 + $0x98] sm:$0xff]
    %v2952 = vld [vmem:[#allocation10 + $0xa0] sm:$0xff]
    %v2953 = vld [vmem:[#allocation10 + $0xa8] sm:$0xff]
    %v2954 = vld [vmem:[#allocation10 + $0xb0] sm:$0xff]
    %v2955 = vld [vmem:[#allocation10 + $0xb8] sm:$0xff]
    %v2956 = vld [vmem:[#allocation10 + $0xc0] sm:$0xff]
    %v2957 = vld [vmem:[#allocation10 + $0xc8] sm:$0xff]
    %v2958 = vld [vmem:[#allocation10 + $0xd0] sm:$0xff]
    %v2959 = vld [vmem:[#allocation10 + $0xd8] sm:$0xff]
    %v2960 = vld [vmem:[#allocation10 + $0xe0] sm:$0xff]
    %v2961 = vld [vmem:[#allocation10 + $0xe8] sm:$0xff]
    %v2962 = vld [vmem:[#allocation10 + $0xf0] sm:$0xff]
    %v2963 = vld [vmem:[#allocation10 + $0xf8] sm:$0xff]
    %v2964 = vld [vmem:[#allocation10 + $0x100] sm:$0xff]
    %v2965 = vld [vmem:[#allocation10 + $0x108] sm:$0xff]
    %v2966 = vld [vmem:[#allocation10 + $0x110] sm:$0xff]
    %v2967 = vld [vmem:[#allocation10 + $0x118] sm:$0xff]
    %v2968 = vld [vmem:[#allocation10 + $0x120] sm:$0xff]
    %v2969 = vld [vmem:[#allocation10 + $0x128] sm:$0xff]
    %v2970 = vld [vmem:[#allocation10 + $0x130] sm:$0xff]
    %v2971 = vld [vmem:[#allocation10 + $0x138] sm:$0xff]
    %v2972 = vld [vmem:[#allocation10 + $0x140] sm:$0xff]
    %v2973 = vld [vmem:[#allocation10 + $0x148] sm:$0xff]
    %v2974 = vld [vmem:[#allocation10 + $0x150] sm:$0xff]
    %v2975 = vld [vmem:[#allocation10 + $0x158] sm:$0xff]
    %v2976 = vld [vmem:[#allocation10 + $0x160] sm:$0xff]
    %v2977 = vld [vmem:[#allocation10 + $0x168] sm:$0xff]
    %v2978 = vld [vmem:[#allocation10 + $0x170] sm:$0xff]
    %v2979 = vld [vmem:[#allocation10 + $0x178] sm:$0xff]
    %v2980 = vld [vmem:[#allocation10 + $0x180] sm:$0xff]
    %v2981 = vld [vmem:[#allocation10 + $0x188] sm:$0xff]
    %v2982 = vld [vmem:[#allocation10 + $0x190] sm:$0xff]
    %v2983 = vld [vmem:[#allocation10 + $0x198] sm:$0xff]
    %v2984 = vld [vmem:[#allocation10 + $0x1a0] sm:$0xff]
    %v2985 = vld [vmem:[#allocation10 + $0x1a8] sm:$0xff]
    %v2986 = vld [vmem:[#allocation10 + $0x1b0] sm:$0xff]
    %v2987 = vld [vmem:[#allocation10 + $0x1b8] sm:$0xff]
    %v2988 = vld [vmem:[#allocation10 + $0x1c0] sm:$0xff]
    %v2989 = vld [vmem:[#allocation10 + $0x1c8] sm:$0xff]
    %v2990 = vld [vmem:[#allocation10 + $0x1d0] sm:$0xff]
    %v2991 = vld [vmem:[#allocation10 + $0x1d8] sm:$0xff]
    %v2992 = vld [vmem:[#allocation10 + $0x1e0] sm:$0xff]
    %v2993 = vld [vmem:[#allocation10 + $0x1e8] sm:$0xff]
    %v2994 = vld [vmem:[#allocation10 + $0x1f0] sm:$0xff]
    %v2995 = vld [vmem:[#allocation10 + $0x1f8] sm:$0xff]
    %v2996 = vld [vmem:[#allocation10 + $0x200] sm:$0xff]
    %v2997 = vld [vmem:[#allocation10 + $0x208] sm:$0xff]
    %v2998 = vld [vmem:[#allocation10 + $0x210] sm:$0xff]
    %v2999 = vld [vmem:[#allocation10 + $0x218] sm:$0xff]
    %v3000 = vld [vmem:[#allocation10 + $0x220] sm:$0xff]
    %v3001 = vld [vmem:[#allocation10 + $0x228] sm:$0xff]
    %v3002 = vld [vmem:[#allocation10 + $0x230] sm:$0xff]
    %v3003 = vld [vmem:[#allocation10 + $0x238] sm:$0xff]
    %v3004 = vld [vmem:[#allocation10 + $0x240] sm:$0xff]
    %v3005 = vld [vmem:[#allocation10 + $0x248] sm:$0xff]
    %v3006 = vld [vmem:[#allocation10 + $0x250] sm:$0xff]
    %v3007 = vld [vmem:[#allocation10 + $0x258] sm:$0xff]
    %v3008 = vld [vmem:[#allocation10 + $0x260] sm:$0xff]
    %v3009 = vld [vmem:[#allocation10 + $0x268] sm:$0xff]
    %v3010 = vld [vmem:[#allocation10 + $0x270] sm:$0xff]
    %v3011 = vld [vmem:[#allocation10 + $0x278] sm:$0xff]
    %v3012 = vld [vmem:[#allocation10 + $0x280] sm:$0xff]
    %v3013 = vld [vmem:[#allocation10 + $0x288] sm:$0xff]
    %v3014 = vld [vmem:[#allocation10 + $0x290] sm:$0xff]
    %v3015 = vld [vmem:[#allocation10 + $0x298] sm:$0xff]
    %v3016 = vld [vmem:[#allocation10 + $0x2a0] sm:$0xff]
    %v3017 = vld [vmem:[#allocation10 + $0x2a8] sm:$0xff]
    %v3018 = vld [vmem:[#allocation10 + $0x2b0] sm:$0xff]
    %v3019 = vld [vmem:[#allocation10 + $0x2b8] sm:$0xff]
    %v3020 = vld [vmem:[#allocation10 + $0x2c0] sm:$0xff]
    %v3021 = vld [vmem:[#allocation10 + $0x2c8] sm:$0xff]
    %v3022 = vld [vmem:[#allocation10 + $0x2d0] sm:$0xff]
    %v3023 = vld [vmem:[#allocation10 + $0x2d8] sm:$0xff]
    %v3024 = vld [vmem:[#allocation10 + $0x2e0] sm:$0xff]
    %v3025 = vld [vmem:[#allocation10 + $0x2e8] sm:$0xff]
    %v3026 = vld [vmem:[#allocation10 + $0x2f0] sm:$0xff]
    %v3027 = vld [vmem:[#allocation10 + $0x2f8] sm:$0xff]
    %v3028 = vld [vmem:[#allocation10 + $0x300] sm:$0xff]
    %v3029 = vld [vmem:[#allocation10 + $0x308] sm:$0xff]
    %v3030 = vld [vmem:[#allocation10 + $0x310] sm:$0xff]
    %v3031 = vld [vmem:[#allocation10 + $0x318] sm:$0xff]
    %v3032 = vld [vmem:[#allocation10 + $0x320] sm:$0xff]
    %v3033 = vld [vmem:[#allocation10 + $0x328] sm:$0xff]
    %v3034 = vld [vmem:[#allocation10 + $0x330] sm:$0xff]
    %v3035 = vld [vmem:[#allocation10 + $0x338] sm:$0xff]
    %v3036 = vld [vmem:[#allocation10 + $0x340] sm:$0xff]
    %v3037 = vld [vmem:[#allocation10 + $0x348] sm:$0xff]
    %v3038 = vld [vmem:[#allocation10 + $0x350] sm:$0xff]
    %v3039 = vld [vmem:[#allocation10 + $0x358] sm:$0xff]
    %v3040 = vld [vmem:[#allocation10 + $0x360] sm:$0xff]
    %v3041 = vld [vmem:[#allocation10 + $0x368] sm:$0xff]
    %v3042 = vld [vmem:[#allocation10 + $0x370] sm:$0xff]
    %v3043 = vld [vmem:[#allocation10 + $0x378] sm:$0xff]
    %v3044 = vld [vmem:[#allocation10 + $0x380] sm:$0xff]
    %v3045 = vld [vmem:[#allocation10 + $0x388] sm:$0xff]
    %v3046 = vld [vmem:[#allocation10 + $0x390] sm:$0xff]
    %v3047 = vld [vmem:[#allocation10 + $0x398] sm:$0xff]
    %v3048 = vld [vmem:[#allocation10 + $0x3a0] sm:$0xff]
    %v3049 = vld [vmem:[#allocation10 + $0x3a8] sm:$0xff]
    %v3050 = vld [vmem:[#allocation10 + $0x3b0] sm:$0xff]
    %v3051 = vld [vmem:[#allocation10 + $0x3b8] sm:$0xff]
    %v3052 = vld [vmem:[#allocation10 + $0x3c0] sm:$0xff]
    %v3053 = vld [vmem:[#allocation10 + $0x3c8] sm:$0xff]
    %v3054 = vld [vmem:[#allocation10 + $0x3d0] sm:$0xff]
    %v3055 = vld [vmem:[#allocation10 + $0x3d8] sm:$0xff]
    %v3056 = vld [vmem:[#allocation10 + $0x3e0] sm:$0xff]
    %v3057 = vld [vmem:[#allocation10 + $0x3e8] sm:$0xff]
    %v3058 = vld [vmem:[#allocation10 + $0x3f0] sm:$0xff]
    %v3059 = vld [vmem:[#allocation10 + $0x3f8] sm:$0xff]
    %v3060 = vld [vmem:[#allocation10 + $0x400] sm:$0xff]
    %v3061 = vld [vmem:[#allocation10 + $0x408] sm:$0xff]
    %v3062 = vld [vmem:[#allocation10 + $0x410] sm:$0xff]
    %v3063 = vld [vmem:[#allocation10 + $0x418] sm:$0xff]
    %v3064 = vld [vmem:[#allocation10 + $0x420] sm:$0xff]
    %v3065 = vld [vmem:[#allocation10 + $0x428] sm:$0xff]
    %v3066 = vld [vmem:[#allocation10 + $0x430] sm:$0xff]
    %v3067 = vld [vmem:[#allocation10 + $0x438] sm:$0xff]
    %v3068 = vld [vmem:[#allocation10 + $0x440] sm:$0xff]
    %v3069 = vld [vmem:[#allocation10 + $0x448] sm:$0xff]
    %v3070 = vld [vmem:[#allocation10 + $0x450] sm:$0xff]
    %v3071 = vld [vmem:[#allocation10 + $0x458] sm:$0xff]
    %v3072 = vld [vmem:[#allocation10 + $0x460] sm:$0xff]
    %v3073 = vld [vmem:[#allocation10 + $0x468] sm:$0xff]
    %v3074 = vld [vmem:[#allocation10 + $0x470] sm:$0xff]
    %v3075 = vld [vmem:[#allocation10 + $0x478] sm:$0xff]
    %v3076 = vld [vmem:[#allocation10 + $0x480] sm:$0xff]
    %v3077 = vld [vmem:[#allocation10 + $0x488] sm:$0xff]
    %v3078 = vld [vmem:[#allocation10 + $0x490] sm:$0xff]
    %v3079 = vld [vmem:[#allocation10 + $0x498] sm:$0xff]
    %v3080 = vld [vmem:[#allocation10 + $0x4a0] sm:$0xff]
    %v3081 = vld [vmem:[#allocation10 + $0x4a8] sm:$0xff]
    %v3082 = vld [vmem:[#allocation10 + $0x4b0] sm:$0xff]
    %v3083 = vld [vmem:[#allocation10 + $0x4b8] sm:$0xff]
    %v3084 = vld [vmem:[#allocation10 + $0x4c0] sm:$0xff]
    %v3085 = vld [vmem:[#allocation10 + $0x4c8] sm:$0xff]
    %v3086 = vld [vmem:[#allocation10 + $0x4d0] sm:$0xff]
    %v3087 = vld [vmem:[#allocation10 + $0x4d8] sm:$0xff]
    %v3088 = vld [vmem:[#allocation10 + $0x4e0] sm:$0xff]
    %v3089 = vld [vmem:[#allocation10 + $0x4e8] sm:$0xff]
    %v3090 = vld [vmem:[#allocation10 + $0x4f0] sm:$0xff]
    %v3091 = vld [vmem:[#allocation10 + $0x4f8] sm:$0xff]
    %v3092 = vld [vmem:[#allocation10 + $0x500] sm:$0xff]
    %v3093 = vld [vmem:[#allocation10 + $0x508] sm:$0xff]
    %v3094 = vld [vmem:[#allocation10 + $0x510] sm:$0xff]
    %v3095 = vld [vmem:[#allocation10 + $0x518] sm:$0xff]
    %v3096 = vld [vmem:[#allocation10 + $0x520] sm:$0xff]
    %v3097 = vld [vmem:[#allocation10 + $0x528] sm:$0xff]
    %v3098 = vld [vmem:[#allocation10 + $0x530] sm:$0xff]
    %v3099 = vld [vmem:[#allocation10 + $0x538] sm:$0xff]
    %v3100 = vld [vmem:[#allocation10 + $0x540] sm:$0xff]
    %v3101 = vld [vmem:[#allocation10 + $0x548] sm:$0xff]
    %v3102 = vld [vmem:[#allocation10 + $0x550] sm:$0xff]
    %v3103 = vld [vmem:[#allocation10 + $0x558] sm:$0xff]
    %v3104 = vld [vmem:[#allocation10 + $0x560] sm:$0xff]
    %v3105 = vld [vmem:[#allocation10 + $0x568] sm:$0xff]
    %v3106 = vld [vmem:[#allocation10 + $0x570] sm:$0xff]
    %v3107 = vld [vmem:[#allocation10 + $0x578] sm:$0xff]
    %v3108 = vld [vmem:[#allocation10 + $0x580] sm:$0xff]
    %v3109 = vld [vmem:[#allocation10 + $0x588] sm:$0xff]
    %v3110 = vld [vmem:[#allocation10 + $0x590] sm:$0xff]
    %v3111 = vld [vmem:[#allocation10 + $0x598] sm:$0xff]
    %v3112 = vld [vmem:[#allocation10 + $0x5a0] sm:$0xff]
    %v3113 = vld [vmem:[#allocation10 + $0x5a8] sm:$0xff]
    %v3114 = vld [vmem:[#allocation10 + $0x5b0] sm:$0xff]
    %v3115 = vld [vmem:[#allocation10 + $0x5b8] sm:$0xff]
    %v3116 = vld [vmem:[#allocation10 + $0x5c0] sm:$0xff]
    %v3117 = vld [vmem:[#allocation10 + $0x5c8] sm:$0xff]
    %v3118 = vld [vmem:[#allocation10 + $0x5d0] sm:$0xff]
    %v3119 = vld [vmem:[#allocation10 + $0x5d8] sm:$0xff]
    %v3120 = vld [vmem:[#allocation10 + $0x5e0] sm:$0xff]
    %v3121 = vld [vmem:[#allocation10 + $0x5e8] sm:$0xff]
    %v3122 = vld [vmem:[#allocation10 + $0x5f0] sm:$0xff]
    %v3123 = vld [vmem:[#allocation10 + $0x5f8] sm:$0xff]
    %v3124 = vld [vmem:[#allocation10 + $0x600] sm:$0xff]
    %v3125 = vld [vmem:[#allocation10 + $0x608] sm:$0xff]
    %v3126 = vld [vmem:[#allocation10 + $0x610] sm:$0xff]
    %v3127 = vld [vmem:[#allocation10 + $0x618] sm:$0xff]
    %v3128 = vld [vmem:[#allocation10 + $0x620] sm:$0xff]
    %v3129 = vld [vmem:[#allocation10 + $0x628] sm:$0xff]
    %v3130 = vld [vmem:[#allocation10 + $0x630] sm:$0xff]
    %v3131 = vld [vmem:[#allocation10 + $0x638] sm:$0xff]
    %v3132 = vld [vmem:[#allocation10 + $0x640] sm:$0xff]
    %v3133 = vld [vmem:[#allocation10 + $0x648] sm:$0xff]
    %v3134 = vld [vmem:[#allocation10 + $0x650] sm:$0xff]
    %v3135 = vld [vmem:[#allocation10 + $0x658] sm:$0xff]
    %v3136 = vld [vmem:[#allocation10 + $0x660] sm:$0xff]
    %v3137 = vld [vmem:[#allocation10 + $0x668] sm:$0xff]
    %v3138 = vld [vmem:[#allocation10 + $0x670] sm:$0xff]
    %v3139 = vld [vmem:[#allocation10 + $0x678] sm:$0xff]
    %v3140 = vld [vmem:[#allocation10 + $0x680] sm:$0xff]
    %v3141 = vld [vmem:[#allocation10 + $0x688] sm:$0xff]
    %v3142 = vld [vmem:[#allocation10 + $0x690] sm:$0xff]
    %v3143 = vld [vmem:[#allocation10 + $0x698] sm:$0xff]
    %v3144 = vld [vmem:[#allocation10 + $0x6a0] sm:$0xff]
    %v3145 = vld [vmem:[#allocation10 + $0x6a8] sm:$0xff]
    %v3146 = vld [vmem:[#allocation10 + $0x6b0] sm:$0xff]
    %v3147 = vld [vmem:[#allocation10 + $0x6b8] sm:$0xff]
    %v3148 = vld [vmem:[#allocation10 + $0x6c0] sm:$0xff]
    %v3149 = vld [vmem:[#allocation10 + $0x6c8] sm:$0xff]
    %v3150 = vld [vmem:[#allocation10 + $0x6d0] sm:$0xff]
    %v3151 = vld [vmem:[#allocation10 + $0x6d8] sm:$0xff]
    %v3152 = vld [vmem:[#allocation10 + $0x6e0] sm:$0xff]
    %v3153 = vld [vmem:[#allocation10 + $0x6e8] sm:$0xff]
    %v3154 = vld [vmem:[#allocation10 + $0x6f0] sm:$0xff]
    %v3155 = vld [vmem:[#allocation10 + $0x6f8] sm:$0xff]
    %v3156 = vld [vmem:[#allocation10 + $0x700] sm:$0xff]
    %v3157 = vld [vmem:[#allocation10 + $0x708] sm:$0xff]
    %v3158 = vld [vmem:[#allocation10 + $0x710] sm:$0xff]
    %v3159 = vld [vmem:[#allocation10 + $0x718] sm:$0xff]
    %v3160 = vld [vmem:[#allocation10 + $0x720] sm:$0xff]
    %v3161 = vld [vmem:[#allocation10 + $0x728] sm:$0xff]
    %v3162 = vld [vmem:[#allocation10 + $0x730] sm:$0xff]
    %v3163 = vld [vmem:[#allocation10 + $0x738] sm:$0xff]
    %v3164 = vld [vmem:[#allocation10 + $0x740] sm:$0xff]
    %v3165 = vld [vmem:[#allocation10 + $0x748] sm:$0xff]
    %v3166 = vld [vmem:[#allocation10 + $0x750] sm:$0xff]
    %v3167 = vld [vmem:[#allocation10 + $0x758] sm:$0xff]
    %v3168 = vld [vmem:[#allocation10 + $0x760] sm:$0xff]
    %v3169 = vld [vmem:[#allocation10 + $0x768] sm:$0xff]
    %v3170 = vld [vmem:[#allocation10 + $0x770] sm:$0xff]
    %v3171 = vld [vmem:[#allocation10 + $0x778] sm:$0xff]
    %v3172 = vld [vmem:[#allocation10 + $0x780] sm:$0xff]
    %v3173 = vld [vmem:[#allocation10 + $0x788] sm:$0xff]
    %v3174 = vld [vmem:[#allocation10 + $0x790] sm:$0xff]
    %v3175 = vld [vmem:[#allocation10 + $0x798] sm:$0xff]
    %v3176 = vld [vmem:[#allocation10 + $0x7a0] sm:$0xff]
    %v3177 = vld [vmem:[#allocation10 + $0x7a8] sm:$0xff]
    %v3178 = vld [vmem:[#allocation10 + $0x7b0] sm:$0xff]
    %v3179 = vld [vmem:[#allocation10 + $0x7b8] sm:$0xff]
    %v3180 = vld [vmem:[#allocation10 + $0x7c0] sm:$0xff]
    %v3181 = vld [vmem:[#allocation10 + $0x7c8] sm:$0xff]
    %v3182 = vld [vmem:[#allocation10 + $0x7d0] sm:$0xff]
    %v3183 = vld [vmem:[#allocation10 + $0x7d8] sm:$0xff]
    %v3184 = vld [vmem:[#allocation10 + $0x7e0] sm:$0xff]
    %v3185 = vld [vmem:[#allocation10 + $0x7e8] sm:$0xff]
    %v3186 = vld [vmem:[#allocation10 + $0x7f0] sm:$0xff]
    %v3187 = vld [vmem:[#allocation10 + $0x7f8] sm:$0xff]
    %v3188 = vld [vmem:[#allocation19] sm:$0xf]
    %v3190 = vperm.slane %v3188, 0
    %v3191 = vperm.slane %v3188, 1
    %v3192 = vperm.slane %v3188, 2
    %v3193 = vperm.slane %v3188, 3
    %v3454 = vunpack.c.l.b16 %v2932
    %v3455 = vunpack.c.h.b16 %v2932
    %v3456 = vunpack.c.l.b16 %v2933
    %v3457 = vunpack.c.h.b16 %v2933
    %v3458 = vunpack.c.l.b16 %v2934
    %v3459 = vunpack.c.h.b16 %v2934
    %v3460 = vunpack.c.l.b16 %v2935
    %v3461 = vunpack.c.h.b16 %v2935
    %v3462 = vunpack.c.l.b16 %v2936
    %v3463 = vunpack.c.h.b16 %v2936
    %v3464 = vunpack.c.l.b16 %v2937
    %v3465 = vunpack.c.h.b16 %v2937
    %v3466 = vunpack.c.l.b16 %v2938
    %v3467 = vunpack.c.h.b16 %v2938
    %v3468 = vunpack.c.l.b16 %v2939
    %v3469 = vunpack.c.h.b16 %v2939
    %v3470 = vunpack.c.l.b16 %v2940
    %v3471 = vunpack.c.h.b16 %v2940
    %v3472 = vunpack.c.l.b16 %v2941
    %v3473 = vunpack.c.h.b16 %v2941
    %v3474 = vunpack.c.l.b16 %v2942
    %v3475 = vunpack.c.h.b16 %v2942
    %v3476 = vunpack.c.l.b16 %v2943
    %v3477 = vunpack.c.h.b16 %v2943
    %v3478 = vunpack.c.l.b16 %v2944
    %v3479 = vunpack.c.h.b16 %v2944
    %v3480 = vunpack.c.l.b16 %v2945
    %v3481 = vunpack.c.h.b16 %v2945
    %v3482 = vunpack.c.l.b16 %v2946
    %v3483 = vunpack.c.h.b16 %v2946
    %v3484 = vunpack.c.l.b16 %v2947
    %v3485 = vunpack.c.h.b16 %v2947
    %v3486 = vunpack.c.l.b16 %v2948
    %v3487 = vunpack.c.h.b16 %v2948
    %v3488 = vunpack.c.l.b16 %v2949
    %v3489 = vunpack.c.h.b16 %v2949
    %v3490 = vunpack.c.l.b16 %v2950
    %v3491 = vunpack.c.h.b16 %v2950
    %v3492 = vunpack.c.l.b16 %v2951
    %v3493 = vunpack.c.h.b16 %v2951
    %v3494 = vunpack.c.l.b16 %v2952
    %v3495 = vunpack.c.h.b16 %v2952
    %v3496 = vunpack.c.l.b16 %v2953
    %v3497 = vunpack.c.h.b16 %v2953
    %v3498 = vunpack.c.l.b16 %v2954
    %v3499 = vunpack.c.h.b16 %v2954
    %v3500 = vunpack.c.l.b16 %v2955
    %v3501 = vunpack.c.h.b16 %v2955
    %v3502 = vunpack.c.l.b16 %v2956
    %v3503 = vunpack.c.h.b16 %v2956
    %v3504 = vunpack.c.l.b16 %v2957
    %v3505 = vunpack.c.h.b16 %v2957
    %v3506 = vunpack.c.l.b16 %v2958
    %v3507 = vunpack.c.h.b16 %v2958
    %v3508 = vunpack.c.l.b16 %v2959
    %v3509 = vunpack.c.h.b16 %v2959
    %v3510 = vunpack.c.l.b16 %v2960
    %v3511 = vunpack.c.h.b16 %v2960
    %v3512 = vunpack.c.l.b16 %v2961
    %v3513 = vunpack.c.h.b16 %v2961
    %v3514 = vunpack.c.l.b16 %v2962
    %v3515 = vunpack.c.h.b16 %v2962
    %v3516 = vunpack.c.l.b16 %v2963
    %v3517 = vunpack.c.h.b16 %v2963
    %v3518 = vunpack.c.l.b16 %v2964
    %v3519 = vunpack.c.h.b16 %v2964
    %v3520 = vunpack.c.l.b16 %v2965
    %v3521 = vunpack.c.h.b16 %v2965
    %v3522 = vunpack.c.l.b16 %v2966
    %v3523 = vunpack.c.h.b16 %v2966
    %v3524 = vunpack.c.l.b16 %v2967
    %v3525 = vunpack.c.h.b16 %v2967
    %v3526 = vunpack.c.l.b16 %v2968
    %v3527 = vunpack.c.h.b16 %v2968
    %v3528 = vunpack.c.l.b16 %v2969
    %v3529 = vunpack.c.h.b16 %v2969
    %v3530 = vunpack.c.l.b16 %v2970
    %v3531 = vunpack.c.h.b16 %v2970
    %v3532 = vunpack.c.l.b16 %v2971
    %v3533 = vunpack.c.h.b16 %v2971
    %v3534 = vunpack.c.l.b16 %v2972
    %v3535 = vunpack.c.h.b16 %v2972
    %v3536 = vunpack.c.l.b16 %v2973
    %v3537 = vunpack.c.h.b16 %v2973
    %v3538 = vunpack.c.l.b16 %v2974
    %v3539 = vunpack.c.h.b16 %v2974
    %v3540 = vunpack.c.l.b16 %v2975
    %v3541 = vunpack.c.h.b16 %v2975
    %v3542 = vunpack.c.l.b16 %v2976
    %v3543 = vunpack.c.h.b16 %v2976
    %v3544 = vunpack.c.l.b16 %v2977
    %v3545 = vunpack.c.h.b16 %v2977
    %v3546 = vunpack.c.l.b16 %v2978
    %v3547 = vunpack.c.h.b16 %v2978
    %v3548 = vunpack.c.l.b16 %v2979
    %v3549 = vunpack.c.h.b16 %v2979
    %v3550 = vunpack.c.l.b16 %v2980
    %v3551 = vunpack.c.h.b16 %v2980
    %v3552 = vunpack.c.l.b16 %v2981
    %v3553 = vunpack.c.h.b16 %v2981
    %v3554 = vunpack.c.l.b16 %v2982
    %v3555 = vunpack.c.h.b16 %v2982
    %v3556 = vunpack.c.l.b16 %v2983
    %v3557 = vunpack.c.h.b16 %v2983
    %v3558 = vunpack.c.l.b16 %v2984
    %v3559 = vunpack.c.h.b16 %v2984
    %v3560 = vunpack.c.l.b16 %v2985
    %v3561 = vunpack.c.h.b16 %v2985
    %v3562 = vunpack.c.l.b16 %v2986
    %v3563 = vunpack.c.h.b16 %v2986
    %v3564 = vunpack.c.l.b16 %v2987
    %v3565 = vunpack.c.h.b16 %v2987
    %v3566 = vunpack.c.l.b16 %v2988
    %v3567 = vunpack.c.h.b16 %v2988
    %v3568 = vunpack.c.l.b16 %v2989
    %v3569 = vunpack.c.h.b16 %v2989
    %v3570 = vunpack.c.l.b16 %v2990
    %v3571 = vunpack.c.h.b16 %v2990
    %v3572 = vunpack.c.l.b16 %v2991
    %v3573 = vunpack.c.h.b16 %v2991
    %v3574 = vunpack.c.l.b16 %v2992
    %v3575 = vunpack.c.h.b16 %v2992
    %v3576 = vunpack.c.l.b16 %v2993
    %v3577 = vunpack.c.h.b16 %v2993
    %v3578 = vunpack.c.l.b16 %v2994
    %v3579 = vunpack.c.h.b16 %v2994
    %v3580 = vunpack.c.l.b16 %v2995
    %v3581 = vunpack.c.h.b16 %v2995
    %v3582 = vunpack.c.l.b16 %v2996
    %v3583 = vunpack.c.h.b16 %v2996
    %v3584 = vunpack.c.l.b16 %v2997
    %v3585 = vunpack.c.h.b16 %v2997
    %v3586 = vunpack.c.l.b16 %v2998
    %v3587 = vunpack.c.h.b16 %v2998
    %v3588 = vunpack.c.l.b16 %v2999
    %v3589 = vunpack.c.h.b16 %v2999
    %v3590 = vunpack.c.l.b16 %v3000
    %v3591 = vunpack.c.h.b16 %v3000
    %v3592 = vunpack.c.l.b16 %v3001
    %v3593 = vunpack.c.h.b16 %v3001
    %v3594 = vunpack.c.l.b16 %v3002
    %v3595 = vunpack.c.h.b16 %v3002
    %v3596 = vunpack.c.l.b16 %v3003
    %v3597 = vunpack.c.h.b16 %v3003
    %v3598 = vunpack.c.l.b16 %v3004
    %v3599 = vunpack.c.h.b16 %v3004
    %v3600 = vunpack.c.l.b16 %v3005
    %v3601 = vunpack.c.h.b16 %v3005
    %v3602 = vunpack.c.l.b16 %v3006
    %v3603 = vunpack.c.h.b16 %v3006
    %v3604 = vunpack.c.l.b16 %v3007
    %v3605 = vunpack.c.h.b16 %v3007
    %v3606 = vunpack.c.l.b16 %v3008
    %v3607 = vunpack.c.h.b16 %v3008
    %v3608 = vunpack.c.l.b16 %v3009
    %v3609 = vunpack.c.h.b16 %v3009
    %v3610 = vunpack.c.l.b16 %v3010
    %v3611 = vunpack.c.h.b16 %v3010
    %v3612 = vunpack.c.l.b16 %v3011
    %v3613 = vunpack.c.h.b16 %v3011
    %v3614 = vunpack.c.l.b16 %v3012
    %v3615 = vunpack.c.h.b16 %v3012
    %v3616 = vunpack.c.l.b16 %v3013
    %v3617 = vunpack.c.h.b16 %v3013
    %v3618 = vunpack.c.l.b16 %v3014
    %v3619 = vunpack.c.h.b16 %v3014
    %v3620 = vunpack.c.l.b16 %v3015
    %v3621 = vunpack.c.h.b16 %v3015
    %v3622 = vunpack.c.l.b16 %v3016
    %v3623 = vunpack.c.h.b16 %v3016
    %v3624 = vunpack.c.l.b16 %v3017
    %v3625 = vunpack.c.h.b16 %v3017
    %v3626 = vunpack.c.l.b16 %v3018
    %v3627 = vunpack.c.h.b16 %v3018
    %v3628 = vunpack.c.l.b16 %v3019
    %v3629 = vunpack.c.h.b16 %v3019
    %v3630 = vunpack.c.l.b16 %v3020
    %v3631 = vunpack.c.h.b16 %v3020
    %v3632 = vunpack.c.l.b16 %v3021
    %v3633 = vunpack.c.h.b16 %v3021
    %v3634 = vunpack.c.l.b16 %v3022
    %v3635 = vunpack.c.h.b16 %v3022
    %v3636 = vunpack.c.l.b16 %v3023
    %v3637 = vunpack.c.h.b16 %v3023
    %v3638 = vunpack.c.l.b16 %v3024
    %v3639 = vunpack.c.h.b16 %v3024
    %v3640 = vunpack.c.l.b16 %v3025
    %v3641 = vunpack.c.h.b16 %v3025
    %v3642 = vunpack.c.l.b16 %v3026
    %v3643 = vunpack.c.h.b16 %v3026
    %v3644 = vunpack.c.l.b16 %v3027
    %v3645 = vunpack.c.h.b16 %v3027
    %v3646 = vunpack.c.l.b16 %v3028
    %v3647 = vunpack.c.h.b16 %v3028
    %v3648 = vunpack.c.l.b16 %v3029
    %v3649 = vunpack.c.h.b16 %v3029
    %v3650 = vunpack.c.l.b16 %v3030
    %v3651 = vunpack.c.h.b16 %v3030
    %v3652 = vunpack.c.l.b16 %v3031
    %v3653 = vunpack.c.h.b16 %v3031
    %v3654 = vunpack.c.l.b16 %v3032
    %v3655 = vunpack.c.h.b16 %v3032
    %v3656 = vunpack.c.l.b16 %v3033
    %v3657 = vunpack.c.h.b16 %v3033
    %v3658 = vunpack.c.l.b16 %v3034
    %v3659 = vunpack.c.h.b16 %v3034
    %v3660 = vunpack.c.l.b16 %v3035
    %v3661 = vunpack.c.h.b16 %v3035
    %v3662 = vunpack.c.l.b16 %v3036
    %v3663 = vunpack.c.h.b16 %v3036
    %v3664 = vunpack.c.l.b16 %v3037
    %v3665 = vunpack.c.h.b16 %v3037
    %v3666 = vunpack.c.l.b16 %v3038
    %v3667 = vunpack.c.h.b16 %v3038
    %v3668 = vunpack.c.l.b16 %v3039
    %v3669 = vunpack.c.h.b16 %v3039
    %v3670 = vunpack.c.l.b16 %v3040
    %v3671 = vunpack.c.h.b16 %v3040
    %v3672 = vunpack.c.l.b16 %v3041
    %v3673 = vunpack.c.h.b16 %v3041
    %v3674 = vunpack.c.l.b16 %v3042
    %v3675 = vunpack.c.h.b16 %v3042
    %v3676 = vunpack.c.l.b16 %v3043
    %v3677 = vunpack.c.h.b16 %v3043
    %v3678 = vunpack.c.l.b16 %v3044
    %v3679 = vunpack.c.h.b16 %v3044
    %v3680 = vunpack.c.l.b16 %v3045
    %v3681 = vunpack.c.h.b16 %v3045
    %v3682 = vunpack.c.l.b16 %v3046
    %v3683 = vunpack.c.h.b16 %v3046
    %v3684 = vunpack.c.l.b16 %v3047
    %v3685 = vunpack.c.h.b16 %v3047
    %v3686 = vunpack.c.l.b16 %v3048
    %v3687 = vunpack.c.h.b16 %v3048
    %v3688 = vunpack.c.l.b16 %v3049
    %v3689 = vunpack.c.h.b16 %v3049
    %v3690 = vunpack.c.l.b16 %v3050
    %v3691 = vunpack.c.h.b16 %v3050
    %v3692 = vunpack.c.l.b16 %v3051
    %v3693 = vunpack.c.h.b16 %v3051
    %v3694 = vunpack.c.l.b16 %v3052
    %v3695 = vunpack.c.h.b16 %v3052
    %v3696 = vunpack.c.l.b16 %v3053
    %v3697 = vunpack.c.h.b16 %v3053
    %v3698 = vunpack.c.l.b16 %v3054
    %v3699 = vunpack.c.h.b16 %v3054
    %v3700 = vunpack.c.l.b16 %v3055
    %v3701 = vunpack.c.h.b16 %v3055
    %v3702 = vunpack.c.l.b16 %v3056
    %v3703 = vunpack.c.h.b16 %v3056
    %v3704 = vunpack.c.l.b16 %v3057
    %v3705 = vunpack.c.h.b16 %v3057
    %v3706 = vunpack.c.l.b16 %v3058
    %v3707 = vunpack.c.h.b16 %v3058
    %v3708 = vunpack.c.l.b16 %v3059
    %v3709 = vunpack.c.h.b16 %v3059
    %v3710 = vunpack.c.l.b16 %v3060
    %v3711 = vunpack.c.h.b16 %v3060
    %v3712 = vunpack.c.l.b16 %v3061
    %v3713 = vunpack.c.h.b16 %v3061
    %v3714 = vunpack.c.l.b16 %v3062
    %v3715 = vunpack.c.h.b16 %v3062
    %v3716 = vunpack.c.l.b16 %v3063
    %v3717 = vunpack.c.h.b16 %v3063
    %v3718 = vunpack.c.l.b16 %v3064
    %v3719 = vunpack.c.h.b16 %v3064
    %v3720 = vunpack.c.l.b16 %v3065
    %v3721 = vunpack.c.h.b16 %v3065
    %v3722 = vunpack.c.l.b16 %v3066
    %v3723 = vunpack.c.h.b16 %v3066
    %v3724 = vunpack.c.l.b16 %v3067
    %v3725 = vunpack.c.h.b16 %v3067
    %v3726 = vunpack.c.l.b16 %v3068
    %v3727 = vunpack.c.h.b16 %v3068
    %v3728 = vunpack.c.l.b16 %v3069
    %v3729 = vunpack.c.h.b16 %v3069
    %v3730 = vunpack.c.l.b16 %v3070
    %v3731 = vunpack.c.h.b16 %v3070
    %v3732 = vunpack.c.l.b16 %v3071
    %v3733 = vunpack.c.h.b16 %v3071
    %v3734 = vunpack.c.l.b16 %v3072
    %v3735 = vunpack.c.h.b16 %v3072
    %v3736 = vunpack.c.l.b16 %v3073
    %v3737 = vunpack.c.h.b16 %v3073
    %v3738 = vunpack.c.l.b16 %v3074
    %v3739 = vunpack.c.h.b16 %v3074
    %v3740 = vunpack.c.l.b16 %v3075
    %v3741 = vunpack.c.h.b16 %v3075
    %v3742 = vunpack.c.l.b16 %v3076
    %v3743 = vunpack.c.h.b16 %v3076
    %v3744 = vunpack.c.l.b16 %v3077
    %v3745 = vunpack.c.h.b16 %v3077
    %v3746 = vunpack.c.l.b16 %v3078
    %v3747 = vunpack.c.h.b16 %v3078
    %v3748 = vunpack.c.l.b16 %v3079
    %v3749 = vunpack.c.h.b16 %v3079
    %v3750 = vunpack.c.l.b16 %v3080
    %v3751 = vunpack.c.h.b16 %v3080
    %v3752 = vunpack.c.l.b16 %v3081
    %v3753 = vunpack.c.h.b16 %v3081
    %v3754 = vunpack.c.l.b16 %v3082
    %v3755 = vunpack.c.h.b16 %v3082
    %v3756 = vunpack.c.l.b16 %v3083
    %v3757 = vunpack.c.h.b16 %v3083
    %v3758 = vunpack.c.l.b16 %v3084
    %v3759 = vunpack.c.h.b16 %v3084
    %v3760 = vunpack.c.l.b16 %v3085
    %v3761 = vunpack.c.h.b16 %v3085
    %v3762 = vunpack.c.l.b16 %v3086
    %v3763 = vunpack.c.h.b16 %v3086
    %v3764 = vunpack.c.l.b16 %v3087
    %v3765 = vunpack.c.h.b16 %v3087
    %v3766 = vunpack.c.l.b16 %v3088
    %v3767 = vunpack.c.h.b16 %v3088
    %v3768 = vunpack.c.l.b16 %v3089
    %v3769 = vunpack.c.h.b16 %v3089
    %v3770 = vunpack.c.l.b16 %v3090
    %v3771 = vunpack.c.h.b16 %v3090
    %v3772 = vunpack.c.l.b16 %v3091
    %v3773 = vunpack.c.h.b16 %v3091
    %v3774 = vunpack.c.l.b16 %v3092
    %v3775 = vunpack.c.h.b16 %v3092
    %v3776 = vunpack.c.l.b16 %v3093
    %v3777 = vunpack.c.h.b16 %v3093
    %v3778 = vunpack.c.l.b16 %v3094
    %v3779 = vunpack.c.h.b16 %v3094
    %v3780 = vunpack.c.l.b16 %v3095
    %v3781 = vunpack.c.h.b16 %v3095
    %v3782 = vunpack.c.l.b16 %v3096
    %v3783 = vunpack.c.h.b16 %v3096
    %v3784 = vunpack.c.l.b16 %v3097
    %v3785 = vunpack.c.h.b16 %v3097
    %v3786 = vunpack.c.l.b16 %v3098
    %v3787 = vunpack.c.h.b16 %v3098
    %v3788 = vunpack.c.l.b16 %v3099
    %v3789 = vunpack.c.h.b16 %v3099
    %v3790 = vunpack.c.l.b16 %v3100
    %v3791 = vunpack.c.h.b16 %v3100
    %v3792 = vunpack.c.l.b16 %v3101
    %v3793 = vunpack.c.h.b16 %v3101
    %v3794 = vunpack.c.l.b16 %v3102
    %v3795 = vunpack.c.h.b16 %v3102
    %v3796 = vunpack.c.l.b16 %v3103
    %v3797 = vunpack.c.h.b16 %v3103
    %v3798 = vunpack.c.l.b16 %v3104
    %v3799 = vunpack.c.h.b16 %v3104
    %v3800 = vunpack.c.l.b16 %v3105
    %v3801 = vunpack.c.h.b16 %v3105
    %v3802 = vunpack.c.l.b16 %v3106
    %v3803 = vunpack.c.h.b16 %v3106
    %v3804 = vunpack.c.l.b16 %v3107
    %v3805 = vunpack.c.h.b16 %v3107
    %v3806 = vunpack.c.l.b16 %v3108
    %v3807 = vunpack.c.h.b16 %v3108
    %v3808 = vunpack.c.l.b16 %v3109
    %v3809 = vunpack.c.h.b16 %v3109
    %v3810 = vunpack.c.l.b16 %v3110
    %v3811 = vunpack.c.h.b16 %v3110
    %v3812 = vunpack.c.l.b16 %v3111
    %v3813 = vunpack.c.h.b16 %v3111
    %v3814 = vunpack.c.l.b16 %v3112
    %v3815 = vunpack.c.h.b16 %v3112
    %v3816 = vunpack.c.l.b16 %v3113
    %v3817 = vunpack.c.h.b16 %v3113
    %v3818 = vunpack.c.l.b16 %v3114
    %v3819 = vunpack.c.h.b16 %v3114
    %v3820 = vunpack.c.l.b16 %v3115
    %v3821 = vunpack.c.h.b16 %v3115
    %v3822 = vunpack.c.l.b16 %v3116
    %v3823 = vunpack.c.h.b16 %v3116
    %v3824 = vunpack.c.l.b16 %v3117
    %v3825 = vunpack.c.h.b16 %v3117
    %v3826 = vunpack.c.l.b16 %v3118
    %v3827 = vunpack.c.h.b16 %v3118
    %v3828 = vunpack.c.l.b16 %v3119
    %v3829 = vunpack.c.h.b16 %v3119
    %v3830 = vunpack.c.l.b16 %v3120
    %v3831 = vunpack.c.h.b16 %v3120
    %v3832 = vunpack.c.l.b16 %v3121
    %v3833 = vunpack.c.h.b16 %v3121
    %v3834 = vunpack.c.l.b16 %v3122
    %v3835 = vunpack.c.h.b16 %v3122
    %v3836 = vunpack.c.l.b16 %v3123
    %v3837 = vunpack.c.h.b16 %v3123
    %v3838 = vunpack.c.l.b16 %v3124
    %v3839 = vunpack.c.h.b16 %v3124
    %v3840 = vunpack.c.l.b16 %v3125
    %v3841 = vunpack.c.h.b16 %v3125
    %v3842 = vunpack.c.l.b16 %v3126
    %v3843 = vunpack.c.h.b16 %v3126
    %v3844 = vunpack.c.l.b16 %v3127
    %v3845 = vunpack.c.h.b16 %v3127
    %v3846 = vunpack.c.l.b16 %v3128
    %v3847 = vunpack.c.h.b16 %v3128
    %v3848 = vunpack.c.l.b16 %v3129
    %v3849 = vunpack.c.h.b16 %v3129
    %v3850 = vunpack.c.l.b16 %v3130
    %v3851 = vunpack.c.h.b16 %v3130
    %v3852 = vunpack.c.l.b16 %v3131
    %v3853 = vunpack.c.h.b16 %v3131
    %v3854 = vunpack.c.l.b16 %v3132
    %v3855 = vunpack.c.h.b16 %v3132
    %v3856 = vunpack.c.l.b16 %v3133
    %v3857 = vunpack.c.h.b16 %v3133
    %v3858 = vunpack.c.l.b16 %v3134
    %v3859 = vunpack.c.h.b16 %v3134
    %v3860 = vunpack.c.l.b16 %v3135
    %v3861 = vunpack.c.h.b16 %v3135
    %v3862 = vunpack.c.l.b16 %v3136
    %v3863 = vunpack.c.h.b16 %v3136
    %v3864 = vunpack.c.l.b16 %v3137
    %v3865 = vunpack.c.h.b16 %v3137
    %v3866 = vunpack.c.l.b16 %v3138
    %v3867 = vunpack.c.h.b16 %v3138
    %v3868 = vunpack.c.l.b16 %v3139
    %v3869 = vunpack.c.h.b16 %v3139
    %v3870 = vunpack.c.l.b16 %v3140
    %v3871 = vunpack.c.h.b16 %v3140
    %v3872 = vunpack.c.l.b16 %v3141
    %v3873 = vunpack.c.h.b16 %v3141
    %v3874 = vunpack.c.l.b16 %v3142
    %v3875 = vunpack.c.h.b16 %v3142
    %v3876 = vunpack.c.l.b16 %v3143
    %v3877 = vunpack.c.h.b16 %v3143
    %v3878 = vunpack.c.l.b16 %v3144
    %v3879 = vunpack.c.h.b16 %v3144
    %v3880 = vunpack.c.l.b16 %v3145
    %v3881 = vunpack.c.h.b16 %v3145
    %v3882 = vunpack.c.l.b16 %v3146
    %v3883 = vunpack.c.h.b16 %v3146
    %v3884 = vunpack.c.l.b16 %v3147
    %v3885 = vunpack.c.h.b16 %v3147
    %v3886 = vunpack.c.l.b16 %v3148
    %v3887 = vunpack.c.h.b16 %v3148
    %v3888 = vunpack.c.l.b16 %v3149
    %v3889 = vunpack.c.h.b16 %v3149
    %v3890 = vunpack.c.l.b16 %v3150
    %v3891 = vunpack.c.h.b16 %v3150
    %v3892 = vunpack.c.l.b16 %v3151
    %v3893 = vunpack.c.h.b16 %v3151
    %v3894 = vunpack.c.l.b16 %v3152
    %v3895 = vunpack.c.h.b16 %v3152
    %v3896 = vunpack.c.l.b16 %v3153
    %v3897 = vunpack.c.h.b16 %v3153
    %v3898 = vunpack.c.l.b16 %v3154
    %v3899 = vunpack.c.h.b16 %v3154
    %v3900 = vunpack.c.l.b16 %v3155
    %v3901 = vunpack.c.h.b16 %v3155
    %v3902 = vunpack.c.l.b16 %v3156
    %v3903 = vunpack.c.h.b16 %v3156
    %v3904 = vunpack.c.l.b16 %v3157
    %v3905 = vunpack.c.h.b16 %v3157
    %v3906 = vunpack.c.l.b16 %v3158
    %v3907 = vunpack.c.h.b16 %v3158
    %v3908 = vunpack.c.l.b16 %v3159
    %v3909 = vunpack.c.h.b16 %v3159
    %v3910 = vunpack.c.l.b16 %v3160
    %v3911 = vunpack.c.h.b16 %v3160
    %v3912 = vunpack.c.l.b16 %v3161
    %v3913 = vunpack.c.h.b16 %v3161
    %v3914 = vunpack.c.l.b16 %v3162
    %v3915 = vunpack.c.h.b16 %v3162
    %v3916 = vunpack.c.l.b16 %v3163
    %v3917 = vunpack.c.h.b16 %v3163
    %v3918 = vunpack.c.l.b16 %v3164
    %v3919 = vunpack.c.h.b16 %v3164
    %v3920 = vunpack.c.l.b16 %v3165
    %v3921 = vunpack.c.h.b16 %v3165
    %v3922 = vunpack.c.l.b16 %v3166
    %v3923 = vunpack.c.h.b16 %v3166
    %v3924 = vunpack.c.l.b16 %v3167
    %v3925 = vunpack.c.h.b16 %v3167
    %v3926 = vunpack.c.l.b16 %v3168
    %v3927 = vunpack.c.h.b16 %v3168
    %v3928 = vunpack.c.l.b16 %v3169
    %v3929 = vunpack.c.h.b16 %v3169
    %v3930 = vunpack.c.l.b16 %v3170
    %v3931 = vunpack.c.h.b16 %v3170
    %v3932 = vunpack.c.l.b16 %v3171
    %v3933 = vunpack.c.h.b16 %v3171
    %v3934 = vunpack.c.l.b16 %v3172
    %v3935 = vunpack.c.h.b16 %v3172
    %v3936 = vunpack.c.l.b16 %v3173
    %v3937 = vunpack.c.h.b16 %v3173
    %v3938 = vunpack.c.l.b16 %v3174
    %v3939 = vunpack.c.h.b16 %v3174
    %v3940 = vunpack.c.l.b16 %v3175
    %v3941 = vunpack.c.h.b16 %v3175
    %v3942 = vunpack.c.l.b16 %v3176
    %v3943 = vunpack.c.h.b16 %v3176
    %v3944 = vunpack.c.l.b16 %v3177
    %v3945 = vunpack.c.h.b16 %v3177
    %v3946 = vunpack.c.l.b16 %v3178
    %v3947 = vunpack.c.h.b16 %v3178
    %v3948 = vunpack.c.l.b16 %v3179
    %v3949 = vunpack.c.h.b16 %v3179
    %v3950 = vunpack.c.l.b16 %v3180
    %v3951 = vunpack.c.h.b16 %v3180
    %v3952 = vunpack.c.l.b16 %v3181
    %v3953 = vunpack.c.h.b16 %v3181
    %v3954 = vunpack.c.l.b16 %v3182
    %v3955 = vunpack.c.h.b16 %v3182
    %v3956 = vunpack.c.l.b16 %v3183
    %v3957 = vunpack.c.h.b16 %v3183
    %v3958 = vunpack.c.l.b16 %v3184
    %v3959 = vunpack.c.h.b16 %v3184
    %v3960 = vunpack.c.l.b16 %v3185
    %v3961 = vunpack.c.h.b16 %v3185
    %v3962 = vunpack.c.l.b16 %v3186
    %v3963 = vunpack.c.h.b16 %v3186
    %v3964 = vunpack.c.l.b16 %v3187
    %v3965 = vunpack.c.h.b16 %v3187
    %v3966 = vpack.c.b16 %v3458, %v3454
    %v3967 = vpack.c.b16 %v3459, %v3455
    %v3968 = vpack.c.b16 %v3460, %v3456
    %v3969 = vpack.c.b16 %v3461, %v3457
    %v3970 = vpack.c.b16 %v3466, %v3462
    %v3971 = vpack.c.b16 %v3467, %v3463
    %v3972 = vpack.c.b16 %v3468, %v3464
    %v3973 = vpack.c.b16 %v3469, %v3465
    %v3974 = vpack.c.b16 %v3474, %v3470
    %v3975 = vpack.c.b16 %v3475, %v3471
    %v3976 = vpack.c.b16 %v3476, %v3472
    %v3977 = vpack.c.b16 %v3477, %v3473
    %v3978 = vpack.c.b16 %v3482, %v3478
    %v3979 = vpack.c.b16 %v3483, %v3479
    %v3980 = vpack.c.b16 %v3484, %v3480
    %v3981 = vpack.c.b16 %v3485, %v3481
    %v3982 = vpack.c.b16 %v3490, %v3486
    %v3983 = vpack.c.b16 %v3491, %v3487
    %v3984 = vpack.c.b16 %v3492, %v3488
    %v3985 = vpack.c.b16 %v3493, %v3489
    %v3986 = vpack.c.b16 %v3498, %v3494
    %v3987 = vpack.c.b16 %v3499, %v3495
    %v3988 = vpack.c.b16 %v3500, %v3496
    %v3989 = vpack.c.b16 %v3501, %v3497
    %v3990 = vpack.c.b16 %v3506, %v3502
    %v3991 = vpack.c.b16 %v3507, %v3503
    %v3992 = vpack.c.b16 %v3508, %v3504
    %v3993 = vpack.c.b16 %v3509, %v3505
    %v3994 = vpack.c.b16 %v3514, %v3510
    %v3995 = vpack.c.b16 %v3515, %v3511
    %v3996 = vpack.c.b16 %v3516, %v3512
    %v3997 = vpack.c.b16 %v3517, %v3513
    %v3998 = vpack.c.b16 %v3522, %v3518
    %v3999 = vpack.c.b16 %v3523, %v3519
    %v4000 = vpack.c.b16 %v3524, %v3520
    %v4001 = vpack.c.b16 %v3525, %v3521
    %v4002 = vpack.c.b16 %v3530, %v3526
    %v4003 = vpack.c.b16 %v3531, %v3527
    %v4004 = vpack.c.b16 %v3532, %v3528
    %v4005 = vpack.c.b16 %v3533, %v3529
    %v4006 = vpack.c.b16 %v3538, %v3534
    %v4007 = vpack.c.b16 %v3539, %v3535
    %v4008 = vpack.c.b16 %v3540, %v3536
    %v4009 = vpack.c.b16 %v3541, %v3537
    %v4010 = vpack.c.b16 %v3546, %v3542
    %v4011 = vpack.c.b16 %v3547, %v3543
    %v4012 = vpack.c.b16 %v3548, %v3544
    %v4013 = vpack.c.b16 %v3549, %v3545
    %v4014 = vpack.c.b16 %v3554, %v3550
    %v4015 = vpack.c.b16 %v3555, %v3551
    %v4016 = vpack.c.b16 %v3556, %v3552
    %v4017 = vpack.c.b16 %v3557, %v3553
    %v4018 = vpack.c.b16 %v3562, %v3558
    %v4019 = vpack.c.b16 %v3563, %v3559
    %v4020 = vpack.c.b16 %v3564, %v3560
    %v4021 = vpack.c.b16 %v3565, %v3561
    %v4022 = vpack.c.b16 %v3570, %v3566
    %v4023 = vpack.c.b16 %v3571, %v3567
    %v4024 = vpack.c.b16 %v3572, %v3568
    %v4025 = vpack.c.b16 %v3573, %v3569
    %v4026 = vpack.c.b16 %v3578, %v3574
    %v4027 = vpack.c.b16 %v3579, %v3575
    %v4028 = vpack.c.b16 %v3580, %v3576
    %v4029 = vpack.c.b16 %v3581, %v3577
    %v4030 = vpack.c.b16 %v3586, %v3582
    %v4031 = vpack.c.b16 %v3587, %v3583
    %v4032 = vpack.c.b16 %v3588, %v3584
    %v4033 = vpack.c.b16 %v3589, %v3585
    %v4034 = vpack.c.b16 %v3594, %v3590
    %v4035 = vpack.c.b16 %v3595, %v3591
    %v4036 = vpack.c.b16 %v3596, %v3592
    %v4037 = vpack.c.b16 %v3597, %v3593
    %v4038 = vpack.c.b16 %v3602, %v3598
    %v4039 = vpack.c.b16 %v3603, %v3599
    %v4040 = vpack.c.b16 %v3604, %v3600
    %v4041 = vpack.c.b16 %v3605, %v3601
    %v4042 = vpack.c.b16 %v3610, %v3606
    %v4043 = vpack.c.b16 %v3611, %v3607
    %v4044 = vpack.c.b16 %v3612, %v3608
    %v4045 = vpack.c.b16 %v3613, %v3609
    %v4046 = vpack.c.b16 %v3618, %v3614
    %v4047 = vpack.c.b16 %v3619, %v3615
    %v4048 = vpack.c.b16 %v3620, %v3616
    %v4049 = vpack.c.b16 %v3621, %v3617
    %v4050 = vpack.c.b16 %v3626, %v3622
    %v4051 = vpack.c.b16 %v3627, %v3623
    %v4052 = vpack.c.b16 %v3628, %v3624
    %v4053 = vpack.c.b16 %v3629, %v3625
    %v4054 = vpack.c.b16 %v3634, %v3630
    %v4055 = vpack.c.b16 %v3635, %v3631
    %v4056 = vpack.c.b16 %v3636, %v3632
    %v4057 = vpack.c.b16 %v3637, %v3633
    %v4058 = vpack.c.b16 %v3642, %v3638
    %v4059 = vpack.c.b16 %v3643, %v3639
    %v4060 = vpack.c.b16 %v3644, %v3640
    %v4061 = vpack.c.b16 %v3645, %v3641
    %v4062 = vpack.c.b16 %v3650, %v3646
    %v4063 = vpack.c.b16 %v3651, %v3647
    %v4064 = vpack.c.b16 %v3652, %v3648
    %v4065 = vpack.c.b16 %v3653, %v3649
    %v4066 = vpack.c.b16 %v3658, %v3654
    %v4067 = vpack.c.b16 %v3659, %v3655
    %v4068 = vpack.c.b16 %v3660, %v3656
    %v4069 = vpack.c.b16 %v3661, %v3657
    %v4070 = vpack.c.b16 %v3666, %v3662
    %v4071 = vpack.c.b16 %v3667, %v3663
    %v4072 = vpack.c.b16 %v3668, %v3664
    %v4073 = vpack.c.b16 %v3669, %v3665
    %v4074 = vpack.c.b16 %v3674, %v3670
    %v4075 = vpack.c.b16 %v3675, %v3671
    %v4076 = vpack.c.b16 %v3676, %v3672
    %v4077 = vpack.c.b16 %v3677, %v3673
    %v4078 = vpack.c.b16 %v3682, %v3678
    %v4079 = vpack.c.b16 %v3683, %v3679
    %v4080 = vpack.c.b16 %v3684, %v3680
    %v4081 = vpack.c.b16 %v3685, %v3681
    %v4082 = vpack.c.b16 %v3690, %v3686
    %v4083 = vpack.c.b16 %v3691, %v3687
    %v4084 = vpack.c.b16 %v3692, %v3688
    %v4085 = vpack.c.b16 %v3693, %v3689
    %v4086 = vpack.c.b16 %v3698, %v3694
    %v4087 = vpack.c.b16 %v3699, %v3695
    %v4088 = vpack.c.b16 %v3700, %v3696
    %v4089 = vpack.c.b16 %v3701, %v3697
    %v4090 = vpack.c.b16 %v3706, %v3702
    %v4091 = vpack.c.b16 %v3707, %v3703
    %v4092 = vpack.c.b16 %v3708, %v3704
    %v4093 = vpack.c.b16 %v3709, %v3705
    %v4094 = vpack.c.b16 %v3714, %v3710
    %v4095 = vpack.c.b16 %v3715, %v3711
    %v4096 = vpack.c.b16 %v3716, %v3712
    %v4097 = vpack.c.b16 %v3717, %v3713
    %v4098 = vpack.c.b16 %v3722, %v3718
    %v4099 = vpack.c.b16 %v3723, %v3719
    %v4100 = vpack.c.b16 %v3724, %v3720
    %v4101 = vpack.c.b16 %v3725, %v3721
    %v4102 = vpack.c.b16 %v3730, %v3726
    %v4103 = vpack.c.b16 %v3731, %v3727
    %v4104 = vpack.c.b16 %v3732, %v3728
    %v4105 = vpack.c.b16 %v3733, %v3729
    %v4106 = vpack.c.b16 %v3738, %v3734
    %v4107 = vpack.c.b16 %v3739, %v3735
    %v4108 = vpack.c.b16 %v3740, %v3736
    %v4109 = vpack.c.b16 %v3741, %v3737
    %v4110 = vpack.c.b16 %v3746, %v3742
    %v4111 = vpack.c.b16 %v3747, %v3743
    %v4112 = vpack.c.b16 %v3748, %v3744
    %v4113 = vpack.c.b16 %v3749, %v3745
    %v4114 = vpack.c.b16 %v3754, %v3750
    %v4115 = vpack.c.b16 %v3755, %v3751
    %v4116 = vpack.c.b16 %v3756, %v3752
    %v4117 = vpack.c.b16 %v3757, %v3753
    %v4118 = vpack.c.b16 %v3762, %v3758
    %v4119 = vpack.c.b16 %v3763, %v3759
    %v4120 = vpack.c.b16 %v3764, %v3760
    %v4121 = vpack.c.b16 %v3765, %v3761
    %v4122 = vpack.c.b16 %v3770, %v3766
    %v4123 = vpack.c.b16 %v3771, %v3767
    %v4124 = vpack.c.b16 %v3772, %v3768
    %v4125 = vpack.c.b16 %v3773, %v3769
    %v4126 = vpack.c.b16 %v3778, %v3774
    %v4127 = vpack.c.b16 %v3779, %v3775
    %v4128 = vpack.c.b16 %v3780, %v3776
    %v4129 = vpack.c.b16 %v3781, %v3777
    %v4130 = vpack.c.b16 %v3786, %v3782
    %v4131 = vpack.c.b16 %v3787, %v3783
    %v4132 = vpack.c.b16 %v3788, %v3784
    %v4133 = vpack.c.b16 %v3789, %v3785
    %v4134 = vpack.c.b16 %v3794, %v3790
    %v4135 = vpack.c.b16 %v3795, %v3791
    %v4136 = vpack.c.b16 %v3796, %v3792
    %v4137 = vpack.c.b16 %v3797, %v3793
    %v4138 = vpack.c.b16 %v3802, %v3798
    %v4139 = vpack.c.b16 %v3803, %v3799
    %v4140 = vpack.c.b16 %v3804, %v3800
    %v4141 = vpack.c.b16 %v3805, %v3801
    %v4142 = vpack.c.b16 %v3810, %v3806
    %v4143 = vpack.c.b16 %v3811, %v3807
    %v4144 = vpack.c.b16 %v3812, %v3808
    %v4145 = vpack.c.b16 %v3813, %v3809
    %v4146 = vpack.c.b16 %v3818, %v3814
    %v4147 = vpack.c.b16 %v3819, %v3815
    %v4148 = vpack.c.b16 %v3820, %v3816
    %v4149 = vpack.c.b16 %v3821, %v3817
    %v4150 = vpack.c.b16 %v3826, %v3822
    %v4151 = vpack.c.b16 %v3827, %v3823
    %v4152 = vpack.c.b16 %v3828, %v3824
    %v4153 = vpack.c.b16 %v3829, %v3825
    %v4154 = vpack.c.b16 %v3834, %v3830
    %v4155 = vpack.c.b16 %v3835, %v3831
    %v4156 = vpack.c.b16 %v3836, %v3832
    %v4157 = vpack.c.b16 %v3837, %v3833
    %v4158 = vpack.c.b16 %v3842, %v3838
    %v4159 = vpack.c.b16 %v3843, %v3839
    %v4160 = vpack.c.b16 %v3844, %v3840
    %v4161 = vpack.c.b16 %v3845, %v3841
    %v4162 = vpack.c.b16 %v3850, %v3846
    %v4163 = vpack.c.b16 %v3851, %v3847
    %v4164 = vpack.c.b16 %v3852, %v3848
    %v4165 = vpack.c.b16 %v3853, %v3849
    %v4166 = vpack.c.b16 %v3858, %v3854
    %v4167 = vpack.c.b16 %v3859, %v3855
    %v4168 = vpack.c.b16 %v3860, %v3856
    %v4169 = vpack.c.b16 %v3861, %v3857
    %v4170 = vpack.c.b16 %v3866, %v3862
    %v4171 = vpack.c.b16 %v3867, %v3863
    %v4172 = vpack.c.b16 %v3868, %v3864
    %v4173 = vpack.c.b16 %v3869, %v3865
    %v4174 = vpack.c.b16 %v3874, %v3870
    %v4175 = vpack.c.b16 %v3875, %v3871
    %v4176 = vpack.c.b16 %v3876, %v3872
    %v4177 = vpack.c.b16 %v3877, %v3873
    %v4178 = vpack.c.b16 %v3882, %v3878
    %v4179 = vpack.c.b16 %v3883, %v3879
    %v4180 = vpack.c.b16 %v3884, %v3880
    %v4181 = vpack.c.b16 %v3885, %v3881
    %v4182 = vpack.c.b16 %v3890, %v3886
    %v4183 = vpack.c.b16 %v3891, %v3887
    %v4184 = vpack.c.b16 %v3892, %v3888
    %v4185 = vpack.c.b16 %v3893, %v3889
    %v4186 = vpack.c.b16 %v3898, %v3894
    %v4187 = vpack.c.b16 %v3899, %v3895
    %v4188 = vpack.c.b16 %v3900, %v3896
    %v4189 = vpack.c.b16 %v3901, %v3897
    %v4190 = vpack.c.b16 %v3906, %v3902
    %v4191 = vpack.c.b16 %v3907, %v3903
    %v4192 = vpack.c.b16 %v3908, %v3904
    %v4193 = vpack.c.b16 %v3909, %v3905
    %v4194 = vpack.c.b16 %v3914, %v3910
    %v4195 = vpack.c.b16 %v3915, %v3911
    %v4196 = vpack.c.b16 %v3916, %v3912
    %v4197 = vpack.c.b16 %v3917, %v3913
    %v4198 = vpack.c.b16 %v3922, %v3918
    %v4199 = vpack.c.b16 %v3923, %v3919
    %v4200 = vpack.c.b16 %v3924, %v3920
    %v4201 = vpack.c.b16 %v3925, %v3921
    %v4202 = vpack.c.b16 %v3930, %v3926
    %v4203 = vpack.c.b16 %v3931, %v3927
    %v4204 = vpack.c.b16 %v3932, %v3928
    %v4205 = vpack.c.b16 %v3933, %v3929
    %v4206 = vpack.c.b16 %v3938, %v3934
    %v4207 = vpack.c.b16 %v3939, %v3935
    %v4208 = vpack.c.b16 %v3940, %v3936
    %v4209 = vpack.c.b16 %v3941, %v3937
    %v4210 = vpack.c.b16 %v3946, %v3942
    %v4211 = vpack.c.b16 %v3947, %v3943
    %v4212 = vpack.c.b16 %v3948, %v3944
    %v4213 = vpack.c.b16 %v3949, %v3945
    %v4214 = vpack.c.b16 %v3954, %v3950
    %v4215 = vpack.c.b16 %v3955, %v3951
    %v4216 = vpack.c.b16 %v3956, %v3952
    %v4217 = vpack.c.b16 %v3957, %v3953
    %v4218 = vpack.c.b16 %v3962, %v3958
    %v4219 = vpack.c.b16 %v3963, %v3959
    %v4220 = vpack.c.b16 %v3964, %v3960
    %v4221 = vpack.c.b16 %v3965, %v3961
    %4478 = vmatpush.bf16.msra.mxu0 %v3994
    %4479 = vmatpush.bf16.msra.mxu0 %v3990
    %4480 = vmatpush.bf16.msra.mxu0 %v3986
    %4481 = vmatpush.bf16.msra.mxu0 %v3982
    %4482 = vmatpush.bf16.msra.mxu0 %v3978
    %4483 = vmatpush.bf16.msra.mxu0 %v3974
    %4484 = vmatpush.bf16.msra.mxu0 %v3970
    %4485 = vmatpush.bf16.msra.mxu0 %v3966
    %4486 = vmatmul.bf16.gmra.mxu0 %v2924
    %v4487 = vpop.f32.mrf.mxu0
    %v4488 = vadd.f32 %v3190, %v4487
    %v4489 = vpop.f32.mrf.mxu0
    %v4490 = vadd.f32 %v3190, %v4489
    %4491 = vdwg.mxu0
    %4492 = vmatpush.bf16.msra.mxu0 %v4026
    %4493 = vmatpush.bf16.msra.mxu0 %v4022
    %4494 = vmatpush.bf16.msra.mxu0 %v4018
    %4495 = vmatpush.bf16.msra.mxu0 %v4014
    %4496 = vmatpush.bf16.msra.mxu0 %v4010
    %4497 = vmatpush.bf16.msra.mxu0 %v4006
    %4498 = vmatpush.bf16.msra.mxu0 %v4002
    %4499 = vmatpush.bf16.msra.mxu0 %v3998
    %4500 = vmatmul.bf16.gmra.mxu0 %v2925
    %v4501 = vpop.f32.mrf.mxu0
    %v4502 = vadd.f32 %v4488, %v4501
    %v4503 = vpop.f32.mrf.mxu0
    %v4504 = vadd.f32 %v4490, %v4503
    %4505 = vdwg.mxu0
    %4506 = vmatpush.bf16.msra.mxu0 %v4058
    %4507 = vmatpush.bf16.msra.mxu0 %v4054
    %4508 = vmatpush.bf16.msra.mxu0 %v4050
    %4509 = vmatpush.bf16.msra.mxu0 %v4046
    %4510 = vmatpush.bf16.msra.mxu0 %v4042
    %4511 = vmatpush.bf16.msra.mxu0 %v4038
    %4512 = vmatpush.bf16.msra.mxu0 %v4034
    %4513 = vmatpush.bf16.msra.mxu0 %v4030
    %4514 = vmatmul.bf16.gmra.mxu0 %v2926
    %v4515 = vpop.f32.mrf.mxu0
    %v4516 = vadd.f32 %v4502, %v4515
    %v4517 = vpop.f32.mrf.mxu0
    %v4518 = vadd.f32 %v4504, %v4517
    %4519 = vdwg.mxu0
    %4520 = vmatpush.bf16.msra.mxu0 %v4090
    %4521 = vmatpush.bf16.msra.mxu0 %v4086
    %4522 = vmatpush.bf16.msra.mxu0 %v4082
    %4523 = vmatpush.bf16.msra.mxu0 %v4078
    %4524 = vmatpush.bf16.msra.mxu0 %v4074
    %4525 = vmatpush.bf16.msra.mxu0 %v4070
    %4526 = vmatpush.bf16.msra.mxu0 %v4066
    %4527 = vmatpush.bf16.msra.mxu0 %v4062
    %4528 = vmatmul.bf16.gmra.mxu0 %v2927
    %v4529 = vpop.f32.mrf.mxu0
    %v4530 = vadd.f32 %v4516, %v4529
    %v4531 = vpop.f32.mrf.mxu0
    %v4532 = vadd.f32 %v4518, %v4531
    %4533 = vdwg.mxu0
    %4534 = vmatpush.bf16.msra.mxu0 %v4122
    %4535 = vmatpush.bf16.msra.mxu0 %v4118
    %4536 = vmatpush.bf16.msra.mxu0 %v4114
    %4537 = vmatpush.bf16.msra.mxu0 %v4110
    %4538 = vmatpush.bf16.msra.mxu0 %v4106
    %4539 = vmatpush.bf16.msra.mxu0 %v4102
    %4540 = vmatpush.bf16.msra.mxu0 %v4098
    %4541 = vmatpush.bf16.msra.mxu0 %v4094
    %4542 = vmatmul.bf16.gmra.mxu0 %v2928
    %v4543 = vpop.f32.mrf.mxu0
    %v4544 = vadd.f32 %v4530, %v4543
    %v4545 = vpop.f32.mrf.mxu0
    %v4546 = vadd.f32 %v4532, %v4545
    %4547 = vdwg.mxu0
    %4548 = vmatpush.bf16.msra.mxu0 %v4154
    %4549 = vmatpush.bf16.msra.mxu0 %v4150
    %4550 = vmatpush.bf16.msra.mxu0 %v4146
    %4551 = vmatpush.bf16.msra.mxu0 %v4142
    %4552 = vmatpush.bf16.msra.mxu0 %v4138
    %4553 = vmatpush.bf16.msra.mxu0 %v4134
    %4554 = vmatpush.bf16.msra.mxu0 %v4130
    %4555 = vmatpush.bf16.msra.mxu0 %v4126
    %4556 = vmatmul.bf16.gmra.mxu0 %v2929
    %v4557 = vpop.f32.mrf.mxu0
    %v4558 = vadd.f32 %v4544, %v4557
    %v4559 = vpop.f32.mrf.mxu0
    %v4560 = vadd.f32 %v4546, %v4559
    %4561 = vdwg.mxu0
    %4562 = vmatpush.bf16.msra.mxu0 %v4186
    %4563 = vmatpush.bf16.msra.mxu0 %v4182
    %4564 = vmatpush.bf16.msra.mxu0 %v4178
    %4565 = vmatpush.bf16.msra.mxu0 %v4174
    %4566 = vmatpush.bf16.msra.mxu0 %v4170
    %4567 = vmatpush.bf16.msra.mxu0 %v4166
    %4568 = vmatpush.bf16.msra.mxu0 %v4162
    %4569 = vmatpush.bf16.msra.mxu0 %v4158
    %4570 = vmatmul.bf16.gmra.mxu0 %v2930
    %v4571 = vpop.f32.mrf.mxu0
    %v4572 = vadd.f32 %v4558, %v4571
    %v4573 = vpop.f32.mrf.mxu0
    %v4574 = vadd.f32 %v4560, %v4573
    %4575 = vdwg.mxu0
    %4576 = vmatpush.bf16.msra.mxu0 %v4218
    %4577 = vmatpush.bf16.msra.mxu0 %v4214
    %4578 = vmatpush.bf16.msra.mxu0 %v4210
    %4579 = vmatpush.bf16.msra.mxu0 %v4206
    %4580 = vmatpush.bf16.msra.mxu0 %v4202
    %4581 = vmatpush.bf16.msra.mxu0 %v4198
    %4582 = vmatpush.bf16.msra.mxu0 %v4194
    %4583 = vmatpush.bf16.msra.mxu0 %v4190
    %4584 = vmatmul.bf16.gmra.mxu0 %v2931
    %v4585 = vpop.f32.mrf.mxu0
    %v4586 = vadd.f32 %v4572, %v4585
    %v4587 = vpop.f32.mrf.mxu0
    %v4588 = vadd.f32 %v4574, %v4587
    %4589 = vdwg.mxu0
    %4590 = vmatpush.bf16.msra.mxu0 %v3995
    %4591 = vmatpush.bf16.msra.mxu0 %v3991
    %4592 = vmatpush.bf16.msra.mxu0 %v3987
    %4593 = vmatpush.bf16.msra.mxu0 %v3983
    %4594 = vmatpush.bf16.msra.mxu0 %v3979
    %4595 = vmatpush.bf16.msra.mxu0 %v3975
    %4596 = vmatpush.bf16.msra.mxu0 %v3971
    %4597 = vmatpush.bf16.msra.mxu0 %v3967
    %4598 = vmatmul.bf16.gmra.mxu0 %v2924
    %v4599 = vpop.f32.mrf.mxu0
    %v4600 = vadd.f32 %v3191, %v4599
    %v4601 = vpop.f32.mrf.mxu0
    %v4602 = vadd.f32 %v3191, %v4601
    %4603 = vdwg.mxu0
    %4604 = vmatpush.bf16.msra.mxu0 %v4027
    %4605 = vmatpush.bf16.msra.mxu0 %v4023
    %4606 = vmatpush.bf16.msra.mxu0 %v4019
    %4607 = vmatpush.bf16.msra.mxu0 %v4015
    %4608 = vmatpush.bf16.msra.mxu0 %v4011
    %4609 = vmatpush.bf16.msra.mxu0 %v4007
    %4610 = vmatpush.bf16.msra.mxu0 %v4003
    %4611 = vmatpush.bf16.msra.mxu0 %v3999
    %4612 = vmatmul.bf16.gmra.mxu0 %v2925
    %v4613 = vpop.f32.mrf.mxu0
    %v4614 = vadd.f32 %v4600, %v4613
    %v4615 = vpop.f32.mrf.mxu0
    %v4616 = vadd.f32 %v4602, %v4615
    %4617 = vdwg.mxu0
    %4618 = vmatpush.bf16.msra.mxu0 %v4059
    %4619 = vmatpush.bf16.msra.mxu0 %v4055
    %4620 = vmatpush.bf16.msra.mxu0 %v4051
    %4621 = vmatpush.bf16.msra.mxu0 %v4047
    %4622 = vmatpush.bf16.msra.mxu0 %v4043
    %4623 = vmatpush.bf16.msra.mxu0 %v4039
    %4624 = vmatpush.bf16.msra.mxu0 %v4035
    %4625 = vmatpush.bf16.msra.mxu0 %v4031
    %4626 = vmatmul.bf16.gmra.mxu0 %v2926
    %v4627 = vpop.f32.mrf.mxu0
    %v4628 = vadd.f32 %v4614, %v4627
    %v4629 = vpop.f32.mrf.mxu0
    %v4630 = vadd.f32 %v4616, %v4629
    %4631 = vdwg.mxu0
    %4632 = vmatpush.bf16.msra.mxu0 %v4091
    %4633 = vmatpush.bf16.msra.mxu0 %v4087
    %4634 = vmatpush.bf16.msra.mxu0 %v4083
    %4635 = vmatpush.bf16.msra.mxu0 %v4079
    %4636 = vmatpush.bf16.msra.mxu0 %v4075
    %4637 = vmatpush.bf16.msra.mxu0 %v4071
    %4638 = vmatpush.bf16.msra.mxu0 %v4067
    %4639 = vmatpush.bf16.msra.mxu0 %v4063
    %4640 = vmatmul.bf16.gmra.mxu0 %v2927
    %v4641 = vpop.f32.mrf.mxu0
    %v4642 = vadd.f32 %v4628, %v4641
    %v4643 = vpop.f32.mrf.mxu0
    %v4644 = vadd.f32 %v4630, %v4643
    %4645 = vdwg.mxu0
    %4646 = vmatpush.bf16.msra.mxu0 %v4123
    %4647 = vmatpush.bf16.msra.mxu0 %v4119
    %4648 = vmatpush.bf16.msra.mxu0 %v4115
    %4649 = vmatpush.bf16.msra.mxu0 %v4111
    %4650 = vmatpush.bf16.msra.mxu0 %v4107
    %4651 = vmatpush.bf16.msra.mxu0 %v4103
    %4652 = vmatpush.bf16.msra.mxu0 %v4099
    %4653 = vmatpush.bf16.msra.mxu0 %v4095
    %4654 = vmatmul.bf16.gmra.mxu0 %v2928
    %v4655 = vpop.f32.mrf.mxu0
    %v4656 = vadd.f32 %v4642, %v4655
    %v4657 = vpop.f32.mrf.mxu0
    %v4658 = vadd.f32 %v4644, %v4657
    %4659 = vdwg.mxu0
    %4660 = vmatpush.bf16.msra.mxu0 %v4155
    %4661 = vmatpush.bf16.msra.mxu0 %v4151
    %4662 = vmatpush.bf16.msra.mxu0 %v4147
    %4663 = vmatpush.bf16.msra.mxu0 %v4143
    %4664 = vmatpush.bf16.msra.mxu0 %v4139
    %4665 = vmatpush.bf16.msra.mxu0 %v4135
    %4666 = vmatpush.bf16.msra.mxu0 %v4131
    %4667 = vmatpush.bf16.msra.mxu0 %v4127
    %4668 = vmatmul.bf16.gmra.mxu0 %v2929
    %v4669 = vpop.f32.mrf.mxu0
    %v4670 = vadd.f32 %v4656, %v4669
    %v4671 = vpop.f32.mrf.mxu0
    %v4672 = vadd.f32 %v4658, %v4671
    %4673 = vdwg.mxu0
    %4674 = vmatpush.bf16.msra.mxu0 %v4187
    %4675 = vmatpush.bf16.msra.mxu0 %v4183
    %4676 = vmatpush.bf16.msra.mxu0 %v4179
    %4677 = vmatpush.bf16.msra.mxu0 %v4175
    %4678 = vmatpush.bf16.msra.mxu0 %v4171
    %4679 = vmatpush.bf16.msra.mxu0 %v4167
    %4680 = vmatpush.bf16.msra.mxu0 %v4163
    %4681 = vmatpush.bf16.msra.mxu0 %v4159
    %4682 = vmatmul.bf16.gmra.mxu0 %v2930
    %v4683 = vpop.f32.mrf.mxu0
    %v4684 = vadd.f32 %v4670, %v4683
    %v4685 = vpop.f32.mrf.mxu0
    %v4686 = vadd.f32 %v4672, %v4685
    %4687 = vdwg.mxu0
    %4688 = vmatpush.bf16.msra.mxu0 %v4219
    %4689 = vmatpush.bf16.msra.mxu0 %v4215
    %4690 = vmatpush.bf16.msra.mxu0 %v4211
    %4691 = vmatpush.bf16.msra.mxu0 %v4207
    %4692 = vmatpush.bf16.msra.mxu0 %v4203
    %4693 = vmatpush.bf16.msra.mxu0 %v4199
    %4694 = vmatpush.bf16.msra.mxu0 %v4195
    %4695 = vmatpush.bf16.msra.mxu0 %v4191
    %4696 = vmatmul.bf16.gmra.mxu0 %v2931
    %v4697 = vpop.f32.mrf.mxu0
    %v4698 = vadd.f32 %v4684, %v4697
    %v4699 = vpop.f32.mrf.mxu0
    %v4700 = vadd.f32 %v4686, %v4699
    %4701 = vdwg.mxu0
    %4702 = vmatpush.bf16.msra.mxu0 %v3996
    %4703 = vmatpush.bf16.msra.mxu0 %v3992
    %4704 = vmatpush.bf16.msra.mxu0 %v3988
    %4705 = vmatpush.bf16.msra.mxu0 %v3984
    %4706 = vmatpush.bf16.msra.mxu0 %v3980
    %4707 = vmatpush.bf16.msra.mxu0 %v3976
    %4708 = vmatpush.bf16.msra.mxu0 %v3972
    %4709 = vmatpush.bf16.msra.mxu0 %v3968
    %4710 = vmatmul.bf16.gmra.mxu0 %v2924
    %v4711 = vpop.f32.mrf.mxu0
    %v4712 = vadd.f32 %v3192, %v4711
    %v4713 = vpop.f32.mrf.mxu0
    %v4714 = vadd.f32 %v3192, %v4713
    %4715 = vdwg.mxu0
    %4716 = vmatpush.bf16.msra.mxu0 %v4028
    %4717 = vmatpush.bf16.msra.mxu0 %v4024
    %4718 = vmatpush.bf16.msra.mxu0 %v4020
    %4719 = vmatpush.bf16.msra.mxu0 %v4016
    %4720 = vmatpush.bf16.msra.mxu0 %v4012
    %4721 = vmatpush.bf16.msra.mxu0 %v4008
    %4722 = vmatpush.bf16.msra.mxu0 %v4004
    %4723 = vmatpush.bf16.msra.mxu0 %v4000
    %4724 = vmatmul.bf16.gmra.mxu0 %v2925
    %v4725 = vpop.f32.mrf.mxu0
    %v4726 = vadd.f32 %v4712, %v4725
    %v4727 = vpop.f32.mrf.mxu0
    %v4728 = vadd.f32 %v4714, %v4727
    %4729 = vdwg.mxu0
    %4730 = vmatpush.bf16.msra.mxu0 %v4060
    %4731 = vmatpush.bf16.msra.mxu0 %v4056
    %4732 = vmatpush.bf16.msra.mxu0 %v4052
    %4733 = vmatpush.bf16.msra.mxu0 %v4048
    %4734 = vmatpush.bf16.msra.mxu0 %v4044
    %4735 = vmatpush.bf16.msra.mxu0 %v4040
    %4736 = vmatpush.bf16.msra.mxu0 %v4036
    %4737 = vmatpush.bf16.msra.mxu0 %v4032
    %4738 = vmatmul.bf16.gmra.mxu0 %v2926
    %v4739 = vpop.f32.mrf.mxu0
    %v4740 = vadd.f32 %v4726, %v4739
    %v4741 = vpop.f32.mrf.mxu0
    %v4742 = vadd.f32 %v4728, %v4741
    %4743 = vdwg.mxu0
    %4744 = vmatpush.bf16.msra.mxu0 %v4092
    %4745 = vmatpush.bf16.msra.mxu0 %v4088
    %4746 = vmatpush.bf16.msra.mxu0 %v4084
    %4747 = vmatpush.bf16.msra.mxu0 %v4080
    %4748 = vmatpush.bf16.msra.mxu0 %v4076
    %4749 = vmatpush.bf16.msra.mxu0 %v4072
    %4750 = vmatpush.bf16.msra.mxu0 %v4068
    %4751 = vmatpush.bf16.msra.mxu0 %v4064
    %4752 = vmatmul.bf16.gmra.mxu0 %v2927
    %v4753 = vpop.f32.mrf.mxu0
    %v4754 = vadd.f32 %v4740, %v4753
    %v4755 = vpop.f32.mrf.mxu0
    %v4756 = vadd.f32 %v4742, %v4755
    %4757 = vdwg.mxu0
    %4758 = vmatpush.bf16.msra.mxu0 %v4124
    %4759 = vmatpush.bf16.msra.mxu0 %v4120
    %4760 = vmatpush.bf16.msra.mxu0 %v4116
    %4761 = vmatpush.bf16.msra.mxu0 %v4112
    %4762 = vmatpush.bf16.msra.mxu0 %v4108
    %4763 = vmatpush.bf16.msra.mxu0 %v4104
    %4764 = vmatpush.bf16.msra.mxu0 %v4100
    %4765 = vmatpush.bf16.msra.mxu0 %v4096
    %4766 = vmatmul.bf16.gmra.mxu0 %v2928
    %v4767 = vpop.f32.mrf.mxu0
    %v4768 = vadd.f32 %v4754, %v4767
    %v4769 = vpop.f32.mrf.mxu0
    %v4770 = vadd.f32 %v4756, %v4769
    %4771 = vdwg.mxu0
    %4772 = vmatpush.bf16.msra.mxu0 %v4156
    %4773 = vmatpush.bf16.msra.mxu0 %v4152
    %4774 = vmatpush.bf16.msra.mxu0 %v4148
    %4775 = vmatpush.bf16.msra.mxu0 %v4144
    %4776 = vmatpush.bf16.msra.mxu0 %v4140
    %4777 = vmatpush.bf16.msra.mxu0 %v4136
    %4778 = vmatpush.bf16.msra.mxu0 %v4132
    %4779 = vmatpush.bf16.msra.mxu0 %v4128
    %4780 = vmatmul.bf16.gmra.mxu0 %v2929
    %v4781 = vpop.f32.mrf.mxu0
    %v4782 = vadd.f32 %v4768, %v4781
    %v4783 = vpop.f32.mrf.mxu0
    %v4784 = vadd.f32 %v4770, %v4783
    %4785 = vdwg.mxu0
    %4786 = vmatpush.bf16.msra.mxu0 %v4188
    %4787 = vmatpush.bf16.msra.mxu0 %v4184
    %4788 = vmatpush.bf16.msra.mxu0 %v4180
    %4789 = vmatpush.bf16.msra.mxu0 %v4176
    %4790 = vmatpush.bf16.msra.mxu0 %v4172
    %4791 = vmatpush.bf16.msra.mxu0 %v4168
    %4792 = vmatpush.bf16.msra.mxu0 %v4164
    %4793 = vmatpush.bf16.msra.mxu0 %v4160
    %4794 = vmatmul.bf16.gmra.mxu0 %v2930
    %v4795 = vpop.f32.mrf.mxu0
    %v4796 = vadd.f32 %v4782, %v4795
    %v4797 = vpop.f32.mrf.mxu0
    %v4798 = vadd.f32 %v4784, %v4797
    %4799 = vdwg.mxu0
    %4800 = vmatpush.bf16.msra.mxu0 %v4220
    %4801 = vmatpush.bf16.msra.mxu0 %v4216
    %4802 = vmatpush.bf16.msra.mxu0 %v4212
    %4803 = vmatpush.bf16.msra.mxu0 %v4208
    %4804 = vmatpush.bf16.msra.mxu0 %v4204
    %4805 = vmatpush.bf16.msra.mxu0 %v4200
    %4806 = vmatpush.bf16.msra.mxu0 %v4196
    %4807 = vmatpush.bf16.msra.mxu0 %v4192
    %4808 = vmatmul.bf16.gmra.mxu0 %v2931
    %v4809 = vpop.f32.mrf.mxu0
    %v4810 = vadd.f32 %v4796, %v4809
    %v4811 = vpop.f32.mrf.mxu0
    %v4812 = vadd.f32 %v4798, %v4811
    %4813 = vdwg.mxu0
    %4814 = vmatpush.bf16.msra.mxu0 %v3997
    %4815 = vmatpush.bf16.msra.mxu0 %v3993
    %4816 = vmatpush.bf16.msra.mxu0 %v3989
    %4817 = vmatpush.bf16.msra.mxu0 %v3985
    %4818 = vmatpush.bf16.msra.mxu0 %v3981
    %4819 = vmatpush.bf16.msra.mxu0 %v3977
    %4820 = vmatpush.bf16.msra.mxu0 %v3973
    %4821 = vmatpush.bf16.msra.mxu0 %v3969
    %4822 = vmatmul.bf16.gmra.mxu0 %v2924
    %v4823 = vpop.f32.mrf.mxu0
    %v4824 = vadd.f32 %v3193, %v4823
    %v4825 = vpop.f32.mrf.mxu0
    %v4826 = vadd.f32 %v3193, %v4825
    %4827 = vdwg.mxu0
    %4828 = vmatpush.bf16.msra.mxu0 %v4029
    %4829 = vmatpush.bf16.msra.mxu0 %v4025
    %4830 = vmatpush.bf16.msra.mxu0 %v4021
    %4831 = vmatpush.bf16.msra.mxu0 %v4017
    %4832 = vmatpush.bf16.msra.mxu0 %v4013
    %4833 = vmatpush.bf16.msra.mxu0 %v4009
    %4834 = vmatpush.bf16.msra.mxu0 %v4005
    %4835 = vmatpush.bf16.msra.mxu0 %v4001
    %4836 = vmatmul.bf16.gmra.mxu0 %v2925
    %v4837 = vpop.f32.mrf.mxu0
    %v4838 = vadd.f32 %v4824, %v4837
    %v4839 = vpop.f32.mrf.mxu0
    %v4840 = vadd.f32 %v4826, %v4839
    %4841 = vdwg.mxu0
    %4842 = vmatpush.bf16.msra.mxu0 %v4061
    %4843 = vmatpush.bf16.msra.mxu0 %v4057
    %4844 = vmatpush.bf16.msra.mxu0 %v4053
    %4845 = vmatpush.bf16.msra.mxu0 %v4049
    %4846 = vmatpush.bf16.msra.mxu0 %v4045
    %4847 = vmatpush.bf16.msra.mxu0 %v4041
    %4848 = vmatpush.bf16.msra.mxu0 %v4037
    %4849 = vmatpush.bf16.msra.mxu0 %v4033
    %4850 = vmatmul.bf16.gmra.mxu0 %v2926
    %v4851 = vpop.f32.mrf.mxu0
    %v4852 = vadd.f32 %v4838, %v4851
    %v4853 = vpop.f32.mrf.mxu0
    %v4854 = vadd.f32 %v4840, %v4853
    %4855 = vdwg.mxu0
    %4856 = vmatpush.bf16.msra.mxu0 %v4093
    %4857 = vmatpush.bf16.msra.mxu0 %v4089
    %4858 = vmatpush.bf16.msra.mxu0 %v4085
    %4859 = vmatpush.bf16.msra.mxu0 %v4081
    %4860 = vmatpush.bf16.msra.mxu0 %v4077
    %4861 = vmatpush.bf16.msra.mxu0 %v4073
    %4862 = vmatpush.bf16.msra.mxu0 %v4069
    %4863 = vmatpush.bf16.msra.mxu0 %v4065
    %4864 = vmatmul.bf16.gmra.mxu0 %v2927
    %v4865 = vpop.f32.mrf.mxu0
    %v4866 = vadd.f32 %v4852, %v4865
    %v4867 = vpop.f32.mrf.mxu0
    %v4868 = vadd.f32 %v4854, %v4867
    %4869 = vdwg.mxu0
    %4870 = vmatpush.bf16.msra.mxu0 %v4125
    %4871 = vmatpush.bf16.msra.mxu0 %v4121
    %4872 = vmatpush.bf16.msra.mxu0 %v4117
    %4873 = vmatpush.bf16.msra.mxu0 %v4113
    %4874 = vmatpush.bf16.msra.mxu0 %v4109
    %4875 = vmatpush.bf16.msra.mxu0 %v4105
    %4876 = vmatpush.bf16.msra.mxu0 %v4101
    %4877 = vmatpush.bf16.msra.mxu0 %v4097
    %4878 = vmatmul.bf16.gmra.mxu0 %v2928
    %v4879 = vpop.f32.mrf.mxu0
    %v4880 = vadd.f32 %v4866, %v4879
    %v4881 = vpop.f32.mrf.mxu0
    %v4882 = vadd.f32 %v4868, %v4881
    %4883 = vdwg.mxu0
    %4884 = vmatpush.bf16.msra.mxu0 %v4157
    %4885 = vmatpush.bf16.msra.mxu0 %v4153
    %4886 = vmatpush.bf16.msra.mxu0 %v4149
    %4887 = vmatpush.bf16.msra.mxu0 %v4145
    %4888 = vmatpush.bf16.msra.mxu0 %v4141
    %4889 = vmatpush.bf16.msra.mxu0 %v4137
    %4890 = vmatpush.bf16.msra.mxu0 %v4133
    %4891 = vmatpush.bf16.msra.mxu0 %v4129
    %4892 = vmatmul.bf16.gmra.mxu0 %v2929
    %v4893 = vpop.f32.mrf.mxu0
    %v4894 = vadd.f32 %v4880, %v4893
    %v4895 = vpop.f32.mrf.mxu0
    %v4896 = vadd.f32 %v4882, %v4895
    %4897 = vdwg.mxu0
    %4898 = vmatpush.bf16.msra.mxu0 %v4189
    %4899 = vmatpush.bf16.msra.mxu0 %v4185
    %4900 = vmatpush.bf16.msra.mxu0 %v4181
    %4901 = vmatpush.bf16.msra.mxu0 %v4177
    %4902 = vmatpush.bf16.msra.mxu0 %v4173
    %4903 = vmatpush.bf16.msra.mxu0 %v4169
    %4904 = vmatpush.bf16.msra.mxu0 %v4165
    %4905 = vmatpush.bf16.msra.mxu0 %v4161
    %4906 = vmatmul.bf16.gmra.mxu0 %v2930
    %v4907 = vpop.f32.mrf.mxu0
    %v4908 = vadd.f32 %v4894, %v4907
    %v4909 = vpop.f32.mrf.mxu0
    %v4910 = vadd.f32 %v4896, %v4909
    %4911 = vdwg.mxu0
    %4912 = vmatpush.bf16.msra.mxu0 %v4221
    %4913 = vmatpush.bf16.msra.mxu0 %v4217
    %4914 = vmatpush.bf16.msra.mxu0 %v4213
    %4915 = vmatpush.bf16.msra.mxu0 %v4209
    %4916 = vmatpush.bf16.msra.mxu0 %v4205
    %4917 = vmatpush.bf16.msra.mxu0 %v4201
    %4918 = vmatpush.bf16.msra.mxu0 %v4197
    %4919 = vmatpush.bf16.msra.mxu0 %v4193
    %4920 = vmatmul.bf16.gmra.mxu0 %v2931
    %v4921 = vpop.f32.mrf.mxu0
    %v4922 = vadd.f32 %v4908, %v4921
    %v4923 = vpop.f32.mrf.mxu0
    %v4924 = vadd.f32 %v4910, %v4923
    %4925 = vdwg.mxu0
    %v4926 = vmul.f32 %v4586, 0.01
    %v4927 = vmul.f32 %v4698, 0.01
    %v4928 = vmul.f32 %v4810, 0.01
    %v4929 = vmul.f32 %v4922, 0.01
    %v4930 = vmul.f32 %v4588, 0.01
    %v4931 = vmul.f32 %v4700, 0.01
    %v4932 = vmul.f32 %v4812, 0.01
    %v4933 = vmul.f32 %v4924, 0.01
    %v4934 = vmax.f32 %v4586, %v4926
    %v4935 = vmax.f32 %v4698, %v4927
    %v4936 = vmax.f32 %v4810, %v4928
    %v4937 = vmax.f32 %v4922, %v4929
    %v4938 = vmax.f32 %v4588, %v4930
    %v4939 = vmax.f32 %v4700, %v4931
    %v4940 = vmax.f32 %v4812, %v4932
    %v4941 = vmax.f32 %v4924, %v4933
    %v4942 = vpack.c.bf16 %v4938, %v4934
    %v4943 = vpack.c.bf16 %v4939, %v4935
    %v4944 = vpack.c.bf16 %v4940, %v4936
    %v4945 = vpack.c.bf16 %v4941, %v4937
    %v4946 = vld [vmem:[#allocation11] sm:$0xff]
    %v4947 = vld [vmem:[#allocation11 + $0x8] sm:$0xff]
    %v4948 = vld [vmem:[#allocation11 + $0x10] sm:$0xff]
    %v4949 = vld [vmem:[#allocation11 + $0x18] sm:$0xff]
    %v4950 = vld [vmem:[#allocation11 + $0x20] sm:$0xff]
    %v4951 = vld [vmem:[#allocation11 + $0x28] sm:$0xff]
    %v4952 = vld [vmem:[#allocation11 + $0x30] sm:$0xff]
    %v4953 = vld [vmem:[#allocation11 + $0x38] sm:$0xff]
    %v4954 = vld [vmem:[#allocation11 + $0x40] sm:$0xff]
    %v4955 = vld [vmem:[#allocation11 + $0x48] sm:$0xff]
    %v4956 = vld [vmem:[#allocation11 + $0x50] sm:$0xff]
    %v4957 = vld [vmem:[#allocation11 + $0x58] sm:$0xff]
    %v4958 = vld [vmem:[#allocation11 + $0x60] sm:$0xff]
    %v4959 = vld [vmem:[#allocation11 + $0x68] sm:$0xff]
    %v4960 = vld [vmem:[#allocation11 + $0x70] sm:$0xff]
    %v4961 = vld [vmem:[#allocation11 + $0x78] sm:$0xff]
    %v4962 = vld [vmem:[#allocation11 + $0x80] sm:$0xff]
    %v4963 = vld [vmem:[#allocation11 + $0x88] sm:$0xff]
    %v4964 = vld [vmem:[#allocation11 + $0x90] sm:$0xff]
    %v4965 = vld [vmem:[#allocation11 + $0x98] sm:$0xff]
    %v4966 = vld [vmem:[#allocation11 + $0xa0] sm:$0xff]
    %v4967 = vld [vmem:[#allocation11 + $0xa8] sm:$0xff]
    %v4968 = vld [vmem:[#allocation11 + $0xb0] sm:$0xff]
    %v4969 = vld [vmem:[#allocation11 + $0xb8] sm:$0xff]
    %v4970 = vld [vmem:[#allocation11 + $0xc0] sm:$0xff]
    %v4971 = vld [vmem:[#allocation11 + $0xc8] sm:$0xff]
    %v4972 = vld [vmem:[#allocation11 + $0xd0] sm:$0xff]
    %v4973 = vld [vmem:[#allocation11 + $0xd8] sm:$0xff]
    %v4974 = vld [vmem:[#allocation11 + $0xe0] sm:$0xff]
    %v4975 = vld [vmem:[#allocation11 + $0xe8] sm:$0xff]
    %v4976 = vld [vmem:[#allocation11 + $0xf0] sm:$0xff]
    %v4977 = vld [vmem:[#allocation11 + $0xf8] sm:$0xff]
    %v4978 = vld [vmem:[#allocation11 + $0x100] sm:$0xff]
    %v4979 = vld [vmem:[#allocation11 + $0x108] sm:$0xff]
    %v4980 = vld [vmem:[#allocation11 + $0x110] sm:$0xff]
    %v4981 = vld [vmem:[#allocation11 + $0x118] sm:$0xff]
    %v4982 = vld [vmem:[#allocation11 + $0x120] sm:$0xff]
    %v4983 = vld [vmem:[#allocation11 + $0x128] sm:$0xff]
    %v4984 = vld [vmem:[#allocation11 + $0x130] sm:$0xff]
    %v4985 = vld [vmem:[#allocation11 + $0x138] sm:$0xff]
    %v4986 = vld [vmem:[#allocation11 + $0x140] sm:$0xff]
    %v4987 = vld [vmem:[#allocation11 + $0x148] sm:$0xff]
    %v4988 = vld [vmem:[#allocation11 + $0x150] sm:$0xff]
    %v4989 = vld [vmem:[#allocation11 + $0x158] sm:$0xff]
    %v4990 = vld [vmem:[#allocation11 + $0x160] sm:$0xff]
    %v4991 = vld [vmem:[#allocation11 + $0x168] sm:$0xff]
    %v4992 = vld [vmem:[#allocation11 + $0x170] sm:$0xff]
    %v4993 = vld [vmem:[#allocation11 + $0x178] sm:$0xff]
    %v4994 = vld [vmem:[#allocation11 + $0x180] sm:$0xff]
    %v4995 = vld [vmem:[#allocation11 + $0x188] sm:$0xff]
    %v4996 = vld [vmem:[#allocation11 + $0x190] sm:$0xff]
    %v4997 = vld [vmem:[#allocation11 + $0x198] sm:$0xff]
    %v4998 = vld [vmem:[#allocation11 + $0x1a0] sm:$0xff]
    %v4999 = vld [vmem:[#allocation11 + $0x1a8] sm:$0xff]
    %v5000 = vld [vmem:[#allocation11 + $0x1b0] sm:$0xff]
    %v5001 = vld [vmem:[#allocation11 + $0x1b8] sm:$0xff]
    %v5002 = vld [vmem:[#allocation11 + $0x1c0] sm:$0xff]
    %v5003 = vld [vmem:[#allocation11 + $0x1c8] sm:$0xff]
    %v5004 = vld [vmem:[#allocation11 + $0x1d0] sm:$0xff]
    %v5005 = vld [vmem:[#allocation11 + $0x1d8] sm:$0xff]
    %v5006 = vld [vmem:[#allocation11 + $0x1e0] sm:$0xff]
    %v5007 = vld [vmem:[#allocation11 + $0x1e8] sm:$0xff]
    %v5008 = vld [vmem:[#allocation11 + $0x1f0] sm:$0xff]
    %v5009 = vld [vmem:[#allocation11 + $0x1f8] sm:$0xff]
    %v5010 = vld [vmem:[%s12] sm:$0x3]
    %v5012 = vperm.slane %v5010, 0
    %v5013 = vperm.slane %v5010, 1
    %v5080 = vunpack.c.l.b16 %v4946
    %v5081 = vunpack.c.h.b16 %v4946
    %v5082 = vunpack.c.l.b16 %v4947
    %v5083 = vunpack.c.h.b16 %v4947
    %v5084 = vunpack.c.l.b16 %v4948
    %v5085 = vunpack.c.h.b16 %v4948
    %v5086 = vunpack.c.l.b16 %v4949
    %v5087 = vunpack.c.h.b16 %v4949
    %v5088 = vunpack.c.l.b16 %v4950
    %v5089 = vunpack.c.h.b16 %v4950
    %v5090 = vunpack.c.l.b16 %v4951
    %v5091 = vunpack.c.h.b16 %v4951
    %v5092 = vunpack.c.l.b16 %v4952
    %v5093 = vunpack.c.h.b16 %v4952
    %v5094 = vunpack.c.l.b16 %v4953
    %v5095 = vunpack.c.h.b16 %v4953
    %v5096 = vunpack.c.l.b16 %v4954
    %v5097 = vunpack.c.h.b16 %v4954
    %v5098 = vunpack.c.l.b16 %v4955
    %v5099 = vunpack.c.h.b16 %v4955
    %v5100 = vunpack.c.l.b16 %v4956
    %v5101 = vunpack.c.h.b16 %v4956
    %v5102 = vunpack.c.l.b16 %v4957
    %v5103 = vunpack.c.h.b16 %v4957
    %v5104 = vunpack.c.l.b16 %v4958
    %v5105 = vunpack.c.h.b16 %v4958
    %v5106 = vunpack.c.l.b16 %v4959
    %v5107 = vunpack.c.h.b16 %v4959
    %v5108 = vunpack.c.l.b16 %v4960
    %v5109 = vunpack.c.h.b16 %v4960
    %v5110 = vunpack.c.l.b16 %v4961
    %v5111 = vunpack.c.h.b16 %v4961
    %v5112 = vunpack.c.l.b16 %v4962
    %v5113 = vunpack.c.h.b16 %v4962
    %v5114 = vunpack.c.l.b16 %v4963
    %v5115 = vunpack.c.h.b16 %v4963
    %v5116 = vunpack.c.l.b16 %v4964
    %v5117 = vunpack.c.h.b16 %v4964
    %v5118 = vunpack.c.l.b16 %v4965
    %v5119 = vunpack.c.h.b16 %v4965
    %v5120 = vunpack.c.l.b16 %v4966
    %v5121 = vunpack.c.h.b16 %v4966
    %v5122 = vunpack.c.l.b16 %v4967
    %v5123 = vunpack.c.h.b16 %v4967
    %v5124 = vunpack.c.l.b16 %v4968
    %v5125 = vunpack.c.h.b16 %v4968
    %v5126 = vunpack.c.l.b16 %v4969
    %v5127 = vunpack.c.h.b16 %v4969
    %v5128 = vunpack.c.l.b16 %v4970
    %v5129 = vunpack.c.h.b16 %v4970
    %v5130 = vunpack.c.l.b16 %v4971
    %v5131 = vunpack.c.h.b16 %v4971
    %v5132 = vunpack.c.l.b16 %v4972
    %v5133 = vunpack.c.h.b16 %v4972
    %v5134 = vunpack.c.l.b16 %v4973
    %v5135 = vunpack.c.h.b16 %v4973
    %v5136 = vunpack.c.l.b16 %v4974
    %v5137 = vunpack.c.h.b16 %v4974
    %v5138 = vunpack.c.l.b16 %v4975
    %v5139 = vunpack.c.h.b16 %v4975
    %v5140 = vunpack.c.l.b16 %v4976
    %v5141 = vunpack.c.h.b16 %v4976
    %v5142 = vunpack.c.l.b16 %v4977
    %v5143 = vunpack.c.h.b16 %v4977
    %v5144 = vunpack.c.l.b16 %v4978
    %v5145 = vunpack.c.h.b16 %v4978
    %v5146 = vunpack.c.l.b16 %v4979
    %v5147 = vunpack.c.h.b16 %v4979
    %v5148 = vunpack.c.l.b16 %v4980
    %v5149 = vunpack.c.h.b16 %v4980
    %v5150 = vunpack.c.l.b16 %v4981
    %v5151 = vunpack.c.h.b16 %v4981
    %v5152 = vunpack.c.l.b16 %v4982
    %v5153 = vunpack.c.h.b16 %v4982
    %v5154 = vunpack.c.l.b16 %v4983
    %v5155 = vunpack.c.h.b16 %v4983
    %v5156 = vunpack.c.l.b16 %v4984
    %v5157 = vunpack.c.h.b16 %v4984
    %v5158 = vunpack.c.l.b16 %v4985
    %v5159 = vunpack.c.h.b16 %v4985
    %v5160 = vunpack.c.l.b16 %v4986
    %v5161 = vunpack.c.h.b16 %v4986
    %v5162 = vunpack.c.l.b16 %v4987
    %v5163 = vunpack.c.h.b16 %v4987
    %v5164 = vunpack.c.l.b16 %v4988
    %v5165 = vunpack.c.h.b16 %v4988
    %v5166 = vunpack.c.l.b16 %v4989
    %v5167 = vunpack.c.h.b16 %v4989
    %v5168 = vunpack.c.l.b16 %v4990
    %v5169 = vunpack.c.h.b16 %v4990
    %v5170 = vunpack.c.l.b16 %v4991
    %v5171 = vunpack.c.h.b16 %v4991
    %v5172 = vunpack.c.l.b16 %v4992
    %v5173 = vunpack.c.h.b16 %v4992
    %v5174 = vunpack.c.l.b16 %v4993
    %v5175 = vunpack.c.h.b16 %v4993
    %v5176 = vunpack.c.l.b16 %v4994
    %v5177 = vunpack.c.h.b16 %v4994
    %v5178 = vunpack.c.l.b16 %v4995
    %v5179 = vunpack.c.h.b16 %v4995
    %v5180 = vunpack.c.l.b16 %v4996
    %v5181 = vunpack.c.h.b16 %v4996
    %v5182 = vunpack.c.l.b16 %v4997
    %v5183 = vunpack.c.h.b16 %v4997
    %v5184 = vunpack.c.l.b16 %v4998
    %v5185 = vunpack.c.h.b16 %v4998
    %v5186 = vunpack.c.l.b16 %v4999
    %v5187 = vunpack.c.h.b16 %v4999
    %v5188 = vunpack.c.l.b16 %v5000
    %v5189 = vunpack.c.h.b16 %v5000
    %v5190 = vunpack.c.l.b16 %v5001
    %v5191 = vunpack.c.h.b16 %v5001
    %v5192 = vunpack.c.l.b16 %v5002
    %v5193 = vunpack.c.h.b16 %v5002
    %v5194 = vunpack.c.l.b16 %v5003
    %v5195 = vunpack.c.h.b16 %v5003
    %v5196 = vunpack.c.l.b16 %v5004
    %v5197 = vunpack.c.h.b16 %v5004
    %v5198 = vunpack.c.l.b16 %v5005
    %v5199 = vunpack.c.h.b16 %v5005
    %v5200 = vunpack.c.l.b16 %v5006
    %v5201 = vunpack.c.h.b16 %v5006
    %v5202 = vunpack.c.l.b16 %v5007
    %v5203 = vunpack.c.h.b16 %v5007
    %v5204 = vunpack.c.l.b16 %v5008
    %v5205 = vunpack.c.h.b16 %v5008
    %v5206 = vunpack.c.l.b16 %v5009
    %v5207 = vunpack.c.h.b16 %v5009
    %v5208 = vpack.c.b16 %v5082, %v5080
    %v5209 = vpack.c.b16 %v5083, %v5081
    %v5210 = vpack.c.b16 %v5086, %v5084
    %v5211 = vpack.c.b16 %v5087, %v5085
    %v5212 = vpack.c.b16 %v5090, %v5088
    %v5213 = vpack.c.b16 %v5091, %v5089
    %v5214 = vpack.c.b16 %v5094, %v5092
    %v5215 = vpack.c.b16 %v5095, %v5093
    %v5216 = vpack.c.b16 %v5098, %v5096
    %v5217 = vpack.c.b16 %v5099, %v5097
    %v5218 = vpack.c.b16 %v5102, %v5100
    %v5219 = vpack.c.b16 %v5103, %v5101
    %v5220 = vpack.c.b16 %v5106, %v5104
    %v5221 = vpack.c.b16 %v5107, %v5105
    %v5222 = vpack.c.b16 %v5110, %v5108
    %v5223 = vpack.c.b16 %v5111, %v5109
    %v5224 = vpack.c.b16 %v5114, %v5112
    %v5225 = vpack.c.b16 %v5115, %v5113
    %v5226 = vpack.c.b16 %v5118, %v5116
    %v5227 = vpack.c.b16 %v5119, %v5117
    %v5228 = vpack.c.b16 %v5122, %v5120
    %v5229 = vpack.c.b16 %v5123, %v5121
    %v5230 = vpack.c.b16 %v5126, %v5124
    %v5231 = vpack.c.b16 %v5127, %v5125
    %v5232 = vpack.c.b16 %v5130, %v5128
    %v5233 = vpack.c.b16 %v5131, %v5129
    %v5234 = vpack.c.b16 %v5134, %v5132
    %v5235 = vpack.c.b16 %v5135, %v5133
    %v5236 = vpack.c.b16 %v5138, %v5136
    %v5237 = vpack.c.b16 %v5139, %v5137
    %v5238 = vpack.c.b16 %v5142, %v5140
    %v5239 = vpack.c.b16 %v5143, %v5141
    %v5240 = vpack.c.b16 %v5146, %v5144
    %v5241 = vpack.c.b16 %v5147, %v5145
    %v5242 = vpack.c.b16 %v5150, %v5148
    %v5243 = vpack.c.b16 %v5151, %v5149
    %v5244 = vpack.c.b16 %v5154, %v5152
    %v5245 = vpack.c.b16 %v5155, %v5153
    %v5246 = vpack.c.b16 %v5158, %v5156
    %v5247 = vpack.c.b16 %v5159, %v5157
    %v5248 = vpack.c.b16 %v5162, %v5160
    %v5249 = vpack.c.b16 %v5163, %v5161
    %v5250 = vpack.c.b16 %v5166, %v5164
    %v5251 = vpack.c.b16 %v5167, %v5165
    %v5252 = vpack.c.b16 %v5170, %v5168
    %v5253 = vpack.c.b16 %v5171, %v5169
    %v5254 = vpack.c.b16 %v5174, %v5172
    %v5255 = vpack.c.b16 %v5175, %v5173
    %v5256 = vpack.c.b16 %v5178, %v5176
    %v5257 = vpack.c.b16 %v5179, %v5177
    %v5258 = vpack.c.b16 %v5182, %v5180
    %v5259 = vpack.c.b16 %v5183, %v5181
    %v5260 = vpack.c.b16 %v5186, %v5184
    %v5261 = vpack.c.b16 %v5187, %v5185
    %v5262 = vpack.c.b16 %v5190, %v5188
    %v5263 = vpack.c.b16 %v5191, %v5189
    %v5264 = vpack.c.b16 %v5194, %v5192
    %v5265 = vpack.c.b16 %v5195, %v5193
    %v5266 = vpack.c.b16 %v5198, %v5196
    %v5267 = vpack.c.b16 %v5199, %v5197
    %v5268 = vpack.c.b16 %v5202, %v5200
    %v5269 = vpack.c.b16 %v5203, %v5201
    %v5270 = vpack.c.b16 %v5206, %v5204
    %v5271 = vpack.c.b16 %v5207, %v5205
    %5336 = vmatpush.bf16.msra.mxu0 %v5222
    %5337 = vmatpush.bf16.msra.mxu0 %v5220
    %5338 = vmatpush.bf16.msra.mxu0 %v5218
    %5339 = vmatpush.bf16.msra.mxu0 %v5216
    %5340 = vmatpush.bf16.msra.mxu0 %v5214
    %5341 = vmatpush.bf16.msra.mxu0 %v5212
    %5342 = vmatpush.bf16.msra.mxu0 %v5210
    %5343 = vmatpush.bf16.msra.mxu0 %v5208
    %5344 = vmatmul.bf16.gmra.mxu0 %v4942
    %v5345 = vpop.f32.mrf.mxu0
    %v5346 = vadd.f32 %v5012, %v5345
    %v5347 = vpop.f32.mrf.mxu0
    %v5348 = vadd.f32 %v5012, %v5347
    %5349 = vdwg.mxu0
    %5350 = vmatpush.bf16.msra.mxu0 %v5238
    %5351 = vmatpush.bf16.msra.mxu0 %v5236
    %5352 = vmatpush.bf16.msra.mxu0 %v5234
    %5353 = vmatpush.bf16.msra.mxu0 %v5232
    %5354 = vmatpush.bf16.msra.mxu0 %v5230
    %5355 = vmatpush.bf16.msra.mxu0 %v5228
    %5356 = vmatpush.bf16.msra.mxu0 %v5226
    %5357 = vmatpush.bf16.msra.mxu0 %v5224
    %5358 = vmatmul.bf16.gmra.mxu0 %v4943
    %v5359 = vpop.f32.mrf.mxu0
    %v5360 = vadd.f32 %v5346, %v5359
    %v5361 = vpop.f32.mrf.mxu0
    %v5362 = vadd.f32 %v5348, %v5361
    %5363 = vdwg.mxu0
    %5364 = vmatpush.bf16.msra.mxu0 %v5254
    %5365 = vmatpush.bf16.msra.mxu0 %v5252
    %5366 = vmatpush.bf16.msra.mxu0 %v5250
    %5367 = vmatpush.bf16.msra.mxu0 %v5248
    %5368 = vmatpush.bf16.msra.mxu0 %v5246
    %5369 = vmatpush.bf16.msra.mxu0 %v5244
    %5370 = vmatpush.bf16.msra.mxu0 %v5242
    %5371 = vmatpush.bf16.msra.mxu0 %v5240
    %5372 = vmatmul.bf16.gmra.mxu0 %v4944
    %v5373 = vpop.f32.mrf.mxu0
    %v5374 = vadd.f32 %v5360, %v5373
    %v5375 = vpop.f32.mrf.mxu0
    %v5376 = vadd.f32 %v5362, %v5375
    %5377 = vdwg.mxu0
    %5378 = vmatpush.bf16.msra.mxu0 %v5270
    %5379 = vmatpush.bf16.msra.mxu0 %v5268
    %5380 = vmatpush.bf16.msra.mxu0 %v5266
    %5381 = vmatpush.bf16.msra.mxu0 %v5264
    %5382 = vmatpush.bf16.msra.mxu0 %v5262
    %5383 = vmatpush.bf16.msra.mxu0 %v5260
    %5384 = vmatpush.bf16.msra.mxu0 %v5258
    %5385 = vmatpush.bf16.msra.mxu0 %v5256
    %5386 = vmatmul.bf16.gmra.mxu0 %v4945
    %v5387 = vpop.f32.mrf.mxu0
    %v5388 = vadd.f32 %v5374, %v5387
    %v5389 = vpop.f32.mrf.mxu0
    %v5390 = vadd.f32 %v5376, %v5389
    %5391 = vdwg.mxu0
    %5392 = vmatpush.bf16.msra.mxu0 %v5223
    %5393 = vmatpush.bf16.msra.mxu0 %v5221
    %5394 = vmatpush.bf16.msra.mxu0 %v5219
    %5395 = vmatpush.bf16.msra.mxu0 %v5217
    %5396 = vmatpush.bf16.msra.mxu0 %v5215
    %5397 = vmatpush.bf16.msra.mxu0 %v5213
    %5398 = vmatpush.bf16.msra.mxu0 %v5211
    %5399 = vmatpush.bf16.msra.mxu0 %v5209
    %5400 = vmatmul.bf16.gmra.mxu0 %v4942
    %v5401 = vpop.f32.mrf.mxu0
    %v5402 = vadd.f32 %v5013, %v5401
    %v5403 = vpop.f32.mrf.mxu0
    %v5404 = vadd.f32 %v5013, %v5403
    %5405 = vdwg.mxu0
    %5406 = vmatpush.bf16.msra.mxu0 %v5239
    %5407 = vmatpush.bf16.msra.mxu0 %v5237
    %5408 = vmatpush.bf16.msra.mxu0 %v5235
    %5409 = vmatpush.bf16.msra.mxu0 %v5233
    %5410 = vmatpush.bf16.msra.mxu0 %v5231
    %5411 = vmatpush.bf16.msra.mxu0 %v5229
    %5412 = vmatpush.bf16.msra.mxu0 %v5227
    %5413 = vmatpush.bf16.msra.mxu0 %v5225
    %5414 = vmatmul.bf16.gmra.mxu0 %v4943
    %v5415 = vpop.f32.mrf.mxu0
    %v5416 = vadd.f32 %v5402, %v5415
    %v5417 = vpop.f32.mrf.mxu0
    %v5418 = vadd.f32 %v5404, %v5417
    %5419 = vdwg.mxu0
    %5420 = vmatpush.bf16.msra.mxu0 %v5255
    %5421 = vmatpush.bf16.msra.mxu0 %v5253
    %5422 = vmatpush.bf16.msra.mxu0 %v5251
    %5423 = vmatpush.bf16.msra.mxu0 %v5249
    %5424 = vmatpush.bf16.msra.mxu0 %v5247
    %5425 = vmatpush.bf16.msra.mxu0 %v5245
    %5426 = vmatpush.bf16.msra.mxu0 %v5243
    %5427 = vmatpush.bf16.msra.mxu0 %v5241
    %5428 = vmatmul.bf16.gmra.mxu0 %v4944
    %v5429 = vpop.f32.mrf.mxu0
    %v5430 = vadd.f32 %v5416, %v5429
    %v5431 = vpop.f32.mrf.mxu0
    %v5432 = vadd.f32 %v5418, %v5431
    %5433 = vdwg.mxu0
    %5434 = vmatpush.bf16.msra.mxu0 %v5271
    %5435 = vmatpush.bf16.msra.mxu0 %v5269
    %5436 = vmatpush.bf16.msra.mxu0 %v5267
    %5437 = vmatpush.bf16.msra.mxu0 %v5265
    %5438 = vmatpush.bf16.msra.mxu0 %v5263
    %5439 = vmatpush.bf16.msra.mxu0 %v5261
    %5440 = vmatpush.bf16.msra.mxu0 %v5259
    %5441 = vmatpush.bf16.msra.mxu0 %v5257
    %5442 = vmatmul.bf16.gmra.mxu0 %v4945
    %v5443 = vpop.f32.mrf.mxu0
    %v5444 = vadd.f32 %v5430, %v5443
    %v5445 = vpop.f32.mrf.mxu0
    %v5446 = vadd.f32 %v5432, %v5445
    %5447 = vdwg.mxu0
    %v5448 = vmul.f32 %v5388, 0.01
    %v5449 = vmul.f32 %v5444, 0.01
    %v5450 = vmul.f32 %v5390, 0.01
    %v5451 = vmul.f32 %v5446, 0.01
    %v5452 = vmax.f32 %v5388, %v5448
    %v5453 = vmax.f32 %v5444, %v5449
    %v5454 = vmax.f32 %v5390, %v5450
    %v5455 = vmax.f32 %v5446, %v5451
    %v5456 = vpack.c.bf16 %v5454, %v5452
    %v5457 = vpack.c.bf16 %v5455, %v5453
    %v5458 = vld [vmem:[#allocation13] sm:$0xf]
    %v5459 = vld [vmem:[#allocation13 + $0x4] sm:$0xf]
    %v5460 = vld [vmem:[#allocation13 + $0x8] sm:$0xf]
    %v5461 = vld [vmem:[#allocation13 + $0xc] sm:$0xf]
    %v5462 = vld [vmem:[#allocation13 + $0x10] sm:$0xf]
    %v5463 = vld [vmem:[#allocation13 + $0x14] sm:$0xf]
    %v5464 = vld [vmem:[#allocation13 + $0x18] sm:$0xf]
    %v5465 = vld [vmem:[#allocation13 + $0x1c] sm:$0xf]
    %v5466 = vld [vmem:[#allocation13 + $0x20] sm:$0xf]
    %v5467 = vld [vmem:[#allocation13 + $0x24] sm:$0xf]
    %v5468 = vld [vmem:[#allocation13 + $0x28] sm:$0xf]
    %v5469 = vld [vmem:[#allocation13 + $0x2c] sm:$0xf]
    %v5470 = vld [vmem:[#allocation13 + $0x30] sm:$0xf]
    %v5471 = vld [vmem:[#allocation13 + $0x34] sm:$0xf]
    %v5472 = vld [vmem:[#allocation13 + $0x38] sm:$0xf]
    %v5473 = vld [vmem:[#allocation13 + $0x3c] sm:$0xf]
    %v5474 = vld [vmem:[#allocation13 + $0x40] sm:$0xf]
    %v5475 = vld [vmem:[#allocation13 + $0x44] sm:$0xf]
    %v5476 = vld [vmem:[#allocation13 + $0x48] sm:$0xf]
    %v5477 = vld [vmem:[#allocation13 + $0x4c] sm:$0xf]
    %v5478 = vld [vmem:[#allocation13 + $0x50] sm:$0xf]
    %v5479 = vld [vmem:[#allocation13 + $0x54] sm:$0xf]
    %v5480 = vld [vmem:[#allocation13 + $0x58] sm:$0xf]
    %v5481 = vld [vmem:[#allocation13 + $0x5c] sm:$0xf]
    %v5482 = vld [vmem:[#allocation13 + $0x60] sm:$0xf]
    %v5483 = vld [vmem:[#allocation13 + $0x64] sm:$0xf]
    %v5484 = vld [vmem:[#allocation13 + $0x68] sm:$0xf]
    %v5485 = vld [vmem:[#allocation13 + $0x6c] sm:$0xf]
    %v5486 = vld [vmem:[#allocation13 + $0x70] sm:$0xf]
    %v5487 = vld [vmem:[#allocation13 + $0x74] sm:$0xf]
    %v5488 = vld [vmem:[#allocation13 + $0x78] sm:$0xf]
    %v5489 = vld [vmem:[#allocation13 + $0x7c] sm:$0xf]
    %v5490 = vld [vmem:[%s13] sm:$0x1]
    %v5492 = vperm.slane %v5490, 0
    %v5526 = vunpack.c.l.b16 %v5458
    %v5527 = vunpack.c.l.b16 %v5459
    %v5528 = vunpack.c.l.b16 %v5460
    %v5529 = vunpack.c.l.b16 %v5461
    %v5530 = vunpack.c.l.b16 %v5462
    %v5531 = vunpack.c.l.b16 %v5463
    %v5532 = vunpack.c.l.b16 %v5464
    %v5533 = vunpack.c.l.b16 %v5465
    %v5534 = vunpack.c.l.b16 %v5466
    %v5535 = vunpack.c.l.b16 %v5467
    %v5536 = vunpack.c.l.b16 %v5468
    %v5537 = vunpack.c.l.b16 %v5469
    %v5538 = vunpack.c.l.b16 %v5470
    %v5539 = vunpack.c.l.b16 %v5471
    %v5540 = vunpack.c.l.b16 %v5472
    %v5541 = vunpack.c.l.b16 %v5473
    %v5542 = vunpack.c.l.b16 %v5474
    %v5543 = vunpack.c.l.b16 %v5475
    %v5544 = vunpack.c.l.b16 %v5476
    %v5545 = vunpack.c.l.b16 %v5477
    %v5546 = vunpack.c.l.b16 %v5478
    %v5547 = vunpack.c.l.b16 %v5479
    %v5548 = vunpack.c.l.b16 %v5480
    %v5549 = vunpack.c.l.b16 %v5481
    %v5550 = vunpack.c.l.b16 %v5482
    %v5551 = vunpack.c.l.b16 %v5483
    %v5552 = vunpack.c.l.b16 %v5484
    %v5553 = vunpack.c.l.b16 %v5485
    %v5554 = vunpack.c.l.b16 %v5486
    %v5555 = vunpack.c.l.b16 %v5487
    %v5556 = vunpack.c.l.b16 %v5488
    %v5557 = vunpack.c.l.b16 %v5489
    %v5558 = vpack.c.b16 %v5527, %v5526
    %v5559 = vpack.c.b16 %v5529, %v5528
    %v5560 = vpack.c.b16 %v5531, %v5530
    %v5561 = vpack.c.b16 %v5533, %v5532
    %v5562 = vpack.c.b16 %v5535, %v5534
    %v5563 = vpack.c.b16 %v5537, %v5536
    %v5564 = vpack.c.b16 %v5539, %v5538
    %v5565 = vpack.c.b16 %v5541, %v5540
    %v5566 = vpack.c.b16 %v5543, %v5542
    %v5567 = vpack.c.b16 %v5545, %v5544
    %v5568 = vpack.c.b16 %v5547, %v5546
    %v5569 = vpack.c.b16 %v5549, %v5548
    %v5570 = vpack.c.b16 %v5551, %v5550
    %v5571 = vpack.c.b16 %v5553, %v5552
    %v5572 = vpack.c.b16 %v5555, %v5554
    %v5573 = vpack.c.b16 %v5557, %v5556
    %5590 = vmatpush.bf16.msra.mxu0 %v5565
    %5591 = vmatpush.bf16.msra.mxu0 %v5564
    %5592 = vmatpush.bf16.msra.mxu0 %v5563
    %5593 = vmatpush.bf16.msra.mxu0 %v5562
    %5594 = vmatpush.bf16.msra.mxu0 %v5561
    %5595 = vmatpush.bf16.msra.mxu0 %v5560
    %5596 = vmatpush.bf16.msra.mxu0 %v5559
    %5597 = vmatpush.bf16.msra.mxu0 %v5558
    %5598 = vmatmul.bf16.gmra.mxu0 %v5456
    %v5599 = vpop.f32.mrf.mxu0
    %v5600 = vadd.f32 %v5492, %v5599
    %v5601 = vpop.f32.mrf.mxu0
    %v5602 = vadd.f32 %v5492, %v5601
    %5603 = vdwg.mxu0
    %5604 = vmatpush.bf16.msra.mxu0 %v5573
    %5605 = vmatpush.bf16.msra.mxu0 %v5572
    %5606 = vmatpush.bf16.msra.mxu0 %v5571
    %5607 = vmatpush.bf16.msra.mxu0 %v5570
    %5608 = vmatpush.bf16.msra.mxu0 %v5569
    %5609 = vmatpush.bf16.msra.mxu0 %v5568
    %5610 = vmatpush.bf16.msra.mxu0 %v5567
    %5611 = vmatpush.bf16.msra.mxu0 %v5566
    %5612 = vmatmul.bf16.gmra.mxu0 %v5457
    %v5613 = vpop.f32.mrf.mxu0
    %v5614 = vadd.f32 %v5600, %v5613
    %v5615 = vpop.f32.mrf.mxu0
    %v5616 = vadd.f32 %v5602, %v5615
    %5617 = vdwg.mxu0
    %v5618 = vmul.f32 %v5614, 0.01
    %v5619 = vmul.f32 %v5616, 0.01
    %v5620 = vmax.f32 %v5614, %v5618
    %v5621 = vmax.f32 %v5616, %v5619
    %v5622 = vpack.c.bf16 %v5621, %v5620
    %v5623 = vld [vmem:[#allocation14] sm:$0xf]
    %v5624 = vld [vmem:[#allocation14 + $0x4] sm:$0xf]
    %v5625 = vld [vmem:[#allocation14 + $0x8] sm:$0xf]
    %v5626 = vld [vmem:[#allocation14 + $0xc] sm:$0xf]
    %v5627 = vld [vmem:[#allocation14 + $0x10] sm:$0xf]
    %v5628 = vld [vmem:[#allocation14 + $0x14] sm:$0xf]
    %v5629 = vld [vmem:[#allocation14 + $0x18] sm:$0xf]
    %v5630 = vld [vmem:[#allocation14 + $0x1c] sm:$0xf]
    %v5631 = vld [vmem:[#allocation14 + $0x20] sm:$0xf]
    %v5632 = vld [vmem:[#allocation14 + $0x24] sm:$0xf]
    %v5633 = vld [vmem:[#allocation14 + $0x28] sm:$0xf]
    %v5634 = vld [vmem:[#allocation14 + $0x2c] sm:$0xf]
    %v5635 = vld [vmem:[#allocation14 + $0x30] sm:$0xf]
    %v5636 = vld [vmem:[#allocation14 + $0x34] sm:$0xf]
    %v5637 = vld [vmem:[#allocation14 + $0x38] sm:$0xf]
    %v5638 = vld [vmem:[#allocation14 + $0x3c] sm:$0xf]
    %v5639 = vld [vmem:[%s14] sm:$0x1]
    %v5641 = vperm.slane %v5639, 0
    %v5659 = vunpack.c.l.b16 %v5623
    %v5660 = vunpack.c.l.b16 %v5624
    %v5661 = vunpack.c.l.b16 %v5625
    %v5662 = vunpack.c.l.b16 %v5626
    %v5663 = vunpack.c.l.b16 %v5627
    %v5664 = vunpack.c.l.b16 %v5628
    %v5665 = vunpack.c.l.b16 %v5629
    %v5666 = vunpack.c.l.b16 %v5630
    %v5667 = vunpack.c.l.b16 %v5631
    %v5668 = vunpack.c.l.b16 %v5632
    %v5669 = vunpack.c.l.b16 %v5633
    %v5670 = vunpack.c.l.b16 %v5634
    %v5671 = vunpack.c.l.b16 %v5635
    %v5672 = vunpack.c.l.b16 %v5636
    %v5673 = vunpack.c.l.b16 %v5637
    %v5674 = vunpack.c.l.b16 %v5638
    %v5675 = vpack.c.b16 %v5660, %v5659
    %v5676 = vpack.c.b16 %v5662, %v5661
    %v5677 = vpack.c.b16 %v5664, %v5663
    %v5678 = vpack.c.b16 %v5666, %v5665
    %v5679 = vpack.c.b16 %v5668, %v5667
    %v5680 = vpack.c.b16 %v5670, %v5669
    %v5681 = vpack.c.b16 %v5672, %v5671
    %v5682 = vpack.c.b16 %v5674, %v5673
    %5691 = vmatpush.bf16.msra.mxu0 %v5682
    %5692 = vmatpush.bf16.msra.mxu0 %v5681
    %5693 = vmatpush.bf16.msra.mxu0 %v5680
    %5694 = vmatpush.bf16.msra.mxu0 %v5679
    %5695 = vmatpush.bf16.msra.mxu0 %v5678
    %5696 = vmatpush.bf16.msra.mxu0 %v5677
    %5697 = vmatpush.bf16.msra.mxu0 %v5676
    %5698 = vmatpush.bf16.msra.mxu0 %v5675
    %5699 = vmatmul.bf16.gmra.mxu0 %v5622
    %v5700 = vpop.f32.mrf.mxu0
    %v5701 = vadd.f32 %v5641, %v5700
    %v5702 = vpop.f32.mrf.mxu0
    %v5703 = vadd.f32 %v5641, %v5702
    %5704 = vdwg.mxu0
    %v5705 = vand.u32 2147483647, %v5701
    %v5706 = vand.u32 2147483647, %v5703
    %v5707 = vsub.f32 0.0, %v5705
    %v5708 = vsub.f32 0.0, %v5706
    %v5709 = vmul.f32 %v5707, 1.442695
    %v5710 = vpow.pop %v5709
    %v5711 = vmul.f32 %v5708, 1.442695
    %v5712 = vpow.pop %v5711
    %v5713 = vadd.f32 %v5710, 1.0
    %v5714 = vadd.f32 %v5712, 1.0
    %v5715 = vrcp.pop %v5713
    %v5716 = vrcp.pop %v5714
    %vm5717 = vcmp.ge.f32.partialorder %v5701, 0.0
    %vm5718 = vcmp.ge.f32.partialorder %v5703, 0.0
    %v5719 = vmul.f32 %v5710, %v5715
    %v5720 = vmul.f32 %v5712, %v5716
    %v5721 = vsel %vm5717, %v5715, %v5719
    %v5722 = vsel %vm5718, %v5716, %v5720
    %5723 = vst [vmem:[#allocation20] sm:$0xff] %v5721
    %5724 = vst [vmem:[#allocation20 + $0x8] sm:$0xff] %v5722
    // Predicated region
    $region106: #{tpu_custom_call.1} parent=1 // pred_check
      _
    $region107: #{tpu_custom_call.1} parent=1 // pred_check_branch
      %5726 = sbr.rel (0) target = $region109
    $region108: #{tpu_custom_call.1} parent=1 // pred_region
      %5728 = vsyncadd [#allocation4], 0
      %s5729 = sshll.u32 [#allocation20], 4
      %s5730 = int_to_ptr.vmem [resolvable:$true] %s5729
      %s5731 = sshll.u32 %s15, 4
      %s5732 = int_to_ptr.hbm [resolvable:$true] %s5731
      %5737 = dma.vmem_to_hbm [thread:$0]  %s5730, 256, %s5732, [#allocation4], 128, 128, 8
    $region109: #{tpu_custom_call.1} parent=1 // pred_fallthru
      _
    // Predicated region
    $region110: #{tpu_custom_call.1} parent=1 // pred_check
      _
    $region111: #{tpu_custom_call.1} parent=1 // pred_check_branch
      %5739 = sbr.rel (0) target = $region113
    $region112: #{tpu_custom_call.1} parent=1 // pred_region
      %5741 = dma.done [#allocation4], 256
    $region113: #{tpu_custom_call.1} parent=1 // pred_fallthru
      _
    %5742 = vsyncpa [#allocation3], 1
    %5743 = vsyncpa [#allocation6], 1
    %5744 = vsyncpa [#allocation9], 1
    %5745 = vsyncpa [#allocation12], 1
    %5746 = vsyncpa [#allocation15], 1
    %5747 = vsyncpa [#allocation18], 1
    %5748 = vsyncpa [#allocation4], 1

// kernel: tpu_custom_call.1
$region0: #{tpu_custom_call.1}
  #allocation0 [shape = 'u32[]', space=smem, size = 0x4, offset = 0x4, fixed_abs, tag = 'smem constant byte address 0x4 - core index']
  #allocation1 [shape = 'u32[72,128]{1,0:T(1,128)}', space=vmem, size = 0x9000, scoped, tag = 'internal scratch']
  %s0 = inlined_call_operand.hbm [shape: bf16[16,128], index: 0, kind: input, shape index: {}]
  %s1 = inlined_call_operand.hbm [shape: bf16[128,256], index: 1, kind: input, shape index: {}]
  %s2 = inlined_call_operand.hbm [shape: bf16[256,512], index: 2, kind: input, shape index: {}]
  %s3 = inlined_call_operand.hbm [shape: bf16[512,1024], index: 3, kind: input, shape index: {}]
  %s4 = inlined_call_operand.hbm [shape: bf16[1024,512], index: 4, kind: input, shape index: {}]
  %s5 = inlined_call_operand.hbm [shape: bf16[512,256], index: 5, kind: input, shape index: {}]
  %s6 = inlined_call_operand.hbm [shape: bf16[256,128], index: 6, kind: input, shape index: {}]
  %s7 = inlined_call_operand.hbm [shape: bf16[128,128], index: 7, kind: input, shape index: {}]
  %s8 = inlined_call_operand.hbm [shape: f32[1,256], index: 8, kind: input, shape index: {}]
  %s9 = inlined_call_operand.hbm [shape: f32[1,512], index: 9, kind: input, shape index: {}]
  %s10 = inlined_call_operand.vmem [shape: f32[1,1024], index: 10, kind: input, shape index: {}]
  %s11 = inlined_call_operand.hbm [shape: f32[1,512], index: 11, kind: input, shape index: {}]
  %s12 = inlined_call_operand.vmem [shape: f32[1,256], index: 12, kind: input, shape index: {}]
  %s13 = inlined_call_operand.vmem [shape: f32[1,128], index: 13, kind: input, shape index: {}]
  %s14 = inlined_call_operand.vmem [shape: f32[1,128], index: 14, kind: input, shape index: {}]
  %s15 = inlined_call_operand.hbm [shape: f32[16,128], index: 15, kind: output, shape index: {}]
  %s16 = sld [smem:[#allocation0]]
  $region114: #{tpu_custom_call.1} parent=0
    _
  %s18 = ssub.s32 1, %s16
  %s19 = scalar_select 0, %s18, %s16
  $region1: #{tpu_custom_call.1} parent=0
    #allocation2 [shape = 'u8[4096]{0}', space=vmem, size = 0x1000, scoped, tag = 'input window, operand 0, single buffered']
    #allocation3 [shape = 's32[1]{0}', space=sflag, size = 0x4, scoped, tag = 'scoped memory for tpu_custom_call.1']
    #allocation4 [shape = 's32[1]{0}', space=sflag, size = 0x4, scoped, tag = 'scoped memory for tpu_custom_call.1']
    #allocation5 [shape = 'u8[65536]{0}', space=vmem, size = 0x10000, scoped, tag = 'input window, operand 1, single buffered']
    #allocation6 [shape = 's32[1]{0}', space=sflag, size = 0x4, scoped, tag = 'scoped memory for tpu_custom_call.1']
    #allocation7 [shape = 'u8[262144]{0}', space=vmem, size = 0x40000, scoped, tag = 'input window, operand 2, single buffered']
    #allocation8 [shape = 'u8[1048576]{0}', space=vmem, size = 0x100000, scoped, tag = 'input window, operand 3, single buffered']
    #allocation9 [shape = 's32[1]{0}', space=sflag, size = 0x4, scoped, tag = 'scoped memory for tpu_custom_call.1']
    #allocation10 [shape = 'u8[1048576]{0}', space=vmem, size = 0x100000, scoped, tag = 'input window, operand 4, single buffered']
    #allocation11 [shape = 'u8[262144]{0}', space=vmem, size = 0x40000, scoped, tag = 'input window, operand 5, single buffered']
    #allocation12 [shape = 's32[1]{0}', space=sflag, size = 0x4, scoped, tag = 'scoped memory for tpu_custom_call.1']
    #allocation13 [shape = 'u8[65536]{0}', space=vmem, size = 0x10000, scoped, tag = 'input window, operand 6, single buffered']
    #allocation14 [shape = 'u8[32768]{0}', space=vmem, size = 0x8000, scoped, tag = 'input window, operand 7, single buffered']
    #allocation15 [shape = 's32[1]{0}', space=sflag, size = 0x4, scoped, tag = 'scoped memory for tpu_custom_call.1']
    #allocation16 [shape = 'u8[1024]{0}', space=vmem, size = 0x400, scoped, tag = 'input window, operand 8, single buffered']
    #allocation17 [shape = 'u8[2048]{0}', space=vmem, size = 0x800, scoped, tag = 'input window, operand 9, single buffered']
    #allocation18 [shape = 's32[1]{0}', space=sflag, size = 0x4, scoped, tag = 'scoped memory for tpu_custom_call.1']
    #allocation19 [shape = 'u8[2048]{0}', space=vmem, size = 0x800, scoped, tag = 'input window, operand 11, single buffered']
    #allocation20 [shape = 'u8[8192]{0}', space=vmem, size = 0x2000, scoped, tag = 'output window, operand 0, single buffered']
    %20 = vsyncpa [#allocation3], 0
    %21 = vsyncpa [#allocation6], 0
    %22 = vsyncpa [#allocation9], 0
    %23 = vsyncpa [#allocation12], 0
    %24 = vsyncpa [#allocation15], 0
    %25 = vsyncpa [#allocation18], 0
    %26 = vsyncpa [#allocation4], 0
    // Predicated region
    $region2: #{tpu_custom_call.1} parent=1 // pred_check
      _
    $region3: #{tpu_custom_call.1} parent=1 // pred_check_branch
      %28 = sbr.rel (0) target = $region5
    $region4: #{tpu_custom_call.1} parent=1 // pred_region
      %30 = vsyncadd [#allocation3], 0
      %s31 = sshll.u32 %s0, 4
      %s32 = int_to_ptr.hbm [resolvable:$true] %s31
      %s33 = sshll.u32 [#allocation2], 4
      %s34 = int_to_ptr.vmem [resolvable:$true] %s33
      %39 = dma.hbm_to_vmem [thread:$0]  %s32, 128, %s34, [#allocation3], 64, 64, 4
    $region5: #{tpu_custom_call.1} parent=1 // pred_fallthru
      _
    // Predicated region
    $region6: #{tpu_custom_call.1} parent=1 // pred_check
      _
    $region7: #{tpu_custom_call.1} parent=1 // pred_check_branch
      %41 = sbr.rel (0) target = $region9
    $region8: #{tpu_custom_call.1} parent=1 // pred_region
      %43 = vsyncadd [#allocation6], 0
      %s44 = sshll.u32 %s1, 4
      %s45 = int_to_ptr.hbm [resolvable:$true] %s44
      %s46 = sshll.u32 [#allocation5], 4
      %s47 = int_to_ptr.vmem [resolvable:$true] %s46
      %52 = dma.hbm_to_vmem [thread:$0]  %s45, 2048, %s47, [#allocation6], 128, 128, 8
    $region9: #{tpu_custom_call.1} parent=1 // pred_fallthru
      _
    // Predicated region
    $region10: #{tpu_custom_call.1} parent=1 // pred_check
      _
    $region11: #{tpu_custom_call.1} parent=1 // pred_check_branch
      %54 = sbr.rel (0) target = $region13
    $region12: #{tpu_custom_call.1} parent=1 // pred_region
      %56 = vsyncadd [#allocation6], 0
      %s57 = sshll.u32 %s2, 4
      %s58 = int_to_ptr.hbm [resolvable:$true] %s57
      %s59 = sshll.u32 [#allocation7], 4
      %s60 = int_to_ptr.vmem [resolvable:$true] %s59
      %65 = dma.hbm_to_vmem [thread:$0]  %s58, 8192, %s60, [#allocation6], 256, 256, 16
    $region13: #{tpu_custom_call.1} parent=1 // pred_fallthru
      _
    // Predicated region
    $region14: #{tpu_custom_call.1} parent=1 // pred_check
      _
    $region15: #{tpu_custom_call.1} parent=1 // pred_check_branch
      %67 = sbr.rel (0) target = $region17
    $region16: #{tpu_custom_call.1} parent=1 // pred_region
      %69 = vsyncadd [#allocation9], 0
      %s70 = sshll.u32 %s3, 4
      %s71 = int_to_ptr.hbm [resolvable:$true] %s70
      %s72 = sshll.u32 [#allocation8], 4
      %s73 = int_to_ptr.vmem [resolvable:$true] %s72
      %78 = dma.hbm_to_vmem [thread:$0]  %s71, 32768, %s73, [#allocation9], 512, 512, 32
    $region17: #{tpu_custom_call.1} parent=1 // pred_fallthru
      _
    // Predicated region
    $region18: #{tpu_custom_call.1} parent=1 // pred_check
      _
    $region19: #{tpu_custom_call.1} parent=1 // pred_check_branch
      %80 = sbr.rel (0) target = $region21
    $region20: #{tpu_custom_call.1} parent=1 // pred_region
      %82 = vsyncadd [#allocation9], 0
      %s83 = sshll.u32 %s4, 4
      %s84 = int_to_ptr.hbm [resolvable:$true] %s83
      %s85 = sshll.u32 [#allocation10], 4
      %s86 = int_to_ptr.vmem [resolvable:$true] %s85
      %91 = dma.hbm_to_vmem [thread:$0]  %s84, 32768, %s86, [#allocation9], 256, 256, 16
    $region21: #{tpu_custom_call.1} parent=1 // pred_fallthru
      _
    // Predicated region
    $region22: #{tpu_custom_call.1} parent=1 // pred_check
      _
    $region23: #{tpu_custom_call.1} parent=1 // pred_check_branch
      %93 = sbr.rel (0) target = $region25
    $region24: #{tpu_custom_call.1} parent=1 // pred_region
      %95 = vsyncadd [#allocation12], 0
      %s96 = sshll.u32 %s5, 4
      %s97 = int_to_ptr.hbm [resolvable:$true] %s96
      %s98 = sshll.u32 [#allocation11], 4
      %s99 = int_to_ptr.vmem [resolvable:$true] %s98
      %104 = dma.hbm_to_vmem [thread:$0]  %s97, 8192, %s99, [#allocation12], 128, 128, 8
    $region25: #{tpu_custom_call.1} parent=1 // pred_fallthru
      _
    // Predicated region
    $region26: #{tpu_custom_call.1} parent=1 // pred_check
      _
    $region27: #{tpu_custom_call.1} parent=1 // pred_check_branch
      %106 = sbr.rel (0) target = $region29
    $region28: #{tpu_custom_call.1} parent=1 // pred_region
      %108 = vsyncadd [#allocation12], 0
      %s109 = sshll.u32 %s6, 4
      %s110 = int_to_ptr.hbm [resolvable:$true] %s109
      %s111 = sshll.u32 [#allocation13], 4
      %s112 = int_to_ptr.vmem [resolvable:$true] %s111
      %117 = dma.hbm_to_vmem [thread:$0]  %s110, 2048, %s112, [#allocation12], 64, 64, 4
    $region29: #{tpu_custom_call.1} parent=1 // pred_fallthru
      _
    // Predicated region
    $region30: #{tpu_custom_call.1} parent=1 // pred_check
      _
    $region31: #{tpu_custom_call.1} parent=1 // pred_check_branch
      %119 = sbr.rel (0) target = $region33
    $region32: #{tpu_custom_call.1} parent=1 // pred_region
      %121 = vsyncadd [#allocation15], 0
      %s122 = sshll.u32 %s7, 4
      %s123 = int_to_ptr.hbm [resolvable:$true] %s122
      %s124 = sshll.u32 [#allocation14], 4
      %s125 = int_to_ptr.vmem [resolvable:$true] %s124
      %130 = dma.hbm_to_vmem [thread:$0]  %s123, 1024, %s125, [#allocation15], 64, 64, 4
    $region33: #{tpu_custom_call.1} parent=1 // pred_fallthru
      _
    // Predicated region
    $region34: #{tpu_custom_call.1} parent=1 // pred_check
      _
    $region35: #{tpu_custom_call.1} parent=1 // pred_check_branch
      %132 = sbr.rel (0) target = $region37
    $region36: #{tpu_custom_call.1} parent=1 // pred_region
      %134 = vsyncadd [#allocation15], 0
      %s136 = sshll.u32 %s8, 4
      %s137 = int_to_ptr.hbm [resolvable:$true] %s136
      %s138 = sshll.u32 [#allocation16], 4
      %s139 = int_to_ptr.vmem [resolvable:$true] %s138
      %141 = dma.hbm_to_vmem [thread:$0]  %s137, 32, %s139, [#allocation15]
    $region37: #{tpu_custom_call.1} parent=1 // pred_fallthru
      _
    // Predicated region
    $region38: #{tpu_custom_call.1} parent=1 // pred_check
      _
    $region39: #{tpu_custom_call.1} parent=1 // pred_check_branch
      %143 = sbr.rel (0) target = $region41
    $region40: #{tpu_custom_call.1} parent=1 // pred_region
      %145 = vsyncadd [#allocation18], 0
      %s147 = sshll.u32 %s9, 4
      %s148 = int_to_ptr.hbm [resolvable:$true] %s147
      %s149 = sshll.u32 [#allocation17], 4
      %s150 = int_to_ptr.vmem [resolvable:$true] %s149
      %152 = dma.hbm_to_vmem [thread:$0]  %s148, 64, %s150, [#allocation18]
    $region41: #{tpu_custom_call.1} parent=1 // pred_fallthru
      _
    // Predicated region
    $region42: #{tpu_custom_call.1} parent=1 // pred_check
      _
    $region43: #{tpu_custom_call.1} parent=1 // pred_check_branch
      %154 = sbr.rel (0) target = $region45
    $region44: #{tpu_custom_call.1} parent=1 // pred_region
      _
    $region45: #{tpu_custom_call.1} parent=1 // pred_fallthru
      _
    // Predicated region
    $region46: #{tpu_custom_call.1} parent=1 // pred_check
      _
    $region47: #{tpu_custom_call.1} parent=1 // pred_check_branch
      %156 = sbr.rel (0) target = $region49
    $region48: #{tpu_custom_call.1} parent=1 // pred_region
      %158 = vsyncadd [#allocation18], 0
      %s160 = sshll.u32 %s11, 4
      %s161 = int_to_ptr.hbm [resolvable:$true] %s160
      %s162 = sshll.u32 [#allocation19], 4
      %s163 = int_to_ptr.vmem [resolvable:$true] %s162
      %165 = dma.hbm_to_vmem [thread:$0]  %s161, 64, %s163, [#allocation18]
    $region49: #{tpu_custom_call.1} parent=1 // pred_fallthru
      _
    // Predicated region
    $region50: #{tpu_custom_call.1} parent=1 // pred_check
      _
    $region51: #{tpu_custom_call.1} parent=1 // pred_check_branch
      %167 = sbr.rel (0) target = $region53
    $region52: #{tpu_custom_call.1} parent=1 // pred_region
      _
    $region53: #{tpu_custom_call.1} parent=1 // pred_fallthru
      _
    // Predicated region
    $region54: #{tpu_custom_call.1} parent=1 // pred_check
      _
    $region55: #{tpu_custom_call.1} parent=1 // pred_check_branch
      %169 = sbr.rel (0) target = $region57
    $region56: #{tpu_custom_call.1} parent=1 // pred_region
      _
    $region57: #{tpu_custom_call.1} parent=1 // pred_fallthru
      _
    // Predicated region
    $region58: #{tpu_custom_call.1} parent=1 // pred_check
      _
    $region59: #{tpu_custom_call.1} parent=1 // pred_check_branch
      %171 = sbr.rel (0) target = $region61
    $region60: #{tpu_custom_call.1} parent=1 // pred_region
      _
    $region61: #{tpu_custom_call.1} parent=1 // pred_fallthru
      _
    // Predicated region
    $region62: #{tpu_custom_call.1} parent=1 // pred_check
      _
    $region63: #{tpu_custom_call.1} parent=1 // pred_check_branch
      %173 = sbr.rel (0) target = $region65
    $region64: #{tpu_custom_call.1} parent=1 // pred_region
      %175 = dma.done [#allocation3], 128
    $region65: #{tpu_custom_call.1} parent=1 // pred_fallthru
      _
    // Predicated region
    $region66: #{tpu_custom_call.1} parent=1 // pred_check
      _
    $region67: #{tpu_custom_call.1} parent=1 // pred_check_branch
      %177 = sbr.rel (0) target = $region69
    $region68: #{tpu_custom_call.1} parent=1 // pred_region
      %179 = dma.done [#allocation6], 2048
    $region69: #{tpu_custom_call.1} parent=1 // pred_fallthru
      _
    // Predicated region
    $region70: #{tpu_custom_call.1} parent=1 // pred_check
      _
    $region71: #{tpu_custom_call.1} parent=1 // pred_check_branch
      %181 = sbr.rel (0) target = $region73
    $region72: #{tpu_custom_call.1} parent=1 // pred_region
      %183 = dma.done [#allocation6], 8192
    $region73: #{tpu_custom_call.1} parent=1 // pred_fallthru
      _
    // Predicated region
    $region74: #{tpu_custom_call.1} parent=1 // pred_check
      _
    $region75: #{tpu_custom_call.1} parent=1 // pred_check_branch
      %185 = sbr.rel (0) target = $region77
    $region76: #{tpu_custom_call.1} parent=1 // pred_region
      %187 = dma.done [#allocation9], 32768
    $region77: #{tpu_custom_call.1} parent=1 // pred_fallthru
      _
    // Predicated region
    $region78: #{tpu_custom_call.1} parent=1 // pred_check
      _
    $region79: #{tpu_custom_call.1} parent=1 // pred_check_branch
      %189 = sbr.rel (0) target = $region81
    $region80: #{tpu_custom_call.1} parent=1 // pred_region
      %191 = dma.done [#allocation9], 32768
    $region81: #{tpu_custom_call.1} parent=1 // pred_fallthru
      _
    // Predicated region
    $region82: #{tpu_custom_call.1} parent=1 // pred_check
      _
    $region83: #{tpu_custom_call.1} parent=1 // pred_check_branch
      %193 = sbr.rel (0) target = $region85
    $region84: #{tpu_custom_call.1} parent=1 // pred_region
      %195 = dma.done [#allocation12], 8192
    $region85: #{tpu_custom_call.1} parent=1 // pred_fallthru
      _
    // Predicated region
    $region86: #{tpu_custom_call.1} parent=1 // pred_check
      _
    $region87: #{tpu_custom_call.1} parent=1 // pred_check_branch
      %197 = sbr.rel (0) target = $region89
    $region88: #{tpu_custom_call.1} parent=1 // pred_region
      %199 = dma.done [#allocation12], 2048
    $region89: #{tpu_custom_call.1} parent=1 // pred_fallthru
      _
    // Predicated region
    $region90: #{tpu_custom_call.1} parent=1 // pred_check
      _
    $region91: #{tpu_custom_call.1} parent=1 // pred_check_branch
      %201 = sbr.rel (0) target = $region93
    $region92: #{tpu_custom_call.1} parent=1 // pred_region
      %203 = dma.done [#allocation15], 1024
    $region93: #{tpu_custom_call.1} parent=1 // pred_fallthru
      _
    // Predicated region
    $region94: #{tpu_custom_call.1} parent=1 // pred_check
      _
    $region95: #{tpu_custom_call.1} parent=1 // pred_check_branch
      %205 = sbr.rel (0) target = $region97
    $region96: #{tpu_custom_call.1} parent=1 // pred_region
      %207 = dma.done [#allocation15], 32
    $region97: #{tpu_custom_call.1} parent=1 // pred_fallthru
      _
    // Predicated region
    $region98: #{tpu_custom_call.1} parent=1 // pred_check
      _
    $region99: #{tpu_custom_call.1} parent=1 // pred_check_branch
      %209 = sbr.rel (0) target = $region101
    $region100: #{tpu_custom_call.1} parent=1 // pred_region
      %211 = dma.done [#allocation18], 64
    $region101: #{tpu_custom_call.1} parent=1 // pred_fallthru
      _
    // Predicated region
    $region102: #{tpu_custom_call.1} parent=1 // pred_check
      _
    $region103: #{tpu_custom_call.1} parent=1 // pred_check_branch
      %213 = sbr.rel (0) target = $region105
    $region104: #{tpu_custom_call.1} parent=1 // pred_region
      %215 = dma.done [#allocation18], 64
    $region105: #{tpu_custom_call.1} parent=1 // pred_fallthru
      _
    %v216 = vld [vmem:[#allocation2] sm:$0xf]
    %v217 = vld [vmem:[#allocation2 + $0x4] sm:$0xf]
    %v218 = vld [vmem:[#allocation5] sm:$0xff]
    %v219 = vld [vmem:[#allocation5 + $0x8] sm:$0xff]
    %v220 = vld [vmem:[#allocation5 + $0x10] sm:$0xff]
    %v221 = vld [vmem:[#allocation5 + $0x18] sm:$0xff]
    %v222 = vld [vmem:[#allocation5 + $0x20] sm:$0xff]
    %v223 = vld [vmem:[#allocation5 + $0x28] sm:$0xff]
    %v224 = vld [vmem:[#allocation5 + $0x30] sm:$0xff]
    %v225 = vld [vmem:[#allocation5 + $0x38] sm:$0xff]
    %v226 = vld [vmem:[#allocation5 + $0x40] sm:$0xff]
    %v227 = vld [vmem:[#allocation5 + $0x48] sm:$0xff]
    %v228 = vld [vmem:[#allocation5 + $0x50] sm:$0xff]
    %v229 = vld [vmem:[#allocation5 + $0x58] sm:$0xff]
    %v230 = vld [vmem:[#allocation5 + $0x60] sm:$0xff]
    %v231 = vld [vmem:[#allocation5 + $0x68] sm:$0xff]
    %v232 = vld [vmem:[#allocation5 + $0x70] sm:$0xff]
    %v233 = vld [vmem:[#allocation5 + $0x78] sm:$0xff]
    %v234 = vld [vmem:[#allocation16] sm:$0x3]
    %v236 = vperm.slane %v234, 0
    %v237 = vperm.slane %v234, 1
    %v242 = vunpack.c.l.b16 %v216
    %v243 = vunpack.c.l.b16 %v217
    %v244 = vpack.c.b16 %v243, %v242
    %v262 = vunpack.c.l.b16 %v218
    %v263 = vunpack.c.h.b16 %v218
    %v264 = vunpack.c.l.b16 %v219
    %v265 = vunpack.c.h.b16 %v219
    %v266 = vunpack.c.l.b16 %v220
    %v267 = vunpack.c.h.b16 %v220
    %v268 = vunpack.c.l.b16 %v221
    %v269 = vunpack.c.h.b16 %v221
    %v270 = vunpack.c.l.b16 %v222
    %v271 = vunpack.c.h.b16 %v222
    %v272 = vunpack.c.l.b16 %v223
    %v273 = vunpack.c.h.b16 %v223
    %v274 = vunpack.c.l.b16 %v224
    %v275 = vunpack.c.h.b16 %v224
    %v276 = vunpack.c.l.b16 %v225
    %v277 = vunpack.c.h.b16 %v225
    %v278 = vunpack.c.l.b16 %v226
    %v279 = vunpack.c.h.b16 %v226
    %v280 = vunpack.c.l.b16 %v227
    %v281 = vunpack.c.h.b16 %v227
    %v282 = vunpack.c.l.b16 %v228
    %v283 = vunpack.c.h.b16 %v228
    %v284 = vunpack.c.l.b16 %v229
    %v285 = vunpack.c.h.b16 %v229
    %v286 = vunpack.c.l.b16 %v230
    %v287 = vunpack.c.h.b16 %v230
    %v288 = vunpack.c.l.b16 %v231
    %v289 = vunpack.c.h.b16 %v231
    %v290 = vunpack.c.l.b16 %v232
    %v291 = vunpack.c.h.b16 %v232
    %v292 = vunpack.c.l.b16 %v233
    %v293 = vunpack.c.h.b16 %v233
    %v294 = vpack.c.b16 %v264, %v262
    %v295 = vpack.c.b16 %v265, %v263
    %v296 = vpack.c.b16 %v268, %v266
    %v297 = vpack.c.b16 %v269, %v267
    %v298 = vpack.c.b16 %v272, %v270
    %v299 = vpack.c.b16 %v273, %v271
    %v300 = vpack.c.b16 %v276, %v274
    %v301 = vpack.c.b16 %v277, %v275
    %v302 = vpack.c.b16 %v280, %v278
    %v303 = vpack.c.b16 %v281, %v279
    %v304 = vpack.c.b16 %v284, %v282
    %v305 = vpack.c.b16 %v285, %v283
    %v306 = vpack.c.b16 %v288, %v286
    %v307 = vpack.c.b16 %v289, %v287
    %v308 = vpack.c.b16 %v292, %v290
    %v309 = vpack.c.b16 %v293, %v291
    %326 = vmatpush.bf16.msra.mxu0 %v308
    %327 = vmatpush.bf16.msra.mxu0 %v306
    %328 = vmatpush.bf16.msra.mxu0 %v304
    %329 = vmatpush.bf16.msra.mxu0 %v302
    %330 = vmatpush.bf16.msra.mxu0 %v300
    %331 = vmatpush.bf16.msra.mxu0 %v298
    %332 = vmatpush.bf16.msra.mxu0 %v296
    %333 = vmatpush.bf16.msra.mxu0 %v294
    %334 = vmatmul.bf16.gmra.mxu0 %v244
    %v335 = vpop.f32.mrf.mxu0
    %v336 = vadd.f32 %v236, %v335
    %v337 = vpop.f32.mrf.mxu0
    %v338 = vadd.f32 %v236, %v337
    %339 = vdwg.mxu0
    %340 = vmatpush.bf16.msra.mxu0 %v309
    %341 = vmatpush.bf16.msra.mxu0 %v307
    %342 = vmatpush.bf16.msra.mxu0 %v305
    %343 = vmatpush.bf16.msra.mxu0 %v303
    %344 = vmatpush.bf16.msra.mxu0 %v301
    %345 = vmatpush.bf16.msra.mxu0 %v299
    %346 = vmatpush.bf16.msra.mxu0 %v297
    %347 = vmatpush.bf16.msra.mxu0 %v295
    %348 = vmatmul.bf16.gmra.mxu0 %v244
    %v349 = vpop.f32.mrf.mxu0
    %v350 = vadd.f32 %v237, %v349
    %v351 = vpop.f32.mrf.mxu0
    %v352 = vadd.f32 %v237, %v351
    %353 = vdwg.mxu0
    %v354 = vmul.f32 %v336, 0.01
    %v355 = vmul.f32 %v350, 0.01
    %v356 = vmul.f32 %v338, 0.01
    %v357 = vmul.f32 %v352, 0.01
    %v358 = vmax.f32 %v336, %v354
    %v359 = vmax.f32 %v350, %v355
    %v360 = vmax.f32 %v338, %v356
    %v361 = vmax.f32 %v352, %v357
    %v362 = vpack.c.bf16 %v360, %v358
    %v363 = vpack.c.bf16 %v361, %v359
    %v364 = vld [vmem:[#allocation7] sm:$0xff]
    %v365 = vld [vmem:[#allocation7 + $0x8] sm:$0xff]
    %v366 = vld [vmem:[#allocation7 + $0x10] sm:$0xff]
    %v367 = vld [vmem:[#allocation7 + $0x18] sm:$0xff]
    %v368 = vld [vmem:[#allocation7 + $0x20] sm:$0xff]
    %v369 = vld [vmem:[#allocation7 + $0x28] sm:$0xff]
    %v370 = vld [vmem:[#allocation7 + $0x30] sm:$0xff]
    %v371 = vld [vmem:[#allocation7 + $0x38] sm:$0xff]
    %v372 = vld [vmem:[#allocation7 + $0x40] sm:$0xff]
    %v373 = vld [vmem:[#allocation7 + $0x48] sm:$0xff]
    %v374 = vld [vmem:[#allocation7 + $0x50] sm:$0xff]
    %v375 = vld [vmem:[#allocation7 + $0x58] sm:$0xff]
    %v376 = vld [vmem:[#allocation7 + $0x60] sm:$0xff]
    %v377 = vld [vmem:[#allocation7 + $0x68] sm:$0xff]
    %v378 = vld [vmem:[#allocation7 + $0x70] sm:$0xff]
    %v379 = vld [vmem:[#allocation7 + $0x78] sm:$0xff]
    %v380 = vld [vmem:[#allocation7 + $0x80] sm:$0xff]
    %v381 = vld [vmem:[#allocation7 + $0x88] sm:$0xff]
    %v382 = vld [vmem:[#allocation7 + $0x90] sm:$0xff]
    %v383 = vld [vmem:[#allocation7 + $0x98] sm:$0xff]
    %v384 = vld [vmem:[#allocation7 + $0xa0] sm:$0xff]
    %v385 = vld [vmem:[#allocation7 + $0xa8] sm:$0xff]
    %v386 = vld [vmem:[#allocation7 + $0xb0] sm:$0xff]
    %v387 = vld [vmem:[#allocation7 + $0xb8] sm:$0xff]
    %v388 = vld [vmem:[#allocation7 + $0xc0] sm:$0xff]
    %v389 = vld [vmem:[#allocation7 + $0xc8] sm:$0xff]
    %v390 = vld [vmem:[#allocation7 + $0xd0] sm:$0xff]
    %v391 = vld [vmem:[#allocation7 + $0xd8] sm:$0xff]
    %v392 = vld [vmem:[#allocation7 + $0xe0] sm:$0xff]
    %v393 = vld [vmem:[#allocation7 + $0xe8] sm:$0xff]
    %v394 = vld [vmem:[#allocation7 + $0xf0] sm:$0xff]
    %v395 = vld [vmem:[#allocation7 + $0xf8] sm:$0xff]
    %v396 = vld [vmem:[#allocation7 + $0x100] sm:$0xff]
    %v397 = vld [vmem:[#allocation7 + $0x108] sm:$0xff]
    %v398 = vld [vmem:[#allocation7 + $0x110] sm:$0xff]
    %v399 = vld [vmem:[#allocation7 + $0x118] sm:$0xff]
    %v400 = vld [vmem:[#allocation7 + $0x120] sm:$0xff]
    %v401 = vld [vmem:[#allocation7 + $0x128] sm:$0xff]
    %v402 = vld [vmem:[#allocation7 + $0x130] sm:$0xff]
    %v403 = vld [vmem:[#allocation7 + $0x138] sm:$0xff]
    %v404 = vld [vmem:[#allocation7 + $0x140] sm:$0xff]
    %v405 = vld [vmem:[#allocation7 + $0x148] sm:$0xff]
    %v406 = vld [vmem:[#allocation7 + $0x150] sm:$0xff]
    %v407 = vld [vmem:[#allocation7 + $0x158] sm:$0xff]
    %v408 = vld [vmem:[#allocation7 + $0x160] sm:$0xff]
    %v409 = vld [vmem:[#allocation7 + $0x168] sm:$0xff]
    %v410 = vld [vmem:[#allocation7 + $0x170] sm:$0xff]
    %v411 = vld [vmem:[#allocation7 + $0x178] sm:$0xff]
    %v412 = vld [vmem:[#allocation7 + $0x180] sm:$0xff]
    %v413 = vld [vmem:[#allocation7 + $0x188] sm:$0xff]
    %v414 = vld [vmem:[#allocation7 + $0x190] sm:$0xff]
    %v415 = vld [vmem:[#allocation7 + $0x198] sm:$0xff]
    %v416 = vld [vmem:[#allocation7 + $0x1a0] sm:$0xff]
    %v417 = vld [vmem:[#allocation7 + $0x1a8] sm:$0xff]
    %v418 = vld [vmem:[#allocation7 + $0x1b0] sm:$0xff]
    %v419 = vld [vmem:[#allocation7 + $0x1b8] sm:$0xff]
    %v420 = vld [vmem:[#allocation7 + $0x1c0] sm:$0xff]
    %v421 = vld [vmem:[#allocation7 + $0x1c8] sm:$0xff]
    %v422 = vld [vmem:[#allocation7 + $0x1d0] sm:$0xff]
    %v423 = vld [vmem:[#allocation7 + $0x1d8] sm:$0xff]
    %v424 = vld [vmem:[#allocation7 + $0x1e0] sm:$0xff]
    %v425 = vld [vmem:[#allocation7 + $0x1e8] sm:$0xff]
    %v426 = vld [vmem:[#allocation7 + $0x1f0] sm:$0xff]
    %v427 = vld [vmem:[#allocation7 + $0x1f8] sm:$0xff]
    %v428 = vld [vmem:[#allocation17] sm:$0xf]
    %v430 = vperm.slane %v428, 0
    %v431 = vperm.slane %v428, 1
    %v432 = vperm.slane %v428, 2
    %v433 = vperm.slane %v428, 3
    %v502 = vunpack.c.l.b16 %v364
    %v503 = vunpack.c.h.b16 %v364
    %v504 = vunpack.c.l.b16 %v365
    %v505 = vunpack.c.h.b16 %v365
    %v506 = vunpack.c.l.b16 %v366
    %v507 = vunpack.c.h.b16 %v366
    %v508 = vunpack.c.l.b16 %v367
    %v509 = vunpack.c.h.b16 %v367
    %v510 = vunpack.c.l.b16 %v368
    %v511 = vunpack.c.h.b16 %v368
    %v512 = vunpack.c.l.b16 %v369
    %v513 = vunpack.c.h.b16 %v369
    %v514 = vunpack.c.l.b16 %v370
    %v515 = vunpack.c.h.b16 %v370
    %v516 = vunpack.c.l.b16 %v371
    %v517 = vunpack.c.h.b16 %v371
    %v518 = vunpack.c.l.b16 %v372
    %v519 = vunpack.c.h.b16 %v372
    %v520 = vunpack.c.l.b16 %v373
    %v521 = vunpack.c.h.b16 %v373
    %v522 = vunpack.c.l.b16 %v374
    %v523 = vunpack.c.h.b16 %v374
    %v524 = vunpack.c.l.b16 %v375
    %v525 = vunpack.c.h.b16 %v375
    %v526 = vunpack.c.l.b16 %v376
    %v527 = vunpack.c.h.b16 %v376
    %v528 = vunpack.c.l.b16 %v377
    %v529 = vunpack.c.h.b16 %v377
    %v530 = vunpack.c.l.b16 %v378
    %v531 = vunpack.c.h.b16 %v378
    %v532 = vunpack.c.l.b16 %v379
    %v533 = vunpack.c.h.b16 %v379
    %v534 = vunpack.c.l.b16 %v380
    %v535 = vunpack.c.h.b16 %v380
    %v536 = vunpack.c.l.b16 %v381
    %v537 = vunpack.c.h.b16 %v381
    %v538 = vunpack.c.l.b16 %v382
    %v539 = vunpack.c.h.b16 %v382
    %v540 = vunpack.c.l.b16 %v383
    %v541 = vunpack.c.h.b16 %v383
    %v542 = vunpack.c.l.b16 %v384
    %v543 = vunpack.c.h.b16 %v384
    %v544 = vunpack.c.l.b16 %v385
    %v545 = vunpack.c.h.b16 %v385
    %v546 = vunpack.c.l.b16 %v386
    %v547 = vunpack.c.h.b16 %v386
    %v548 = vunpack.c.l.b16 %v387
    %v549 = vunpack.c.h.b16 %v387
    %v550 = vunpack.c.l.b16 %v388
    %v551 = vunpack.c.h.b16 %v388
    %v552 = vunpack.c.l.b16 %v389
    %v553 = vunpack.c.h.b16 %v389
    %v554 = vunpack.c.l.b16 %v390
    %v555 = vunpack.c.h.b16 %v390
    %v556 = vunpack.c.l.b16 %v391
    %v557 = vunpack.c.h.b16 %v391
    %v558 = vunpack.c.l.b16 %v392
    %v559 = vunpack.c.h.b16 %v392
    %v560 = vunpack.c.l.b16 %v393
    %v561 = vunpack.c.h.b16 %v393
    %v562 = vunpack.c.l.b16 %v394
    %v563 = vunpack.c.h.b16 %v394
    %v564 = vunpack.c.l.b16 %v395
    %v565 = vunpack.c.h.b16 %v395
    %v566 = vunpack.c.l.b16 %v396
    %v567 = vunpack.c.h.b16 %v396
    %v568 = vunpack.c.l.b16 %v397
    %v569 = vunpack.c.h.b16 %v397
    %v570 = vunpack.c.l.b16 %v398
    %v571 = vunpack.c.h.b16 %v398
    %v572 = vunpack.c.l.b16 %v399
    %v573 = vunpack.c.h.b16 %v399
    %v574 = vunpack.c.l.b16 %v400
    %v575 = vunpack.c.h.b16 %v400
    %v576 = vunpack.c.l.b16 %v401
    %v577 = vunpack.c.h.b16 %v401
    %v578 = vunpack.c.l.b16 %v402
    %v579 = vunpack.c.h.b16 %v402
    %v580 = vunpack.c.l.b16 %v403
    %v581 = vunpack.c.h.b16 %v403
    %v582 = vunpack.c.l.b16 %v404
    %v583 = vunpack.c.h.b16 %v404
    %v584 = vunpack.c.l.b16 %v405
    %v585 = vunpack.c.h.b16 %v405
    %v586 = vunpack.c.l.b16 %v406
    %v587 = vunpack.c.h.b16 %v406
    %v588 = vunpack.c.l.b16 %v407
    %v589 = vunpack.c.h.b16 %v407
    %v590 = vunpack.c.l.b16 %v408
    %v591 = vunpack.c.h.b16 %v408
    %v592 = vunpack.c.l.b16 %v409
    %v593 = vunpack.c.h.b16 %v409
    %v594 = vunpack.c.l.b16 %v410
    %v595 = vunpack.c.h.b16 %v410
    %v596 = vunpack.c.l.b16 %v411
    %v597 = vunpack.c.h.b16 %v411
    %v598 = vunpack.c.l.b16 %v412
    %v599 = vunpack.c.h.b16 %v412
    %v600 = vunpack.c.l.b16 %v413
    %v601 = vunpack.c.h.b16 %v413
    %v602 = vunpack.c.l.b16 %v414
    %v603 = vunpack.c.h.b16 %v414
    %v604 = vunpack.c.l.b16 %v415
    %v605 = vunpack.c.h.b16 %v415
    %v606 = vunpack.c.l.b16 %v416
    %v607 = vunpack.c.h.b16 %v416
    %v608 = vunpack.c.l.b16 %v417
    %v609 = vunpack.c.h.b16 %v417
    %v610 = vunpack.c.l.b16 %v418
    %v611 = vunpack.c.h.b16 %v418
    %v612 = vunpack.c.l.b16 %v419
    %v613 = vunpack.c.h.b16 %v419
    %v614 = vunpack.c.l.b16 %v420
    %v615 = vunpack.c.h.b16 %v420
    %v616 = vunpack.c.l.b16 %v421
    %v617 = vunpack.c.h.b16 %v421
    %v618 = vunpack.c.l.b16 %v422
    %v619 = vunpack.c.h.b16 %v422
    %v620 = vunpack.c.l.b16 %v423
    %v621 = vunpack.c.h.b16 %v423
    %v622 = vunpack.c.l.b16 %v424
    %v623 = vunpack.c.h.b16 %v424
    %v624 = vunpack.c.l.b16 %v425
    %v625 = vunpack.c.h.b16 %v425
    %v626 = vunpack.c.l.b16 %v426
    %v627 = vunpack.c.h.b16 %v426
    %v628 = vunpack.c.l.b16 %v427
    %v629 = vunpack.c.h.b16 %v427
    %v630 = vpack.c.b16 %v506, %v502
    %v631 = vpack.c.b16 %v507, %v503
    %v632 = vpack.c.b16 %v508, %v504
    %v633 = vpack.c.b16 %v509, %v505
    %v634 = vpack.c.b16 %v514, %v510
    %v635 = vpack.c.b16 %v515, %v511
    %v636 = vpack.c.b16 %v516, %v512
    %v637 = vpack.c.b16 %v517, %v513
    %v638 = vpack.c.b16 %v522, %v518
    %v639 = vpack.c.b16 %v523, %v519
    %v640 = vpack.c.b16 %v524, %v520
    %v641 = vpack.c.b16 %v525, %v521
    %v642 = vpack.c.b16 %v530, %v526
    %v643 = vpack.c.b16 %v531, %v527
    %v644 = vpack.c.b16 %v532, %v528
    %v645 = vpack.c.b16 %v533, %v529
    %v646 = vpack.c.b16 %v538, %v534
    %v647 = vpack.c.b16 %v539, %v535
    %v648 = vpack.c.b16 %v540, %v536
    %v649 = vpack.c.b16 %v541, %v537
    %v650 = vpack.c.b16 %v546, %v542
    %v651 = vpack.c.b16 %v547, %v543
    %v652 = vpack.c.b16 %v548, %v544
    %v653 = vpack.c.b16 %v549, %v545
    %v654 = vpack.c.b16 %v554, %v550
    %v655 = vpack.c.b16 %v555, %v551
    %v656 = vpack.c.b16 %v556, %v552
    %v657 = vpack.c.b16 %v557, %v553
    %v658 = vpack.c.b16 %v562, %v558
    %v659 = vpack.c.b16 %v563, %v559
    %v660 = vpack.c.b16 %v564, %v560
    %v661 = vpack.c.b16 %v565, %v561
    %v662 = vpack.c.b16 %v570, %v566
    %v663 = vpack.c.b16 %v571, %v567
    %v664 = vpack.c.b16 %v572, %v568
    %v665 = vpack.c.b16 %v573, %v569
    %v666 = vpack.c.b16 %v578, %v574
    %v667 = vpack.c.b16 %v579, %v575
    %v668 = vpack.c.b16 %v580, %v576
    %v669 = vpack.c.b16 %v581, %v577
    %v670 = vpack.c.b16 %v586, %v582
    %v671 = vpack.c.b16 %v587, %v583
    %v672 = vpack.c.b16 %v588, %v584
    %v673 = vpack.c.b16 %v589, %v585
    %v674 = vpack.c.b16 %v594, %v590
    %v675 = vpack.c.b16 %v595, %v591
    %v676 = vpack.c.b16 %v596, %v592
    %v677 = vpack.c.b16 %v597, %v593
    %v678 = vpack.c.b16 %v602, %v598
    %v679 = vpack.c.b16 %v603, %v599
    %v680 = vpack.c.b16 %v604, %v600
    %v681 = vpack.c.b16 %v605, %v601
    %v682 = vpack.c.b16 %v610, %v606
    %v683 = vpack.c.b16 %v611, %v607
    %v684 = vpack.c.b16 %v612, %v608
    %v685 = vpack.c.b16 %v613, %v609
    %v686 = vpack.c.b16 %v618, %v614
    %v687 = vpack.c.b16 %v619, %v615
    %v688 = vpack.c.b16 %v620, %v616
    %v689 = vpack.c.b16 %v621, %v617
    %v690 = vpack.c.b16 %v626, %v622
    %v691 = vpack.c.b16 %v627, %v623
    %v692 = vpack.c.b16 %v628, %v624
    %v693 = vpack.c.b16 %v629, %v625
    %758 = vmatpush.bf16.msra.mxu0 %v658
    %759 = vmatpush.bf16.msra.mxu0 %v654
    %760 = vmatpush.bf16.msra.mxu0 %v650
    %761 = vmatpush.bf16.msra.mxu0 %v646
    %762 = vmatpush.bf16.msra.mxu0 %v642
    %763 = vmatpush.bf16.msra.mxu0 %v638
    %764 = vmatpush.bf16.msra.mxu0 %v634
    %765 = vmatpush.bf16.msra.mxu0 %v630
    %766 = vmatmul.bf16.gmra.mxu0 %v362
    %v767 = vpop.f32.mrf.mxu0
    %v768 = vadd.f32 %v430, %v767
    %v769 = vpop.f32.mrf.mxu0
    %v770 = vadd.f32 %v430, %v769
    %771 = vdwg.mxu0
    %772 = vmatpush.bf16.msra.mxu0 %v690
    %773 = vmatpush.bf16.msra.mxu0 %v686
    %774 = vmatpush.bf16.msra.mxu0 %v682
    %775 = vmatpush.bf16.msra.mxu0 %v678
    %776 = vmatpush.bf16.msra.mxu0 %v674
    %777 = vmatpush.bf16.msra.mxu0 %v670
    %778 = vmatpush.bf16.msra.mxu0 %v666
    %779 = vmatpush.bf16.msra.mxu0 %v662
    %780 = vmatmul.bf16.gmra.mxu0 %v363
    %v781 = vpop.f32.mrf.mxu0
    %v782 = vadd.f32 %v768, %v781
    %v783 = vpop.f32.mrf.mxu0
    %v784 = vadd.f32 %v770, %v783
    %785 = vdwg.mxu0
    %786 = vmatpush.bf16.msra.mxu0 %v659
    %787 = vmatpush.bf16.msra.mxu0 %v655
    %788 = vmatpush.bf16.msra.mxu0 %v651
    %789 = vmatpush.bf16.msra.mxu0 %v647
    %790 = vmatpush.bf16.msra.mxu0 %v643
    %791 = vmatpush.bf16.msra.mxu0 %v639
    %792 = vmatpush.bf16.msra.mxu0 %v635
    %793 = vmatpush.bf16.msra.mxu0 %v631
    %794 = vmatmul.bf16.gmra.mxu0 %v362
    %v795 = vpop.f32.mrf.mxu0
    %v796 = vadd.f32 %v431, %v795
    %v797 = vpop.f32.mrf.mxu0
    %v798 = vadd.f32 %v431, %v797
    %799 = vdwg.mxu0
    %800 = vmatpush.bf16.msra.mxu0 %v691
    %801 = vmatpush.bf16.msra.mxu0 %v687
    %802 = vmatpush.bf16.msra.mxu0 %v683
    %803 = vmatpush.bf16.msra.mxu0 %v679
    %804 = vmatpush.bf16.msra.mxu0 %v675
    %805 = vmatpush.bf16.msra.mxu0 %v671
    %806 = vmatpush.bf16.msra.mxu0 %v667
    %807 = vmatpush.bf16.msra.mxu0 %v663
    %808 = vmatmul.bf16.gmra.mxu0 %v363
    %v809 = vpop.f32.mrf.mxu0
    %v810 = vadd.f32 %v796, %v809
    %v811 = vpop.f32.mrf.mxu0
    %v812 = vadd.f32 %v798, %v811
    %813 = vdwg.mxu0
    %814 = vmatpush.bf16.msra.mxu0 %v660
    %815 = vmatpush.bf16.msra.mxu0 %v656
    %816 = vmatpush.bf16.msra.mxu0 %v652
    %817 = vmatpush.bf16.msra.mxu0 %v648
    %818 = vmatpush.bf16.msra.mxu0 %v644
    %819 = vmatpush.bf16.msra.mxu0 %v640
    %820 = vmatpush.bf16.msra.mxu0 %v636
    %821 = vmatpush.bf16.msra.mxu0 %v632
    %822 = vmatmul.bf16.gmra.mxu0 %v362
    %v823 = vpop.f32.mrf.mxu0
    %v824 = vadd.f32 %v432, %v823
    %v825 = vpop.f32.mrf.mxu0
    %v826 = vadd.f32 %v432, %v825
    %827 = vdwg.mxu0
    %828 = vmatpush.bf16.msra.mxu0 %v692
    %829 = vmatpush.bf16.msra.mxu0 %v688
    %830 = vmatpush.bf16.msra.mxu0 %v684
    %831 = vmatpush.bf16.msra.mxu0 %v680
    %832 = vmatpush.bf16.msra.mxu0 %v676
    %833 = vmatpush.bf16.msra.mxu0 %v672
    %834 = vmatpush.bf16.msra.mxu0 %v668
    %835 = vmatpush.bf16.msra.mxu0 %v664
    %836 = vmatmul.bf16.gmra.mxu0 %v363
    %v837 = vpop.f32.mrf.mxu0
    %v838 = vadd.f32 %v824, %v837
    %v839 = vpop.f32.mrf.mxu0
    %v840 = vadd.f32 %v826, %v839
    %841 = vdwg.mxu0
    %842 = vmatpush.bf16.msra.mxu0 %v661
    %843 = vmatpush.bf16.msra.mxu0 %v657
    %844 = vmatpush.bf16.msra.mxu0 %v653
    %845 = vmatpush.bf16.msra.mxu0 %v649
    %846 = vmatpush.bf16.msra.mxu0 %v645
    %847 = vmatpush.bf16.msra.mxu0 %v641
    %848 = vmatpush.bf16.msra.mxu0 %v637
    %849 = vmatpush.bf16.msra.mxu0 %v633
    %850 = vmatmul.bf16.gmra.mxu0 %v362
    %v851 = vpop.f32.mrf.mxu0
    %v852 = vadd.f32 %v433, %v851
    %v853 = vpop.f32.mrf.mxu0
    %v854 = vadd.f32 %v433, %v853
    %855 = vdwg.mxu0
    %856 = vmatpush.bf16.msra.mxu0 %v693
    %857 = vmatpush.bf16.msra.mxu0 %v689
    %858 = vmatpush.bf16.msra.mxu0 %v685
    %859 = vmatpush.bf16.msra.mxu0 %v681
    %860 = vmatpush.bf16.msra.mxu0 %v677
    %861 = vmatpush.bf16.msra.mxu0 %v673
    %862 = vmatpush.bf16.msra.mxu0 %v669
    %863 = vmatpush.bf16.msra.mxu0 %v665
    %864 = vmatmul.bf16.gmra.mxu0 %v363
    %v865 = vpop.f32.mrf.mxu0
    %v866 = vadd.f32 %v852, %v865
    %v867 = vpop.f32.mrf.mxu0
    %v868 = vadd.f32 %v854, %v867
    %869 = vdwg.mxu0
    %v870 = vmul.f32 %v782, 0.01
    %v871 = vmul.f32 %v810, 0.01
    %v872 = vmul.f32 %v838, 0.01
    %v873 = vmul.f32 %v866, 0.01
    %v874 = vmul.f32 %v784, 0.01
    %v875 = vmul.f32 %v812, 0.01
    %v876 = vmul.f32 %v840, 0.01
    %v877 = vmul.f32 %v868, 0.01
    %v878 = vmax.f32 %v782, %v870
    %v879 = vmax.f32 %v810, %v871
    %v880 = vmax.f32 %v838, %v872
    %v881 = vmax.f32 %v866, %v873
    %v882 = vmax.f32 %v784, %v874
    %v883 = vmax.f32 %v812, %v875
    %v884 = vmax.f32 %v840, %v876
    %v885 = vmax.f32 %v868, %v877
    %v886 = vpack.c.bf16 %v882, %v878
    %v887 = vpack.c.bf16 %v883, %v879
    %v888 = vpack.c.bf16 %v884, %v880
    %v889 = vpack.c.bf16 %v885, %v881
    %v890 = vld [vmem:[#allocation8] sm:$0xff]
    %v891 = vld [vmem:[#allocation8 + $0x8] sm:$0xff]
    %v892 = vld [vmem:[#allocation8 + $0x10] sm:$0xff]
    %v893 = vld [vmem:[#allocation8 + $0x18] sm:$0xff]
    %v894 = vld [vmem:[#allocation8 + $0x20] sm:$0xff]
    %v895 = vld [vmem:[#allocation8 + $0x28] sm:$0xff]
    %v896 = vld [vmem:[#allocation8 + $0x30] sm:$0xff]
    %v897 = vld [vmem:[#allocation8 + $0x38] sm:$0xff]
    %v898 = vld [vmem:[#allocation8 + $0x40] sm:$0xff]
    %v899 = vld [vmem:[#allocation8 + $0x48] sm:$0xff]
    %v900 = vld [vmem:[#allocation8 + $0x50] sm:$0xff]
    %v901 = vld [vmem:[#allocation8 + $0x58] sm:$0xff]
    %v902 = vld [vmem:[#allocation8 + $0x60] sm:$0xff]
    %v903 = vld [vmem:[#allocation8 + $0x68] sm:$0xff]
    %v904 = vld [vmem:[#allocation8 + $0x70] sm:$0xff]
    %v905 = vld [vmem:[#allocation8 + $0x78] sm:$0xff]
    %v906 = vld [vmem:[#allocation8 + $0x80] sm:$0xff]
    %v907 = vld [vmem:[#allocation8 + $0x88] sm:$0xff]
    %v908 = vld [vmem:[#allocation8 + $0x90] sm:$0xff]
    %v909 = vld [vmem:[#allocation8 + $0x98] sm:$0xff]
    %v910 = vld [vmem:[#allocation8 + $0xa0] sm:$0xff]
    %v911 = vld [vmem:[#allocation8 + $0xa8] sm:$0xff]
    %v912 = vld [vmem:[#allocation8 + $0xb0] sm:$0xff]
    %v913 = vld [vmem:[#allocation8 + $0xb8] sm:$0xff]
    %v914 = vld [vmem:[#allocation8 + $0xc0] sm:$0xff]
    %v915 = vld [vmem:[#allocation8 + $0xc8] sm:$0xff]
    %v916 = vld [vmem:[#allocation8 + $0xd0] sm:$0xff]
    %v917 = vld [vmem:[#allocation8 + $0xd8] sm:$0xff]
    %v918 = vld [vmem:[#allocation8 + $0xe0] sm:$0xff]
    %v919 = vld [vmem:[#allocation8 + $0xe8] sm:$0xff]
    %v920 = vld [vmem:[#allocation8 + $0xf0] sm:$0xff]
    %v921 = vld [vmem:[#allocation8 + $0xf8] sm:$0xff]
    %v922 = vld [vmem:[#allocation8 + $0x100] sm:$0xff]
    %v923 = vld [vmem:[#allocation8 + $0x108] sm:$0xff]
    %v924 = vld [vmem:[#allocation8 + $0x110] sm:$0xff]
    %v925 = vld [vmem:[#allocation8 + $0x118] sm:$0xff]
    %v926 = vld [vmem:[#allocation8 + $0x120] sm:$0xff]
    %v927 = vld [vmem:[#allocation8 + $0x128] sm:$0xff]
    %v928 = vld [vmem:[#allocation8 + $0x130] sm:$0xff]
    %v929 = vld [vmem:[#allocation8 + $0x138] sm:$0xff]
    %v930 = vld [vmem:[#allocation8 + $0x140] sm:$0xff]
    %v931 = vld [vmem:[#allocation8 + $0x148] sm:$0xff]
    %v932 = vld [vmem:[#allocation8 + $0x150] sm:$0xff]
    %v933 = vld [vmem:[#allocation8 + $0x158] sm:$0xff]
    %v934 = vld [vmem:[#allocation8 + $0x160] sm:$0xff]
    %v935 = vld [vmem:[#allocation8 + $0x168] sm:$0xff]
    %v936 = vld [vmem:[#allocation8 + $0x170] sm:$0xff]
    %v937 = vld [vmem:[#allocation8 + $0x178] sm:$0xff]
    %v938 = vld [vmem:[#allocation8 + $0x180] sm:$0xff]
    %v939 = vld [vmem:[#allocation8 + $0x188] sm:$0xff]
    %v940 = vld [vmem:[#allocation8 + $0x190] sm:$0xff]
    %v941 = vld [vmem:[#allocation8 + $0x198] sm:$0xff]
    %v942 = vld [vmem:[#allocation8 + $0x1a0] sm:$0xff]
    %v943 = vld [vmem:[#allocation8 + $0x1a8] sm:$0xff]
    %v944 = vld [vmem:[#allocation8 + $0x1b0] sm:$0xff]
    %v945 = vld [vmem:[#allocation8 + $0x1b8] sm:$0xff]
    %v946 = vld [vmem:[#allocation8 + $0x1c0] sm:$0xff]
    %v947 = vld [vmem:[#allocation8 + $0x1c8] sm:$0xff]
    %v948 = vld [vmem:[#allocation8 + $0x1d0] sm:$0xff]
    %v949 = vld [vmem:[#allocation8 + $0x1d8] sm:$0xff]
    %v950 = vld [vmem:[#allocation8 + $0x1e0] sm:$0xff]
    %v951 = vld [vmem:[#allocation8 + $0x1e8] sm:$0xff]
    %v952 = vld [vmem:[#allocation8 + $0x1f0] sm:$0xff]
    %v953 = vld [vmem:[#allocation8 + $0x1f8] sm:$0xff]
    %v954 = vld [vmem:[#allocation8 + $0x200] sm:$0xff]
    %v955 = vld [vmem:[#allocation8 + $0x208] sm:$0xff]
    %v956 = vld [vmem:[#allocation8 + $0x210] sm:$0xff]
    %v957 = vld [vmem:[#allocation8 + $0x218] sm:$0xff]
    %v958 = vld [vmem:[#allocation8 + $0x220] sm:$0xff]
    %v959 = vld [vmem:[#allocation8 + $0x228] sm:$0xff]
    %v960 = vld [vmem:[#allocation8 + $0x230] sm:$0xff]
    %v961 = vld [vmem:[#allocation8 + $0x238] sm:$0xff]
    %v962 = vld [vmem:[#allocation8 + $0x240] sm:$0xff]
    %v963 = vld [vmem:[#allocation8 + $0x248] sm:$0xff]
    %v964 = vld [vmem:[#allocation8 + $0x250] sm:$0xff]
    %v965 = vld [vmem:[#allocation8 + $0x258] sm:$0xff]
    %v966 = vld [vmem:[#allocation8 + $0x260] sm:$0xff]
    %v967 = vld [vmem:[#allocation8 + $0x268] sm:$0xff]
    %v968 = vld [vmem:[#allocation8 + $0x270] sm:$0xff]
    %v969 = vld [vmem:[#allocation8 + $0x278] sm:$0xff]
    %v970 = vld [vmem:[#allocation8 + $0x280] sm:$0xff]
    %v971 = vld [vmem:[#allocation8 + $0x288] sm:$0xff]
    %v972 = vld [vmem:[#allocation8 + $0x290] sm:$0xff]
    %v973 = vld [vmem:[#allocation8 + $0x298] sm:$0xff]
    %v974 = vld [vmem:[#allocation8 + $0x2a0] sm:$0xff]
    %v975 = vld [vmem:[#allocation8 + $0x2a8] sm:$0xff]
    %v976 = vld [vmem:[#allocation8 + $0x2b0] sm:$0xff]
    %v977 = vld [vmem:[#allocation8 + $0x2b8] sm:$0xff]
    %v978 = vld [vmem:[#allocation8 + $0x2c0] sm:$0xff]
    %v979 = vld [vmem:[#allocation8 + $0x2c8] sm:$0xff]
    %v980 = vld [vmem:[#allocation8 + $0x2d0] sm:$0xff]
    %v981 = vld [vmem:[#allocation8 + $0x2d8] sm:$0xff]
    %v982 = vld [vmem:[#allocation8 + $0x2e0] sm:$0xff]
    %v983 = vld [vmem:[#allocation8 + $0x2e8] sm:$0xff]
    %v984 = vld [vmem:[#allocation8 + $0x2f0] sm:$0xff]
    %v985 = vld [vmem:[#allocation8 + $0x2f8] sm:$0xff]
    %v986 = vld [vmem:[#allocation8 + $0x300] sm:$0xff]
    %v987 = vld [vmem:[#allocation8 + $0x308] sm:$0xff]
    %v988 = vld [vmem:[#allocation8 + $0x310] sm:$0xff]
    %v989 = vld [vmem:[#allocation8 + $0x318] sm:$0xff]
    %v990 = vld [vmem:[#allocation8 + $0x320] sm:$0xff]
    %v991 = vld [vmem:[#allocation8 + $0x328] sm:$0xff]
    %v992 = vld [vmem:[#allocation8 + $0x330] sm:$0xff]
    %v993 = vld [vmem:[#allocation8 + $0x338] sm:$0xff]
    %v994 = vld [vmem:[#allocation8 + $0x340] sm:$0xff]
    %v995 = vld [vmem:[#allocation8 + $0x348] sm:$0xff]
    %v996 = vld [vmem:[#allocation8 + $0x350] sm:$0xff]
    %v997 = vld [vmem:[#allocation8 + $0x358] sm:$0xff]
    %v998 = vld [vmem:[#allocation8 + $0x360] sm:$0xff]
    %v999 = vld [vmem:[#allocation8 + $0x368] sm:$0xff]
    %v1000 = vld [vmem:[#allocation8 + $0x370] sm:$0xff]
    %v1001 = vld [vmem:[#allocation8 + $0x378] sm:$0xff]
    %v1002 = vld [vmem:[#allocation8 + $0x380] sm:$0xff]
    %v1003 = vld [vmem:[#allocation8 + $0x388] sm:$0xff]
    %v1004 = vld [vmem:[#allocation8 + $0x390] sm:$0xff]
    %v1005 = vld [vmem:[#allocation8 + $0x398] sm:$0xff]
    %v1006 = vld [vmem:[#allocation8 + $0x3a0] sm:$0xff]
    %v1007 = vld [vmem:[#allocation8 + $0x3a8] sm:$0xff]
    %v1008 = vld [vmem:[#allocation8 + $0x3b0] sm:$0xff]
    %v1009 = vld [vmem:[#allocation8 + $0x3b8] sm:$0xff]
    %v1010 = vld [vmem:[#allocation8 + $0x3c0] sm:$0xff]
    %v1011 = vld [vmem:[#allocation8 + $0x3c8] sm:$0xff]
    %v1012 = vld [vmem:[#allocation8 + $0x3d0] sm:$0xff]
    %v1013 = vld [vmem:[#allocation8 + $0x3d8] sm:$0xff]
    %v1014 = vld [vmem:[#allocation8 + $0x3e0] sm:$0xff]
    %v1015 = vld [vmem:[#allocation8 + $0x3e8] sm:$0xff]
    %v1016 = vld [vmem:[#allocation8 + $0x3f0] sm:$0xff]
    %v1017 = vld [vmem:[#allocation8 + $0x3f8] sm:$0xff]
    %v1018 = vld [vmem:[#allocation8 + $0x400] sm:$0xff]
    %v1019 = vld [vmem:[#allocation8 + $0x408] sm:$0xff]
    %v1020 = vld [vmem:[#allocation8 + $0x410] sm:$0xff]
    %v1021 = vld [vmem:[#allocation8 + $0x418] sm:$0xff]
    %v1022 = vld [vmem:[#allocation8 + $0x420] sm:$0xff]
    %v1023 = vld [vmem:[#allocation8 + $0x428] sm:$0xff]
    %v1024 = vld [vmem:[#allocation8 + $0x430] sm:$0xff]
    %v1025 = vld [vmem:[#allocation8 + $0x438] sm:$0xff]
    %v1026 = vld [vmem:[#allocation8 + $0x440] sm:$0xff]
    %v1027 = vld [vmem:[#allocation8 + $0x448] sm:$0xff]
    %v1028 = vld [vmem:[#allocation8 + $0x450] sm:$0xff]
    %v1029 = vld [vmem:[#allocation8 + $0x458] sm:$0xff]
    %v1030 = vld [vmem:[#allocation8 + $0x460] sm:$0xff]
    %v1031 = vld [vmem:[#allocation8 + $0x468] sm:$0xff]
    %v1032 = vld [vmem:[#allocation8 + $0x470] sm:$0xff]
    %v1033 = vld [vmem:[#allocation8 + $0x478] sm:$0xff]
    %v1034 = vld [vmem:[#allocation8 + $0x480] sm:$0xff]
    %v1035 = vld [vmem:[#allocation8 + $0x488] sm:$0xff]
    %v1036 = vld [vmem:[#allocation8 + $0x490] sm:$0xff]
    %v1037 = vld [vmem:[#allocation8 + $0x498] sm:$0xff]
    %v1038 = vld [vmem:[#allocation8 + $0x4a0] sm:$0xff]
    %v1039 = vld [vmem:[#allocation8 + $0x4a8] sm:$0xff]
    %v1040 = vld [vmem:[#allocation8 + $0x4b0] sm:$0xff]
    %v1041 = vld [vmem:[#allocation8 + $0x4b8] sm:$0xff]
    %v1042 = vld [vmem:[#allocation8 + $0x4c0] sm:$0xff]
    %v1043 = vld [vmem:[#allocation8 + $0x4c8] sm:$0xff]
    %v1044 = vld [vmem:[#allocation8 + $0x4d0] sm:$0xff]
    %v1045 = vld [vmem:[#allocation8 + $0x4d8] sm:$0xff]
    %v1046 = vld [vmem:[#allocation8 + $0x4e0] sm:$0xff]
    %v1047 = vld [vmem:[#allocation8 + $0x4e8] sm:$0xff]
    %v1048 = vld [vmem:[#allocation8 + $0x4f0] sm:$0xff]
    %v1049 = vld [vmem:[#allocation8 + $0x4f8] sm:$0xff]
    %v1050 = vld [vmem:[#allocation8 + $0x500] sm:$0xff]
    %v1051 = vld [vmem:[#allocation8 + $0x508] sm:$0xff]
    %v1052 = vld [vmem:[#allocation8 + $0x510] sm:$0xff]
    %v1053 = vld [vmem:[#allocation8 + $0x518] sm:$0xff]
    %v1054 = vld [vmem:[#allocation8 + $0x520] sm:$0xff]
    %v1055 = vld [vmem:[#allocation8 + $0x528] sm:$0xff]
    %v1056 = vld [vmem:[#allocation8 + $0x530] sm:$0xff]
    %v1057 = vld [vmem:[#allocation8 + $0x538] sm:$0xff]
    %v1058 = vld [vmem:[#allocation8 + $0x540] sm:$0xff]
    %v1059 = vld [vmem:[#allocation8 + $0x548] sm:$0xff]
    %v1060 = vld [vmem:[#allocation8 + $0x550] sm:$0xff]
    %v1061 = vld [vmem:[#allocation8 + $0x558] sm:$0xff]
    %v1062 = vld [vmem:[#allocation8 + $0x560] sm:$0xff]
    %v1063 = vld [vmem:[#allocation8 + $0x568] sm:$0xff]
    %v1064 = vld [vmem:[#allocation8 + $0x570] sm:$0xff]
    %v1065 = vld [vmem:[#allocation8 + $0x578] sm:$0xff]
    %v1066 = vld [vmem:[#allocation8 + $0x580] sm:$0xff]
    %v1067 = vld [vmem:[#allocation8 + $0x588] sm:$0xff]
    %v1068 = vld [vmem:[#allocation8 + $0x590] sm:$0xff]
    %v1069 = vld [vmem:[#allocation8 + $0x598] sm:$0xff]
    %v1070 = vld [vmem:[#allocation8 + $0x5a0] sm:$0xff]
    %v1071 = vld [vmem:[#allocation8 + $0x5a8] sm:$0xff]
    %v1072 = vld [vmem:[#allocation8 + $0x5b0] sm:$0xff]
    %v1073 = vld [vmem:[#allocation8 + $0x5b8] sm:$0xff]
    %v1074 = vld [vmem:[#allocation8 + $0x5c0] sm:$0xff]
    %v1075 = vld [vmem:[#allocation8 + $0x5c8] sm:$0xff]
    %v1076 = vld [vmem:[#allocation8 + $0x5d0] sm:$0xff]
    %v1077 = vld [vmem:[#allocation8 + $0x5d8] sm:$0xff]
    %v1078 = vld [vmem:[#allocation8 + $0x5e0] sm:$0xff]
    %v1079 = vld [vmem:[#allocation8 + $0x5e8] sm:$0xff]
    %v1080 = vld [vmem:[#allocation8 + $0x5f0] sm:$0xff]
    %v1081 = vld [vmem:[#allocation8 + $0x5f8] sm:$0xff]
    %v1082 = vld [vmem:[#allocation8 + $0x600] sm:$0xff]
    %v1083 = vld [vmem:[#allocation8 + $0x608] sm:$0xff]
    %v1084 = vld [vmem:[#allocation8 + $0x610] sm:$0xff]
    %v1085 = vld [vmem:[#allocation8 + $0x618] sm:$0xff]
    %v1086 = vld [vmem:[#allocation8 + $0x620] sm:$0xff]
    %v1087 = vld [vmem:[#allocation8 + $0x628] sm:$0xff]
    %v1088 = vld [vmem:[#allocation8 + $0x630] sm:$0xff]
    %v1089 = vld [vmem:[#allocation8 + $0x638] sm:$0xff]
    %v1090 = vld [vmem:[#allocation8 + $0x640] sm:$0xff]
    %v1091 = vld [vmem:[#allocation8 + $0x648] sm:$0xff]
    %v1092 = vld [vmem:[#allocation8 + $0x650] sm:$0xff]
    %v1093 = vld [vmem:[#allocation8 + $0x658] sm:$0xff]
    %v1094 = vld [vmem:[#allocation8 + $0x660] sm:$0xff]
    %v1095 = vld [vmem:[#allocation8 + $0x668] sm:$0xff]
    %v1096 = vld [vmem:[#allocation8 + $0x670] sm:$0xff]
    %v1097 = vld [vmem:[#allocation8 + $0x678] sm:$0xff]
    %v1098 = vld [vmem:[#allocation8 + $0x680] sm:$0xff]
    %v1099 = vld [vmem:[#allocation8 + $0x688] sm:$0xff]
    %v1100 = vld [vmem:[#allocation8 + $0x690] sm:$0xff]
    %v1101 = vld [vmem:[#allocation8 + $0x698] sm:$0xff]
    %v1102 = vld [vmem:[#allocation8 + $0x6a0] sm:$0xff]
    %v1103 = vld [vmem:[#allocation8 + $0x6a8] sm:$0xff]
    %v1104 = vld [vmem:[#allocation8 + $0x6b0] sm:$0xff]
    %v1105 = vld [vmem:[#allocation8 + $0x6b8] sm:$0xff]
    %v1106 = vld [vmem:[#allocation8 + $0x6c0] sm:$0xff]
    %v1107 = vld [vmem:[#allocation8 + $0x6c8] sm:$0xff]
    %v1108 = vld [vmem:[#allocation8 + $0x6d0] sm:$0xff]
    %v1109 = vld [vmem:[#allocation8 + $0x6d8] sm:$0xff]
    %v1110 = vld [vmem:[#allocation8 + $0x6e0] sm:$0xff]
    %v1111 = vld [vmem:[#allocation8 + $0x6e8] sm:$0xff]
    %v1112 = vld [vmem:[#allocation8 + $0x6f0] sm:$0xff]
    %v1113 = vld [vmem:[#allocation8 + $0x6f8] sm:$0xff]
    %v1114 = vld [vmem:[#allocation8 + $0x700] sm:$0xff]
    %v1115 = vld [vmem:[#allocation8 + $0x708] sm:$0xff]
    %v1116 = vld [vmem:[#allocation8 + $0x710] sm:$0xff]
    %v1117 = vld [vmem:[#allocation8 + $0x718] sm:$0xff]
    %v1118 = vld [vmem:[#allocation8 + $0x720] sm:$0xff]
    %v1119 = vld [vmem:[#allocation8 + $0x728] sm:$0xff]
    %v1120 = vld [vmem:[#allocation8 + $0x730] sm:$0xff]
    %v1121 = vld [vmem:[#allocation8 + $0x738] sm:$0xff]
    %v1122 = vld [vmem:[#allocation8 + $0x740] sm:$0xff]
    %v1123 = vld [vmem:[#allocation8 + $0x748] sm:$0xff]
    %v1124 = vld [vmem:[#allocation8 + $0x750] sm:$0xff]
    %v1125 = vld [vmem:[#allocation8 + $0x758] sm:$0xff]
    %v1126 = vld [vmem:[#allocation8 + $0x760] sm:$0xff]
    %v1127 = vld [vmem:[#allocation8 + $0x768] sm:$0xff]
    %v1128 = vld [vmem:[#allocation8 + $0x770] sm:$0xff]
    %v1129 = vld [vmem:[#allocation8 + $0x778] sm:$0xff]
    %v1130 = vld [vmem:[#allocation8 + $0x780] sm:$0xff]
    %v1131 = vld [vmem:[#allocation8 + $0x788] sm:$0xff]
    %v1132 = vld [vmem:[#allocation8 + $0x790] sm:$0xff]
    %v1133 = vld [vmem:[#allocation8 + $0x798] sm:$0xff]
    %v1134 = vld [vmem:[#allocation8 + $0x7a0] sm:$0xff]
    %v1135 = vld [vmem:[#allocation8 + $0x7a8] sm:$0xff]
    %v1136 = vld [vmem:[#allocation8 + $0x7b0] sm:$0xff]
    %v1137 = vld [vmem:[#allocation8 + $0x7b8] sm:$0xff]
    %v1138 = vld [vmem:[#allocation8 + $0x7c0] sm:$0xff]
    %v1139 = vld [vmem:[#allocation8 + $0x7c8] sm:$0xff]
    %v1140 = vld [vmem:[#allocation8 + $0x7d0] sm:$0xff]
    %v1141 = vld [vmem:[#allocation8 + $0x7d8] sm:$0xff]
    %v1142 = vld [vmem:[#allocation8 + $0x7e0] sm:$0xff]
    %v1143 = vld [vmem:[#allocation8 + $0x7e8] sm:$0xff]
    %v1144 = vld [vmem:[#allocation8 + $0x7f0] sm:$0xff]
    %v1145 = vld [vmem:[#allocation8 + $0x7f8] sm:$0xff]
    %v1146 = vld [vmem:[%s10] sm:$0xff]
    %v1148 = vperm.slane %v1146, 0
    %v1149 = vperm.slane %v1146, 1
    %v1150 = vperm.slane %v1146, 2
    %v1151 = vperm.slane %v1146, 3
    %v1152 = vperm.slane %v1146, 4
    %v1153 = vperm.slane %v1146, 5
    %v1154 = vperm.slane %v1146, 6
    %v1155 = vperm.slane %v1146, 7
    %v1420 = vunpack.c.l.b16 %v890
    %v1421 = vunpack.c.h.b16 %v890
    %v1422 = vunpack.c.l.b16 %v891
    %v1423 = vunpack.c.h.b16 %v891
    %v1424 = vunpack.c.l.b16 %v892
    %v1425 = vunpack.c.h.b16 %v892
    %v1426 = vunpack.c.l.b16 %v893
    %v1427 = vunpack.c.h.b16 %v893
    %v1428 = vunpack.c.l.b16 %v894
    %v1429 = vunpack.c.h.b16 %v894
    %v1430 = vunpack.c.l.b16 %v895
    %v1431 = vunpack.c.h.b16 %v895
    %v1432 = vunpack.c.l.b16 %v896
    %v1433 = vunpack.c.h.b16 %v896
    %v1434 = vunpack.c.l.b16 %v897
    %v1435 = vunpack.c.h.b16 %v897
    %v1436 = vunpack.c.l.b16 %v898
    %v1437 = vunpack.c.h.b16 %v898
    %v1438 = vunpack.c.l.b16 %v899
    %v1439 = vunpack.c.h.b16 %v899
    %v1440 = vunpack.c.l.b16 %v900
    %v1441 = vunpack.c.h.b16 %v900
    %v1442 = vunpack.c.l.b16 %v901
    %v1443 = vunpack.c.h.b16 %v901
    %v1444 = vunpack.c.l.b16 %v902
    %v1445 = vunpack.c.h.b16 %v902
    %v1446 = vunpack.c.l.b16 %v903
    %v1447 = vunpack.c.h.b16 %v903
    %v1448 = vunpack.c.l.b16 %v904
    %v1449 = vunpack.c.h.b16 %v904
    %v1450 = vunpack.c.l.b16 %v905
    %v1451 = vunpack.c.h.b16 %v905
    %v1452 = vunpack.c.l.b16 %v906
    %v1453 = vunpack.c.h.b16 %v906
    %v1454 = vunpack.c.l.b16 %v907
    %v1455 = vunpack.c.h.b16 %v907
    %v1456 = vunpack.c.l.b16 %v908
    %v1457 = vunpack.c.h.b16 %v908
    %v1458 = vunpack.c.l.b16 %v909
    %v1459 = vunpack.c.h.b16 %v909
    %v1460 = vunpack.c.l.b16 %v910
    %v1461 = vunpack.c.h.b16 %v910
    %v1462 = vunpack.c.l.b16 %v911
    %v1463 = vunpack.c.h.b16 %v911
    %v1464 = vunpack.c.l.b16 %v912
    %v1465 = vunpack.c.h.b16 %v912
    %v1466 = vunpack.c.l.b16 %v913
    %v1467 = vunpack.c.h.b16 %v913
    %v1468 = vunpack.c.l.b16 %v914
    %v1469 = vunpack.c.h.b16 %v914
    %v1470 = vunpack.c.l.b16 %v915
    %v1471 = vunpack.c.h.b16 %v915
    %v1472 = vunpack.c.l.b16 %v916
    %v1473 = vunpack.c.h.b16 %v916
    %v1474 = vunpack.c.l.b16 %v917
    %v1475 = vunpack.c.h.b16 %v917
    %v1476 = vunpack.c.l.b16 %v918
    %v1477 = vunpack.c.h.b16 %v918
    %v1478 = vunpack.c.l.b16 %v919
    %v1479 = vunpack.c.h.b16 %v919
    %v1480 = vunpack.c.l.b16 %v920
    %v1481 = vunpack.c.h.b16 %v920
    %v1482 = vunpack.c.l.b16 %v921
    %v1483 = vunpack.c.h.b16 %v921
    %v1484 = vunpack.c.l.b16 %v922
    %v1485 = vunpack.c.h.b16 %v922
    %v1486 = vunpack.c.l.b16 %v923
    %v1487 = vunpack.c.h.b16 %v923
    %v1488 = vunpack.c.l.b16 %v924
    %v1489 = vunpack.c.h.b16 %v924
    %v1490 = vunpack.c.l.b16 %v925
    %v1491 = vunpack.c.h.b16 %v925
    %v1492 = vunpack.c.l.b16 %v926
    %v1493 = vunpack.c.h.b16 %v926
    %v1494 = vunpack.c.l.b16 %v927
    %v1495 = vunpack.c.h.b16 %v927
    %v1496 = vunpack.c.l.b16 %v928
    %v1497 = vunpack.c.h.b16 %v928
    %v1498 = vunpack.c.l.b16 %v929
    %v1499 = vunpack.c.h.b16 %v929
    %v1500 = vunpack.c.l.b16 %v930
    %v1501 = vunpack.c.h.b16 %v930
    %v1502 = vunpack.c.l.b16 %v931
    %v1503 = vunpack.c.h.b16 %v931
    %v1504 = vunpack.c.l.b16 %v932
    %v1505 = vunpack.c.h.b16 %v932
    %v1506 = vunpack.c.l.b16 %v933
    %v1507 = vunpack.c.h.b16 %v933
    %v1508 = vunpack.c.l.b16 %v934
    %v1509 = vunpack.c.h.b16 %v934
    %v1510 = vunpack.c.l.b16 %v935
    %v1511 = vunpack.c.h.b16 %v935
    %v1512 = vunpack.c.l.b16 %v936
    %v1513 = vunpack.c.h.b16 %v936
    %v1514 = vunpack.c.l.b16 %v937
    %v1515 = vunpack.c.h.b16 %v937
    %v1516 = vunpack.c.l.b16 %v938
    %v1517 = vunpack.c.h.b16 %v938
    %v1518 = vunpack.c.l.b16 %v939
    %v1519 = vunpack.c.h.b16 %v939
    %v1520 = vunpack.c.l.b16 %v940
    %v1521 = vunpack.c.h.b16 %v940
    %v1522 = vunpack.c.l.b16 %v941
    %v1523 = vunpack.c.h.b16 %v941
    %v1524 = vunpack.c.l.b16 %v942
    %v1525 = vunpack.c.h.b16 %v942
    %v1526 = vunpack.c.l.b16 %v943
    %v1527 = vunpack.c.h.b16 %v943
    %v1528 = vunpack.c.l.b16 %v944
    %v1529 = vunpack.c.h.b16 %v944
    %v1530 = vunpack.c.l.b16 %v945
    %v1531 = vunpack.c.h.b16 %v945
    %v1532 = vunpack.c.l.b16 %v946
    %v1533 = vunpack.c.h.b16 %v946
    %v1534 = vunpack.c.l.b16 %v947
    %v1535 = vunpack.c.h.b16 %v947
    %v1536 = vunpack.c.l.b16 %v948
    %v1537 = vunpack.c.h.b16 %v948
    %v1538 = vunpack.c.l.b16 %v949
    %v1539 = vunpack.c.h.b16 %v949
    %v1540 = vunpack.c.l.b16 %v950
    %v1541 = vunpack.c.h.b16 %v950
    %v1542 = vunpack.c.l.b16 %v951
    %v1543 = vunpack.c.h.b16 %v951
    %v1544 = vunpack.c.l.b16 %v952
    %v1545 = vunpack.c.h.b16 %v952
    %v1546 = vunpack.c.l.b16 %v953
    %v1547 = vunpack.c.h.b16 %v953
    %v1548 = vunpack.c.l.b16 %v954
    %v1549 = vunpack.c.h.b16 %v954
    %v1550 = vunpack.c.l.b16 %v955
    %v1551 = vunpack.c.h.b16 %v955
    %v1552 = vunpack.c.l.b16 %v956
    %v1553 = vunpack.c.h.b16 %v956
    %v1554 = vunpack.c.l.b16 %v957
    %v1555 = vunpack.c.h.b16 %v957
    %v1556 = vunpack.c.l.b16 %v958
    %v1557 = vunpack.c.h.b16 %v958
    %v1558 = vunpack.c.l.b16 %v959
    %v1559 = vunpack.c.h.b16 %v959
    %v1560 = vunpack.c.l.b16 %v960
    %v1561 = vunpack.c.h.b16 %v960
    %v1562 = vunpack.c.l.b16 %v961
    %v1563 = vunpack.c.h.b16 %v961
    %v1564 = vunpack.c.l.b16 %v962
    %v1565 = vunpack.c.h.b16 %v962
    %v1566 = vunpack.c.l.b16 %v963
    %v1567 = vunpack.c.h.b16 %v963
    %v1568 = vunpack.c.l.b16 %v964
    %v1569 = vunpack.c.h.b16 %v964
    %v1570 = vunpack.c.l.b16 %v965
    %v1571 = vunpack.c.h.b16 %v965
    %v1572 = vunpack.c.l.b16 %v966
    %v1573 = vunpack.c.h.b16 %v966
    %v1574 = vunpack.c.l.b16 %v967
    %v1575 = vunpack.c.h.b16 %v967
    %v1576 = vunpack.c.l.b16 %v968
    %v1577 = vunpack.c.h.b16 %v968
    %v1578 = vunpack.c.l.b16 %v969
    %v1579 = vunpack.c.h.b16 %v969
    %v1580 = vunpack.c.l.b16 %v970
    %v1581 = vunpack.c.h.b16 %v970
    %v1582 = vunpack.c.l.b16 %v971
    %v1583 = vunpack.c.h.b16 %v971
    %v1584 = vunpack.c.l.b16 %v972
    %v1585 = vunpack.c.h.b16 %v972
    %v1586 = vunpack.c.l.b16 %v973
    %v1587 = vunpack.c.h.b16 %v973
    %v1588 = vunpack.c.l.b16 %v974
    %v1589 = vunpack.c.h.b16 %v974
    %v1590 = vunpack.c.l.b16 %v975
    %v1591 = vunpack.c.h.b16 %v975
    %v1592 = vunpack.c.l.b16 %v976
    %v1593 = vunpack.c.h.b16 %v976
    %v1594 = vunpack.c.l.b16 %v977
    %v1595 = vunpack.c.h.b16 %v977
    %v1596 = vunpack.c.l.b16 %v978
    %v1597 = vunpack.c.h.b16 %v978
    %v1598 = vunpack.c.l.b16 %v979
    %v1599 = vunpack.c.h.b16 %v979
    %v1600 = vunpack.c.l.b16 %v980
    %v1601 = vunpack.c.h.b16 %v980
    %v1602 = vunpack.c.l.b16 %v981
    %v1603 = vunpack.c.h.b16 %v981
    %v1604 = vunpack.c.l.b16 %v982
    %v1605 = vunpack.c.h.b16 %v982
    %v1606 = vunpack.c.l.b16 %v983
    %v1607 = vunpack.c.h.b16 %v983
    %v1608 = vunpack.c.l.b16 %v984
    %v1609 = vunpack.c.h.b16 %v984
    %v1610 = vunpack.c.l.b16 %v985
    %v1611 = vunpack.c.h.b16 %v985
    %v1612 = vunpack.c.l.b16 %v986
    %v1613 = vunpack.c.h.b16 %v986
    %v1614 = vunpack.c.l.b16 %v987
    %v1615 = vunpack.c.h.b16 %v987
    %v1616 = vunpack.c.l.b16 %v988
    %v1617 = vunpack.c.h.b16 %v988
    %v1618 = vunpack.c.l.b16 %v989
    %v1619 = vunpack.c.h.b16 %v989
    %v1620 = vunpack.c.l.b16 %v990
    %v1621 = vunpack.c.h.b16 %v990
    %v1622 = vunpack.c.l.b16 %v991
    %v1623 = vunpack.c.h.b16 %v991
    %v1624 = vunpack.c.l.b16 %v992
    %v1625 = vunpack.c.h.b16 %v992
    %v1626 = vunpack.c.l.b16 %v993
    %v1627 = vunpack.c.h.b16 %v993
    %v1628 = vunpack.c.l.b16 %v994
    %v1629 = vunpack.c.h.b16 %v994
    %v1630 = vunpack.c.l.b16 %v995
    %v1631 = vunpack.c.h.b16 %v995
    %v1632 = vunpack.c.l.b16 %v996
    %v1633 = vunpack.c.h.b16 %v996
    %v1634 = vunpack.c.l.b16 %v997
    %v1635 = vunpack.c.h.b16 %v997
    %v1636 = vunpack.c.l.b16 %v998
    %v1637 = vunpack.c.h.b16 %v998
    %v1638 = vunpack.c.l.b16 %v999
    %v1639 = vunpack.c.h.b16 %v999
    %v1640 = vunpack.c.l.b16 %v1000
    %v1641 = vunpack.c.h.b16 %v1000
    %v1642 = vunpack.c.l.b16 %v1001
    %v1643 = vunpack.c.h.b16 %v1001
    %v1644 = vunpack.c.l.b16 %v1002
    %v1645 = vunpack.c.h.b16 %v1002
    %v1646 = vunpack.c.l.b16 %v1003
    %v1647 = vunpack.c.h.b16 %v1003
    %v1648 = vunpack.c.l.b16 %v1004
    %v1649 = vunpack.c.h.b16 %v1004
    %v1650 = vunpack.c.l.b16 %v1005
    %v1651 = vunpack.c.h.b16 %v1005
    %v1652 = vunpack.c.l.b16 %v1006
    %v1653 = vunpack.c.h.b16 %v1006
    %v1654 = vunpack.c.l.b16 %v1007
    %v1655 = vunpack.c.h.b16 %v1007
    %v1656 = vunpack.c.l.b16 %v1008
    %v1657 = vunpack.c.h.b16 %v1008
    %v1658 = vunpack.c.l.b16 %v1009
    %v1659 = vunpack.c.h.b16 %v1009
    %v1660 = vunpack.c.l.b16 %v1010
    %v1661 = vunpack.c.h.b16 %v1010
    %v1662 = vunpack.c.l.b16 %v1011
    %v1663 = vunpack.c.h.b16 %v1011
    %v1664 = vunpack.c.l.b16 %v1012
    %v1665 = vunpack.c.h.b16 %v1012
    %v1666 = vunpack.c.l.b16 %v1013
    %v1667 = vunpack.c.h.b16 %v1013
    %v1668 = vunpack.c.l.b16 %v1014
    %v1669 = vunpack.c.h.b16 %v1014
    %v1670 = vunpack.c.l.b16 %v1015
    %v1671 = vunpack.c.h.b16 %v1015
    %v1672 = vunpack.c.l.b16 %v1016
    %v1673 = vunpack.c.h.b16 %v1016
    %v1674 = vunpack.c.l.b16 %v1017
    %v1675 = vunpack.c.h.b16 %v1017
    %v1676 = vunpack.c.l.b16 %v1018
    %v1677 = vunpack.c.h.b16 %v1018
    %v1678 = vunpack.c.l.b16 %v1019
    %v1679 = vunpack.c.h.b16 %v1019
    %v1680 = vunpack.c.l.b16 %v1020
    %v1681 = vunpack.c.h.b16 %v1020
    %v1682 = vunpack.c.l.b16 %v1021
    %v1683 = vunpack.c.h.b16 %v1021
    %v1684 = vunpack.c.l.b16 %v1022
    %v1685 = vunpack.c.h.b16 %v1022
    %v1686 = vunpack.c.l.b16 %v1023
    %v1687 = vunpack.c.h.b16 %v1023
    %v1688 = vunpack.c.l.b16 %v1024
    %v1689 = vunpack.c.h.b16 %v1024
    %v1690 = vunpack.c.l.b16 %v1025
    %v1691 = vunpack.c.h.b16 %v1025
    %v1692 = vunpack.c.l.b16 %v1026
    %v1693 = vunpack.c.h.b16 %v1026
    %v1694 = vunpack.c.l.b16 %v1027
    %v1695 = vunpack.c.h.b16 %v1027
    %v1696 = vunpack.c.l.b16 %v1028
    %v1697 = vunpack.c.h.b16 %v1028
    %v1698 = vunpack.c.l.b16 %v1029
    %v1699 = vunpack.c.h.b16 %v1029
    %v1700 = vunpack.c.l.b16 %v1030
    %v1701 = vunpack.c.h.b16 %v1030
    %v1702 = vunpack.c.l.b16 %v1031
    %v1703 = vunpack.c.h.b16 %v1031
    %v1704 = vunpack.c.l.b16 %v1032
    %v1705 = vunpack.c.h.b16 %v1032
    %v1706 = vunpack.c.l.b16 %v1033
    %v1707 = vunpack.c.h.b16 %v1033
    %v1708 = vunpack.c.l.b16 %v1034
    %v1709 = vunpack.c.h.b16 %v1034
    %v1710 = vunpack.c.l.b16 %v1035
    %v1711 = vunpack.c.h.b16 %v1035
    %v1712 = vunpack.c.l.b16 %v1036
    %v1713 = vunpack.c.h.b16 %v1036
    %v1714 = vunpack.c.l.b16 %v1037
    %v1715 = vunpack.c.h.b16 %v1037
    %v1716 = vunpack.c.l.b16 %v1038
    %v1717 = vunpack.c.h.b16 %v1038
    %v1718 = vunpack.c.l.b16 %v1039
    %v1719 = vunpack.c.h.b16 %v1039
    %v1720 = vunpack.c.l.b16 %v1040
    %v1721 = vunpack.c.h.b16 %v1040
    %v1722 = vunpack.c.l.b16 %v1041
    %v1723 = vunpack.c.h.b16 %v1041
    %v1724 = vunpack.c.l.b16 %v1042
    %v1725 = vunpack.c.h.b16 %v1042
    %v1726 = vunpack.c.l.b16 %v1043
    %v1727 = vunpack.c.h.b16 %v1043
    %v1728 = vunpack.c.l.b16 %v1044
    %v1729 = vunpack.c.h.b16 %v1044
    %v1730 = vunpack.c.l.b16 %v1045
    %v1731 = vunpack.c.h.b16 %v1045
    %v1732 = vunpack.c.l.b16 %v1046
    %v1733 = vunpack.c.h.b16 %v1046
    %v1734 = vunpack.c.l.b16 %v1047
    %v1735 = vunpack.c.h.b16 %v1047
    %v1736 = vunpack.c.l.b16 %v1048
    %v1737 = vunpack.c.h.b16 %v1048
    %v1738 = vunpack.c.l.b16 %v1049
    %v1739 = vunpack.c.h.b16 %v1049
    %v1740 = vunpack.c.l.b16 %v1050
    %v1741 = vunpack.c.h.b16 %v1050
    %v1742 = vunpack.c.l.b16 %v1051
    %v1743 = vunpack.c.h.b16 %v1051
    %v1744 = vunpack.c.l.b16 %v1052
    %v1745 = vunpack.c.h.b16 %v1052
    %v1746 = vunpack.c.l.b16 %v1053
    %v1747 = vunpack.c.h.b16 %v1053
    %v1748 = vunpack.c.l.b16 %v1054
    %v1749 = vunpack.c.h.b16 %v1054
    %v1750 = vunpack.c.l.b16 %v1055
    %v1751 = vunpack.c.h.b16 %v1055
    %v1752 = vunpack.c.l.b16 %v1056
    %v1753 = vunpack.c.h.b16 %v1056
    %v1754 = vunpack.c.l.b16 %v1057
    %v1755 = vunpack.c.h.b16 %v1057
    %v1756 = vunpack.c.l.b16 %v1058
    %v1757 = vunpack.c.h.b16 %v1058
    %v1758 = vunpack.c.l.b16 %v1059
    %v1759 = vunpack.c.h.b16 %v1059
    %v1760 = vunpack.c.l.b16 %v1060
    %v1761 = vunpack.c.h.b16 %v1060
    %v1762 = vunpack.c.l.b16 %v1061
    %v1763 = vunpack.c.h.b16 %v1061
    %v1764 = vunpack.c.l.b16 %v1062
    %v1765 = vunpack.c.h.b16 %v1062
    %v1766 = vunpack.c.l.b16 %v1063
    %v1767 = vunpack.c.h.b16 %v1063
    %v1768 = vunpack.c.l.b16 %v1064
    %v1769 = vunpack.c.h.b16 %v1064
    %v1770 = vunpack.c.l.b16 %v1065
    %v1771 = vunpack.c.h.b16 %v1065
    %v1772 = vunpack.c.l.b16 %v1066
    %v1773 = vunpack.c.h.b16 %v1066
    %v1774 = vunpack.c.l.b16 %v1067
    %v1775 = vunpack.c.h.b16 %v1067
    %v1776 = vunpack.c.l.b16 %v1068
    %v1777 = vunpack.c.h.b16 %v1068
    %v1778 = vunpack.c.l.b16 %v1069
    %v1779 = vunpack.c.h.b16 %v1069
    %v1780 = vunpack.c.l.b16 %v1070
    %v1781 = vunpack.c.h.b16 %v1070
    %v1782 = vunpack.c.l.b16 %v1071
    %v1783 = vunpack.c.h.b16 %v1071
    %v1784 = vunpack.c.l.b16 %v1072
    %v1785 = vunpack.c.h.b16 %v1072
    %v1786 = vunpack.c.l.b16 %v1073
    %v1787 = vunpack.c.h.b16 %v1073
    %v1788 = vunpack.c.l.b16 %v1074
    %v1789 = vunpack.c.h.b16 %v1074
    %v1790 = vunpack.c.l.b16 %v1075
    %v1791 = vunpack.c.h.b16 %v1075
    %v1792 = vunpack.c.l.b16 %v1076
    %v1793 = vunpack.c.h.b16 %v1076
    %v1794 = vunpack.c.l.b16 %v1077
    %v1795 = vunpack.c.h.b16 %v1077
    %v1796 = vunpack.c.l.b16 %v1078
    %v1797 = vunpack.c.h.b16 %v1078
    %v1798 = vunpack.c.l.b16 %v1079
    %v1799 = vunpack.c.h.b16 %v1079
    %v1800 = vunpack.c.l.b16 %v1080
    %v1801 = vunpack.c.h.b16 %v1080
    %v1802 = vunpack.c.l.b16 %v1081
    %v1803 = vunpack.c.h.b16 %v1081
    %v1804 = vunpack.c.l.b16 %v1082
    %v1805 = vunpack.c.h.b16 %v1082
    %v1806 = vunpack.c.l.b16 %v1083
    %v1807 = vunpack.c.h.b16 %v1083
    %v1808 = vunpack.c.l.b16 %v1084
    %v1809 = vunpack.c.h.b16 %v1084
    %v1810 = vunpack.c.l.b16 %v1085
    %v1811 = vunpack.c.h.b16 %v1085
    %v1812 = vunpack.c.l.b16 %v1086
    %v1813 = vunpack.c.h.b16 %v1086
    %v1814 = vunpack.c.l.b16 %v1087
    %v1815 = vunpack.c.h.b16 %v1087
    %v1816 = vunpack.c.l.b16 %v1088
    %v1817 = vunpack.c.h.b16 %v1088
    %v1818 = vunpack.c.l.b16 %v1089
    %v1819 = vunpack.c.h.b16 %v1089
    %v1820 = vunpack.c.l.b16 %v1090
    %v1821 = vunpack.c.h.b16 %v1090
    %v1822 = vunpack.c.l.b16 %v1091
    %v1823 = vunpack.c.h.b16 %v1091
    %v1824 = vunpack.c.l.b16 %v1092
    %v1825 = vunpack.c.h.b16 %v1092
    %v1826 = vunpack.c.l.b16 %v1093
    %v1827 = vunpack.c.h.b16 %v1093
    %v1828 = vunpack.c.l.b16 %v1094
    %v1829 = vunpack.c.h.b16 %v1094
    %v1830 = vunpack.c.l.b16 %v1095
    %v1831 = vunpack.c.h.b16 %v1095
    %v1832 = vunpack.c.l.b16 %v1096
    %v1833 = vunpack.c.h.b16 %v1096
    %v1834 = vunpack.c.l.b16 %v1097
    %v1835 = vunpack.c.h.b16 %v1097
    %v1836 = vunpack.c.l.b16 %v1098
    %v1837 = vunpack.c.h.b16 %v1098
    %v1838 = vunpack.c.l.b16 %v1099
    %v1839 = vunpack.c.h.b16 %v1099
    %v1840 = vunpack.c.l.b16 %v1100
    %v1841 = vunpack.c.h.b16 %v1100
    %v1842 = vunpack.c.l.b16 %v1101
    %v1843 = vunpack.c.h.b16 %v1101
    %v1844 = vunpack.c.l.b16 %v1102
    %v1845 = vunpack.c.h.b16 %v1102
    %v1846 = vunpack.c.l.b16 %v1103
    %v1847 = vunpack.c.h.b16 %v1103
    %v1848 = vunpack.c.l.b16 %v1104
    %v1849 = vunpack.c.h.b16 %v1104
    %v1850 = vunpack.c.l.b16 %v1105
    %v1851 = vunpack.c.h.b16 %v1105
    %v1852 = vunpack.c.l.b16 %v1106
    %v1853 = vunpack.c.h.b16 %v1106
    %v1854 = vunpack.c.l.b16 %v1107
    %v1855 = vunpack.c.h.b16 %v1107
    %v1856 = vunpack.c.l.b16 %v1108
    %v1857 = vunpack.c.h.b16 %v1108
    %v1858 = vunpack.c.l.b16 %v1109
    %v1859 = vunpack.c.h.b16 %v1109
    %v1860 = vunpack.c.l.b16 %v1110
    %v1861 = vunpack.c.h.b16 %v1110
    %v1862 = vunpack.c.l.b16 %v1111
    %v1863 = vunpack.c.h.b16 %v1111
    %v1864 = vunpack.c.l.b16 %v1112
    %v1865 = vunpack.c.h.b16 %v1112
    %v1866 = vunpack.c.l.b16 %v1113
    %v1867 = vunpack.c.h.b16 %v1113
    %v1868 = vunpack.c.l.b16 %v1114
    %v1869 = vunpack.c.h.b16 %v1114
    %v1870 = vunpack.c.l.b16 %v1115
    %v1871 = vunpack.c.h.b16 %v1115
    %v1872 = vunpack.c.l.b16 %v1116
    %v1873 = vunpack.c.h.b16 %v1116
    %v1874 = vunpack.c.l.b16 %v1117
    %v1875 = vunpack.c.h.b16 %v1117
    %v1876 = vunpack.c.l.b16 %v1118
    %v1877 = vunpack.c.h.b16 %v1118
    %v1878 = vunpack.c.l.b16 %v1119
    %v1879 = vunpack.c.h.b16 %v1119
    %v1880 = vunpack.c.l.b16 %v1120
    %v1881 = vunpack.c.h.b16 %v1120
    %v1882 = vunpack.c.l.b16 %v1121
    %v1883 = vunpack.c.h.b16 %v1121
    %v1884 = vunpack.c.l.b16 %v1122
    %v1885 = vunpack.c.h.b16 %v1122
    %v1886 = vunpack.c.l.b16 %v1123
    %v1887 = vunpack.c.h.b16 %v1123
    %v1888 = vunpack.c.l.b16 %v1124
    %v1889 = vunpack.c.h.b16 %v1124
    %v1890 = vunpack.c.l.b16 %v1125
    %v1891 = vunpack.c.h.b16 %v1125
    %v1892 = vunpack.c.l.b16 %v1126
    %v1893 = vunpack.c.h.b16 %v1126
    %v1894 = vunpack.c.l.b16 %v1127
    %v1895 = vunpack.c.h.b16 %v1127
    %v1896 = vunpack.c.l.b16 %v1128
    %v1897 = vunpack.c.h.b16 %v1128
    %v1898 = vunpack.c.l.b16 %v1129
    %v1899 = vunpack.c.h.b16 %v1129
    %v1900 = vunpack.c.l.b16 %v1130
    %v1901 = vunpack.c.h.b16 %v1130
    %v1902 = vunpack.c.l.b16 %v1131
    %v1903 = vunpack.c.h.b16 %v1131
    %v1904 = vunpack.c.l.b16 %v1132
    %v1905 = vunpack.c.h.b16 %v1132
    %v1906 = vunpack.c.l.b16 %v1133
    %v1907 = vunpack.c.h.b16 %v1133
    %v1908 = vunpack.c.l.b16 %v1134
    %v1909 = vunpack.c.h.b16 %v1134
    %v1910 = vunpack.c.l.b16 %v1135
    %v1911 = vunpack.c.h.b16 %v1135
    %v1912 = vunpack.c.l.b16 %v1136
    %v1913 = vunpack.c.h.b16 %v1136
    %v1914 = vunpack.c.l.b16 %v1137
    %v1915 = vunpack.c.h.b16 %v1137
    %v1916 = vunpack.c.l.b16 %v1138
    %v1917 = vunpack.c.h.b16 %v1138
    %v1918 = vunpack.c.l.b16 %v1139
    %v1919 = vunpack.c.h.b16 %v1139
    %v1920 = vunpack.c.l.b16 %v1140
    %v1921 = vunpack.c.h.b16 %v1140
    %v1922 = vunpack.c.l.b16 %v1141
    %v1923 = vunpack.c.h.b16 %v1141
    %v1924 = vunpack.c.l.b16 %v1142
    %v1925 = vunpack.c.h.b16 %v1142
    %v1926 = vunpack.c.l.b16 %v1143
    %v1927 = vunpack.c.h.b16 %v1143
    %v1928 = vunpack.c.l.b16 %v1144
    %v1929 = vunpack.c.h.b16 %v1144
    %v1930 = vunpack.c.l.b16 %v1145
    %v1931 = vunpack.c.h.b16 %v1145
    %v1932 = vpack.c.b16 %v1428, %v1420
    %v1933 = vpack.c.b16 %v1429, %v1421
    %v1934 = vpack.c.b16 %v1430, %v1422
    %v1935 = vpack.c.b16 %v1431, %v1423
    %v1936 = vpack.c.b16 %v1432, %v1424
    %v1937 = vpack.c.b16 %v1433, %v1425
    %v1938 = vpack.c.b16 %v1434, %v1426
    %v1939 = vpack.c.b16 %v1435, %v1427
    %v1940 = vpack.c.b16 %v1444, %v1436
    %v1941 = vpack.c.b16 %v1445, %v1437
    %v1942 = vpack.c.b16 %v1446, %v1438
    %v1943 = vpack.c.b16 %v1447, %v1439
    %v1944 = vpack.c.b16 %v1448, %v1440
    %v1945 = vpack.c.b16 %v1449, %v1441
    %v1946 = vpack.c.b16 %v1450, %v1442
    %v1947 = vpack.c.b16 %v1451, %v1443
    %v1948 = vpack.c.b16 %v1460, %v1452
    %v1949 = vpack.c.b16 %v1461, %v1453
    %v1950 = vpack.c.b16 %v1462, %v1454
    %v1951 = vpack.c.b16 %v1463, %v1455
    %v1952 = vpack.c.b16 %v1464, %v1456
    %v1953 = vpack.c.b16 %v1465, %v1457
    %v1954 = vpack.c.b16 %v1466, %v1458
    %v1955 = vpack.c.b16 %v1467, %v1459
    %v1956 = vpack.c.b16 %v1476, %v1468
    %v1957 = vpack.c.b16 %v1477, %v1469
    %v1958 = vpack.c.b16 %v1478, %v1470
    %v1959 = vpack.c.b16 %v1479, %v1471
    %v1960 = vpack.c.b16 %v1480, %v1472
    %v1961 = vpack.c.b16 %v1481, %v1473
    %v1962 = vpack.c.b16 %v1482, %v1474
    %v1963 = vpack.c.b16 %v1483, %v1475
    %v1964 = vpack.c.b16 %v1492, %v1484
    %v1965 = vpack.c.b16 %v1493, %v1485
    %v1966 = vpack.c.b16 %v1494, %v1486
    %v1967 = vpack.c.b16 %v1495, %v1487
    %v1968 = vpack.c.b16 %v1496, %v1488
    %v1969 = vpack.c.b16 %v1497, %v1489
    %v1970 = vpack.c.b16 %v1498, %v1490
    %v1971 = vpack.c.b16 %v1499, %v1491
    %v1972 = vpack.c.b16 %v1508, %v1500
    %v1973 = vpack.c.b16 %v1509, %v1501
    %v1974 = vpack.c.b16 %v1510, %v1502
    %v1975 = vpack.c.b16 %v1511, %v1503
    %v1976 = vpack.c.b16 %v1512, %v1504
    %v1977 = vpack.c.b16 %v1513, %v1505
    %v1978 = vpack.c.b16 %v1514, %v1506
    %v1979 = vpack.c.b16 %v1515, %v1507
    %v1980 = vpack.c.b16 %v1524, %v1516
    %v1981 = vpack.c.b16 %v1525, %v1517
    %v1982 = vpack.c.b16 %v1526, %v1518
    %v1983 = vpack.c.b16 %v1527, %v1519
    %v1984 = vpack.c.b16 %v1528, %v1520
    %v1985 = vpack.c.b16 %v1529, %v1521
    %v1986 = vpack.c.b16 %v1530, %v1522
    %v1987 = vpack.c.b16 %v1531, %v1523
    %v1988 = vpack.c.b16 %v1540, %v1532
    %v1989 = vpack.c.b16 %v1541, %v1533
    %v1990 = vpack.c.b16 %v1542, %v1534
    %v1991 = vpack.c.b16 %v1543, %v1535
    %v1992 = vpack.c.b16 %v1544, %v1536
    %v1993 = vpack.c.b16 %v1545, %v1537
    %v1994 = vpack.c.b16 %v1546, %v1538
    %v1995 = vpack.c.b16 %v1547, %v1539
    %v1996 = vpack.c.b16 %v1556, %v1548
    %v1997 = vpack.c.b16 %v1557, %v1549
    %v1998 = vpack.c.b16 %v1558, %v1550
    %v1999 = vpack.c.b16 %v1559, %v1551
    %v2000 = vpack.c.b16 %v1560, %v1552
    %v2001 = vpack.c.b16 %v1561, %v1553
    %v2002 = vpack.c.b16 %v1562, %v1554
    %v2003 = vpack.c.b16 %v1563, %v1555
    %v2004 = vpack.c.b16 %v1572, %v1564
    %v2005 = vpack.c.b16 %v1573, %v1565
    %v2006 = vpack.c.b16 %v1574, %v1566
    %v2007 = vpack.c.b16 %v1575, %v1567
    %v2008 = vpack.c.b16 %v1576, %v1568
    %v2009 = vpack.c.b16 %v1577, %v1569
    %v2010 = vpack.c.b16 %v1578, %v1570
    %v2011 = vpack.c.b16 %v1579, %v1571
    %v2012 = vpack.c.b16 %v1588, %v1580
    %v2013 = vpack.c.b16 %v1589, %v1581
    %v2014 = vpack.c.b16 %v1590, %v1582
    %v2015 = vpack.c.b16 %v1591, %v1583
    %v2016 = vpack.c.b16 %v1592, %v1584
    %v2017 = vpack.c.b16 %v1593, %v1585
    %v2018 = vpack.c.b16 %v1594, %v1586
    %v2019 = vpack.c.b16 %v1595, %v1587
    %v2020 = vpack.c.b16 %v1604, %v1596
    %v2021 = vpack.c.b16 %v1605, %v1597
    %v2022 = vpack.c.b16 %v1606, %v1598
    %v2023 = vpack.c.b16 %v1607, %v1599
    %v2024 = vpack.c.b16 %v1608, %v1600
    %v2025 = vpack.c.b16 %v1609, %v1601
    %v2026 = vpack.c.b16 %v1610, %v1602
    %v2027 = vpack.c.b16 %v1611, %v1603
    %v2028 = vpack.c.b16 %v1620, %v1612
    %v2029 = vpack.c.b16 %v1621, %v1613
    %v2030 = vpack.c.b16 %v1622, %v1614
    %v2031 = vpack.c.b16 %v1623, %v1615
    %v2032 = vpack.c.b16 %v1624, %v1616
    %v2033 = vpack.c.b16 %v1625, %v1617
    %v2034 = vpack.c.b16 %v1626, %v1618
    %v2035 = vpack.c.b16 %v1627, %v1619
    %v2036 = vpack.c.b16 %v1636, %v1628
    %v2037 = vpack.c.b16 %v1637, %v1629
    %v2038 = vpack.c.b16 %v1638, %v1630
    %v2039 = vpack.c.b16 %v1639, %v1631
    %v2040 = vpack.c.b16 %v1640, %v1632
    %v2041 = vpack.c.b16 %v1641, %v1633
    %v2042 = vpack.c.b16 %v1642, %v1634
    %v2043 = vpack.c.b16 %v1643, %v1635
    %v2044 = vpack.c.b16 %v1652, %v1644
    %v2045 = vpack.c.b16 %v1653, %v1645
    %v2046 = vpack.c.b16 %v1654, %v1646
    %v2047 = vpack.c.b16 %v1655, %v1647
    %v2048 = vpack.c.b16 %v1656, %v1648
    %v2049 = vpack.c.b16 %v1657, %v1649
    %v2050 = vpack.c.b16 %v1658, %v1650
    %v2051 = vpack.c.b16 %v1659, %v1651
    %v2052 = vpack.c.b16 %v1668, %v1660
    %v2053 = vpack.c.b16 %v1669, %v1661
    %v2054 = vpack.c.b16 %v1670, %v1662
    %v2055 = vpack.c.b16 %v1671, %v1663
    %v2056 = vpack.c.b16 %v1672, %v1664
    %v2057 = vpack.c.b16 %v1673, %v1665
    %v2058 = vpack.c.b16 %v1674, %v1666
    %v2059 = vpack.c.b16 %v1675, %v1667
    %v2060 = vpack.c.b16 %v1684, %v1676
    %v2061 = vpack.c.b16 %v1685, %v1677
    %v2062 = vpack.c.b16 %v1686, %v1678
    %v2063 = vpack.c.b16 %v1687, %v1679
    %v2064 = vpack.c.b16 %v1688, %v1680
    %v2065 = vpack.c.b16 %v1689, %v1681
    %v2066 = vpack.c.b16 %v1690, %v1682
    %v2067 = vpack.c.b16 %v1691, %v1683
    %v2068 = vpack.c.b16 %v1700, %v1692
    %v2069 = vpack.c.b16 %v1701, %v1693
    %v2070 = vpack.c.b16 %v1702, %v1694
    %v2071 = vpack.c.b16 %v1703, %v1695
    %v2072 = vpack.c.b16 %v1704, %v1696
    %v2073 = vpack.c.b16 %v1705, %v1697
    %v2074 = vpack.c.b16 %v1706, %v1698
    %v2075 = vpack.c.b16 %v1707, %v1699
    %v2076 = vpack.c.b16 %v1716, %v1708
    %v2077 = vpack.c.b16 %v1717, %v1709
    %v2078 = vpack.c.b16 %v1718, %v1710
    %v2079 = vpack.c.b16 %v1719, %v1711
    %v2080 = vpack.c.b16 %v1720, %v1712
    %v2081 = vpack.c.b16 %v1721, %v1713
    %v2082 = vpack.c.b16 %v1722, %v1714
    %v2083 = vpack.c.b16 %v1723, %v1715
    %v2084 = vpack.c.b16 %v1732, %v1724
    %v2085 = vpack.c.b16 %v1733, %v1725
    %v2086 = vpack.c.b16 %v1734, %v1726
    %v2087 = vpack.c.b16 %v1735, %v1727
    %v2088 = vpack.c.b16 %v1736, %v1728
    %v2089 = vpack.c.b16 %v1737, %v1729
    %v2090 = vpack.c.b16 %v1738, %v1730
    %v2091 = vpack.c.b16 %v1739, %v1731
    %v2092 = vpack.c.b16 %v1748, %v1740
    %v2093 = vpack.c.b16 %v1749, %v1741
    %v2094 = vpack.c.b16 %v1750, %v1742
    %v2095 = vpack.c.b16 %v1751, %v1743
    %v2096 = vpack.c.b16 %v1752, %v1744
    %v2097 = vpack.c.b16 %v1753, %v1745
    %v2098 = vpack.c.b16 %v1754, %v1746
    %v2099 = vpack.c.b16 %v1755, %v1747
    %v2100 = vpack.c.b16 %v1764, %v1756
    %v2101 = vpack.c.b16 %v1765, %v1757
    %v2102 = vpack.c.b16 %v1766, %v1758
    %v2103 = vpack.c.b16 %v1767, %v1759
    %v2104 = vpack.c.b16 %v1768, %v1760
    %v2105 = vpack.c.b16 %v1769, %v1761
    %v2106 = vpack.c.b16 %v1770, %v1762
    %v2107 = vpack.c.b16 %v1771, %v1763
    %v2108 = vpack.c.b16 %v1780, %v1772
    %v2109 = vpack.c.b16 %v1781, %v1773
    %v2110 = vpack.c.b16 %v1782, %v1774
    %v2111 = vpack.c.b16 %v1783, %v1775
    %v2112 = vpack.c.b16 %v1784, %v1776
    %v2113 = vpack.c.b16 %v1785, %v1777
    %v2114 = vpack.c.b16 %v1786, %v1778
    %v2115 = vpack.c.b16 %v1787, %v1779
    %v2116 = vpack.c.b16 %v1796, %v1788
    %v2117 = vpack.c.b16 %v1797, %v1789
    %v2118 = vpack.c.b16 %v1798, %v1790
    %v2119 = vpack.c.b16 %v1799, %v1791
    %v2120 = vpack.c.b16 %v1800, %v1792
    %v2121 = vpack.c.b16 %v1801, %v1793
    %v2122 = vpack.c.b16 %v1802, %v1794
    %v2123 = vpack.c.b16 %v1803, %v1795
    %v2124 = vpack.c.b16 %v1812, %v1804
    %v2125 = vpack.c.b16 %v1813, %v1805
    %v2126 = vpack.c.b16 %v1814, %v1806
    %v2127 = vpack.c.b16 %v1815, %v1807
    %v2128 = vpack.c.b16 %v1816, %v1808
    %v2129 = vpack.c.b16 %v1817, %v1809
    %v2130 = vpack.c.b16 %v1818, %v1810
    %v2131 = vpack.c.b16 %v1819, %v1811
    %v2132 = vpack.c.b16 %v1828, %v1820
    %v2133 = vpack.c.b16 %v1829, %v1821
    %v2134 = vpack.c.b16 %v1830, %v1822
    %v2135 = vpack.c.b16 %v1831, %v1823
    %v2136 = vpack.c.b16 %v1832, %v1824
    %v2137 = vpack.c.b16 %v1833, %v1825
    %v2138 = vpack.c.b16 %v1834, %v1826
    %v2139 = vpack.c.b16 %v1835, %v1827
    %v2140 = vpack.c.b16 %v1844, %v1836
    %v2141 = vpack.c.b16 %v1845, %v1837
    %v2142 = vpack.c.b16 %v1846, %v1838
    %v2143 = vpack.c.b16 %v1847, %v1839
    %v2144 = vpack.c.b16 %v1848, %v1840
    %v2145 = vpack.c.b16 %v1849, %v1841
    %v2146 = vpack.c.b16 %v1850, %v1842
    %v2147 = vpack.c.b16 %v1851, %v1843
    %v2148 = vpack.c.b16 %v1860, %v1852
    %v2149 = vpack.c.b16 %v1861, %v1853
    %v2150 = vpack.c.b16 %v1862, %v1854
    %v2151 = vpack.c.b16 %v1863, %v1855
    %v2152 = vpack.c.b16 %v1864, %v1856
    %v2153 = vpack.c.b16 %v1865, %v1857
    %v2154 = vpack.c.b16 %v1866, %v1858
    %v2155 = vpack.c.b16 %v1867, %v1859
    %v2156 = vpack.c.b16 %v1876, %v1868
    %v2157 = vpack.c.b16 %v1877, %v1869
    %v2158 = vpack.c.b16 %v1878, %v1870
    %v2159 = vpack.c.b16 %v1879, %v1871
    %v2160 = vpack.c.b16 %v1880, %v1872
    %v2161 = vpack.c.b16 %v1881, %v1873
    %v2162 = vpack.c.b16 %v1882, %v1874
    %v2163 = vpack.c.b16 %v1883, %v1875
    %v2164 = vpack.c.b16 %v1892, %v1884
    %v2165 = vpack.c.b16 %v1893, %v1885
    %v2166 = vpack.c.b16 %v1894, %v1886
    %v2167 = vpack.c.b16 %v1895, %v1887
    %v2168 = vpack.c.b16 %v1896, %v1888
    %v2169 = vpack.c.b16 %v1897, %v1889
    %v2170 = vpack.c.b16 %v1898, %v1890
    %v2171 = vpack.c.b16 %v1899, %v1891
    %v2172 = vpack.c.b16 %v1908, %v1900
    %v2173 = vpack.c.b16 %v1909, %v1901
    %v2174 = vpack.c.b16 %v1910, %v1902
    %v2175 = vpack.c.b16 %v1911, %v1903
    %v2176 = vpack.c.b16 %v1912, %v1904
    %v2177 = vpack.c.b16 %v1913, %v1905
    %v2178 = vpack.c.b16 %v1914, %v1906
    %v2179 = vpack.c.b16 %v1915, %v1907
    %v2180 = vpack.c.b16 %v1924, %v1916
    %v2181 = vpack.c.b16 %v1925, %v1917
    %v2182 = vpack.c.b16 %v1926, %v1918
    %v2183 = vpack.c.b16 %v1927, %v1919
    %v2184 = vpack.c.b16 %v1928, %v1920
    %v2185 = vpack.c.b16 %v1929, %v1921
    %v2186 = vpack.c.b16 %v1930, %v1922
    %v2187 = vpack.c.b16 %v1931, %v1923
    %2444 = vmatpush.bf16.msra.mxu0 %v1988
    %2445 = vmatpush.bf16.msra.mxu0 %v1980
    %2446 = vmatpush.bf16.msra.mxu0 %v1972
    %2447 = vmatpush.bf16.msra.mxu0 %v1964
    %2448 = vmatpush.bf16.msra.mxu0 %v1956
    %2449 = vmatpush.bf16.msra.mxu0 %v1948
    %2450 = vmatpush.bf16.msra.mxu0 %v1940
    %2451 = vmatpush.bf16.msra.mxu0 %v1932
    %2452 = vmatmul.bf16.gmra.mxu0 %v886
    %v2453 = vpop.f32.mrf.mxu0
    %v2454 = vadd.f32 %v1148, %v2453
    %v2455 = vpop.f32.mrf.mxu0
    %v2456 = vadd.f32 %v1148, %v2455
    %2457 = vdwg.mxu0
    %2458 = vmatpush.bf16.msra.mxu0 %v2052
    %2459 = vmatpush.bf16.msra.mxu0 %v2044
    %2460 = vmatpush.bf16.msra.mxu0 %v2036
    %2461 = vmatpush.bf16.msra.mxu0 %v2028
    %2462 = vmatpush.bf16.msra.mxu0 %v2020
    %2463 = vmatpush.bf16.msra.mxu0 %v2012
    %2464 = vmatpush.bf16.msra.mxu0 %v2004
    %2465 = vmatpush.bf16.msra.mxu0 %v1996
    %2466 = vmatmul.bf16.gmra.mxu0 %v887
    %v2467 = vpop.f32.mrf.mxu0
    %v2468 = vadd.f32 %v2454, %v2467
    %v2469 = vpop.f32.mrf.mxu0
    %v2470 = vadd.f32 %v2456, %v2469
    %2471 = vdwg.mxu0
    %2472 = vmatpush.bf16.msra.mxu0 %v2116
    %2473 = vmatpush.bf16.msra.mxu0 %v2108
    %2474 = vmatpush.bf16.msra.mxu0 %v2100
    %2475 = vmatpush.bf16.msra.mxu0 %v2092
    %2476 = vmatpush.bf16.msra.mxu0 %v2084
    %2477 = vmatpush.bf16.msra.mxu0 %v2076
    %2478 = vmatpush.bf16.msra.mxu0 %v2068
    %2479 = vmatpush.bf16.msra.mxu0 %v2060
    %2480 = vmatmul.bf16.gmra.mxu0 %v888
    %v2481 = vpop.f32.mrf.mxu0
    %v2482 = vadd.f32 %v2468, %v2481
    %v2483 = vpop.f32.mrf.mxu0
    %v2484 = vadd.f32 %v2470, %v2483
    %2485 = vdwg.mxu0
    %2486 = vmatpush.bf16.msra.mxu0 %v2180
    %2487 = vmatpush.bf16.msra.mxu0 %v2172
    %2488 = vmatpush.bf16.msra.mxu0 %v2164
    %2489 = vmatpush.bf16.msra.mxu0 %v2156
    %2490 = vmatpush.bf16.msra.mxu0 %v2148
    %2491 = vmatpush.bf16.msra.mxu0 %v2140
    %2492 = vmatpush.bf16.msra.mxu0 %v2132
    %2493 = vmatpush.bf16.msra.mxu0 %v2124
    %2494 = vmatmul.bf16.gmra.mxu0 %v889
    %v2495 = vpop.f32.mrf.mxu0
    %v2496 = vadd.f32 %v2482, %v2495
    %v2497 = vpop.f32.mrf.mxu0
    %v2498 = vadd.f32 %v2484, %v2497
    %2499 = vdwg.mxu0
    %2500 = vmatpush.bf16.msra.mxu0 %v1989
    %2501 = vmatpush.bf16.msra.mxu0 %v1981
    %2502 = vmatpush.bf16.msra.mxu0 %v1973
    %2503 = vmatpush.bf16.msra.mxu0 %v1965
    %2504 = vmatpush.bf16.msra.mxu0 %v1957
    %2505 = vmatpush.bf16.msra.mxu0 %v1949
    %2506 = vmatpush.bf16.msra.mxu0 %v1941
    %2507 = vmatpush.bf16.msra.mxu0 %v1933
    %2508 = vmatmul.bf16.gmra.mxu0 %v886
    %v2509 = vpop.f32.mrf.mxu0
    %v2510 = vadd.f32 %v1149, %v2509
    %v2511 = vpop.f32.mrf.mxu0
    %v2512 = vadd.f32 %v1149, %v2511
    %2513 = vdwg.mxu0
    %2514 = vmatpush.bf16.msra.mxu0 %v2053
    %2515 = vmatpush.bf16.msra.mxu0 %v2045
    %2516 = vmatpush.bf16.msra.mxu0 %v2037
    %2517 = vmatpush.bf16.msra.mxu0 %v2029
    %2518 = vmatpush.bf16.msra.mxu0 %v2021
    %2519 = vmatpush.bf16.msra.mxu0 %v2013
    %2520 = vmatpush.bf16.msra.mxu0 %v2005
    %2521 = vmatpush.bf16.msra.mxu0 %v1997
    %2522 = vmatmul.bf16.gmra.mxu0 %v887
    %v2523 = vpop.f32.mrf.mxu0
    %v2524 = vadd.f32 %v2510, %v2523
    %v2525 = vpop.f32.mrf.mxu0
    %v2526 = vadd.f32 %v2512, %v2525
    %2527 = vdwg.mxu0
    %2528 = vmatpush.bf16.msra.mxu0 %v2117
    %2529 = vmatpush.bf16.msra.mxu0 %v2109
    %2530 = vmatpush.bf16.msra.mxu0 %v2101
    %2531 = vmatpush.bf16.msra.mxu0 %v2093
    %2532 = vmatpush.bf16.msra.mxu0 %v2085
    %2533 = vmatpush.bf16.msra.mxu0 %v2077
    %2534 = vmatpush.bf16.msra.mxu0 %v2069
    %2535 = vmatpush.bf16.msra.mxu0 %v2061
    %2536 = vmatmul.bf16.gmra.mxu0 %v888
    %v2537 = vpop.f32.mrf.mxu0
    %v2538 = vadd.f32 %v2524, %v2537
    %v2539 = vpop.f32.mrf.mxu0
    %v2540 = vadd.f32 %v2526, %v2539
    %2541 = vdwg.mxu0
    %2542 = vmatpush.bf16.msra.mxu0 %v2181
    %2543 = vmatpush.bf16.msra.mxu0 %v2173
    %2544 = vmatpush.bf16.msra.mxu0 %v2165
    %2545 = vmatpush.bf16.msra.mxu0 %v2157
    %2546 = vmatpush.bf16.msra.mxu0 %v2149
    %2547 = vmatpush.bf16.msra.mxu0 %v2141
    %2548 = vmatpush.bf16.msra.mxu0 %v2133
    %2549 = vmatpush.bf16.msra.mxu0 %v2125
    %2550 = vmatmul.bf16.gmra.mxu0 %v889
    %v2551 = vpop.f32.mrf.mxu0
    %v2552 = vadd.f32 %v2538, %v2551
    %v2553 = vpop.f32.mrf.mxu0
    %v2554 = vadd.f32 %v2540, %v2553
    %2555 = vdwg.mxu0
    %2556 = vmatpush.bf16.msra.mxu0 %v1990
    %2557 = vmatpush.bf16.msra.mxu0 %v1982
    %2558 = vmatpush.bf16.msra.mxu0 %v1974
    %2559 = vmatpush.bf16.msra.mxu0 %v1966
    %2560 = vmatpush.bf16.msra.mxu0 %v1958
    %2561 = vmatpush.bf16.msra.mxu0 %v1950
    %2562 = vmatpush.bf16.msra.mxu0 %v1942
    %2563 = vmatpush.bf16.msra.mxu0 %v1934
    %2564 = vmatmul.bf16.gmra.mxu0 %v886
    %v2565 = vpop.f32.mrf.mxu0
    %v2566 = vadd.f32 %v1150, %v2565
    %v2567 = vpop.f32.mrf.mxu0
    %v2568 = vadd.f32 %v1150, %v2567
    %2569 = vdwg.mxu0
    %2570 = vmatpush.bf16.msra.mxu0 %v2054
    %2571 = vmatpush.bf16.msra.mxu0 %v2046
    %2572 = vmatpush.bf16.msra.mxu0 %v2038
    %2573 = vmatpush.bf16.msra.mxu0 %v2030
    %2574 = vmatpush.bf16.msra.mxu0 %v2022
    %2575 = vmatpush.bf16.msra.mxu0 %v2014
    %2576 = vmatpush.bf16.msra.mxu0 %v2006
    %2577 = vmatpush.bf16.msra.mxu0 %v1998
    %2578 = vmatmul.bf16.gmra.mxu0 %v887
    %v2579 = vpop.f32.mrf.mxu0
    %v2580 = vadd.f32 %v2566, %v2579
    %v2581 = vpop.f32.mrf.mxu0
    %v2582 = vadd.f32 %v2568, %v2581
    %2583 = vdwg.mxu0
    %2584 = vmatpush.bf16.msra.mxu0 %v2118
    %2585 = vmatpush.bf16.msra.mxu0 %v2110
    %2586 = vmatpush.bf16.msra.mxu0 %v2102
    %2587 = vmatpush.bf16.msra.mxu0 %v2094
    %2588 = vmatpush.bf16.msra.mxu0 %v2086
    %2589 = vmatpush.bf16.msra.mxu0 %v2078
    %2590 = vmatpush.bf16.msra.mxu0 %v2070
    %2591 = vmatpush.bf16.msra.mxu0 %v2062
    %2592 = vmatmul.bf16.gmra.mxu0 %v888
    %v2593 = vpop.f32.mrf.mxu0
    %v2594 = vadd.f32 %v2580, %v2593
    %v2595 = vpop.f32.mrf.mxu0
    %v2596 = vadd.f32 %v2582, %v2595
    %2597 = vdwg.mxu0
    %2598 = vmatpush.bf16.msra.mxu0 %v2182
    %2599 = vmatpush.bf16.msra.mxu0 %v2174
    %2600 = vmatpush.bf16.msra.mxu0 %v2166
    %2601 = vmatpush.bf16.msra.mxu0 %v2158
    %2602 = vmatpush.bf16.msra.mxu0 %v2150
    %2603 = vmatpush.bf16.msra.mxu0 %v2142
    %2604 = vmatpush.bf16.msra.mxu0 %v2134
    %2605 = vmatpush.bf16.msra.mxu0 %v2126
    %2606 = vmatmul.bf16.gmra.mxu0 %v889
    %v2607 = vpop.f32.mrf.mxu0
    %v2608 = vadd.f32 %v2594, %v2607
    %v2609 = vpop.f32.mrf.mxu0
    %v2610 = vadd.f32 %v2596, %v2609
    %2611 = vdwg.mxu0
    %2612 = vmatpush.bf16.msra.mxu0 %v1991
    %2613 = vmatpush.bf16.msra.mxu0 %v1983
    %2614 = vmatpush.bf16.msra.mxu0 %v1975
    %2615 = vmatpush.bf16.msra.mxu0 %v1967
    %2616 = vmatpush.bf16.msra.mxu0 %v1959
    %2617 = vmatpush.bf16.msra.mxu0 %v1951
    %2618 = vmatpush.bf16.msra.mxu0 %v1943
    %2619 = vmatpush.bf16.msra.mxu0 %v1935
    %2620 = vmatmul.bf16.gmra.mxu0 %v886
    %v2621 = vpop.f32.mrf.mxu0
    %v2622 = vadd.f32 %v1151, %v2621
    %v2623 = vpop.f32.mrf.mxu0
    %v2624 = vadd.f32 %v1151, %v2623
    %2625 = vdwg.mxu0
    %2626 = vmatpush.bf16.msra.mxu0 %v2055
    %2627 = vmatpush.bf16.msra.mxu0 %v2047
    %2628 = vmatpush.bf16.msra.mxu0 %v2039
    %2629 = vmatpush.bf16.msra.mxu0 %v2031
    %2630 = vmatpush.bf16.msra.mxu0 %v2023
    %2631 = vmatpush.bf16.msra.mxu0 %v2015
    %2632 = vmatpush.bf16.msra.mxu0 %v2007
    %2633 = vmatpush.bf16.msra.mxu0 %v1999
    %2634 = vmatmul.bf16.gmra.mxu0 %v887
    %v2635 = vpop.f32.mrf.mxu0
    %v2636 = vadd.f32 %v2622, %v2635
    %v2637 = vpop.f32.mrf.mxu0
    %v2638 = vadd.f32 %v2624, %v2637
    %2639 = vdwg.mxu0
    %2640 = vmatpush.bf16.msra.mxu0 %v2119
    %2641 = vmatpush.bf16.msra.mxu0 %v2111
    %2642 = vmatpush.bf16.msra.mxu0 %v2103
    %2643 = vmatpush.bf16.msra.mxu0 %v2095
    %2644 = vmatpush.bf16.msra.mxu0 %v2087
    %2645 = vmatpush.bf16.msra.mxu0 %v2079
    %2646 = vmatpush.bf16.msra.mxu0 %v2071
    %2647 = vmatpush.bf16.msra.mxu0 %v2063
    %2648 = vmatmul.bf16.gmra.mxu0 %v888
    %v2649 = vpop.f32.mrf.mxu0
    %v2650 = vadd.f32 %v2636, %v2649
    %v2651 = vpop.f32.mrf.mxu0
    %v2652 = vadd.f32 %v2638, %v2651
    %2653 = vdwg.mxu0
    %2654 = vmatpush.bf16.msra.mxu0 %v2183
    %2655 = vmatpush.bf16.msra.mxu0 %v2175
    %2656 = vmatpush.bf16.msra.mxu0 %v2167
    %2657 = vmatpush.bf16.msra.mxu0 %v2159
    %2658 = vmatpush.bf16.msra.mxu0 %v2151
    %2659 = vmatpush.bf16.msra.mxu0 %v2143
    %2660 = vmatpush.bf16.msra.mxu0 %v2135
    %2661 = vmatpush.bf16.msra.mxu0 %v2127
    %2662 = vmatmul.bf16.gmra.mxu0 %v889
    %v2663 = vpop.f32.mrf.mxu0
    %v2664 = vadd.f32 %v2650, %v2663
    %v2665 = vpop.f32.mrf.mxu0
    %v2666 = vadd.f32 %v2652, %v2665
    %2667 = vdwg.mxu0
    %2668 = vmatpush.bf16.msra.mxu0 %v1992
    %2669 = vmatpush.bf16.msra.mxu0 %v1984
    %2670 = vmatpush.bf16.msra.mxu0 %v1976
    %2671 = vmatpush.bf16.msra.mxu0 %v1968
    %2672 = vmatpush.bf16.msra.mxu0 %v1960
    %2673 = vmatpush.bf16.msra.mxu0 %v1952
    %2674 = vmatpush.bf16.msra.mxu0 %v1944
    %2675 = vmatpush.bf16.msra.mxu0 %v1936
    %2676 = vmatmul.bf16.gmra.mxu0 %v886
    %v2677 = vpop.f32.mrf.mxu0
    %v2678 = vadd.f32 %v1152, %v2677
    %v2679 = vpop.f32.mrf.mxu0
    %v2680 = vadd.f32 %v1152, %v2679
    %2681 = vdwg.mxu0
    %2682 = vmatpush.bf16.msra.mxu0 %v2056
    %2683 = vmatpush.bf16.msra.mxu0 %v2048
    %2684 = vmatpush.bf16.msra.mxu0 %v2040
    %2685 = vmatpush.bf16.msra.mxu0 %v2032
    %2686 = vmatpush.bf16.msra.mxu0 %v2024
    %2687 = vmatpush.bf16.msra.mxu0 %v2016
    %2688 = vmatpush.bf16.msra.mxu0 %v2008
    %2689 = vmatpush.bf16.msra.mxu0 %v2000
    %2690 = vmatmul.bf16.gmra.mxu0 %v887
    %v2691 = vpop.f32.mrf.mxu0
    %v2692 = vadd.f32 %v2678, %v2691
    %v2693 = vpop.f32.mrf.mxu0
    %v2694 = vadd.f32 %v2680, %v2693
    %2695 = vdwg.mxu0
    %2696 = vmatpush.bf16.msra.mxu0 %v2120
    %2697 = vmatpush.bf16.msra.mxu0 %v2112
    %2698 = vmatpush.bf16.msra.mxu0 %v2104
    %2699 = vmatpush.bf16.msra.mxu0 %v2096
    %2700 = vmatpush.bf16.msra.mxu0 %v2088
    %2701 = vmatpush.bf16.msra.mxu0 %v2080
    %2702 = vmatpush.bf16.msra.mxu0 %v2072
    %2703 = vmatpush.bf16.msra.mxu0 %v2064
    %2704 = vmatmul.bf16.gmra.mxu0 %v888
    %v2705 = vpop.f32.mrf.mxu0
    %v2706 = vadd.f32 %v2692, %v2705
    %v2707 = vpop.f32.mrf.mxu0
    %v2708 = vadd.f32 %v2694, %v2707
    %2709 = vdwg.mxu0
    %2710 = vmatpush.bf16.msra.mxu0 %v2184
    %2711 = vmatpush.bf16.msra.mxu0 %v2176
    %2712 = vmatpush.bf16.msra.mxu0 %v2168
    %2713 = vmatpush.bf16.msra.mxu0 %v2160
    %2714 = vmatpush.bf16.msra.mxu0 %v2152
    %2715 = vmatpush.bf16.msra.mxu0 %v2144
    %2716 = vmatpush.bf16.msra.mxu0 %v2136
    %2717 = vmatpush.bf16.msra.mxu0 %v2128
    %2718 = vmatmul.bf16.gmra.mxu0 %v889
    %v2719 = vpop.f32.mrf.mxu0
    %v2720 = vadd.f32 %v2706, %v2719
    %v2721 = vpop.f32.mrf.mxu0
    %v2722 = vadd.f32 %v2708, %v2721
    %2723 = vdwg.mxu0
    %2724 = vmatpush.bf16.msra.mxu0 %v1993
    %2725 = vmatpush.bf16.msra.mxu0 %v1985
    %2726 = vmatpush.bf16.msra.mxu0 %v1977
    %2727 = vmatpush.bf16.msra.mxu0 %v1969
    %2728 = vmatpush.bf16.msra.mxu0 %v1961
    %2729 = vmatpush.bf16.msra.mxu0 %v1953
    %2730 = vmatpush.bf16.msra.mxu0 %v1945
    %2731 = vmatpush.bf16.msra.mxu0 %v1937
    %2732 = vmatmul.bf16.gmra.mxu0 %v886
    %v2733 = vpop.f32.mrf.mxu0
    %v2734 = vadd.f32 %v1153, %v2733
    %v2735 = vpop.f32.mrf.mxu0
    %v2736 = vadd.f32 %v1153, %v2735
    %2737 = vdwg.mxu0
    %2738 = vmatpush.bf16.msra.mxu0 %v2057
    %2739 = vmatpush.bf16.msra.mxu0 %v2049
    %2740 = vmatpush.bf16.msra.mxu0 %v2041
    %2741 = vmatpush.bf16.msra.mxu0 %v2033
    %2742 = vmatpush.bf16.msra.mxu0 %v2025
    %2743 = vmatpush.bf16.msra.mxu0 %v2017
    %2744 = vmatpush.bf16.msra.mxu0 %v2009
    %2745 = vmatpush.bf16.msra.mxu0 %v2001
    %2746 = vmatmul.bf16.gmra.mxu0 %v887
    %v2747 = vpop.f32.mrf.mxu0
    %v2748 = vadd.f32 %v2734, %v2747
    %v2749 = vpop.f32.mrf.mxu0
    %v2750 = vadd.f32 %v2736, %v2749
    %2751 = vdwg.mxu0
    %2752 = vmatpush.bf16.msra.mxu0 %v2121
    %2753 = vmatpush.bf16.msra.mxu0 %v2113
    %2754 = vmatpush.bf16.msra.mxu0 %v2105
    %2755 = vmatpush.bf16.msra.mxu0 %v2097
    %2756 = vmatpush.bf16.msra.mxu0 %v2089
    %2757 = vmatpush.bf16.msra.mxu0 %v2081
    %2758 = vmatpush.bf16.msra.mxu0 %v2073
    %2759 = vmatpush.bf16.msra.mxu0 %v2065
    %2760 = vmatmul.bf16.gmra.mxu0 %v888
    %v2761 = vpop.f32.mrf.mxu0
    %v2762 = vadd.f32 %v2748, %v2761
    %v2763 = vpop.f32.mrf.mxu0
    %v2764 = vadd.f32 %v2750, %v2763
    %2765 = vdwg.mxu0
    %2766 = vmatpush.bf16.msra.mxu0 %v2185
    %2767 = vmatpush.bf16.msra.mxu0 %v2177
    %2768 = vmatpush.bf16.msra.mxu0 %v2169
    %2769 = vmatpush.bf16.msra.mxu0 %v2161
    %2770 = vmatpush.bf16.msra.mxu0 %v2153
    %2771 = vmatpush.bf16.msra.mxu0 %v2145
    %2772 = vmatpush.bf16.msra.mxu0 %v2137
    %2773 = vmatpush.bf16.msra.mxu0 %v2129
    %2774 = vmatmul.bf16.gmra.mxu0 %v889
    %v2775 = vpop.f32.mrf.mxu0
    %v2776 = vadd.f32 %v2762, %v2775
    %v2777 = vpop.f32.mrf.mxu0
    %v2778 = vadd.f32 %v2764, %v2777
    %2779 = vdwg.mxu0
    %2780 = vmatpush.bf16.msra.mxu0 %v1994
    %2781 = vmatpush.bf16.msra.mxu0 %v1986
    %2782 = vmatpush.bf16.msra.mxu0 %v1978
    %2783 = vmatpush.bf16.msra.mxu0 %v1970
    %2784 = vmatpush.bf16.msra.mxu0 %v1962
    %2785 = vmatpush.bf16.msra.mxu0 %v1954
    %2786 = vmatpush.bf16.msra.mxu0 %v1946
    %2787 = vmatpush.bf16.msra.mxu0 %v1938
    %2788 = vmatmul.bf16.gmra.mxu0 %v886
    %v2789 = vpop.f32.mrf.mxu0
    %v2790 = vadd.f32 %v1154, %v2789
    %v2791 = vpop.f32.mrf.mxu0
    %v2792 = vadd.f32 %v1154, %v2791
    %2793 = vdwg.mxu0
    %2794 = vmatpush.bf16.msra.mxu0 %v2058
    %2795 = vmatpush.bf16.msra.mxu0 %v2050
    %2796 = vmatpush.bf16.msra.mxu0 %v2042
    %2797 = vmatpush.bf16.msra.mxu0 %v2034
    %2798 = vmatpush.bf16.msra.mxu0 %v2026
    %2799 = vmatpush.bf16.msra.mxu0 %v2018
    %2800 = vmatpush.bf16.msra.mxu0 %v2010
    %2801 = vmatpush.bf16.msra.mxu0 %v2002
    %2802 = vmatmul.bf16.gmra.mxu0 %v887
    %v2803 = vpop.f32.mrf.mxu0
    %v2804 = vadd.f32 %v2790, %v2803
    %v2805 = vpop.f32.mrf.mxu0
    %v2806 = vadd.f32 %v2792, %v2805
    %2807 = vdwg.mxu0
    %2808 = vmatpush.bf16.msra.mxu0 %v2122
    %2809 = vmatpush.bf16.msra.mxu0 %v2114
    %2810 = vmatpush.bf16.msra.mxu0 %v2106
    %2811 = vmatpush.bf16.msra.mxu0 %v2098
    %2812 = vmatpush.bf16.msra.mxu0 %v2090
    %2813 = vmatpush.bf16.msra.mxu0 %v2082
    %2814 = vmatpush.bf16.msra.mxu0 %v2074
    %2815 = vmatpush.bf16.msra.mxu0 %v2066
    %2816 = vmatmul.bf16.gmra.mxu0 %v888
    %v2817 = vpop.f32.mrf.mxu0
    %v2818 = vadd.f32 %v2804, %v2817
    %v2819 = vpop.f32.mrf.mxu0
    %v2820 = vadd.f32 %v2806, %v2819
    %2821 = vdwg.mxu0
    %2822 = vmatpush.bf16.msra.mxu0 %v2186
    %2823 = vmatpush.bf16.msra.mxu0 %v2178
    %2824 = vmatpush.bf16.msra.mxu0 %v2170
    %2825 = vmatpush.bf16.msra.mxu0 %v2162
    %2826 = vmatpush.bf16.msra.mxu0 %v2154
    %2827 = vmatpush.bf16.msra.mxu0 %v2146
    %2828 = vmatpush.bf16.msra.mxu0 %v2138
    %2829 = vmatpush.bf16.msra.mxu0 %v2130
    %2830 = vmatmul.bf16.gmra.mxu0 %v889
    %v2831 = vpop.f32.mrf.mxu0
    %v2832 = vadd.f32 %v2818, %v2831
    %v2833 = vpop.f32.mrf.mxu0
    %v2834 = vadd.f32 %v2820, %v2833
    %2835 = vdwg.mxu0
    %2836 = vmatpush.bf16.msra.mxu0 %v1995
    %2837 = vmatpush.bf16.msra.mxu0 %v1987
    %2838 = vmatpush.bf16.msra.mxu0 %v1979
    %2839 = vmatpush.bf16.msra.mxu0 %v1971
    %2840 = vmatpush.bf16.msra.mxu0 %v1963
    %2841 = vmatpush.bf16.msra.mxu0 %v1955
    %2842 = vmatpush.bf16.msra.mxu0 %v1947
    %2843 = vmatpush.bf16.msra.mxu0 %v1939
    %2844 = vmatmul.bf16.gmra.mxu0 %v886
    %v2845 = vpop.f32.mrf.mxu0
    %v2846 = vadd.f32 %v1155, %v2845
    %v2847 = vpop.f32.mrf.mxu0
    %v2848 = vadd.f32 %v1155, %v2847
    %2849 = vdwg.mxu0
    %2850 = vmatpush.bf16.msra.mxu0 %v2059
    %2851 = vmatpush.bf16.msra.mxu0 %v2051
    %2852 = vmatpush.bf16.msra.mxu0 %v2043
    %2853 = vmatpush.bf16.msra.mxu0 %v2035
    %2854 = vmatpush.bf16.msra.mxu0 %v2027
    %2855 = vmatpush.bf16.msra.mxu0 %v2019
    %2856 = vmatpush.bf16.msra.mxu0 %v2011
    %2857 = vmatpush.bf16.msra.mxu0 %v2003
    %2858 = vmatmul.bf16.gmra.mxu0 %v887
    %v2859 = vpop.f32.mrf.mxu0
    %v2860 = vadd.f32 %v2846, %v2859
    %v2861 = vpop.f32.mrf.mxu0
    %v2862 = vadd.f32 %v2848, %v2861
    %2863 = vdwg.mxu0
    %2864 = vmatpush.bf16.msra.mxu0 %v2123
    %2865 = vmatpush.bf16.msra.mxu0 %v2115
    %2866 = vmatpush.bf16.msra.mxu0 %v2107
    %2867 = vmatpush.bf16.msra.mxu0 %v2099
    %2868 = vmatpush.bf16.msra.mxu0 %v2091
    %2869 = vmatpush.bf16.msra.mxu0 %v2083
    %2870 = vmatpush.bf16.msra.mxu0 %v2075
    %2871 = vmatpush.bf16.msra.mxu0 %v2067
    %2872 = vmatmul.bf16.gmra.mxu0 %v888
    %v2873 = vpop.f32.mrf.mxu0
    %v2874 = vadd.f32 %v2860, %v2873
    %v2875 = vpop.f32.mrf.mxu0
    %v2876 = vadd.f32 %v2862, %v2875
    %2877 = vdwg.mxu0
    %2878 = vmatpush.bf16.msra.mxu0 %v2187
    %2879 = vmatpush.bf16.msra.mxu0 %v2179
    %2880 = vmatpush.bf16.msra.mxu0 %v2171
    %2881 = vmatpush.bf16.msra.mxu0 %v2163
    %2882 = vmatpush.bf16.msra.mxu0 %v2155
    %2883 = vmatpush.bf16.msra.mxu0 %v2147
    %2884 = vmatpush.bf16.msra.mxu0 %v2139
    %2885 = vmatpush.bf16.msra.mxu0 %v2131
    %2886 = vmatmul.bf16.gmra.mxu0 %v889
    %v2887 = vpop.f32.mrf.mxu0
    %v2888 = vadd.f32 %v2874, %v2887
    %v2889 = vpop.f32.mrf.mxu0
    %v2890 = vadd.f32 %v2876, %v2889
    %2891 = vdwg.mxu0
    %v2892 = vmul.f32 %v2496, 0.01
    %v2893 = vmul.f32 %v2552, 0.01
    %v2894 = vmul.f32 %v2608, 0.01
    %v2895 = vmul.f32 %v2664, 0.01
    %v2896 = vmul.f32 %v2720, 0.01
    %v2897 = vmul.f32 %v2776, 0.01
    %v2898 = vmul.f32 %v2832, 0.01
    %v2899 = vmul.f32 %v2888, 0.01
    %v2900 = vmul.f32 %v2498, 0.01
    %v2901 = vmul.f32 %v2554, 0.01
    %v2902 = vmul.f32 %v2610, 0.01
    %v2903 = vmul.f32 %v2666, 0.01
    %v2904 = vmul.f32 %v2722, 0.01
    %v2905 = vmul.f32 %v2778, 0.01
    %v2906 = vmul.f32 %v2834, 0.01
    %v2907 = vmul.f32 %v2890, 0.01
    %v2908 = vmax.f32 %v2496, %v2892
    %v2909 = vmax.f32 %v2552, %v2893
    %v2910 = vmax.f32 %v2608, %v2894
    %v2911 = vmax.f32 %v2664, %v2895
    %v2912 = vmax.f32 %v2720, %v2896
    %v2913 = vmax.f32 %v2776, %v2897
    %v2914 = vmax.f32 %v2832, %v2898
    %v2915 = vmax.f32 %v2888, %v2899
    %v2916 = vmax.f32 %v2498, %v2900
    %v2917 = vmax.f32 %v2554, %v2901
    %v2918 = vmax.f32 %v2610, %v2902
    %v2919 = vmax.f32 %v2666, %v2903
    %v2920 = vmax.f32 %v2722, %v2904
    %v2921 = vmax.f32 %v2778, %v2905
    %v2922 = vmax.f32 %v2834, %v2906
    %v2923 = vmax.f32 %v2890, %v2907
    %v2924 = vpack.c.bf16 %v2916, %v2908
    %v2925 = vpack.c.bf16 %v2917, %v2909
    %v2926 = vpack.c.bf16 %v2918, %v2910
    %v2927 = vpack.c.bf16 %v2919, %v2911
    %v2928 = vpack.c.bf16 %v2920, %v2912
    %v2929 = vpack.c.bf16 %v2921, %v2913
    %v2930 = vpack.c.bf16 %v2922, %v2914
    %v2931 = vpack.c.bf16 %v2923, %v2915
    %v2932 = vld [vmem:[#allocation10] sm:$0xff]
    %v2933 = vld [vmem:[#allocation10 + $0x8] sm:$0xff]
    %v2934 = vld [vmem:[#allocation10 + $0x10] sm:$0xff]
    %v2935 = vld [vmem:[#allocation10 + $0x18] sm:$0xff]
    %v2936 = vld [vmem:[#allocation10 + $0x20] sm:$0xff]
    %v2937 = vld [vmem:[#allocation10 + $0x28] sm:$0xff]
    %v2938 = vld [vmem:[#allocation10 + $0x30] sm:$0xff]
    %v2939 = vld [vmem:[#allocation10 + $0x38] sm:$0xff]
    %v2940 = vld [vmem:[#allocation10 + $0x40] sm:$0xff]
    %v2941 = vld [vmem:[#allocation10 + $0x48] sm:$0xff]
    %v2942 = vld [vmem:[#allocation10 + $0x50] sm:$0xff]
    %v2943 = vld [vmem:[#allocation10 + $0x58] sm:$0xff]
    %v2944 = vld [vmem:[#allocation10 + $0x60] sm:$0xff]
    %v2945 = vld [vmem:[#allocation10 + $0x68] sm:$0xff]
    %v2946 = vld [vmem:[#allocation10 + $0x70] sm:$0xff]
    %v2947 = vld [vmem:[#allocation10 + $0x78] sm:$0xff]
    %v2948 = vld [vmem:[#allocation10 + $0x80] sm:$0xff]
    %v2949 = vld [vmem:[#allocation10 + $0x88] sm:$0xff]
    %v2950 = vld [vmem:[#allocation10 + $0x90] sm:$0xff]
    %v2951 = vld [vmem:[#allocation10 + $0x98] sm:$0xff]
    %v2952 = vld [vmem:[#allocation10 + $0xa0] sm:$0xff]
    %v2953 = vld [vmem:[#allocation10 + $0xa8] sm:$0xff]
    %v2954 = vld [vmem:[#allocation10 + $0xb0] sm:$0xff]
    %v2955 = vld [vmem:[#allocation10 + $0xb8] sm:$0xff]
    %v2956 = vld [vmem:[#allocation10 + $0xc0] sm:$0xff]
    %v2957 = vld [vmem:[#allocation10 + $0xc8] sm:$0xff]
    %v2958 = vld [vmem:[#allocation10 + $0xd0] sm:$0xff]
    %v2959 = vld [vmem:[#allocation10 + $0xd8] sm:$0xff]
    %v2960 = vld [vmem:[#allocation10 + $0xe0] sm:$0xff]
    %v2961 = vld [vmem:[#allocation10 + $0xe8] sm:$0xff]
    %v2962 = vld [vmem:[#allocation10 + $0xf0] sm:$0xff]
    %v2963 = vld [vmem:[#allocation10 + $0xf8] sm:$0xff]
    %v2964 = vld [vmem:[#allocation10 + $0x100] sm:$0xff]
    %v2965 = vld [vmem:[#allocation10 + $0x108] sm:$0xff]
    %v2966 = vld [vmem:[#allocation10 + $0x110] sm:$0xff]
    %v2967 = vld [vmem:[#allocation10 + $0x118] sm:$0xff]
    %v2968 = vld [vmem:[#allocation10 + $0x120] sm:$0xff]
    %v2969 = vld [vmem:[#allocation10 + $0x128] sm:$0xff]
    %v2970 = vld [vmem:[#allocation10 + $0x130] sm:$0xff]
    %v2971 = vld [vmem:[#allocation10 + $0x138] sm:$0xff]
    %v2972 = vld [vmem:[#allocation10 + $0x140] sm:$0xff]
    %v2973 = vld [vmem:[#allocation10 + $0x148] sm:$0xff]
    %v2974 = vld [vmem:[#allocation10 + $0x150] sm:$0xff]
    %v2975 = vld [vmem:[#allocation10 + $0x158] sm:$0xff]
    %v2976 = vld [vmem:[#allocation10 + $0x160] sm:$0xff]
    %v2977 = vld [vmem:[#allocation10 + $0x168] sm:$0xff]
    %v2978 = vld [vmem:[#allocation10 + $0x170] sm:$0xff]
    %v2979 = vld [vmem:[#allocation10 + $0x178] sm:$0xff]
    %v2980 = vld [vmem:[#allocation10 + $0x180] sm:$0xff]
    %v2981 = vld [vmem:[#allocation10 + $0x188] sm:$0xff]
    %v2982 = vld [vmem:[#allocation10 + $0x190] sm:$0xff]
    %v2983 = vld [vmem:[#allocation10 + $0x198] sm:$0xff]
    %v2984 = vld [vmem:[#allocation10 + $0x1a0] sm:$0xff]
    %v2985 = vld [vmem:[#allocation10 + $0x1a8] sm:$0xff]
    %v2986 = vld [vmem:[#allocation10 + $0x1b0] sm:$0xff]
    %v2987 = vld [vmem:[#allocation10 + $0x1b8] sm:$0xff]
    %v2988 = vld [vmem:[#allocation10 + $0x1c0] sm:$0xff]
    %v2989 = vld [vmem:[#allocation10 + $0x1c8] sm:$0xff]
    %v2990 = vld [vmem:[#allocation10 + $0x1d0] sm:$0xff]
    %v2991 = vld [vmem:[#allocation10 + $0x1d8] sm:$0xff]
    %v2992 = vld [vmem:[#allocation10 + $0x1e0] sm:$0xff]
    %v2993 = vld [vmem:[#allocation10 + $0x1e8] sm:$0xff]
    %v2994 = vld [vmem:[#allocation10 + $0x1f0] sm:$0xff]
    %v2995 = vld [vmem:[#allocation10 + $0x1f8] sm:$0xff]
    %v2996 = vld [vmem:[#allocation10 + $0x200] sm:$0xff]
    %v2997 = vld [vmem:[#allocation10 + $0x208] sm:$0xff]
    %v2998 = vld [vmem:[#allocation10 + $0x210] sm:$0xff]
    %v2999 = vld [vmem:[#allocation10 + $0x218] sm:$0xff]
    %v3000 = vld [vmem:[#allocation10 + $0x220] sm:$0xff]
    %v3001 = vld [vmem:[#allocation10 + $0x228] sm:$0xff]
    %v3002 = vld [vmem:[#allocation10 + $0x230] sm:$0xff]
    %v3003 = vld [vmem:[#allocation10 + $0x238] sm:$0xff]
    %v3004 = vld [vmem:[#allocation10 + $0x240] sm:$0xff]
    %v3005 = vld [vmem:[#allocation10 + $0x248] sm:$0xff]
    %v3006 = vld [vmem:[#allocation10 + $0x250] sm:$0xff]
    %v3007 = vld [vmem:[#allocation10 + $0x258] sm:$0xff]
    %v3008 = vld [vmem:[#allocation10 + $0x260] sm:$0xff]
    %v3009 = vld [vmem:[#allocation10 + $0x268] sm:$0xff]
    %v3010 = vld [vmem:[#allocation10 + $0x270] sm:$0xff]
    %v3011 = vld [vmem:[#allocation10 + $0x278] sm:$0xff]
    %v3012 = vld [vmem:[#allocation10 + $0x280] sm:$0xff]
    %v3013 = vld [vmem:[#allocation10 + $0x288] sm:$0xff]
    %v3014 = vld [vmem:[#allocation10 + $0x290] sm:$0xff]
    %v3015 = vld [vmem:[#allocation10 + $0x298] sm:$0xff]
    %v3016 = vld [vmem:[#allocation10 + $0x2a0] sm:$0xff]
    %v3017 = vld [vmem:[#allocation10 + $0x2a8] sm:$0xff]
    %v3018 = vld [vmem:[#allocation10 + $0x2b0] sm:$0xff]
    %v3019 = vld [vmem:[#allocation10 + $0x2b8] sm:$0xff]
    %v3020 = vld [vmem:[#allocation10 + $0x2c0] sm:$0xff]
    %v3021 = vld [vmem:[#allocation10 + $0x2c8] sm:$0xff]
    %v3022 = vld [vmem:[#allocation10 + $0x2d0] sm:$0xff]
    %v3023 = vld [vmem:[#allocation10 + $0x2d8] sm:$0xff]
    %v3024 = vld [vmem:[#allocation10 + $0x2e0] sm:$0xff]
    %v3025 = vld [vmem:[#allocation10 + $0x2e8] sm:$0xff]
    %v3026 = vld [vmem:[#allocation10 + $0x2f0] sm:$0xff]
    %v3027 = vld [vmem:[#allocation10 + $0x2f8] sm:$0xff]
    %v3028 = vld [vmem:[#allocation10 + $0x300] sm:$0xff]
    %v3029 = vld [vmem:[#allocation10 + $0x308] sm:$0xff]
    %v3030 = vld [vmem:[#allocation10 + $0x310] sm:$0xff]
    %v3031 = vld [vmem:[#allocation10 + $0x318] sm:$0xff]
    %v3032 = vld [vmem:[#allocation10 + $0x320] sm:$0xff]
    %v3033 = vld [vmem:[#allocation10 + $0x328] sm:$0xff]
    %v3034 = vld [vmem:[#allocation10 + $0x330] sm:$0xff]
    %v3035 = vld [vmem:[#allocation10 + $0x338] sm:$0xff]
    %v3036 = vld [vmem:[#allocation10 + $0x340] sm:$0xff]
    %v3037 = vld [vmem:[#allocation10 + $0x348] sm:$0xff]
    %v3038 = vld [vmem:[#allocation10 + $0x350] sm:$0xff]
    %v3039 = vld [vmem:[#allocation10 + $0x358] sm:$0xff]
    %v3040 = vld [vmem:[#allocation10 + $0x360] sm:$0xff]
    %v3041 = vld [vmem:[#allocation10 + $0x368] sm:$0xff]
    %v3042 = vld [vmem:[#allocation10 + $0x370] sm:$0xff]
    %v3043 = vld [vmem:[#allocation10 + $0x378] sm:$0xff]
    %v3044 = vld [vmem:[#allocation10 + $0x380] sm:$0xff]
    %v3045 = vld [vmem:[#allocation10 + $0x388] sm:$0xff]
    %v3046 = vld [vmem:[#allocation10 + $0x390] sm:$0xff]
    %v3047 = vld [vmem:[#allocation10 + $0x398] sm:$0xff]
    %v3048 = vld [vmem:[#allocation10 + $0x3a0] sm:$0xff]
    %v3049 = vld [vmem:[#allocation10 + $0x3a8] sm:$0xff]
    %v3050 = vld [vmem:[#allocation10 + $0x3b0] sm:$0xff]
    %v3051 = vld [vmem:[#allocation10 + $0x3b8] sm:$0xff]
    %v3052 = vld [vmem:[#allocation10 + $0x3c0] sm:$0xff]
    %v3053 = vld [vmem:[#allocation10 + $0x3c8] sm:$0xff]
    %v3054 = vld [vmem:[#allocation10 + $0x3d0] sm:$0xff]
    %v3055 = vld [vmem:[#allocation10 + $0x3d8] sm:$0xff]
    %v3056 = vld [vmem:[#allocation10 + $0x3e0] sm:$0xff]
    %v3057 = vld [vmem:[#allocation10 + $0x3e8] sm:$0xff]
    %v3058 = vld [vmem:[#allocation10 + $0x3f0] sm:$0xff]
    %v3059 = vld [vmem:[#allocation10 + $0x3f8] sm:$0xff]
    %v3060 = vld [vmem:[#allocation10 + $0x400] sm:$0xff]
    %v3061 = vld [vmem:[#allocation10 + $0x408] sm:$0xff]
    %v3062 = vld [vmem:[#allocation10 + $0x410] sm:$0xff]
    %v3063 = vld [vmem:[#allocation10 + $0x418] sm:$0xff]
    %v3064 = vld [vmem:[#allocation10 + $0x420] sm:$0xff]
    %v3065 = vld [vmem:[#allocation10 + $0x428] sm:$0xff]
    %v3066 = vld [vmem:[#allocation10 + $0x430] sm:$0xff]
    %v3067 = vld [vmem:[#allocation10 + $0x438] sm:$0xff]
    %v3068 = vld [vmem:[#allocation10 + $0x440] sm:$0xff]
    %v3069 = vld [vmem:[#allocation10 + $0x448] sm:$0xff]
    %v3070 = vld [vmem:[#allocation10 + $0x450] sm:$0xff]
    %v3071 = vld [vmem:[#allocation10 + $0x458] sm:$0xff]
    %v3072 = vld [vmem:[#allocation10 + $0x460] sm:$0xff]
    %v3073 = vld [vmem:[#allocation10 + $0x468] sm:$0xff]
    %v3074 = vld [vmem:[#allocation10 + $0x470] sm:$0xff]
    %v3075 = vld [vmem:[#allocation10 + $0x478] sm:$0xff]
    %v3076 = vld [vmem:[#allocation10 + $0x480] sm:$0xff]
    %v3077 = vld [vmem:[#allocation10 + $0x488] sm:$0xff]
    %v3078 = vld [vmem:[#allocation10 + $0x490] sm:$0xff]
    %v3079 = vld [vmem:[#allocation10 + $0x498] sm:$0xff]
    %v3080 = vld [vmem:[#allocation10 + $0x4a0] sm:$0xff]
    %v3081 = vld [vmem:[#allocation10 + $0x4a8] sm:$0xff]
    %v3082 = vld [vmem:[#allocation10 + $0x4b0] sm:$0xff]
    %v3083 = vld [vmem:[#allocation10 + $0x4b8] sm:$0xff]
    %v3084 = vld [vmem:[#allocation10 + $0x4c0] sm:$0xff]
    %v3085 = vld [vmem:[#allocation10 + $0x4c8] sm:$0xff]
    %v3086 = vld [vmem:[#allocation10 + $0x4d0] sm:$0xff]
    %v3087 = vld [vmem:[#allocation10 + $0x4d8] sm:$0xff]
    %v3088 = vld [vmem:[#allocation10 + $0x4e0] sm:$0xff]
    %v3089 = vld [vmem:[#allocation10 + $0x4e8] sm:$0xff]
    %v3090 = vld [vmem:[#allocation10 + $0x4f0] sm:$0xff]
    %v3091 = vld [vmem:[#allocation10 + $0x4f8] sm:$0xff]
    %v3092 = vld [vmem:[#allocation10 + $0x500] sm:$0xff]
    %v3093 = vld [vmem:[#allocation10 + $0x508] sm:$0xff]
    %v3094 = vld [vmem:[#allocation10 + $0x510] sm:$0xff]
    %v3095 = vld [vmem:[#allocation10 + $0x518] sm:$0xff]
    %v3096 = vld [vmem:[#allocation10 + $0x520] sm:$0xff]
    %v3097 = vld [vmem:[#allocation10 + $0x528] sm:$0xff]
    %v3098 = vld [vmem:[#allocation10 + $0x530] sm:$0xff]
    %v3099 = vld [vmem:[#allocation10 + $0x538] sm:$0xff]
    %v3100 = vld [vmem:[#allocation10 + $0x540] sm:$0xff]
    %v3101 = vld [vmem:[#allocation10 + $0x548] sm:$0xff]
    %v3102 = vld [vmem:[#allocation10 + $0x550] sm:$0xff]
    %v3103 = vld [vmem:[#allocation10 + $0x558] sm:$0xff]
    %v3104 = vld [vmem:[#allocation10 + $0x560] sm:$0xff]
    %v3105 = vld [vmem:[#allocation10 + $0x568] sm:$0xff]
    %v3106 = vld [vmem:[#allocation10 + $0x570] sm:$0xff]
    %v3107 = vld [vmem:[#allocation10 + $0x578] sm:$0xff]
    %v3108 = vld [vmem:[#allocation10 + $0x580] sm:$0xff]
    %v3109 = vld [vmem:[#allocation10 + $0x588] sm:$0xff]
    %v3110 = vld [vmem:[#allocation10 + $0x590] sm:$0xff]
    %v3111 = vld [vmem:[#allocation10 + $0x598] sm:$0xff]
    %v3112 = vld [vmem:[#allocation10 + $0x5a0] sm:$0xff]
    %v3113 = vld [vmem:[#allocation10 + $0x5a8] sm:$0xff]
    %v3114 = vld [vmem:[#allocation10 + $0x5b0] sm:$0xff]
    %v3115 = vld [vmem:[#allocation10 + $0x5b8] sm:$0xff]
    %v3116 = vld [vmem:[#allocation10 + $0x5c0] sm:$0xff]
    %v3117 = vld [vmem:[#allocation10 + $0x5c8] sm:$0xff]
    %v3118 = vld [vmem:[#allocation10 + $0x5d0] sm:$0xff]
    %v3119 = vld [vmem:[#allocation10 + $0x5d8] sm:$0xff]
    %v3120 = vld [vmem:[#allocation10 + $0x5e0] sm:$0xff]
    %v3121 = vld [vmem:[#allocation10 + $0x5e8] sm:$0xff]
    %v3122 = vld [vmem:[#allocation10 + $0x5f0] sm:$0xff]
    %v3123 = vld [vmem:[#allocation10 + $0x5f8] sm:$0xff]
    %v3124 = vld [vmem:[#allocation10 + $0x600] sm:$0xff]
    %v3125 = vld [vmem:[#allocation10 + $0x608] sm:$0xff]
    %v3126 = vld [vmem:[#allocation10 + $0x610] sm:$0xff]
    %v3127 = vld [vmem:[#allocation10 + $0x618] sm:$0xff]
    %v3128 = vld [vmem:[#allocation10 + $0x620] sm:$0xff]
    %v3129 = vld [vmem:[#allocation10 + $0x628] sm:$0xff]
    %v3130 = vld [vmem:[#allocation10 + $0x630] sm:$0xff]
    %v3131 = vld [vmem:[#allocation10 + $0x638] sm:$0xff]
    %v3132 = vld [vmem:[#allocation10 + $0x640] sm:$0xff]
    %v3133 = vld [vmem:[#allocation10 + $0x648] sm:$0xff]
    %v3134 = vld [vmem:[#allocation10 + $0x650] sm:$0xff]
    %v3135 = vld [vmem:[#allocation10 + $0x658] sm:$0xff]
    %v3136 = vld [vmem:[#allocation10 + $0x660] sm:$0xff]
    %v3137 = vld [vmem:[#allocation10 + $0x668] sm:$0xff]
    %v3138 = vld [vmem:[#allocation10 + $0x670] sm:$0xff]
    %v3139 = vld [vmem:[#allocation10 + $0x678] sm:$0xff]
    %v3140 = vld [vmem:[#allocation10 + $0x680] sm:$0xff]
    %v3141 = vld [vmem:[#allocation10 + $0x688] sm:$0xff]
    %v3142 = vld [vmem:[#allocation10 + $0x690] sm:$0xff]
    %v3143 = vld [vmem:[#allocation10 + $0x698] sm:$0xff]
    %v3144 = vld [vmem:[#allocation10 + $0x6a0] sm:$0xff]
    %v3145 = vld [vmem:[#allocation10 + $0x6a8] sm:$0xff]
    %v3146 = vld [vmem:[#allocation10 + $0x6b0] sm:$0xff]
    %v3147 = vld [vmem:[#allocation10 + $0x6b8] sm:$0xff]
    %v3148 = vld [vmem:[#allocation10 + $0x6c0] sm:$0xff]
    %v3149 = vld [vmem:[#allocation10 + $0x6c8] sm:$0xff]
    %v3150 = vld [vmem:[#allocation10 + $0x6d0] sm:$0xff]
    %v3151 = vld [vmem:[#allocation10 + $0x6d8] sm:$0xff]
    %v3152 = vld [vmem:[#allocation10 + $0x6e0] sm:$0xff]
    %v3153 = vld [vmem:[#allocation10 + $0x6e8] sm:$0xff]
    %v3154 = vld [vmem:[#allocation10 + $0x6f0] sm:$0xff]
    %v3155 = vld [vmem:[#allocation10 + $0x6f8] sm:$0xff]
    %v3156 = vld [vmem:[#allocation10 + $0x700] sm:$0xff]
    %v3157 = vld [vmem:[#allocation10 + $0x708] sm:$0xff]
    %v3158 = vld [vmem:[#allocation10 + $0x710] sm:$0xff]
    %v3159 = vld [vmem:[#allocation10 + $0x718] sm:$0xff]
    %v3160 = vld [vmem:[#allocation10 + $0x720] sm:$0xff]
    %v3161 = vld [vmem:[#allocation10 + $0x728] sm:$0xff]
    %v3162 = vld [vmem:[#allocation10 + $0x730] sm:$0xff]
    %v3163 = vld [vmem:[#allocation10 + $0x738] sm:$0xff]
    %v3164 = vld [vmem:[#allocation10 + $0x740] sm:$0xff]
    %v3165 = vld [vmem:[#allocation10 + $0x748] sm:$0xff]
    %v3166 = vld [vmem:[#allocation10 + $0x750] sm:$0xff]
    %v3167 = vld [vmem:[#allocation10 + $0x758] sm:$0xff]
    %v3168 = vld [vmem:[#allocation10 + $0x760] sm:$0xff]
    %v3169 = vld [vmem:[#allocation10 + $0x768] sm:$0xff]
    %v3170 = vld [vmem:[#allocation10 + $0x770] sm:$0xff]
    %v3171 = vld [vmem:[#allocation10 + $0x778] sm:$0xff]
    %v3172 = vld [vmem:[#allocation10 + $0x780] sm:$0xff]
    %v3173 = vld [vmem:[#allocation10 + $0x788] sm:$0xff]
    %v3174 = vld [vmem:[#allocation10 + $0x790] sm:$0xff]
    %v3175 = vld [vmem:[#allocation10 + $0x798] sm:$0xff]
    %v3176 = vld [vmem:[#allocation10 + $0x7a0] sm:$0xff]
    %v3177 = vld [vmem:[#allocation10 + $0x7a8] sm:$0xff]
    %v3178 = vld [vmem:[#allocation10 + $0x7b0] sm:$0xff]
    %v3179 = vld [vmem:[#allocation10 + $0x7b8] sm:$0xff]
    %v3180 = vld [vmem:[#allocation10 + $0x7c0] sm:$0xff]
    %v3181 = vld [vmem:[#allocation10 + $0x7c8] sm:$0xff]
    %v3182 = vld [vmem:[#allocation10 + $0x7d0] sm:$0xff]
    %v3183 = vld [vmem:[#allocation10 + $0x7d8] sm:$0xff]
    %v3184 = vld [vmem:[#allocation10 + $0x7e0] sm:$0xff]
    %v3185 = vld [vmem:[#allocation10 + $0x7e8] sm:$0xff]
    %v3186 = vld [vmem:[#allocation10 + $0x7f0] sm:$0xff]
    %v3187 = vld [vmem:[#allocation10 + $0x7f8] sm:$0xff]
    %v3188 = vld [vmem:[#allocation19] sm:$0xf]
    %v3190 = vperm.slane %v3188, 0
    %v3191 = vperm.slane %v3188, 1
    %v3192 = vperm.slane %v3188, 2
    %v3193 = vperm.slane %v3188, 3
    %v3454 = vunpack.c.l.b16 %v2932
    %v3455 = vunpack.c.h.b16 %v2932
    %v3456 = vunpack.c.l.b16 %v2933
    %v3457 = vunpack.c.h.b16 %v2933
    %v3458 = vunpack.c.l.b16 %v2934
    %v3459 = vunpack.c.h.b16 %v2934
    %v3460 = vunpack.c.l.b16 %v2935
    %v3461 = vunpack.c.h.b16 %v2935
    %v3462 = vunpack.c.l.b16 %v2936
    %v3463 = vunpack.c.h.b16 %v2936
    %v3464 = vunpack.c.l.b16 %v2937
    %v3465 = vunpack.c.h.b16 %v2937
    %v3466 = vunpack.c.l.b16 %v2938
    %v3467 = vunpack.c.h.b16 %v2938
    %v3468 = vunpack.c.l.b16 %v2939
    %v3469 = vunpack.c.h.b16 %v2939
    %v3470 = vunpack.c.l.b16 %v2940
    %v3471 = vunpack.c.h.b16 %v2940
    %v3472 = vunpack.c.l.b16 %v2941
    %v3473 = vunpack.c.h.b16 %v2941
    %v3474 = vunpack.c.l.b16 %v2942
    %v3475 = vunpack.c.h.b16 %v2942
    %v3476 = vunpack.c.l.b16 %v2943
    %v3477 = vunpack.c.h.b16 %v2943
    %v3478 = vunpack.c.l.b16 %v2944
    %v3479 = vunpack.c.h.b16 %v2944
    %v3480 = vunpack.c.l.b16 %v2945
    %v3481 = vunpack.c.h.b16 %v2945
    %v3482 = vunpack.c.l.b16 %v2946
    %v3483 = vunpack.c.h.b16 %v2946
    %v3484 = vunpack.c.l.b16 %v2947
    %v3485 = vunpack.c.h.b16 %v2947
    %v3486 = vunpack.c.l.b16 %v2948
    %v3487 = vunpack.c.h.b16 %v2948
    %v3488 = vunpack.c.l.b16 %v2949
    %v3489 = vunpack.c.h.b16 %v2949
    %v3490 = vunpack.c.l.b16 %v2950
    %v3491 = vunpack.c.h.b16 %v2950
    %v3492 = vunpack.c.l.b16 %v2951
    %v3493 = vunpack.c.h.b16 %v2951
    %v3494 = vunpack.c.l.b16 %v2952
    %v3495 = vunpack.c.h.b16 %v2952
    %v3496 = vunpack.c.l.b16 %v2953
    %v3497 = vunpack.c.h.b16 %v2953
    %v3498 = vunpack.c.l.b16 %v2954
    %v3499 = vunpack.c.h.b16 %v2954
    %v3500 = vunpack.c.l.b16 %v2955
    %v3501 = vunpack.c.h.b16 %v2955
    %v3502 = vunpack.c.l.b16 %v2956
    %v3503 = vunpack.c.h.b16 %v2956
    %v3504 = vunpack.c.l.b16 %v2957
    %v3505 = vunpack.c.h.b16 %v2957
    %v3506 = vunpack.c.l.b16 %v2958
    %v3507 = vunpack.c.h.b16 %v2958
    %v3508 = vunpack.c.l.b16 %v2959
    %v3509 = vunpack.c.h.b16 %v2959
    %v3510 = vunpack.c.l.b16 %v2960
    %v3511 = vunpack.c.h.b16 %v2960
    %v3512 = vunpack.c.l.b16 %v2961
    %v3513 = vunpack.c.h.b16 %v2961
    %v3514 = vunpack.c.l.b16 %v2962
    %v3515 = vunpack.c.h.b16 %v2962
    %v3516 = vunpack.c.l.b16 %v2963
    %v3517 = vunpack.c.h.b16 %v2963
    %v3518 = vunpack.c.l.b16 %v2964
    %v3519 = vunpack.c.h.b16 %v2964
    %v3520 = vunpack.c.l.b16 %v2965
    %v3521 = vunpack.c.h.b16 %v2965
    %v3522 = vunpack.c.l.b16 %v2966
    %v3523 = vunpack.c.h.b16 %v2966
    %v3524 = vunpack.c.l.b16 %v2967
    %v3525 = vunpack.c.h.b16 %v2967
    %v3526 = vunpack.c.l.b16 %v2968
    %v3527 = vunpack.c.h.b16 %v2968
    %v3528 = vunpack.c.l.b16 %v2969
    %v3529 = vunpack.c.h.b16 %v2969
    %v3530 = vunpack.c.l.b16 %v2970
    %v3531 = vunpack.c.h.b16 %v2970
    %v3532 = vunpack.c.l.b16 %v2971
    %v3533 = vunpack.c.h.b16 %v2971
    %v3534 = vunpack.c.l.b16 %v2972
    %v3535 = vunpack.c.h.b16 %v2972
    %v3536 = vunpack.c.l.b16 %v2973
    %v3537 = vunpack.c.h.b16 %v2973
    %v3538 = vunpack.c.l.b16 %v2974
    %v3539 = vunpack.c.h.b16 %v2974
    %v3540 = vunpack.c.l.b16 %v2975
    %v3541 = vunpack.c.h.b16 %v2975
    %v3542 = vunpack.c.l.b16 %v2976
    %v3543 = vunpack.c.h.b16 %v2976
    %v3544 = vunpack.c.l.b16 %v2977
    %v3545 = vunpack.c.h.b16 %v2977
    %v3546 = vunpack.c.l.b16 %v2978
    %v3547 = vunpack.c.h.b16 %v2978
    %v3548 = vunpack.c.l.b16 %v2979
    %v3549 = vunpack.c.h.b16 %v2979
    %v3550 = vunpack.c.l.b16 %v2980
    %v3551 = vunpack.c.h.b16 %v2980
    %v3552 = vunpack.c.l.b16 %v2981
    %v3553 = vunpack.c.h.b16 %v2981
    %v3554 = vunpack.c.l.b16 %v2982
    %v3555 = vunpack.c.h.b16 %v2982
    %v3556 = vunpack.c.l.b16 %v2983
    %v3557 = vunpack.c.h.b16 %v2983
    %v3558 = vunpack.c.l.b16 %v2984
    %v3559 = vunpack.c.h.b16 %v2984
    %v3560 = vunpack.c.l.b16 %v2985
    %v3561 = vunpack.c.h.b16 %v2985
    %v3562 = vunpack.c.l.b16 %v2986
    %v3563 = vunpack.c.h.b16 %v2986
    %v3564 = vunpack.c.l.b16 %v2987
    %v3565 = vunpack.c.h.b16 %v2987
    %v3566 = vunpack.c.l.b16 %v2988
    %v3567 = vunpack.c.h.b16 %v2988
    %v3568 = vunpack.c.l.b16 %v2989
    %v3569 = vunpack.c.h.b16 %v2989
    %v3570 = vunpack.c.l.b16 %v2990
    %v3571 = vunpack.c.h.b16 %v2990
    %v3572 = vunpack.c.l.b16 %v2991
    %v3573 = vunpack.c.h.b16 %v2991
    %v3574 = vunpack.c.l.b16 %v2992
    %v3575 = vunpack.c.h.b16 %v2992
    %v3576 = vunpack.c.l.b16 %v2993
    %v3577 = vunpack.c.h.b16 %v2993
    %v3578 = vunpack.c.l.b16 %v2994
    %v3579 = vunpack.c.h.b16 %v2994
    %v3580 = vunpack.c.l.b16 %v2995
    %v3581 = vunpack.c.h.b16 %v2995
    %v3582 = vunpack.c.l.b16 %v2996
    %v3583 = vunpack.c.h.b16 %v2996
    %v3584 = vunpack.c.l.b16 %v2997
    %v3585 = vunpack.c.h.b16 %v2997
    %v3586 = vunpack.c.l.b16 %v2998
    %v3587 = vunpack.c.h.b16 %v2998
    %v3588 = vunpack.c.l.b16 %v2999
    %v3589 = vunpack.c.h.b16 %v2999
    %v3590 = vunpack.c.l.b16 %v3000
    %v3591 = vunpack.c.h.b16 %v3000
    %v3592 = vunpack.c.l.b16 %v3001
    %v3593 = vunpack.c.h.b16 %v3001
    %v3594 = vunpack.c.l.b16 %v3002
    %v3595 = vunpack.c.h.b16 %v3002
    %v3596 = vunpack.c.l.b16 %v3003
    %v3597 = vunpack.c.h.b16 %v3003
    %v3598 = vunpack.c.l.b16 %v3004
    %v3599 = vunpack.c.h.b16 %v3004
    %v3600 = vunpack.c.l.b16 %v3005
    %v3601 = vunpack.c.h.b16 %v3005
    %v3602 = vunpack.c.l.b16 %v3006
    %v3603 = vunpack.c.h.b16 %v3006
    %v3604 = vunpack.c.l.b16 %v3007
    %v3605 = vunpack.c.h.b16 %v3007
    %v3606 = vunpack.c.l.b16 %v3008
    %v3607 = vunpack.c.h.b16 %v3008
    %v3608 = vunpack.c.l.b16 %v3009
    %v3609 = vunpack.c.h.b16 %v3009
    %v3610 = vunpack.c.l.b16 %v3010
    %v3611 = vunpack.c.h.b16 %v3010
    %v3612 = vunpack.c.l.b16 %v3011
    %v3613 = vunpack.c.h.b16 %v3011
    %v3614 = vunpack.c.l.b16 %v3012
    %v3615 = vunpack.c.h.b16 %v3012
    %v3616 = vunpack.c.l.b16 %v3013
    %v3617 = vunpack.c.h.b16 %v3013
    %v3618 = vunpack.c.l.b16 %v3014
    %v3619 = vunpack.c.h.b16 %v3014
    %v3620 = vunpack.c.l.b16 %v3015
    %v3621 = vunpack.c.h.b16 %v3015
    %v3622 = vunpack.c.l.b16 %v3016
    %v3623 = vunpack.c.h.b16 %v3016
    %v3624 = vunpack.c.l.b16 %v3017
    %v3625 = vunpack.c.h.b16 %v3017
    %v3626 = vunpack.c.l.b16 %v3018
    %v3627 = vunpack.c.h.b16 %v3018
    %v3628 = vunpack.c.l.b16 %v3019
    %v3629 = vunpack.c.h.b16 %v3019
    %v3630 = vunpack.c.l.b16 %v3020
    %v3631 = vunpack.c.h.b16 %v3020
    %v3632 = vunpack.c.l.b16 %v3021
    %v3633 = vunpack.c.h.b16 %v3021
    %v3634 = vunpack.c.l.b16 %v3022
    %v3635 = vunpack.c.h.b16 %v3022
    %v3636 = vunpack.c.l.b16 %v3023
    %v3637 = vunpack.c.h.b16 %v3023
    %v3638 = vunpack.c.l.b16 %v3024
    %v3639 = vunpack.c.h.b16 %v3024
    %v3640 = vunpack.c.l.b16 %v3025
    %v3641 = vunpack.c.h.b16 %v3025
    %v3642 = vunpack.c.l.b16 %v3026
    %v3643 = vunpack.c.h.b16 %v3026
    %v3644 = vunpack.c.l.b16 %v3027
    %v3645 = vunpack.c.h.b16 %v3027
    %v3646 = vunpack.c.l.b16 %v3028
    %v3647 = vunpack.c.h.b16 %v3028
    %v3648 = vunpack.c.l.b16 %v3029
    %v3649 = vunpack.c.h.b16 %v3029
    %v3650 = vunpack.c.l.b16 %v3030
    %v3651 = vunpack.c.h.b16 %v3030
    %v3652 = vunpack.c.l.b16 %v3031
    %v3653 = vunpack.c.h.b16 %v3031
    %v3654 = vunpack.c.l.b16 %v3032
    %v3655 = vunpack.c.h.b16 %v3032
    %v3656 = vunpack.c.l.b16 %v3033
    %v3657 = vunpack.c.h.b16 %v3033
    %v3658 = vunpack.c.l.b16 %v3034
    %v3659 = vunpack.c.h.b16 %v3034
    %v3660 = vunpack.c.l.b16 %v3035
    %v3661 = vunpack.c.h.b16 %v3035
    %v3662 = vunpack.c.l.b16 %v3036
    %v3663 = vunpack.c.h.b16 %v3036
    %v3664 = vunpack.c.l.b16 %v3037
    %v3665 = vunpack.c.h.b16 %v3037
    %v3666 = vunpack.c.l.b16 %v3038
    %v3667 = vunpack.c.h.b16 %v3038
    %v3668 = vunpack.c.l.b16 %v3039
    %v3669 = vunpack.c.h.b16 %v3039
    %v3670 = vunpack.c.l.b16 %v3040
    %v3671 = vunpack.c.h.b16 %v3040
    %v3672 = vunpack.c.l.b16 %v3041
    %v3673 = vunpack.c.h.b16 %v3041
    %v3674 = vunpack.c.l.b16 %v3042
    %v3675 = vunpack.c.h.b16 %v3042
    %v3676 = vunpack.c.l.b16 %v3043
    %v3677 = vunpack.c.h.b16 %v3043
    %v3678 = vunpack.c.l.b16 %v3044
    %v3679 = vunpack.c.h.b16 %v3044
    %v3680 = vunpack.c.l.b16 %v3045
    %v3681 = vunpack.c.h.b16 %v3045
    %v3682 = vunpack.c.l.b16 %v3046
    %v3683 = vunpack.c.h.b16 %v3046
    %v3684 = vunpack.c.l.b16 %v3047
    %v3685 = vunpack.c.h.b16 %v3047
    %v3686 = vunpack.c.l.b16 %v3048
    %v3687 = vunpack.c.h.b16 %v3048
    %v3688 = vunpack.c.l.b16 %v3049
    %v3689 = vunpack.c.h.b16 %v3049
    %v3690 = vunpack.c.l.b16 %v3050
    %v3691 = vunpack.c.h.b16 %v3050
    %v3692 = vunpack.c.l.b16 %v3051
    %v3693 = vunpack.c.h.b16 %v3051
    %v3694 = vunpack.c.l.b16 %v3052
    %v3695 = vunpack.c.h.b16 %v3052
    %v3696 = vunpack.c.l.b16 %v3053
    %v3697 = vunpack.c.h.b16 %v3053
    %v3698 = vunpack.c.l.b16 %v3054
    %v3699 = vunpack.c.h.b16 %v3054
    %v3700 = vunpack.c.l.b16 %v3055
    %v3701 = vunpack.c.h.b16 %v3055
    %v3702 = vunpack.c.l.b16 %v3056
    %v3703 = vunpack.c.h.b16 %v3056
    %v3704 = vunpack.c.l.b16 %v3057
    %v3705 = vunpack.c.h.b16 %v3057
    %v3706 = vunpack.c.l.b16 %v3058
    %v3707 = vunpack.c.h.b16 %v3058
    %v3708 = vunpack.c.l.b16 %v3059
    %v3709 = vunpack.c.h.b16 %v3059
    %v3710 = vunpack.c.l.b16 %v3060
    %v3711 = vunpack.c.h.b16 %v3060
    %v3712 = vunpack.c.l.b16 %v3061
    %v3713 = vunpack.c.h.b16 %v3061
    %v3714 = vunpack.c.l.b16 %v3062
    %v3715 = vunpack.c.h.b16 %v3062
    %v3716 = vunpack.c.l.b16 %v3063
    %v3717 = vunpack.c.h.b16 %v3063
    %v3718 = vunpack.c.l.b16 %v3064
    %v3719 = vunpack.c.h.b16 %v3064
    %v3720 = vunpack.c.l.b16 %v3065
    %v3721 = vunpack.c.h.b16 %v3065
    %v3722 = vunpack.c.l.b16 %v3066
    %v3723 = vunpack.c.h.b16 %v3066
    %v3724 = vunpack.c.l.b16 %v3067
    %v3725 = vunpack.c.h.b16 %v3067
    %v3726 = vunpack.c.l.b16 %v3068
    %v3727 = vunpack.c.h.b16 %v3068
    %v3728 = vunpack.c.l.b16 %v3069
    %v3729 = vunpack.c.h.b16 %v3069
    %v3730 = vunpack.c.l.b16 %v3070
    %v3731 = vunpack.c.h.b16 %v3070
    %v3732 = vunpack.c.l.b16 %v3071
    %v3733 = vunpack.c.h.b16 %v3071
    %v3734 = vunpack.c.l.b16 %v3072
    %v3735 = vunpack.c.h.b16 %v3072
    %v3736 = vunpack.c.l.b16 %v3073
    %v3737 = vunpack.c.h.b16 %v3073
    %v3738 = vunpack.c.l.b16 %v3074
    %v3739 = vunpack.c.h.b16 %v3074
    %v3740 = vunpack.c.l.b16 %v3075
    %v3741 = vunpack.c.h.b16 %v3075
    %v3742 = vunpack.c.l.b16 %v3076
    %v3743 = vunpack.c.h.b16 %v3076
    %v3744 = vunpack.c.l.b16 %v3077
    %v3745 = vunpack.c.h.b16 %v3077
    %v3746 = vunpack.c.l.b16 %v3078
    %v3747 = vunpack.c.h.b16 %v3078
    %v3748 = vunpack.c.l.b16 %v3079
    %v3749 = vunpack.c.h.b16 %v3079
    %v3750 = vunpack.c.l.b16 %v3080
    %v3751 = vunpack.c.h.b16 %v3080
    %v3752 = vunpack.c.l.b16 %v3081
    %v3753 = vunpack.c.h.b16 %v3081
    %v3754 = vunpack.c.l.b16 %v3082
    %v3755 = vunpack.c.h.b16 %v3082
    %v3756 = vunpack.c.l.b16 %v3083
    %v3757 = vunpack.c.h.b16 %v3083
    %v3758 = vunpack.c.l.b16 %v3084
    %v3759 = vunpack.c.h.b16 %v3084
    %v3760 = vunpack.c.l.b16 %v3085
    %v3761 = vunpack.c.h.b16 %v3085
    %v3762 = vunpack.c.l.b16 %v3086
    %v3763 = vunpack.c.h.b16 %v3086
    %v3764 = vunpack.c.l.b16 %v3087
    %v3765 = vunpack.c.h.b16 %v3087
    %v3766 = vunpack.c.l.b16 %v3088
    %v3767 = vunpack.c.h.b16 %v3088
    %v3768 = vunpack.c.l.b16 %v3089
    %v3769 = vunpack.c.h.b16 %v3089
    %v3770 = vunpack.c.l.b16 %v3090
    %v3771 = vunpack.c.h.b16 %v3090
    %v3772 = vunpack.c.l.b16 %v3091
    %v3773 = vunpack.c.h.b16 %v3091
    %v3774 = vunpack.c.l.b16 %v3092
    %v3775 = vunpack.c.h.b16 %v3092
    %v3776 = vunpack.c.l.b16 %v3093
    %v3777 = vunpack.c.h.b16 %v3093
    %v3778 = vunpack.c.l.b16 %v3094
    %v3779 = vunpack.c.h.b16 %v3094
    %v3780 = vunpack.c.l.b16 %v3095
    %v3781 = vunpack.c.h.b16 %v3095
    %v3782 = vunpack.c.l.b16 %v3096
    %v3783 = vunpack.c.h.b16 %v3096
    %v3784 = vunpack.c.l.b16 %v3097
    %v3785 = vunpack.c.h.b16 %v3097
    %v3786 = vunpack.c.l.b16 %v3098
    %v3787 = vunpack.c.h.b16 %v3098
    %v3788 = vunpack.c.l.b16 %v3099
    %v3789 = vunpack.c.h.b16 %v3099
    %v3790 = vunpack.c.l.b16 %v3100
    %v3791 = vunpack.c.h.b16 %v3100
    %v3792 = vunpack.c.l.b16 %v3101
    %v3793 = vunpack.c.h.b16 %v3101
    %v3794 = vunpack.c.l.b16 %v3102
    %v3795 = vunpack.c.h.b16 %v3102
    %v3796 = vunpack.c.l.b16 %v3103
    %v3797 = vunpack.c.h.b16 %v3103
    %v3798 = vunpack.c.l.b16 %v3104
    %v3799 = vunpack.c.h.b16 %v3104
    %v3800 = vunpack.c.l.b16 %v3105
    %v3801 = vunpack.c.h.b16 %v3105
    %v3802 = vunpack.c.l.b16 %v3106
    %v3803 = vunpack.c.h.b16 %v3106
    %v3804 = vunpack.c.l.b16 %v3107
    %v3805 = vunpack.c.h.b16 %v3107
    %v3806 = vunpack.c.l.b16 %v3108
    %v3807 = vunpack.c.h.b16 %v3108
    %v3808 = vunpack.c.l.b16 %v3109
    %v3809 = vunpack.c.h.b16 %v3109
    %v3810 = vunpack.c.l.b16 %v3110
    %v3811 = vunpack.c.h.b16 %v3110
    %v3812 = vunpack.c.l.b16 %v3111
    %v3813 = vunpack.c.h.b16 %v3111
    %v3814 = vunpack.c.l.b16 %v3112
    %v3815 = vunpack.c.h.b16 %v3112
    %v3816 = vunpack.c.l.b16 %v3113
    %v3817 = vunpack.c.h.b16 %v3113
    %v3818 = vunpack.c.l.b16 %v3114
    %v3819 = vunpack.c.h.b16 %v3114
    %v3820 = vunpack.c.l.b16 %v3115
    %v3821 = vunpack.c.h.b16 %v3115
    %v3822 = vunpack.c.l.b16 %v3116
    %v3823 = vunpack.c.h.b16 %v3116
    %v3824 = vunpack.c.l.b16 %v3117
    %v3825 = vunpack.c.h.b16 %v3117
    %v3826 = vunpack.c.l.b16 %v3118
    %v3827 = vunpack.c.h.b16 %v3118
    %v3828 = vunpack.c.l.b16 %v3119
    %v3829 = vunpack.c.h.b16 %v3119
    %v3830 = vunpack.c.l.b16 %v3120
    %v3831 = vunpack.c.h.b16 %v3120
    %v3832 = vunpack.c.l.b16 %v3121
    %v3833 = vunpack.c.h.b16 %v3121
    %v3834 = vunpack.c.l.b16 %v3122
    %v3835 = vunpack.c.h.b16 %v3122
    %v3836 = vunpack.c.l.b16 %v3123
    %v3837 = vunpack.c.h.b16 %v3123
    %v3838 = vunpack.c.l.b16 %v3124
    %v3839 = vunpack.c.h.b16 %v3124
    %v3840 = vunpack.c.l.b16 %v3125
    %v3841 = vunpack.c.h.b16 %v3125
    %v3842 = vunpack.c.l.b16 %v3126
    %v3843 = vunpack.c.h.b16 %v3126
    %v3844 = vunpack.c.l.b16 %v3127
    %v3845 = vunpack.c.h.b16 %v3127
    %v3846 = vunpack.c.l.b16 %v3128
    %v3847 = vunpack.c.h.b16 %v3128
    %v3848 = vunpack.c.l.b16 %v3129
    %v3849 = vunpack.c.h.b16 %v3129
    %v3850 = vunpack.c.l.b16 %v3130
    %v3851 = vunpack.c.h.b16 %v3130
    %v3852 = vunpack.c.l.b16 %v3131
    %v3853 = vunpack.c.h.b16 %v3131
    %v3854 = vunpack.c.l.b16 %v3132
    %v3855 = vunpack.c.h.b16 %v3132
    %v3856 = vunpack.c.l.b16 %v3133
    %v3857 = vunpack.c.h.b16 %v3133
    %v3858 = vunpack.c.l.b16 %v3134
    %v3859 = vunpack.c.h.b16 %v3134
    %v3860 = vunpack.c.l.b16 %v3135
    %v3861 = vunpack.c.h.b16 %v3135
    %v3862 = vunpack.c.l.b16 %v3136
    %v3863 = vunpack.c.h.b16 %v3136
    %v3864 = vunpack.c.l.b16 %v3137
    %v3865 = vunpack.c.h.b16 %v3137
    %v3866 = vunpack.c.l.b16 %v3138
    %v3867 = vunpack.c.h.b16 %v3138
    %v3868 = vunpack.c.l.b16 %v3139
    %v3869 = vunpack.c.h.b16 %v3139
    %v3870 = vunpack.c.l.b16 %v3140
    %v3871 = vunpack.c.h.b16 %v3140
    %v3872 = vunpack.c.l.b16 %v3141
    %v3873 = vunpack.c.h.b16 %v3141
    %v3874 = vunpack.c.l.b16 %v3142
    %v3875 = vunpack.c.h.b16 %v3142
    %v3876 = vunpack.c.l.b16 %v3143
    %v3877 = vunpack.c.h.b16 %v3143
    %v3878 = vunpack.c.l.b16 %v3144
    %v3879 = vunpack.c.h.b16 %v3144
    %v3880 = vunpack.c.l.b16 %v3145
    %v3881 = vunpack.c.h.b16 %v3145
    %v3882 = vunpack.c.l.b16 %v3146
    %v3883 = vunpack.c.h.b16 %v3146
    %v3884 = vunpack.c.l.b16 %v3147
    %v3885 = vunpack.c.h.b16 %v3147
    %v3886 = vunpack.c.l.b16 %v3148
    %v3887 = vunpack.c.h.b16 %v3148
    %v3888 = vunpack.c.l.b16 %v3149
    %v3889 = vunpack.c.h.b16 %v3149
    %v3890 = vunpack.c.l.b16 %v3150
    %v3891 = vunpack.c.h.b16 %v3150
    %v3892 = vunpack.c.l.b16 %v3151
    %v3893 = vunpack.c.h.b16 %v3151
    %v3894 = vunpack.c.l.b16 %v3152
    %v3895 = vunpack.c.h.b16 %v3152
    %v3896 = vunpack.c.l.b16 %v3153
    %v3897 = vunpack.c.h.b16 %v3153
    %v3898 = vunpack.c.l.b16 %v3154
    %v3899 = vunpack.c.h.b16 %v3154
    %v3900 = vunpack.c.l.b16 %v3155
    %v3901 = vunpack.c.h.b16 %v3155
    %v3902 = vunpack.c.l.b16 %v3156
    %v3903 = vunpack.c.h.b16 %v3156
    %v3904 = vunpack.c.l.b16 %v3157
    %v3905 = vunpack.c.h.b16 %v3157
    %v3906 = vunpack.c.l.b16 %v3158
    %v3907 = vunpack.c.h.b16 %v3158
    %v3908 = vunpack.c.l.b16 %v3159
    %v3909 = vunpack.c.h.b16 %v3159
    %v3910 = vunpack.c.l.b16 %v3160
    %v3911 = vunpack.c.h.b16 %v3160
    %v3912 = vunpack.c.l.b16 %v3161
    %v3913 = vunpack.c.h.b16 %v3161
    %v3914 = vunpack.c.l.b16 %v3162
    %v3915 = vunpack.c.h.b16 %v3162
    %v3916 = vunpack.c.l.b16 %v3163
    %v3917 = vunpack.c.h.b16 %v3163
    %v3918 = vunpack.c.l.b16 %v3164
    %v3919 = vunpack.c.h.b16 %v3164
    %v3920 = vunpack.c.l.b16 %v3165
    %v3921 = vunpack.c.h.b16 %v3165
    %v3922 = vunpack.c.l.b16 %v3166
    %v3923 = vunpack.c.h.b16 %v3166
    %v3924 = vunpack.c.l.b16 %v3167
    %v3925 = vunpack.c.h.b16 %v3167
    %v3926 = vunpack.c.l.b16 %v3168
    %v3927 = vunpack.c.h.b16 %v3168
    %v3928 = vunpack.c.l.b16 %v3169
    %v3929 = vunpack.c.h.b16 %v3169
    %v3930 = vunpack.c.l.b16 %v3170
    %v3931 = vunpack.c.h.b16 %v3170
    %v3932 = vunpack.c.l.b16 %v3171
    %v3933 = vunpack.c.h.b16 %v3171
    %v3934 = vunpack.c.l.b16 %v3172
    %v3935 = vunpack.c.h.b16 %v3172
    %v3936 = vunpack.c.l.b16 %v3173
    %v3937 = vunpack.c.h.b16 %v3173
    %v3938 = vunpack.c.l.b16 %v3174
    %v3939 = vunpack.c.h.b16 %v3174
    %v3940 = vunpack.c.l.b16 %v3175
    %v3941 = vunpack.c.h.b16 %v3175
    %v3942 = vunpack.c.l.b16 %v3176
    %v3943 = vunpack.c.h.b16 %v3176
    %v3944 = vunpack.c.l.b16 %v3177
    %v3945 = vunpack.c.h.b16 %v3177
    %v3946 = vunpack.c.l.b16 %v3178
    %v3947 = vunpack.c.h.b16 %v3178
    %v3948 = vunpack.c.l.b16 %v3179
    %v3949 = vunpack.c.h.b16 %v3179
    %v3950 = vunpack.c.l.b16 %v3180
    %v3951 = vunpack.c.h.b16 %v3180
    %v3952 = vunpack.c.l.b16 %v3181
    %v3953 = vunpack.c.h.b16 %v3181
    %v3954 = vunpack.c.l.b16 %v3182
    %v3955 = vunpack.c.h.b16 %v3182
    %v3956 = vunpack.c.l.b16 %v3183
    %v3957 = vunpack.c.h.b16 %v3183
    %v3958 = vunpack.c.l.b16 %v3184
    %v3959 = vunpack.c.h.b16 %v3184
    %v3960 = vunpack.c.l.b16 %v3185
    %v3961 = vunpack.c.h.b16 %v3185
    %v3962 = vunpack.c.l.b16 %v3186
    %v3963 = vunpack.c.h.b16 %v3186
    %v3964 = vunpack.c.l.b16 %v3187
    %v3965 = vunpack.c.h.b16 %v3187
    %v3966 = vpack.c.b16 %v3458, %v3454
    %v3967 = vpack.c.b16 %v3459, %v3455
    %v3968 = vpack.c.b16 %v3460, %v3456
    %v3969 = vpack.c.b16 %v3461, %v3457
    %v3970 = vpack.c.b16 %v3466, %v3462
    %v3971 = vpack.c.b16 %v3467, %v3463
    %v3972 = vpack.c.b16 %v3468, %v3464
    %v3973 = vpack.c.b16 %v3469, %v3465
    %v3974 = vpack.c.b16 %v3474, %v3470
    %v3975 = vpack.c.b16 %v3475, %v3471
    %v3976 = vpack.c.b16 %v3476, %v3472
    %v3977 = vpack.c.b16 %v3477, %v3473
    %v3978 = vpack.c.b16 %v3482, %v3478
    %v3979 = vpack.c.b16 %v3483, %v3479
    %v3980 = vpack.c.b16 %v3484, %v3480
    %v3981 = vpack.c.b16 %v3485, %v3481
    %v3982 = vpack.c.b16 %v3490, %v3486
    %v3983 = vpack.c.b16 %v3491, %v3487
    %v3984 = vpack.c.b16 %v3492, %v3488
    %v3985 = vpack.c.b16 %v3493, %v3489
    %v3986 = vpack.c.b16 %v3498, %v3494
    %v3987 = vpack.c.b16 %v3499, %v3495
    %v3988 = vpack.c.b16 %v3500, %v3496
    %v3989 = vpack.c.b16 %v3501, %v3497
    %v3990 = vpack.c.b16 %v3506, %v3502
    %v3991 = vpack.c.b16 %v3507, %v3503
    %v3992 = vpack.c.b16 %v3508, %v3504
    %v3993 = vpack.c.b16 %v3509, %v3505
    %v3994 = vpack.c.b16 %v3514, %v3510
    %v3995 = vpack.c.b16 %v3515, %v3511
    %v3996 = vpack.c.b16 %v3516, %v3512
    %v3997 = vpack.c.b16 %v3517, %v3513
    %v3998 = vpack.c.b16 %v3522, %v3518
    %v3999 = vpack.c.b16 %v3523, %v3519
    %v4000 = vpack.c.b16 %v3524, %v3520
    %v4001 = vpack.c.b16 %v3525, %v3521
    %v4002 = vpack.c.b16 %v3530, %v3526
    %v4003 = vpack.c.b16 %v3531, %v3527
    %v4004 = vpack.c.b16 %v3532, %v3528
    %v4005 = vpack.c.b16 %v3533, %v3529
    %v4006 = vpack.c.b16 %v3538, %v3534
    %v4007 = vpack.c.b16 %v3539, %v3535
    %v4008 = vpack.c.b16 %v3540, %v3536
    %v4009 = vpack.c.b16 %v3541, %v3537
    %v4010 = vpack.c.b16 %v3546, %v3542
    %v4011 = vpack.c.b16 %v3547, %v3543
    %v4012 = vpack.c.b16 %v3548, %v3544
    %v4013 = vpack.c.b16 %v3549, %v3545
    %v4014 = vpack.c.b16 %v3554, %v3550
    %v4015 = vpack.c.b16 %v3555, %v3551
    %v4016 = vpack.c.b16 %v3556, %v3552
    %v4017 = vpack.c.b16 %v3557, %v3553
    %v4018 = vpack.c.b16 %v3562, %v3558
    %v4019 = vpack.c.b16 %v3563, %v3559
    %v4020 = vpack.c.b16 %v3564, %v3560
    %v4021 = vpack.c.b16 %v3565, %v3561
    %v4022 = vpack.c.b16 %v3570, %v3566
    %v4023 = vpack.c.b16 %v3571, %v3567
    %v4024 = vpack.c.b16 %v3572, %v3568
    %v4025 = vpack.c.b16 %v3573, %v3569
    %v4026 = vpack.c.b16 %v3578, %v3574
    %v4027 = vpack.c.b16 %v3579, %v3575
    %v4028 = vpack.c.b16 %v3580, %v3576
    %v4029 = vpack.c.b16 %v3581, %v3577
    %v4030 = vpack.c.b16 %v3586, %v3582
    %v4031 = vpack.c.b16 %v3587, %v3583
    %v4032 = vpack.c.b16 %v3588, %v3584
    %v4033 = vpack.c.b16 %v3589, %v3585
    %v4034 = vpack.c.b16 %v3594, %v3590
    %v4035 = vpack.c.b16 %v3595, %v3591
    %v4036 = vpack.c.b16 %v3596, %v3592
    %v4037 = vpack.c.b16 %v3597, %v3593
    %v4038 = vpack.c.b16 %v3602, %v3598
    %v4039 = vpack.c.b16 %v3603, %v3599
    %v4040 = vpack.c.b16 %v3604, %v3600
    %v4041 = vpack.c.b16 %v3605, %v3601
    %v4042 = vpack.c.b16 %v3610, %v3606
    %v4043 = vpack.c.b16 %v3611, %v3607
    %v4044 = vpack.c.b16 %v3612, %v3608
    %v4045 = vpack.c.b16 %v3613, %v3609
    %v4046 = vpack.c.b16 %v3618, %v3614
    %v4047 = vpack.c.b16 %v3619, %v3615
    %v4048 = vpack.c.b16 %v3620, %v3616
    %v4049 = vpack.c.b16 %v3621, %v3617
    %v4050 = vpack.c.b16 %v3626, %v3622
    %v4051 = vpack.c.b16 %v3627, %v3623
    %v4052 = vpack.c.b16 %v3628, %v3624
    %v4053 = vpack.c.b16 %v3629, %v3625
    %v4054 = vpack.c.b16 %v3634, %v3630
    %v4055 = vpack.c.b16 %v3635, %v3631
    %v4056 = vpack.c.b16 %v3636, %v3632
    %v4057 = vpack.c.b16 %v3637, %v3633
    %v4058 = vpack.c.b16 %v3642, %v3638
    %v4059 = vpack.c.b16 %v3643, %v3639
    %v4060 = vpack.c.b16 %v3644, %v3640
    %v4061 = vpack.c.b16 %v3645, %v3641
    %v4062 = vpack.c.b16 %v3650, %v3646
    %v4063 = vpack.c.b16 %v3651, %v3647
    %v4064 = vpack.c.b16 %v3652, %v3648
    %v4065 = vpack.c.b16 %v3653, %v3649
    %v4066 = vpack.c.b16 %v3658, %v3654
    %v4067 = vpack.c.b16 %v3659, %v3655
    %v4068 = vpack.c.b16 %v3660, %v3656
    %v4069 = vpack.c.b16 %v3661, %v3657
    %v4070 = vpack.c.b16 %v3666, %v3662
    %v4071 = vpack.c.b16 %v3667, %v3663
    %v4072 = vpack.c.b16 %v3668, %v3664
    %v4073 = vpack.c.b16 %v3669, %v3665
    %v4074 = vpack.c.b16 %v3674, %v3670
    %v4075 = vpack.c.b16 %v3675, %v3671
    %v4076 = vpack.c.b16 %v3676, %v3672
    %v4077 = vpack.c.b16 %v3677, %v3673
    %v4078 = vpack.c.b16 %v3682, %v3678
    %v4079 = vpack.c.b16 %v3683, %v3679
    %v4080 = vpack.c.b16 %v3684, %v3680
    %v4081 = vpack.c.b16 %v3685, %v3681
    %v4082 = vpack.c.b16 %v3690, %v3686
    %v4083 = vpack.c.b16 %v3691, %v3687
    %v4084 = vpack.c.b16 %v3692, %v3688
    %v4085 = vpack.c.b16 %v3693, %v3689
    %v4086 = vpack.c.b16 %v3698, %v3694
    %v4087 = vpack.c.b16 %v3699, %v3695
    %v4088 = vpack.c.b16 %v3700, %v3696
    %v4089 = vpack.c.b16 %v3701, %v3697
    %v4090 = vpack.c.b16 %v3706, %v3702
    %v4091 = vpack.c.b16 %v3707, %v3703
    %v4092 = vpack.c.b16 %v3708, %v3704
    %v4093 = vpack.c.b16 %v3709, %v3705
    %v4094 = vpack.c.b16 %v3714, %v3710
    %v4095 = vpack.c.b16 %v3715, %v3711
    %v4096 = vpack.c.b16 %v3716, %v3712
    %v4097 = vpack.c.b16 %v3717, %v3713
    %v4098 = vpack.c.b16 %v3722, %v3718
    %v4099 = vpack.c.b16 %v3723, %v3719
    %v4100 = vpack.c.b16 %v3724, %v3720
    %v4101 = vpack.c.b16 %v3725, %v3721
    %v4102 = vpack.c.b16 %v3730, %v3726
    %v4103 = vpack.c.b16 %v3731, %v3727
    %v4104 = vpack.c.b16 %v3732, %v3728
    %v4105 = vpack.c.b16 %v3733, %v3729
    %v4106 = vpack.c.b16 %v3738, %v3734
    %v4107 = vpack.c.b16 %v3739, %v3735
    %v4108 = vpack.c.b16 %v3740, %v3736
    %v4109 = vpack.c.b16 %v3741, %v3737
    %v4110 = vpack.c.b16 %v3746, %v3742
    %v4111 = vpack.c.b16 %v3747, %v3743
    %v4112 = vpack.c.b16 %v3748, %v3744
    %v4113 = vpack.c.b16 %v3749, %v3745
    %v4114 = vpack.c.b16 %v3754, %v3750
    %v4115 = vpack.c.b16 %v3755, %v3751
    %v4116 = vpack.c.b16 %v3756, %v3752
    %v4117 = vpack.c.b16 %v3757, %v3753
    %v4118 = vpack.c.b16 %v3762, %v3758
    %v4119 = vpack.c.b16 %v3763, %v3759
    %v4120 = vpack.c.b16 %v3764, %v3760
    %v4121 = vpack.c.b16 %v3765, %v3761
    %v4122 = vpack.c.b16 %v3770, %v3766
    %v4123 = vpack.c.b16 %v3771, %v3767
    %v4124 = vpack.c.b16 %v3772, %v3768
    %v4125 = vpack.c.b16 %v3773, %v3769
    %v4126 = vpack.c.b16 %v3778, %v3774
    %v4127 = vpack.c.b16 %v3779, %v3775
    %v4128 = vpack.c.b16 %v3780, %v3776
    %v4129 = vpack.c.b16 %v3781, %v3777
    %v4130 = vpack.c.b16 %v3786, %v3782
    %v4131 = vpack.c.b16 %v3787, %v3783
    %v4132 = vpack.c.b16 %v3788, %v3784
    %v4133 = vpack.c.b16 %v3789, %v3785
    %v4134 = vpack.c.b16 %v3794, %v3790
    %v4135 = vpack.c.b16 %v3795, %v3791
    %v4136 = vpack.c.b16 %v3796, %v3792
    %v4137 = vpack.c.b16 %v3797, %v3793
    %v4138 = vpack.c.b16 %v3802, %v3798
    %v4139 = vpack.c.b16 %v3803, %v3799
    %v4140 = vpack.c.b16 %v3804, %v3800
    %v4141 = vpack.c.b16 %v3805, %v3801
    %v4142 = vpack.c.b16 %v3810, %v3806
    %v4143 = vpack.c.b16 %v3811, %v3807
    %v4144 = vpack.c.b16 %v3812, %v3808
    %v4145 = vpack.c.b16 %v3813, %v3809
    %v4146 = vpack.c.b16 %v3818, %v3814
    %v4147 = vpack.c.b16 %v3819, %v3815
    %v4148 = vpack.c.b16 %v3820, %v3816
    %v4149 = vpack.c.b16 %v3821, %v3817
    %v4150 = vpack.c.b16 %v3826, %v3822
    %v4151 = vpack.c.b16 %v3827, %v3823
    %v4152 = vpack.c.b16 %v3828, %v3824
    %v4153 = vpack.c.b16 %v3829, %v3825
    %v4154 = vpack.c.b16 %v3834, %v3830
    %v4155 = vpack.c.b16 %v3835, %v3831
    %v4156 = vpack.c.b16 %v3836, %v3832
    %v4157 = vpack.c.b16 %v3837, %v3833
    %v4158 = vpack.c.b16 %v3842, %v3838
    %v4159 = vpack.c.b16 %v3843, %v3839
    %v4160 = vpack.c.b16 %v3844, %v3840
    %v4161 = vpack.c.b16 %v3845, %v3841
    %v4162 = vpack.c.b16 %v3850, %v3846
    %v4163 = vpack.c.b16 %v3851, %v3847
    %v4164 = vpack.c.b16 %v3852, %v3848
    %v4165 = vpack.c.b16 %v3853, %v3849
    %v4166 = vpack.c.b16 %v3858, %v3854
    %v4167 = vpack.c.b16 %v3859, %v3855
    %v4168 = vpack.c.b16 %v3860, %v3856
    %v4169 = vpack.c.b16 %v3861, %v3857
    %v4170 = vpack.c.b16 %v3866, %v3862
    %v4171 = vpack.c.b16 %v3867, %v3863
    %v4172 = vpack.c.b16 %v3868, %v3864
    %v4173 = vpack.c.b16 %v3869, %v3865
    %v4174 = vpack.c.b16 %v3874, %v3870
    %v4175 = vpack.c.b16 %v3875, %v3871
    %v4176 = vpack.c.b16 %v3876, %v3872
    %v4177 = vpack.c.b16 %v3877, %v3873
    %v4178 = vpack.c.b16 %v3882, %v3878
    %v4179 = vpack.c.b16 %v3883, %v3879
    %v4180 = vpack.c.b16 %v3884, %v3880
    %v4181 = vpack.c.b16 %v3885, %v3881
    %v4182 = vpack.c.b16 %v3890, %v3886
    %v4183 = vpack.c.b16 %v3891, %v3887
    %v4184 = vpack.c.b16 %v3892, %v3888
    %v4185 = vpack.c.b16 %v3893, %v3889
    %v4186 = vpack.c.b16 %v3898, %v3894
    %v4187 = vpack.c.b16 %v3899, %v3895
    %v4188 = vpack.c.b16 %v3900, %v3896
    %v4189 = vpack.c.b16 %v3901, %v3897
    %v4190 = vpack.c.b16 %v3906, %v3902
    %v4191 = vpack.c.b16 %v3907, %v3903
    %v4192 = vpack.c.b16 %v3908, %v3904
    %v4193 = vpack.c.b16 %v3909, %v3905
    %v4194 = vpack.c.b16 %v3914, %v3910
    %v4195 = vpack.c.b16 %v3915, %v3911
    %v4196 = vpack.c.b16 %v3916, %v3912
    %v4197 = vpack.c.b16 %v3917, %v3913
    %v4198 = vpack.c.b16 %v3922, %v3918
    %v4199 = vpack.c.b16 %v3923, %v3919
    %v4200 = vpack.c.b16 %v3924, %v3920
    %v4201 = vpack.c.b16 %v3925, %v3921
    %v4202 = vpack.c.b16 %v3930, %v3926
    %v4203 = vpack.c.b16 %v3931, %v3927
    %v4204 = vpack.c.b16 %v3932, %v3928
    %v4205 = vpack.c.b16 %v3933, %v3929
    %v4206 = vpack.c.b16 %v3938, %v3934
    %v4207 = vpack.c.b16 %v3939, %v3935
    %v4208 = vpack.c.b16 %v3940, %v3936
    %v4209 = vpack.c.b16 %v3941, %v3937
    %v4210 = vpack.c.b16 %v3946, %v3942
    %v4211 = vpack.c.b16 %v3947, %v3943
    %v4212 = vpack.c.b16 %v3948, %v3944
    %v4213 = vpack.c.b16 %v3949, %v3945
    %v4214 = vpack.c.b16 %v3954, %v3950
    %v4215 = vpack.c.b16 %v3955, %v3951
    %v4216 = vpack.c.b16 %v3956, %v3952
    %v4217 = vpack.c.b16 %v3957, %v3953
    %v4218 = vpack.c.b16 %v3962, %v3958
    %v4219 = vpack.c.b16 %v3963, %v3959
    %v4220 = vpack.c.b16 %v3964, %v3960
    %v4221 = vpack.c.b16 %v3965, %v3961
    %4478 = vmatpush.bf16.msra.mxu0 %v3994
    %4479 = vmatpush.bf16.msra.mxu0 %v3990
    %4480 = vmatpush.bf16.msra.mxu0 %v3986
    %4481 = vmatpush.bf16.msra.mxu0 %v3982
    %4482 = vmatpush.bf16.msra.mxu0 %v3978
    %4483 = vmatpush.bf16.msra.mxu0 %v3974
    %4484 = vmatpush.bf16.msra.mxu0 %v3970
    %4485 = vmatpush.bf16.msra.mxu0 %v3966
    %4486 = vmatmul.bf16.gmra.mxu0 %v2924
    %v4487 = vpop.f32.mrf.mxu0
    %v4488 = vadd.f32 %v3190, %v4487
    %v4489 = vpop.f32.mrf.mxu0
    %v4490 = vadd.f32 %v3190, %v4489
    %4491 = vdwg.mxu0
    %4492 = vmatpush.bf16.msra.mxu0 %v4026
    %4493 = vmatpush.bf16.msra.mxu0 %v4022
    %4494 = vmatpush.bf16.msra.mxu0 %v4018
    %4495 = vmatpush.bf16.msra.mxu0 %v4014
    %4496 = vmatpush.bf16.msra.mxu0 %v4010
    %4497 = vmatpush.bf16.msra.mxu0 %v4006
    %4498 = vmatpush.bf16.msra.mxu0 %v4002
    %4499 = vmatpush.bf16.msra.mxu0 %v3998
    %4500 = vmatmul.bf16.gmra.mxu0 %v2925
    %v4501 = vpop.f32.mrf.mxu0
    %v4502 = vadd.f32 %v4488, %v4501
    %v4503 = vpop.f32.mrf.mxu0
    %v4504 = vadd.f32 %v4490, %v4503
    %4505 = vdwg.mxu0
    %4506 = vmatpush.bf16.msra.mxu0 %v4058
    %4507 = vmatpush.bf16.msra.mxu0 %v4054
    %4508 = vmatpush.bf16.msra.mxu0 %v4050
    %4509 = vmatpush.bf16.msra.mxu0 %v4046
    %4510 = vmatpush.bf16.msra.mxu0 %v4042
    %4511 = vmatpush.bf16.msra.mxu0 %v4038
    %4512 = vmatpush.bf16.msra.mxu0 %v4034
    %4513 = vmatpush.bf16.msra.mxu0 %v4030
    %4514 = vmatmul.bf16.gmra.mxu0 %v2926
    %v4515 = vpop.f32.mrf.mxu0
    %v4516 = vadd.f32 %v4502, %v4515
    %v4517 = vpop.f32.mrf.mxu0
    %v4518 = vadd.f32 %v4504, %v4517
    %4519 = vdwg.mxu0
    %4520 = vmatpush.bf16.msra.mxu0 %v4090
    %4521 = vmatpush.bf16.msra.mxu0 %v4086
    %4522 = vmatpush.bf16.msra.mxu0 %v4082
    %4523 = vmatpush.bf16.msra.mxu0 %v4078
    %4524 = vmatpush.bf16.msra.mxu0 %v4074
    %4525 = vmatpush.bf16.msra.mxu0 %v4070
    %4526 = vmatpush.bf16.msra.mxu0 %v4066
    %4527 = vmatpush.bf16.msra.mxu0 %v4062
    %4528 = vmatmul.bf16.gmra.mxu0 %v2927
    %v4529 = vpop.f32.mrf.mxu0
    %v4530 = vadd.f32 %v4516, %v4529
    %v4531 = vpop.f32.mrf.mxu0
    %v4532 = vadd.f32 %v4518, %v4531
    %4533 = vdwg.mxu0
    %4534 = vmatpush.bf16.msra.mxu0 %v4122
    %4535 = vmatpush.bf16.msra.mxu0 %v4118
    %4536 = vmatpush.bf16.msra.mxu0 %v4114
    %4537 = vmatpush.bf16.msra.mxu0 %v4110
    %4538 = vmatpush.bf16.msra.mxu0 %v4106
    %4539 = vmatpush.bf16.msra.mxu0 %v4102
    %4540 = vmatpush.bf16.msra.mxu0 %v4098
    %4541 = vmatpush.bf16.msra.mxu0 %v4094
    %4542 = vmatmul.bf16.gmra.mxu0 %v2928
    %v4543 = vpop.f32.mrf.mxu0
    %v4544 = vadd.f32 %v4530, %v4543
    %v4545 = vpop.f32.mrf.mxu0
    %v4546 = vadd.f32 %v4532, %v4545
    %4547 = vdwg.mxu0
    %4548 = vmatpush.bf16.msra.mxu0 %v4154
    %4549 = vmatpush.bf16.msra.mxu0 %v4150
    %4550 = vmatpush.bf16.msra.mxu0 %v4146
    %4551 = vmatpush.bf16.msra.mxu0 %v4142
    %4552 = vmatpush.bf16.msra.mxu0 %v4138
    %4553 = vmatpush.bf16.msra.mxu0 %v4134
    %4554 = vmatpush.bf16.msra.mxu0 %v4130
    %4555 = vmatpush.bf16.msra.mxu0 %v4126
    %4556 = vmatmul.bf16.gmra.mxu0 %v2929
    %v4557 = vpop.f32.mrf.mxu0
    %v4558 = vadd.f32 %v4544, %v4557
    %v4559 = vpop.f32.mrf.mxu0
    %v4560 = vadd.f32 %v4546, %v4559
    %4561 = vdwg.mxu0
    %4562 = vmatpush.bf16.msra.mxu0 %v4186
    %4563 = vmatpush.bf16.msra.mxu0 %v4182
    %4564 = vmatpush.bf16.msra.mxu0 %v4178
    %4565 = vmatpush.bf16.msra.mxu0 %v4174
    %4566 = vmatpush.bf16.msra.mxu0 %v4170
    %4567 = vmatpush.bf16.msra.mxu0 %v4166
    %4568 = vmatpush.bf16.msra.mxu0 %v4162
    %4569 = vmatpush.bf16.msra.mxu0 %v4158
    %4570 = vmatmul.bf16.gmra.mxu0 %v2930
    %v4571 = vpop.f32.mrf.mxu0
    %v4572 = vadd.f32 %v4558, %v4571
    %v4573 = vpop.f32.mrf.mxu0
    %v4574 = vadd.f32 %v4560, %v4573
    %4575 = vdwg.mxu0
    %4576 = vmatpush.bf16.msra.mxu0 %v4218
    %4577 = vmatpush.bf16.msra.mxu0 %v4214
    %4578 = vmatpush.bf16.msra.mxu0 %v4210
    %4579 = vmatpush.bf16.msra.mxu0 %v4206
    %4580 = vmatpush.bf16.msra.mxu0 %v4202
    %4581 = vmatpush.bf16.msra.mxu0 %v4198
    %4582 = vmatpush.bf16.msra.mxu0 %v4194
    %4583 = vmatpush.bf16.msra.mxu0 %v4190
    %4584 = vmatmul.bf16.gmra.mxu0 %v2931
    %v4585 = vpop.f32.mrf.mxu0
    %v4586 = vadd.f32 %v4572, %v4585
    %v4587 = vpop.f32.mrf.mxu0
    %v4588 = vadd.f32 %v4574, %v4587
    %4589 = vdwg.mxu0
    %4590 = vmatpush.bf16.msra.mxu0 %v3995
    %4591 = vmatpush.bf16.msra.mxu0 %v3991
    %4592 = vmatpush.bf16.msra.mxu0 %v3987
    %4593 = vmatpush.bf16.msra.mxu0 %v3983
    %4594 = vmatpush.bf16.msra.mxu0 %v3979
    %4595 = vmatpush.bf16.msra.mxu0 %v3975
    %4596 = vmatpush.bf16.msra.mxu0 %v3971
    %4597 = vmatpush.bf16.msra.mxu0 %v3967
    %4598 = vmatmul.bf16.gmra.mxu0 %v2924
    %v4599 = vpop.f32.mrf.mxu0
    %v4600 = vadd.f32 %v3191, %v4599
    %v4601 = vpop.f32.mrf.mxu0
    %v4602 = vadd.f32 %v3191, %v4601
    %4603 = vdwg.mxu0
    %4604 = vmatpush.bf16.msra.mxu0 %v4027
    %4605 = vmatpush.bf16.msra.mxu0 %v4023
    %4606 = vmatpush.bf16.msra.mxu0 %v4019
    %4607 = vmatpush.bf16.msra.mxu0 %v4015
    %4608 = vmatpush.bf16.msra.mxu0 %v4011
    %4609 = vmatpush.bf16.msra.mxu0 %v4007
    %4610 = vmatpush.bf16.msra.mxu0 %v4003
    %4611 = vmatpush.bf16.msra.mxu0 %v3999
    %4612 = vmatmul.bf16.gmra.mxu0 %v2925
    %v4613 = vpop.f32.mrf.mxu0
    %v4614 = vadd.f32 %v4600, %v4613
    %v4615 = vpop.f32.mrf.mxu0
    %v4616 = vadd.f32 %v4602, %v4615
    %4617 = vdwg.mxu0
    %4618 = vmatpush.bf16.msra.mxu0 %v4059
    %4619 = vmatpush.bf16.msra.mxu0 %v4055
    %4620 = vmatpush.bf16.msra.mxu0 %v4051
    %4621 = vmatpush.bf16.msra.mxu0 %v4047
    %4622 = vmatpush.bf16.msra.mxu0 %v4043
    %4623 = vmatpush.bf16.msra.mxu0 %v4039
    %4624 = vmatpush.bf16.msra.mxu0 %v4035
    %4625 = vmatpush.bf16.msra.mxu0 %v4031
    %4626 = vmatmul.bf16.gmra.mxu0 %v2926
    %v4627 = vpop.f32.mrf.mxu0
    %v4628 = vadd.f32 %v4614, %v4627
    %v4629 = vpop.f32.mrf.mxu0
    %v4630 = vadd.f32 %v4616, %v4629
    %4631 = vdwg.mxu0
    %4632 = vmatpush.bf16.msra.mxu0 %v4091
    %4633 = vmatpush.bf16.msra.mxu0 %v4087
    %4634 = vmatpush.bf16.msra.mxu0 %v4083
    %4635 = vmatpush.bf16.msra.mxu0 %v4079
    %4636 = vmatpush.bf16.msra.mxu0 %v4075
    %4637 = vmatpush.bf16.msra.mxu0 %v4071
    %4638 = vmatpush.bf16.msra.mxu0 %v4067
    %4639 = vmatpush.bf16.msra.mxu0 %v4063
    %4640 = vmatmul.bf16.gmra.mxu0 %v2927
    %v4641 = vpop.f32.mrf.mxu0
    %v4642 = vadd.f32 %v4628, %v4641
    %v4643 = vpop.f32.mrf.mxu0
    %v4644 = vadd.f32 %v4630, %v4643
    %4645 = vdwg.mxu0
    %4646 = vmatpush.bf16.msra.mxu0 %v4123
    %4647 = vmatpush.bf16.msra.mxu0 %v4119
    %4648 = vmatpush.bf16.msra.mxu0 %v4115
    %4649 = vmatpush.bf16.msra.mxu0 %v4111
    %4650 = vmatpush.bf16.msra.mxu0 %v4107
    %4651 = vmatpush.bf16.msra.mxu0 %v4103
    %4652 = vmatpush.bf16.msra.mxu0 %v4099
    %4653 = vmatpush.bf16.msra.mxu0 %v4095
    %4654 = vmatmul.bf16.gmra.mxu0 %v2928
    %v4655 = vpop.f32.mrf.mxu0
    %v4656 = vadd.f32 %v4642, %v4655
    %v4657 = vpop.f32.mrf.mxu0
    %v4658 = vadd.f32 %v4644, %v4657
    %4659 = vdwg.mxu0
    %4660 = vmatpush.bf16.msra.mxu0 %v4155
    %4661 = vmatpush.bf16.msra.mxu0 %v4151
    %4662 = vmatpush.bf16.msra.mxu0 %v4147
    %4663 = vmatpush.bf16.msra.mxu0 %v4143
    %4664 = vmatpush.bf16.msra.mxu0 %v4139
    %4665 = vmatpush.bf16.msra.mxu0 %v4135
    %4666 = vmatpush.bf16.msra.mxu0 %v4131
    %4667 = vmatpush.bf16.msra.mxu0 %v4127
    %4668 = vmatmul.bf16.gmra.mxu0 %v2929
    %v4669 = vpop.f32.mrf.mxu0
    %v4670 = vadd.f32 %v4656, %v4669
    %v4671 = vpop.f32.mrf.mxu0
    %v4672 = vadd.f32 %v4658, %v4671
    %4673 = vdwg.mxu0
    %4674 = vmatpush.bf16.msra.mxu0 %v4187
    %4675 = vmatpush.bf16.msra.mxu0 %v4183
    %4676 = vmatpush.bf16.msra.mxu0 %v4179
    %4677 = vmatpush.bf16.msra.mxu0 %v4175
    %4678 = vmatpush.bf16.msra.mxu0 %v4171
    %4679 = vmatpush.bf16.msra.mxu0 %v4167
    %4680 = vmatpush.bf16.msra.mxu0 %v4163
    %4681 = vmatpush.bf16.msra.mxu0 %v4159
    %4682 = vmatmul.bf16.gmra.mxu0 %v2930
    %v4683 = vpop.f32.mrf.mxu0
    %v4684 = vadd.f32 %v4670, %v4683
    %v4685 = vpop.f32.mrf.mxu0
    %v4686 = vadd.f32 %v4672, %v4685
    %4687 = vdwg.mxu0
    %4688 = vmatpush.bf16.msra.mxu0 %v4219
    %4689 = vmatpush.bf16.msra.mxu0 %v4215
    %4690 = vmatpush.bf16.msra.mxu0 %v4211
    %4691 = vmatpush.bf16.msra.mxu0 %v4207
    %4692 = vmatpush.bf16.msra.mxu0 %v4203
    %4693 = vmatpush.bf16.msra.mxu0 %v4199
    %4694 = vmatpush.bf16.msra.mxu0 %v4195
    %4695 = vmatpush.bf16.msra.mxu0 %v4191
    %4696 = vmatmul.bf16.gmra.mxu0 %v2931
    %v4697 = vpop.f32.mrf.mxu0
    %v4698 = vadd.f32 %v4684, %v4697
    %v4699 = vpop.f32.mrf.mxu0
    %v4700 = vadd.f32 %v4686, %v4699
    %4701 = vdwg.mxu0
    %4702 = vmatpush.bf16.msra.mxu0 %v3996
    %4703 = vmatpush.bf16.msra.mxu0 %v3992
    %4704 = vmatpush.bf16.msra.mxu0 %v3988
    %4705 = vmatpush.bf16.msra.mxu0 %v3984
    %4706 = vmatpush.bf16.msra.mxu0 %v3980
    %4707 = vmatpush.bf16.msra.mxu0 %v3976
    %4708 = vmatpush.bf16.msra.mxu0 %v3972
    %4709 = vmatpush.bf16.msra.mxu0 %v3968
    %4710 = vmatmul.bf16.gmra.mxu0 %v2924
    %v4711 = vpop.f32.mrf.mxu0
    %v4712 = vadd.f32 %v3192, %v4711
    %v4713 = vpop.f32.mrf.mxu0
    %v4714 = vadd.f32 %v3192, %v4713
    %4715 = vdwg.mxu0
    %4716 = vmatpush.bf16.msra.mxu0 %v4028
    %4717 = vmatpush.bf16.msra.mxu0 %v4024
    %4718 = vmatpush.bf16.msra.mxu0 %v4020
    %4719 = vmatpush.bf16.msra.mxu0 %v4016
    %4720 = vmatpush.bf16.msra.mxu0 %v4012
    %4721 = vmatpush.bf16.msra.mxu0 %v4008
    %4722 = vmatpush.bf16.msra.mxu0 %v4004
    %4723 = vmatpush.bf16.msra.mxu0 %v4000
    %4724 = vmatmul.bf16.gmra.mxu0 %v2925
    %v4725 = vpop.f32.mrf.mxu0
    %v4726 = vadd.f32 %v4712, %v4725
    %v4727 = vpop.f32.mrf.mxu0
    %v4728 = vadd.f32 %v4714, %v4727
    %4729 = vdwg.mxu0
    %4730 = vmatpush.bf16.msra.mxu0 %v4060
    %4731 = vmatpush.bf16.msra.mxu0 %v4056
    %4732 = vmatpush.bf16.msra.mxu0 %v4052
    %4733 = vmatpush.bf16.msra.mxu0 %v4048
    %4734 = vmatpush.bf16.msra.mxu0 %v4044
    %4735 = vmatpush.bf16.msra.mxu0 %v4040
    %4736 = vmatpush.bf16.msra.mxu0 %v4036
    %4737 = vmatpush.bf16.msra.mxu0 %v4032
    %4738 = vmatmul.bf16.gmra.mxu0 %v2926
    %v4739 = vpop.f32.mrf.mxu0
    %v4740 = vadd.f32 %v4726, %v4739
    %v4741 = vpop.f32.mrf.mxu0
    %v4742 = vadd.f32 %v4728, %v4741
    %4743 = vdwg.mxu0
    %4744 = vmatpush.bf16.msra.mxu0 %v4092
    %4745 = vmatpush.bf16.msra.mxu0 %v4088
    %4746 = vmatpush.bf16.msra.mxu0 %v4084
    %4747 = vmatpush.bf16.msra.mxu0 %v4080
    %4748 = vmatpush.bf16.msra.mxu0 %v4076
    %4749 = vmatpush.bf16.msra.mxu0 %v4072
    %4750 = vmatpush.bf16.msra.mxu0 %v4068
    %4751 = vmatpush.bf16.msra.mxu0 %v4064
    %4752 = vmatmul.bf16.gmra.mxu0 %v2927
    %v4753 = vpop.f32.mrf.mxu0
    %v4754 = vadd.f32 %v4740, %v4753
    %v4755 = vpop.f32.mrf.mxu0
    %v4756 = vadd.f32 %v4742, %v4755
    %4757 = vdwg.mxu0
    %4758 = vmatpush.bf16.msra.mxu0 %v4124
    %4759 = vmatpush.bf16.msra.mxu0 %v4120
    %4760 = vmatpush.bf16.msra.mxu0 %v4116
    %4761 = vmatpush.bf16.msra.mxu0 %v4112
    %4762 = vmatpush.bf16.msra.mxu0 %v4108
    %4763 = vmatpush.bf16.msra.mxu0 %v4104
    %4764 = vmatpush.bf16.msra.mxu0 %v4100
    %4765 = vmatpush.bf16.msra.mxu0 %v4096
    %4766 = vmatmul.bf16.gmra.mxu0 %v2928
    %v4767 = vpop.f32.mrf.mxu0
    %v4768 = vadd.f32 %v4754, %v4767
    %v4769 = vpop.f32.mrf.mxu0
    %v4770 = vadd.f32 %v4756, %v4769
    %4771 = vdwg.mxu0
    %4772 = vmatpush.bf16.msra.mxu0 %v4156
    %4773 = vmatpush.bf16.msra.mxu0 %v4152
    %4774 = vmatpush.bf16.msra.mxu0 %v4148
    %4775 = vmatpush.bf16.msra.mxu0 %v4144
    %4776 = vmatpush.bf16.msra.mxu0 %v4140
    %4777 = vmatpush.bf16.msra.mxu0 %v4136
    %4778 = vmatpush.bf16.msra.mxu0 %v4132
    %4779 = vmatpush.bf16.msra.mxu0 %v4128
    %4780 = vmatmul.bf16.gmra.mxu0 %v2929
    %v4781 = vpop.f32.mrf.mxu0
    %v4782 = vadd.f32 %v4768, %v4781
    %v4783 = vpop.f32.mrf.mxu0
    %v4784 = vadd.f32 %v4770, %v4783
    %4785 = vdwg.mxu0
    %4786 = vmatpush.bf16.msra.mxu0 %v4188
    %4787 = vmatpush.bf16.msra.mxu0 %v4184
    %4788 = vmatpush.bf16.msra.mxu0 %v4180
    %4789 = vmatpush.bf16.msra.mxu0 %v4176
    %4790 = vmatpush.bf16.msra.mxu0 %v4172
    %4791 = vmatpush.bf16.msra.mxu0 %v4168
    %4792 = vmatpush.bf16.msra.mxu0 %v4164
    %4793 = vmatpush.bf16.msra.mxu0 %v4160
    %4794 = vmatmul.bf16.gmra.mxu0 %v2930
    %v4795 = vpop.f32.mrf.mxu0
    %v4796 = vadd.f32 %v4782, %v4795
    %v4797 = vpop.f32.mrf.mxu0
    %v4798 = vadd.f32 %v4784, %v4797
    %4799 = vdwg.mxu0
    %4800 = vmatpush.bf16.msra.mxu0 %v4220
    %4801 = vmatpush.bf16.msra.mxu0 %v4216
    %4802 = vmatpush.bf16.msra.mxu0 %v4212
    %4803 = vmatpush.bf16.msra.mxu0 %v4208
    %4804 = vmatpush.bf16.msra.mxu0 %v4204
    %4805 = vmatpush.bf16.msra.mxu0 %v4200
    %4806 = vmatpush.bf16.msra.mxu0 %v4196
    %4807 = vmatpush.bf16.msra.mxu0 %v4192
    %4808 = vmatmul.bf16.gmra.mxu0 %v2931
    %v4809 = vpop.f32.mrf.mxu0
    %v4810 = vadd.f32 %v4796, %v4809
    %v4811 = vpop.f32.mrf.mxu0
    %v4812 = vadd.f32 %v4798, %v4811
    %4813 = vdwg.mxu0
    %4814 = vmatpush.bf16.msra.mxu0 %v3997
    %4815 = vmatpush.bf16.msra.mxu0 %v3993
    %4816 = vmatpush.bf16.msra.mxu0 %v3989
    %4817 = vmatpush.bf16.msra.mxu0 %v3985
    %4818 = vmatpush.bf16.msra.mxu0 %v3981
    %4819 = vmatpush.bf16.msra.mxu0 %v3977
    %4820 = vmatpush.bf16.msra.mxu0 %v3973
    %4821 = vmatpush.bf16.msra.mxu0 %v3969
    %4822 = vmatmul.bf16.gmra.mxu0 %v2924
    %v4823 = vpop.f32.mrf.mxu0
    %v4824 = vadd.f32 %v3193, %v4823
    %v4825 = vpop.f32.mrf.mxu0
    %v4826 = vadd.f32 %v3193, %v4825
    %4827 = vdwg.mxu0
    %4828 = vmatpush.bf16.msra.mxu0 %v4029
    %4829 = vmatpush.bf16.msra.mxu0 %v4025
    %4830 = vmatpush.bf16.msra.mxu0 %v4021
    %4831 = vmatpush.bf16.msra.mxu0 %v4017
    %4832 = vmatpush.bf16.msra.mxu0 %v4013
    %4833 = vmatpush.bf16.msra.mxu0 %v4009
    %4834 = vmatpush.bf16.msra.mxu0 %v4005
    %4835 = vmatpush.bf16.msra.mxu0 %v4001
    %4836 = vmatmul.bf16.gmra.mxu0 %v2925
    %v4837 = vpop.f32.mrf.mxu0
    %v4838 = vadd.f32 %v4824, %v4837
    %v4839 = vpop.f32.mrf.mxu0
    %v4840 = vadd.f32 %v4826, %v4839
    %4841 = vdwg.mxu0
    %4842 = vmatpush.bf16.msra.mxu0 %v4061
    %4843 = vmatpush.bf16.msra.mxu0 %v4057
    %4844 = vmatpush.bf16.msra.mxu0 %v4053
    %4845 = vmatpush.bf16.msra.mxu0 %v4049
    %4846 = vmatpush.bf16.msra.mxu0 %v4045
    %4847 = vmatpush.bf16.msra.mxu0 %v4041
    %4848 = vmatpush.bf16.msra.mxu0 %v4037
    %4849 = vmatpush.bf16.msra.mxu0 %v4033
    %4850 = vmatmul.bf16.gmra.mxu0 %v2926
    %v4851 = vpop.f32.mrf.mxu0
    %v4852 = vadd.f32 %v4838, %v4851
    %v4853 = vpop.f32.mrf.mxu0
    %v4854 = vadd.f32 %v4840, %v4853
    %4855 = vdwg.mxu0
    %4856 = vmatpush.bf16.msra.mxu0 %v4093
    %4857 = vmatpush.bf16.msra.mxu0 %v4089
    %4858 = vmatpush.bf16.msra.mxu0 %v4085
    %4859 = vmatpush.bf16.msra.mxu0 %v4081
    %4860 = vmatpush.bf16.msra.mxu0 %v4077
    %4861 = vmatpush.bf16.msra.mxu0 %v4073
    %4862 = vmatpush.bf16.msra.mxu0 %v4069
    %4863 = vmatpush.bf16.msra.mxu0 %v4065
    %4864 = vmatmul.bf16.gmra.mxu0 %v2927
    %v4865 = vpop.f32.mrf.mxu0
    %v4866 = vadd.f32 %v4852, %v4865
    %v4867 = vpop.f32.mrf.mxu0
    %v4868 = vadd.f32 %v4854, %v4867
    %4869 = vdwg.mxu0
    %4870 = vmatpush.bf16.msra.mxu0 %v4125
    %4871 = vmatpush.bf16.msra.mxu0 %v4121
    %4872 = vmatpush.bf16.msra.mxu0 %v4117
    %4873 = vmatpush.bf16.msra.mxu0 %v4113
    %4874 = vmatpush.bf16.msra.mxu0 %v4109
    %4875 = vmatpush.bf16.msra.mxu0 %v4105
    %4876 = vmatpush.bf16.msra.mxu0 %v4101
    %4877 = vmatpush.bf16.msra.mxu0 %v4097
    %4878 = vmatmul.bf16.gmra.mxu0 %v2928
    %v4879 = vpop.f32.mrf.mxu0
    %v4880 = vadd.f32 %v4866, %v4879
    %v4881 = vpop.f32.mrf.mxu0
    %v4882 = vadd.f32 %v4868, %v4881
    %4883 = vdwg.mxu0
    %4884 = vmatpush.bf16.msra.mxu0 %v4157
    %4885 = vmatpush.bf16.msra.mxu0 %v4153
    %4886 = vmatpush.bf16.msra.mxu0 %v4149
    %4887 = vmatpush.bf16.msra.mxu0 %v4145
    %4888 = vmatpush.bf16.msra.mxu0 %v4141
    %4889 = vmatpush.bf16.msra.mxu0 %v4137
    %4890 = vmatpush.bf16.msra.mxu0 %v4133
    %4891 = vmatpush.bf16.msra.mxu0 %v4129
    %4892 = vmatmul.bf16.gmra.mxu0 %v2929
    %v4893 = vpop.f32.mrf.mxu0
    %v4894 = vadd.f32 %v4880, %v4893
    %v4895 = vpop.f32.mrf.mxu0
    %v4896 = vadd.f32 %v4882, %v4895
    %4897 = vdwg.mxu0
    %4898 = vmatpush.bf16.msra.mxu0 %v4189
    %4899 = vmatpush.bf16.msra.mxu0 %v4185
    %4900 = vmatpush.bf16.msra.mxu0 %v4181
    %4901 = vmatpush.bf16.msra.mxu0 %v4177
    %4902 = vmatpush.bf16.msra.mxu0 %v4173
    %4903 = vmatpush.bf16.msra.mxu0 %v4169
    %4904 = vmatpush.bf16.msra.mxu0 %v4165
    %4905 = vmatpush.bf16.msra.mxu0 %v4161
    %4906 = vmatmul.bf16.gmra.mxu0 %v2930
    %v4907 = vpop.f32.mrf.mxu0
    %v4908 = vadd.f32 %v4894, %v4907
    %v4909 = vpop.f32.mrf.mxu0
    %v4910 = vadd.f32 %v4896, %v4909
    %4911 = vdwg.mxu0
    %4912 = vmatpush.bf16.msra.mxu0 %v4221
    %4913 = vmatpush.bf16.msra.mxu0 %v4217
    %4914 = vmatpush.bf16.msra.mxu0 %v4213
    %4915 = vmatpush.bf16.msra.mxu0 %v4209
    %4916 = vmatpush.bf16.msra.mxu0 %v4205
    %4917 = vmatpush.bf16.msra.mxu0 %v4201
    %4918 = vmatpush.bf16.msra.mxu0 %v4197
    %4919 = vmatpush.bf16.msra.mxu0 %v4193
    %4920 = vmatmul.bf16.gmra.mxu0 %v2931
    %v4921 = vpop.f32.mrf.mxu0
    %v4922 = vadd.f32 %v4908, %v4921
    %v4923 = vpop.f32.mrf.mxu0
    %v4924 = vadd.f32 %v4910, %v4923
    %4925 = vdwg.mxu0
    %v4926 = vmul.f32 %v4586, 0.01
    %v4927 = vmul.f32 %v4698, 0.01
    %v4928 = vmul.f32 %v4810, 0.01
    %v4929 = vmul.f32 %v4922, 0.01
    %v4930 = vmul.f32 %v4588, 0.01
    %v4931 = vmul.f32 %v4700, 0.01
    %v4932 = vmul.f32 %v4812, 0.01
    %v4933 = vmul.f32 %v4924, 0.01
    %v4934 = vmax.f32 %v4586, %v4926
    %v4935 = vmax.f32 %v4698, %v4927
    %v4936 = vmax.f32 %v4810, %v4928
    %v4937 = vmax.f32 %v4922, %v4929
    %v4938 = vmax.f32 %v4588, %v4930
    %v4939 = vmax.f32 %v4700, %v4931
    %v4940 = vmax.f32 %v4812, %v4932
    %v4941 = vmax.f32 %v4924, %v4933
    %v4942 = vpack.c.bf16 %v4938, %v4934
    %v4943 = vpack.c.bf16 %v4939, %v4935
    %v4944 = vpack.c.bf16 %v4940, %v4936
    %v4945 = vpack.c.bf16 %v4941, %v4937
    %v4946 = vld [vmem:[#allocation11] sm:$0xff]
    %v4947 = vld [vmem:[#allocation11 + $0x8] sm:$0xff]
    %v4948 = vld [vmem:[#allocation11 + $0x10] sm:$0xff]
    %v4949 = vld [vmem:[#allocation11 + $0x18] sm:$0xff]
    %v4950 = vld [vmem:[#allocation11 + $0x20] sm:$0xff]
    %v4951 = vld [vmem:[#allocation11 + $0x28] sm:$0xff]
    %v4952 = vld [vmem:[#allocation11 + $0x30] sm:$0xff]
    %v4953 = vld [vmem:[#allocation11 + $0x38] sm:$0xff]
    %v4954 = vld [vmem:[#allocation11 + $0x40] sm:$0xff]
    %v4955 = vld [vmem:[#allocation11 + $0x48] sm:$0xff]
    %v4956 = vld [vmem:[#allocation11 + $0x50] sm:$0xff]
    %v4957 = vld [vmem:[#allocation11 + $0x58] sm:$0xff]
    %v4958 = vld [vmem:[#allocation11 + $0x60] sm:$0xff]
    %v4959 = vld [vmem:[#allocation11 + $0x68] sm:$0xff]
    %v4960 = vld [vmem:[#allocation11 + $0x70] sm:$0xff]
    %v4961 = vld [vmem:[#allocation11 + $0x78] sm:$0xff]
    %v4962 = vld [vmem:[#allocation11 + $0x80] sm:$0xff]
    %v4963 = vld [vmem:[#allocation11 + $0x88] sm:$0xff]
    %v4964 = vld [vmem:[#allocation11 + $0x90] sm:$0xff]
    %v4965 = vld [vmem:[#allocation11 + $0x98] sm:$0xff]
    %v4966 = vld [vmem:[#allocation11 + $0xa0] sm:$0xff]
    %v4967 = vld [vmem:[#allocation11 + $0xa8] sm:$0xff]
    %v4968 = vld [vmem:[#allocation11 + $0xb0] sm:$0xff]
    %v4969 = vld [vmem:[#allocation11 + $0xb8] sm:$0xff]
    %v4970 = vld [vmem:[#allocation11 + $0xc0] sm:$0xff]
    %v4971 = vld [vmem:[#allocation11 + $0xc8] sm:$0xff]
    %v4972 = vld [vmem:[#allocation11 + $0xd0] sm:$0xff]
    %v4973 = vld [vmem:[#allocation11 + $0xd8] sm:$0xff]
    %v4974 = vld [vmem:[#allocation11 + $0xe0] sm:$0xff]
    %v4975 = vld [vmem:[#allocation11 + $0xe8] sm:$0xff]
    %v4976 = vld [vmem:[#allocation11 + $0xf0] sm:$0xff]
    %v4977 = vld [vmem:[#allocation11 + $0xf8] sm:$0xff]
    %v4978 = vld [vmem:[#allocation11 + $0x100] sm:$0xff]
    %v4979 = vld [vmem:[#allocation11 + $0x108] sm:$0xff]
    %v4980 = vld [vmem:[#allocation11 + $0x110] sm:$0xff]
    %v4981 = vld [vmem:[#allocation11 + $0x118] sm:$0xff]
    %v4982 = vld [vmem:[#allocation11 + $0x120] sm:$0xff]
    %v4983 = vld [vmem:[#allocation11 + $0x128] sm:$0xff]
    %v4984 = vld [vmem:[#allocation11 + $0x130] sm:$0xff]
    %v4985 = vld [vmem:[#allocation11 + $0x138] sm:$0xff]
    %v4986 = vld [vmem:[#allocation11 + $0x140] sm:$0xff]
    %v4987 = vld [vmem:[#allocation11 + $0x148] sm:$0xff]
    %v4988 = vld [vmem:[#allocation11 + $0x150] sm:$0xff]
    %v4989 = vld [vmem:[#allocation11 + $0x158] sm:$0xff]
    %v4990 = vld [vmem:[#allocation11 + $0x160] sm:$0xff]
    %v4991 = vld [vmem:[#allocation11 + $0x168] sm:$0xff]
    %v4992 = vld [vmem:[#allocation11 + $0x170] sm:$0xff]
    %v4993 = vld [vmem:[#allocation11 + $0x178] sm:$0xff]
    %v4994 = vld [vmem:[#allocation11 + $0x180] sm:$0xff]
    %v4995 = vld [vmem:[#allocation11 + $0x188] sm:$0xff]
    %v4996 = vld [vmem:[#allocation11 + $0x190] sm:$0xff]
    %v4997 = vld [vmem:[#allocation11 + $0x198] sm:$0xff]
    %v4998 = vld [vmem:[#allocation11 + $0x1a0] sm:$0xff]
    %v4999 = vld [vmem:[#allocation11 + $0x1a8] sm:$0xff]
    %v5000 = vld [vmem:[#allocation11 + $0x1b0] sm:$0xff]
    %v5001 = vld [vmem:[#allocation11 + $0x1b8] sm:$0xff]
    %v5002 = vld [vmem:[#allocation11 + $0x1c0] sm:$0xff]
    %v5003 = vld [vmem:[#allocation11 + $0x1c8] sm:$0xff]
    %v5004 = vld [vmem:[#allocation11 + $0x1d0] sm:$0xff]
    %v5005 = vld [vmem:[#allocation11 + $0x1d8] sm:$0xff]
    %v5006 = vld [vmem:[#allocation11 + $0x1e0] sm:$0xff]
    %v5007 = vld [vmem:[#allocation11 + $0x1e8] sm:$0xff]
    %v5008 = vld [vmem:[#allocation11 + $0x1f0] sm:$0xff]
    %v5009 = vld [vmem:[#allocation11 + $0x1f8] sm:$0xff]
    %v5010 = vld [vmem:[%s12] sm:$0x3]
    %v5012 = vperm.slane %v5010, 0
    %v5013 = vperm.slane %v5010, 1
    %v5080 = vunpack.c.l.b16 %v4946
    %v5081 = vunpack.c.h.b16 %v4946
    %v5082 = vunpack.c.l.b16 %v4947
    %v5083 = vunpack.c.h.b16 %v4947
    %v5084 = vunpack.c.l.b16 %v4948
    %v5085 = vunpack.c.h.b16 %v4948
    %v5086 = vunpack.c.l.b16 %v4949
    %v5087 = vunpack.c.h.b16 %v4949
    %v5088 = vunpack.c.l.b16 %v4950
    %v5089 = vunpack.c.h.b16 %v4950
    %v5090 = vunpack.c.l.b16 %v4951
    %v5091 = vunpack.c.h.b16 %v4951
    %v5092 = vunpack.c.l.b16 %v4952
    %v5093 = vunpack.c.h.b16 %v4952
    %v5094 = vunpack.c.l.b16 %v4953
    %v5095 = vunpack.c.h.b16 %v4953
    %v5096 = vunpack.c.l.b16 %v4954
    %v5097 = vunpack.c.h.b16 %v4954
    %v5098 = vunpack.c.l.b16 %v4955
    %v5099 = vunpack.c.h.b16 %v4955
    %v5100 = vunpack.c.l.b16 %v4956
    %v5101 = vunpack.c.h.b16 %v4956
    %v5102 = vunpack.c.l.b16 %v4957
    %v5103 = vunpack.c.h.b16 %v4957
    %v5104 = vunpack.c.l.b16 %v4958
    %v5105 = vunpack.c.h.b16 %v4958
    %v5106 = vunpack.c.l.b16 %v4959
    %v5107 = vunpack.c.h.b16 %v4959
    %v5108 = vunpack.c.l.b16 %v4960
    %v5109 = vunpack.c.h.b16 %v4960
    %v5110 = vunpack.c.l.b16 %v4961
    %v5111 = vunpack.c.h.b16 %v4961
    %v5112 = vunpack.c.l.b16 %v4962
    %v5113 = vunpack.c.h.b16 %v4962
    %v5114 = vunpack.c.l.b16 %v4963
    %v5115 = vunpack.c.h.b16 %v4963
    %v5116 = vunpack.c.l.b16 %v4964
    %v5117 = vunpack.c.h.b16 %v4964
    %v5118 = vunpack.c.l.b16 %v4965
    %v5119 = vunpack.c.h.b16 %v4965
    %v5120 = vunpack.c.l.b16 %v4966
    %v5121 = vunpack.c.h.b16 %v4966
    %v5122 = vunpack.c.l.b16 %v4967
    %v5123 = vunpack.c.h.b16 %v4967
    %v5124 = vunpack.c.l.b16 %v4968
    %v5125 = vunpack.c.h.b16 %v4968
    %v5126 = vunpack.c.l.b16 %v4969
    %v5127 = vunpack.c.h.b16 %v4969
    %v5128 = vunpack.c.l.b16 %v4970
    %v5129 = vunpack.c.h.b16 %v4970
    %v5130 = vunpack.c.l.b16 %v4971
    %v5131 = vunpack.c.h.b16 %v4971
    %v5132 = vunpack.c.l.b16 %v4972
    %v5133 = vunpack.c.h.b16 %v4972
    %v5134 = vunpack.c.l.b16 %v4973
    %v5135 = vunpack.c.h.b16 %v4973
    %v5136 = vunpack.c.l.b16 %v4974
    %v5137 = vunpack.c.h.b16 %v4974
    %v5138 = vunpack.c.l.b16 %v4975
    %v5139 = vunpack.c.h.b16 %v4975
    %v5140 = vunpack.c.l.b16 %v4976
    %v5141 = vunpack.c.h.b16 %v4976
    %v5142 = vunpack.c.l.b16 %v4977
    %v5143 = vunpack.c.h.b16 %v4977
    %v5144 = vunpack.c.l.b16 %v4978
    %v5145 = vunpack.c.h.b16 %v4978
    %v5146 = vunpack.c.l.b16 %v4979
    %v5147 = vunpack.c.h.b16 %v4979
    %v5148 = vunpack.c.l.b16 %v4980
    %v5149 = vunpack.c.h.b16 %v4980
    %v5150 = vunpack.c.l.b16 %v4981
    %v5151 = vunpack.c.h.b16 %v4981
    %v5152 = vunpack.c.l.b16 %v4982
    %v5153 = vunpack.c.h.b16 %v4982
    %v5154 = vunpack.c.l.b16 %v4983
    %v5155 = vunpack.c.h.b16 %v4983
    %v5156 = vunpack.c.l.b16 %v4984
    %v5157 = vunpack.c.h.b16 %v4984
    %v5158 = vunpack.c.l.b16 %v4985
    %v5159 = vunpack.c.h.b16 %v4985
    %v5160 = vunpack.c.l.b16 %v4986
    %v5161 = vunpack.c.h.b16 %v4986
    %v5162 = vunpack.c.l.b16 %v4987
    %v5163 = vunpack.c.h.b16 %v4987
    %v5164 = vunpack.c.l.b16 %v4988
    %v5165 = vunpack.c.h.b16 %v4988
    %v5166 = vunpack.c.l.b16 %v4989
    %v5167 = vunpack.c.h.b16 %v4989
    %v5168 = vunpack.c.l.b16 %v4990
    %v5169 = vunpack.c.h.b16 %v4990
    %v5170 = vunpack.c.l.b16 %v4991
    %v5171 = vunpack.c.h.b16 %v4991
    %v5172 = vunpack.c.l.b16 %v4992
    %v5173 = vunpack.c.h.b16 %v4992
    %v5174 = vunpack.c.l.b16 %v4993
    %v5175 = vunpack.c.h.b16 %v4993
    %v5176 = vunpack.c.l.b16 %v4994
    %v5177 = vunpack.c.h.b16 %v4994
    %v5178 = vunpack.c.l.b16 %v4995
    %v5179 = vunpack.c.h.b16 %v4995
    %v5180 = vunpack.c.l.b16 %v4996
    %v5181 = vunpack.c.h.b16 %v4996
    %v5182 = vunpack.c.l.b16 %v4997
    %v5183 = vunpack.c.h.b16 %v4997
    %v5184 = vunpack.c.l.b16 %v4998
    %v5185 = vunpack.c.h.b16 %v4998
    %v5186 = vunpack.c.l.b16 %v4999
    %v5187 = vunpack.c.h.b16 %v4999
    %v5188 = vunpack.c.l.b16 %v5000
    %v5189 = vunpack.c.h.b16 %v5000
    %v5190 = vunpack.c.l.b16 %v5001
    %v5191 = vunpack.c.h.b16 %v5001
    %v5192 = vunpack.c.l.b16 %v5002
    %v5193 = vunpack.c.h.b16 %v5002
    %v5194 = vunpack.c.l.b16 %v5003
    %v5195 = vunpack.c.h.b16 %v5003
    %v5196 = vunpack.c.l.b16 %v5004
    %v5197 = vunpack.c.h.b16 %v5004
    %v5198 = vunpack.c.l.b16 %v5005
    %v5199 = vunpack.c.h.b16 %v5005
    %v5200 = vunpack.c.l.b16 %v5006
    %v5201 = vunpack.c.h.b16 %v5006
    %v5202 = vunpack.c.l.b16 %v5007
    %v5203 = vunpack.c.h.b16 %v5007
    %v5204 = vunpack.c.l.b16 %v5008
    %v5205 = vunpack.c.h.b16 %v5008
    %v5206 = vunpack.c.l.b16 %v5009
    %v5207 = vunpack.c.h.b16 %v5009
    %v5208 = vpack.c.b16 %v5082, %v5080
    %v5209 = vpack.c.b16 %v5083, %v5081
    %v5210 = vpack.c.b16 %v5086, %v5084
    %v5211 = vpack.c.b16 %v5087, %v5085
    %v5212 = vpack.c.b16 %v5090, %v5088
    %v5213 = vpack.c.b16 %v5091, %v5089
    %v5214 = vpack.c.b16 %v5094, %v5092
    %v5215 = vpack.c.b16 %v5095, %v5093
    %v5216 = vpack.c.b16 %v5098, %v5096
    %v5217 = vpack.c.b16 %v5099, %v5097
    %v5218 = vpack.c.b16 %v5102, %v5100
    %v5219 = vpack.c.b16 %v5103, %v5101
    %v5220 = vpack.c.b16 %v5106, %v5104
    %v5221 = vpack.c.b16 %v5107, %v5105
    %v5222 = vpack.c.b16 %v5110, %v5108
    %v5223 = vpack.c.b16 %v5111, %v5109
    %v5224 = vpack.c.b16 %v5114, %v5112
    %v5225 = vpack.c.b16 %v5115, %v5113
    %v5226 = vpack.c.b16 %v5118, %v5116
    %v5227 = vpack.c.b16 %v5119, %v5117
    %v5228 = vpack.c.b16 %v5122, %v5120
    %v5229 = vpack.c.b16 %v5123, %v5121
    %v5230 = vpack.c.b16 %v5126, %v5124
    %v5231 = vpack.c.b16 %v5127, %v5125
    %v5232 = vpack.c.b16 %v5130, %v5128
    %v5233 = vpack.c.b16 %v5131, %v5129
    %v5234 = vpack.c.b16 %v5134, %v5132
    %v5235 = vpack.c.b16 %v5135, %v5133
    %v5236 = vpack.c.b16 %v5138, %v5136
    %v5237 = vpack.c.b16 %v5139, %v5137
    %v5238 = vpack.c.b16 %v5142, %v5140
    %v5239 = vpack.c.b16 %v5143, %v5141
    %v5240 = vpack.c.b16 %v5146, %v5144
    %v5241 = vpack.c.b16 %v5147, %v5145
    %v5242 = vpack.c.b16 %v5150, %v5148
    %v5243 = vpack.c.b16 %v5151, %v5149
    %v5244 = vpack.c.b16 %v5154, %v5152
    %v5245 = vpack.c.b16 %v5155, %v5153
    %v5246 = vpack.c.b16 %v5158, %v5156
    %v5247 = vpack.c.b16 %v5159, %v5157
    %v5248 = vpack.c.b16 %v5162, %v5160
    %v5249 = vpack.c.b16 %v5163, %v5161
    %v5250 = vpack.c.b16 %v5166, %v5164
    %v5251 = vpack.c.b16 %v5167, %v5165
    %v5252 = vpack.c.b16 %v5170, %v5168
    %v5253 = vpack.c.b16 %v5171, %v5169
    %v5254 = vpack.c.b16 %v5174, %v5172
    %v5255 = vpack.c.b16 %v5175, %v5173
    %v5256 = vpack.c.b16 %v5178, %v5176
    %v5257 = vpack.c.b16 %v5179, %v5177
    %v5258 = vpack.c.b16 %v5182, %v5180
    %v5259 = vpack.c.b16 %v5183, %v5181
    %v5260 = vpack.c.b16 %v5186, %v5184
    %v5261 = vpack.c.b16 %v5187, %v5185
    %v5262 = vpack.c.b16 %v5190, %v5188
    %v5263 = vpack.c.b16 %v5191, %v5189
    %v5264 = vpack.c.b16 %v5194, %v5192
    %v5265 = vpack.c.b16 %v5195, %v5193
    %v5266 = vpack.c.b16 %v5198, %v5196
    %v5267 = vpack.c.b16 %v5199, %v5197
    %v5268 = vpack.c.b16 %v5202, %v5200
    %v5269 = vpack.c.b16 %v5203, %v5201
    %v5270 = vpack.c.b16 %v5206, %v5204
    %v5271 = vpack.c.b16 %v5207, %v5205
    %5336 = vmatpush.bf16.msra.mxu0 %v5222
    %5337 = vmatpush.bf16.msra.mxu0 %v5220
    %5338 = vmatpush.bf16.msra.mxu0 %v5218
    %5339 = vmatpush.bf16.msra.mxu0 %v5216
    %5340 = vmatpush.bf16.msra.mxu0 %v5214
    %5341 = vmatpush.bf16.msra.mxu0 %v5212
    %5342 = vmatpush.bf16.msra.mxu0 %v5210
    %5343 = vmatpush.bf16.msra.mxu0 %v5208
    %5344 = vmatmul.bf16.gmra.mxu0 %v4942
    %v5345 = vpop.f32.mrf.mxu0
    %v5346 = vadd.f32 %v5012, %v5345
    %v5347 = vpop.f32.mrf.mxu0
    %v5348 = vadd.f32 %v5012, %v5347
    %5349 = vdwg.mxu0
    %5350 = vmatpush.bf16.msra.mxu0 %v5238
    %5351 = vmatpush.bf16.msra.mxu0 %v5236
    %5352 = vmatpush.bf16.msra.mxu0 %v5234
    %5353 = vmatpush.bf16.msra.mxu0 %v5232
    %5354 = vmatpush.bf16.msra.mxu0 %v5230
    %5355 = vmatpush.bf16.msra.mxu0 %v5228
    %5356 = vmatpush.bf16.msra.mxu0 %v5226
    %5357 = vmatpush.bf16.msra.mxu0 %v5224
    %5358 = vmatmul.bf16.gmra.mxu0 %v4943
    %v5359 = vpop.f32.mrf.mxu0
    %v5360 = vadd.f32 %v5346, %v5359
    %v5361 = vpop.f32.mrf.mxu0
    %v5362 = vadd.f32 %v5348, %v5361
    %5363 = vdwg.mxu0
    %5364 = vmatpush.bf16.msra.mxu0 %v5254
    %5365 = vmatpush.bf16.msra.mxu0 %v5252
    %5366 = vmatpush.bf16.msra.mxu0 %v5250
    %5367 = vmatpush.bf16.msra.mxu0 %v5248
    %5368 = vmatpush.bf16.msra.mxu0 %v5246
    %5369 = vmatpush.bf16.msra.mxu0 %v5244
    %5370 = vmatpush.bf16.msra.mxu0 %v5242
    %5371 = vmatpush.bf16.msra.mxu0 %v5240
    %5372 = vmatmul.bf16.gmra.mxu0 %v4944
    %v5373 = vpop.f32.mrf.mxu0
    %v5374 = vadd.f32 %v5360, %v5373
    %v5375 = vpop.f32.mrf.mxu0
    %v5376 = vadd.f32 %v5362, %v5375
    %5377 = vdwg.mxu0
    %5378 = vmatpush.bf16.msra.mxu0 %v5270
    %5379 = vmatpush.bf16.msra.mxu0 %v5268
    %5380 = vmatpush.bf16.msra.mxu0 %v5266
    %5381 = vmatpush.bf16.msra.mxu0 %v5264
    %5382 = vmatpush.bf16.msra.mxu0 %v5262
    %5383 = vmatpush.bf16.msra.mxu0 %v5260
    %5384 = vmatpush.bf16.msra.mxu0 %v5258
    %5385 = vmatpush.bf16.msra.mxu0 %v5256
    %5386 = vmatmul.bf16.gmra.mxu0 %v4945
    %v5387 = vpop.f32.mrf.mxu0
    %v5388 = vadd.f32 %v5374, %v5387
    %v5389 = vpop.f32.mrf.mxu0
    %v5390 = vadd.f32 %v5376, %v5389
    %5391 = vdwg.mxu0
    %5392 = vmatpush.bf16.msra.mxu0 %v5223
    %5393 = vmatpush.bf16.msra.mxu0 %v5221
    %5394 = vmatpush.bf16.msra.mxu0 %v5219
    %5395 = vmatpush.bf16.msra.mxu0 %v5217
    %5396 = vmatpush.bf16.msra.mxu0 %v5215
    %5397 = vmatpush.bf16.msra.mxu0 %v5213
    %5398 = vmatpush.bf16.msra.mxu0 %v5211
    %5399 = vmatpush.bf16.msra.mxu0 %v5209
    %5400 = vmatmul.bf16.gmra.mxu0 %v4942
    %v5401 = vpop.f32.mrf.mxu0
    %v5402 = vadd.f32 %v5013, %v5401
    %v5403 = vpop.f32.mrf.mxu0
    %v5404 = vadd.f32 %v5013, %v5403
    %5405 = vdwg.mxu0
    %5406 = vmatpush.bf16.msra.mxu0 %v5239
    %5407 = vmatpush.bf16.msra.mxu0 %v5237
    %5408 = vmatpush.bf16.msra.mxu0 %v5235
    %5409 = vmatpush.bf16.msra.mxu0 %v5233
    %5410 = vmatpush.bf16.msra.mxu0 %v5231
    %5411 = vmatpush.bf16.msra.mxu0 %v5229
    %5412 = vmatpush.bf16.msra.mxu0 %v5227
    %5413 = vmatpush.bf16.msra.mxu0 %v5225
    %5414 = vmatmul.bf16.gmra.mxu0 %v4943
    %v5415 = vpop.f32.mrf.mxu0
    %v5416 = vadd.f32 %v5402, %v5415
    %v5417 = vpop.f32.mrf.mxu0
    %v5418 = vadd.f32 %v5404, %v5417
    %5419 = vdwg.mxu0
    %5420 = vmatpush.bf16.msra.mxu0 %v5255
    %5421 = vmatpush.bf16.msra.mxu0 %v5253
    %5422 = vmatpush.bf16.msra.mxu0 %v5251
    %5423 = vmatpush.bf16.msra.mxu0 %v5249
    %5424 = vmatpush.bf16.msra.mxu0 %v5247
    %5425 = vmatpush.bf16.msra.mxu0 %v5245
    %5426 = vmatpush.bf16.msra.mxu0 %v5243
    %5427 = vmatpush.bf16.msra.mxu0 %v5241
    %5428 = vmatmul.bf16.gmra.mxu0 %v4944
    %v5429 = vpop.f32.mrf.mxu0
    %v5430 = vadd.f32 %v5416, %v5429
    %v5431 = vpop.f32.mrf.mxu0
    %v5432 = vadd.f32 %v5418, %v5431
    %5433 = vdwg.mxu0
    %5434 = vmatpush.bf16.msra.mxu0 %v5271
    %5435 = vmatpush.bf16.msra.mxu0 %v5269
    %5436 = vmatpush.bf16.msra.mxu0 %v5267
    %5437 = vmatpush.bf16.msra.mxu0 %v5265
    %5438 = vmatpush.bf16.msra.mxu0 %v5263
    %5439 = vmatpush.bf16.msra.mxu0 %v5261
    %5440 = vmatpush.bf16.msra.mxu0 %v5259
    %5441 = vmatpush.bf16.msra.mxu0 %v5257
    %5442 = vmatmul.bf16.gmra.mxu0 %v4945
    %v5443 = vpop.f32.mrf.mxu0
    %v5444 = vadd.f32 %v5430, %v5443
    %v5445 = vpop.f32.mrf.mxu0
    %v5446 = vadd.f32 %v5432, %v5445
    %5447 = vdwg.mxu0
    %v5448 = vmul.f32 %v5388, 0.01
    %v5449 = vmul.f32 %v5444, 0.01
    %v5450 = vmul.f32 %v5390, 0.01
    %v5451 = vmul.f32 %v5446, 0.01
    %v5452 = vmax.f32 %v5388, %v5448
    %v5453 = vmax.f32 %v5444, %v5449
    %v5454 = vmax.f32 %v5390, %v5450
    %v5455 = vmax.f32 %v5446, %v5451
    %v5456 = vpack.c.bf16 %v5454, %v5452
    %v5457 = vpack.c.bf16 %v5455, %v5453
    %v5458 = vld [vmem:[#allocation13] sm:$0xf]
    %v5459 = vld [vmem:[#allocation13 + $0x4] sm:$0xf]
    %v5460 = vld [vmem:[#allocation13 + $0x8] sm:$0xf]
    %v5461 = vld [vmem:[#allocation13 + $0xc] sm:$0xf]
    %v5462 = vld [vmem:[#allocation13 + $0x10] sm:$0xf]
    %v5463 = vld [vmem:[#allocation13 + $0x14] sm:$0xf]
    %v5464 = vld [vmem:[#allocation13 + $0x18] sm:$0xf]
    %v5465 = vld [vmem:[#allocation13 + $0x1c] sm:$0xf]
    %v5466 = vld [vmem:[#allocation13 + $0x20] sm:$0xf]
    %v5467 = vld [vmem:[#allocation13 + $0x24] sm:$0xf]
    %v5468 = vld [vmem:[#allocation13 + $0x28] sm:$0xf]
    %v5469 = vld [vmem:[#allocation13 + $0x2c] sm:$0xf]
    %v5470 = vld [vmem:[#allocation13 + $0x30] sm:$0xf]
    %v5471 = vld [vmem:[#allocation13 + $0x34] sm:$0xf]
    %v5472 = vld [vmem:[#allocation13 + $0x38] sm:$0xf]
    %v5473 = vld [vmem:[#allocation13 + $0x3c] sm:$0xf]
    %v5474 = vld [vmem:[#allocation13 + $0x40] sm:$0xf]
    %v5475 = vld [vmem:[#allocation13 + $0x44] sm:$0xf]
    %v5476 = vld [vmem:[#allocation13 + $0x48] sm:$0xf]
    %v5477 = vld [vmem:[#allocation13 + $0x4c] sm:$0xf]
    %v5478 = vld [vmem:[#allocation13 + $0x50] sm:$0xf]
    %v5479 = vld [vmem:[#allocation13 + $0x54] sm:$0xf]
    %v5480 = vld [vmem:[#allocation13 + $0x58] sm:$0xf]
    %v5481 = vld [vmem:[#allocation13 + $0x5c] sm:$0xf]
    %v5482 = vld [vmem:[#allocation13 + $0x60] sm:$0xf]
    %v5483 = vld [vmem:[#allocation13 + $0x64] sm:$0xf]
    %v5484 = vld [vmem:[#allocation13 + $0x68] sm:$0xf]
    %v5485 = vld [vmem:[#allocation13 + $0x6c] sm:$0xf]
    %v5486 = vld [vmem:[#allocation13 + $0x70] sm:$0xf]
    %v5487 = vld [vmem:[#allocation13 + $0x74] sm:$0xf]
    %v5488 = vld [vmem:[#allocation13 + $0x78] sm:$0xf]
    %v5489 = vld [vmem:[#allocation13 + $0x7c] sm:$0xf]
    %v5490 = vld [vmem:[%s13] sm:$0x1]
    %v5492 = vperm.slane %v5490, 0
    %v5526 = vunpack.c.l.b16 %v5458
    %v5527 = vunpack.c.l.b16 %v5459
    %v5528 = vunpack.c.l.b16 %v5460
    %v5529 = vunpack.c.l.b16 %v5461
    %v5530 = vunpack.c.l.b16 %v5462
    %v5531 = vunpack.c.l.b16 %v5463
    %v5532 = vunpack.c.l.b16 %v5464
    %v5533 = vunpack.c.l.b16 %v5465
    %v5534 = vunpack.c.l.b16 %v5466
    %v5535 = vunpack.c.l.b16 %v5467
    %v5536 = vunpack.c.l.b16 %v5468
    %v5537 = vunpack.c.l.b16 %v5469
    %v5538 = vunpack.c.l.b16 %v5470
    %v5539 = vunpack.c.l.b16 %v5471
    %v5540 = vunpack.c.l.b16 %v5472
    %v5541 = vunpack.c.l.b16 %v5473
    %v5542 = vunpack.c.l.b16 %v5474
    %v5543 = vunpack.c.l.b16 %v5475
    %v5544 = vunpack.c.l.b16 %v5476
    %v5545 = vunpack.c.l.b16 %v5477
    %v5546 = vunpack.c.l.b16 %v5478
    %v5547 = vunpack.c.l.b16 %v5479
    %v5548 = vunpack.c.l.b16 %v5480
    %v5549 = vunpack.c.l.b16 %v5481
    %v5550 = vunpack.c.l.b16 %v5482
    %v5551 = vunpack.c.l.b16 %v5483
    %v5552 = vunpack.c.l.b16 %v5484
    %v5553 = vunpack.c.l.b16 %v5485
    %v5554 = vunpack.c.l.b16 %v5486
    %v5555 = vunpack.c.l.b16 %v5487
    %v5556 = vunpack.c.l.b16 %v5488
    %v5557 = vunpack.c.l.b16 %v5489
    %v5558 = vpack.c.b16 %v5527, %v5526
    %v5559 = vpack.c.b16 %v5529, %v5528
    %v5560 = vpack.c.b16 %v5531, %v5530
    %v5561 = vpack.c.b16 %v5533, %v5532
    %v5562 = vpack.c.b16 %v5535, %v5534
    %v5563 = vpack.c.b16 %v5537, %v5536
    %v5564 = vpack.c.b16 %v5539, %v5538
    %v5565 = vpack.c.b16 %v5541, %v5540
    %v5566 = vpack.c.b16 %v5543, %v5542
    %v5567 = vpack.c.b16 %v5545, %v5544
    %v5568 = vpack.c.b16 %v5547, %v5546
    %v5569 = vpack.c.b16 %v5549, %v5548
    %v5570 = vpack.c.b16 %v5551, %v5550
    %v5571 = vpack.c.b16 %v5553, %v5552
    %v5572 = vpack.c.b16 %v5555, %v5554
    %v5573 = vpack.c.b16 %v5557, %v5556
    %5590 = vmatpush.bf16.msra.mxu0 %v5565
    %5591 = vmatpush.bf16.msra.mxu0 %v5564
    %5592 = vmatpush.bf16.msra.mxu0 %v5563
    %5593 = vmatpush.bf16.msra.mxu0 %v5562
    %5594 = vmatpush.bf16.msra.mxu0 %v5561
    %5595 = vmatpush.bf16.msra.mxu0 %v5560
    %5596 = vmatpush.bf16.msra.mxu0 %v5559
    %5597 = vmatpush.bf16.msra.mxu0 %v5558
    %5598 = vmatmul.bf16.gmra.mxu0 %v5456
    %v5599 = vpop.f32.mrf.mxu0
    %v5600 = vadd.f32 %v5492, %v5599
    %v5601 = vpop.f32.mrf.mxu0
    %v5602 = vadd.f32 %v5492, %v5601
    %5603 = vdwg.mxu0
    %5604 = vmatpush.bf16.msra.mxu0 %v5573
    %5605 = vmatpush.bf16.msra.mxu0 %v5572
    %5606 = vmatpush.bf16.msra.mxu0 %v5571
    %5607 = vmatpush.bf16.msra.mxu0 %v5570
    %5608 = vmatpush.bf16.msra.mxu0 %v5569
    %5609 = vmatpush.bf16.msra.mxu0 %v5568
    %5610 = vmatpush.bf16.msra.mxu0 %v5567
    %5611 = vmatpush.bf16.msra.mxu0 %v5566
    %5612 = vmatmul.bf16.gmra.mxu0 %v5457
    %v5613 = vpop.f32.mrf.mxu0
    %v5614 = vadd.f32 %v5600, %v5613
    %v5615 = vpop.f32.mrf.mxu0
    %v5616 = vadd.f32 %v5602, %v5615
    %5617 = vdwg.mxu0
    %v5618 = vmul.f32 %v5614, 0.01
    %v5619 = vmul.f32 %v5616, 0.01
    %v5620 = vmax.f32 %v5614, %v5618
    %v5621 = vmax.f32 %v5616, %v5619
    %v5622 = vpack.c.bf16 %v5621, %v5620
    %v5623 = vld [vmem:[#allocation14] sm:$0xf]
    %v5624 = vld [vmem:[#allocation14 + $0x4] sm:$0xf]
    %v5625 = vld [vmem:[#allocation14 + $0x8] sm:$0xf]
    %v5626 = vld [vmem:[#allocation14 + $0xc] sm:$0xf]
    %v5627 = vld [vmem:[#allocation14 + $0x10] sm:$0xf]
    %v5628 = vld [vmem:[#allocation14 + $0x14] sm:$0xf]
    %v5629 = vld [vmem:[#allocation14 + $0x18] sm:$0xf]
    %v5630 = vld [vmem:[#allocation14 + $0x1c] sm:$0xf]
    %v5631 = vld [vmem:[#allocation14 + $0x20] sm:$0xf]
    %v5632 = vld [vmem:[#allocation14 + $0x24] sm:$0xf]
    %v5633 = vld [vmem:[#allocation14 + $0x28] sm:$0xf]
    %v5634 = vld [vmem:[#allocation14 + $0x2c] sm:$0xf]
    %v5635 = vld [vmem:[#allocation14 + $0x30] sm:$0xf]
    %v5636 = vld [vmem:[#allocation14 + $0x34] sm:$0xf]
    %v5637 = vld [vmem:[#allocation14 + $0x38] sm:$0xf]
    %v5638 = vld [vmem:[#allocation14 + $0x3c] sm:$0xf]
    %v5639 = vld [vmem:[%s14] sm:$0x1]
    %v5641 = vperm.slane %v5639, 0
    %v5659 = vunpack.c.l.b16 %v5623
    %v5660 = vunpack.c.l.b16 %v5624
    %v5661 = vunpack.c.l.b16 %v5625
    %v5662 = vunpack.c.l.b16 %v5626
    %v5663 = vunpack.c.l.b16 %v5627
    %v5664 = vunpack.c.l.b16 %v5628
    %v5665 = vunpack.c.l.b16 %v5629
    %v5666 = vunpack.c.l.b16 %v5630
    %v5667 = vunpack.c.l.b16 %v5631
    %v5668 = vunpack.c.l.b16 %v5632
    %v5669 = vunpack.c.l.b16 %v5633
    %v5670 = vunpack.c.l.b16 %v5634
    %v5671 = vunpack.c.l.b16 %v5635
    %v5672 = vunpack.c.l.b16 %v5636
    %v5673 = vunpack.c.l.b16 %v5637
    %v5674 = vunpack.c.l.b16 %v5638
    %v5675 = vpack.c.b16 %v5660, %v5659
    %v5676 = vpack.c.b16 %v5662, %v5661
    %v5677 = vpack.c.b16 %v5664, %v5663
    %v5678 = vpack.c.b16 %v5666, %v5665
    %v5679 = vpack.c.b16 %v5668, %v5667
    %v5680 = vpack.c.b16 %v5670, %v5669
    %v5681 = vpack.c.b16 %v5672, %v5671
    %v5682 = vpack.c.b16 %v5674, %v5673
    %5691 = vmatpush.bf16.msra.mxu0 %v5682
    %5692 = vmatpush.bf16.msra.mxu0 %v5681
    %5693 = vmatpush.bf16.msra.mxu0 %v5680
    %5694 = vmatpush.bf16.msra.mxu0 %v5679
    %5695 = vmatpush.bf16.msra.mxu0 %v5678
    %5696 = vmatpush.bf16.msra.mxu0 %v5677
    %5697 = vmatpush.bf16.msra.mxu0 %v5676
    %5698 = vmatpush.bf16.msra.mxu0 %v5675
    %5699 = vmatmul.bf16.gmra.mxu0 %v5622
    %v5700 = vpop.f32.mrf.mxu0
    %v5701 = vadd.f32 %v5641, %v5700
    %v5702 = vpop.f32.mrf.mxu0
    %v5703 = vadd.f32 %v5641, %v5702
    %5704 = vdwg.mxu0
    %v5705 = vand.u32 2147483647, %v5701
    %v5706 = vand.u32 2147483647, %v5703
    %v5707 = vsub.f32 0.0, %v5705
    %v5708 = vsub.f32 0.0, %v5706
    %v5709 = vmul.f32 %v5707, 1.442695
    %v5710 = vpow.pop %v5709
    %v5711 = vmul.f32 %v5708, 1.442695
    %v5712 = vpow.pop %v5711
    %v5713 = vadd.f32 %v5710, 1.0
    %v5714 = vadd.f32 %v5712, 1.0
    %v5715 = vrcp.pop %v5713
    %v5716 = vrcp.pop %v5714
    %vm5717 = vcmp.ge.f32.partialorder %v5701, 0.0
    %vm5718 = vcmp.ge.f32.partialorder %v5703, 0.0
    %v5719 = vmul.f32 %v5710, %v5715
    %v5720 = vmul.f32 %v5712, %v5716
    %v5721 = vsel %vm5717, %v5715, %v5719
    %v5722 = vsel %vm5718, %v5716, %v5720
    %5723 = vst [vmem:[#allocation20] sm:$0xff] %v5721
    %5724 = vst [vmem:[#allocation20 + $0x8] sm:$0xff] %v5722
    // Predicated region
    $region106: #{tpu_custom_call.1} parent=1 // pred_check
      _
    $region107: #{tpu_custom_call.1} parent=1 // pred_check_branch
      %5726 = sbr.rel (0) target = $region109
    $region108: #{tpu_custom_call.1} parent=1 // pred_region
      %5728 = vsyncadd [#allocation4], 0
      %s5729 = sshll.u32 [#allocation20], 4
      %s5730 = int_to_ptr.vmem [resolvable:$true] %s5729
      %s5731 = sshll.u32 %s15, 4
      %s5732 = int_to_ptr.hbm [resolvable:$true] %s5731
      %5737 = dma.vmem_to_hbm [thread:$0]  %s5730, 256, %s5732, [#allocation4], 128, 128, 8
    $region109: #{tpu_custom_call.1} parent=1 // pred_fallthru
      _
    // Predicated region
    $region110: #{tpu_custom_call.1} parent=1 // pred_check
      _
    $region111: #{tpu_custom_call.1} parent=1 // pred_check_branch
      %5739 = sbr.rel (0) target = $region113
    $region112: #{tpu_custom_call.1} parent=1 // pred_region
      %5741 = dma.done [#allocation4], 256
    $region113: #{tpu_custom_call.1} parent=1 // pred_fallthru
      _
    %5742 = vsyncpa [#allocation3], 1
    %5743 = vsyncpa [#allocation6], 1
    %5744 = vsyncpa [#allocation9], 1
    %5745 = vsyncpa [#allocation12], 1
    %5746 = vsyncpa [#allocation15], 1
    %5747 = vsyncpa [#allocation18], 1
    %5748 = vsyncpa [#allocation4], 1

</llo_original>
